<compile_context>
chip_gen: v7x
topology: tpu7x:2x2x1
jax: 0.10.0
libtpu: 0.0.40
codegen_flags: <defaults>
</compile_context>

<pallas_src>
import math
import numpy as np
import jax
import jax.numpy as jnp
from jax import lax
from jax.experimental import pallas as pl
from jax.experimental.pallas import tpu as pltpu

# ------------------------- config -------------------------
IMG, PATCH, IN_CH = 16, 8, 3
EMBED, DEPTH, HEADS = 32, 2, 4
HEAD_DIM = EMBED // HEADS
MLP_HIDDEN = int(EMBED * 4.0)
NUM_CLASSES = 10
GRID_HW = IMG // PATCH                      # 2
NUM_PATCHES = GRID_HW * GRID_HW             # 4
NTOK = NUM_PATCHES + 1                      # 5 (cls + patches)
NPAD = 8                                    # tokens padded to one sublane tile
KPE = IN_CH * PATCH * PATCH                 # 192
SCALE = HEAD_DIM ** (-0.5)
EPS = 1e-6
INIT_VALUES = 0.1
NUM_REL_DIST = (2 * GRID_HW - 1) * (2 * GRID_HW - 1) + 3   # 12
MASK_NEG = -1e9

B_TILE = 16                                 # images per grid step
R_TILE = B_TILE * NPAD                      # 128 token rows per grid step
OUT_PAD = 128                               # lane-dense classifier output width
SQRT_2_OVER_PI = 0.7978845608028654


# ------------------------- math helpers (inside the kernel) -------------------------
def _gelu_tanh(x):
    # tanh-approx GELU: lowers to the EUP slot (exact-erf deviation << tolerance here)
    return 0.5 * x * (1.0 + jnp.tanh(SQRT_2_OVER_PI * (x + 0.044715 * x * x * x)))


def _ln(x, w, b):
    # LayerNorm over last dim, eps=1e-6, biased variance (PyTorch semantics), f32
    mu = jnp.mean(x, axis=-1, keepdims=True)
    xc = x - mu
    var = jnp.mean(xc * xc, axis=-1, keepdims=True)
    return xc * lax.rsqrt(var + EPS) * w + b


# ------------------------- the fused Pallas kernel -------------------------
def beit_fused_kernel(patches_ref, pew_ref, base_ref,
                      ln1w_ref, ln1b_ref,
                      wq_ref, bq_ref, wk_ref, wvp_ref, bvp_ref, bproj_ref,
                      abias_ref,
                      ln2w_ref, ln2b_ref, w1_ref, b1_ref, w2_ref, b2_ref,
                      fcnw_ref, fcnb_ref, pool_ref, headw_ref, headb_ref,
                      o_ref):
    # ---- patch embed + cls token + abs pos (conv bias / cls / pos folded into base) ----
    x = jnp.dot(patches_ref[...], pew_ref[...],
                preferred_element_type=jnp.float32) + base_ref[...]        # (R_TILE, D) f32

    # ---- transformer blocks (static unroll over DEPTH; weights stacked on DEPTH axis) ----
    for li in range(DEPTH):
        # attention branch: x += gamma_1 * Attn(LN1(x))   (gamma_1 folded into v-proj/bproj)
        h = _ln(x, ln1w_ref[li], ln1b_ref[li])
        hb = h.astype(jnp.bfloat16)
        attn = None
        for hd in range(HEADS):               # static unroll; no lane slices / concatenates
            qh = jnp.dot(hb, wq_ref[li, hd],
                         preferred_element_type=jnp.float32) + bq_ref[li, hd]   # (R, Dh)
            kh = jnp.dot(hb, wk_ref[li, hd],
                         preferred_element_type=jnp.float32)                    # (R, Dh)
            # per-head value already projected to EMBED: v~ = h @ (Wv_h @ Wproj_h*g1) + b~
            vh = jnp.dot(hb, wvp_ref[li, hd],
                         preferred_element_type=jnp.float32) + bvp_ref[li, hd]  # (R, D)
            s = lax.dot_general(qh.astype(jnp.bfloat16), kh.astype(jnp.bfloat16),
                                (((1,), (1,)), ((), ())),
                                preferred_element_type=jnp.float32)             # (R, R)
            # additive bias carries rel-pos values + cross-image block mask + pad-token
            # mask (with an unmasked self-entry for pad rows), so no max-subtraction is
            # needed: scores are bounded small and masked entries underflow to exp()=0.
            p = jnp.exp(s + abias_ref[li, hd])
            p = p * pl.reciprocal(jnp.sum(p, axis=-1, keepdims=True), approx=True)
            o = jnp.dot(p.astype(jnp.bfloat16), vh.astype(jnp.bfloat16),
                        preferred_element_type=jnp.float32)                     # (R, D)
            attn = o if attn is None else attn + o
        x = x + attn + bproj_ref[li]

        # MLP branch: x += gamma_2 * Mlp(LN2(x))   (gamma_2 folded into fc2)
        h2 = _ln(x, ln2w_ref[li], ln2b_ref[li]).astype(jnp.bfloat16)
        m = jnp.dot(h2, w1_ref[li], preferred_element_type=jnp.float32) + b1_ref[li]
        m = _gelu_tanh(m).astype(jnp.bfloat16)
        x = x + jnp.dot(m, w2_ref[li], preferred_element_type=jnp.float32) + b2_ref[li]

    # ---- head: mean over patch tokens (precomputed pooling matrix) -> fc_norm -> classifier ----
    pooled = jnp.dot(pool_ref[...], x, preferred_element_type=jnp.float32)   # (B_TILE, D)
    hh = _ln(pooled, fcnw_ref[...], fcnb_ref[...]).astype(jnp.bfloat16)
    o_ref[...] = jnp.dot(hh, headw_ref[...],
                         preferred_element_type=jnp.float32) + headb_ref[...]  # (B_TILE, 128)


# ------------------------- pallas_call wrapper -------------------------
def _resident_spec(arr):
    nd = arr.ndim
    return pl.BlockSpec(arr.shape, lambda i, _nd=nd: (0,) * _nd)


def patchify(x):
    # NCHW -> (B*num_patches, C*ph*pw), flattened (C, ph, pw) order to match Conv2d.
    B = x.shape[0]
    x = x.reshape(B, IN_CH, GRID_HW, PATCH, GRID_HW, PATCH)
    x = x.transpose(0, 2, 4, 1, 3, 5)
    return x.reshape(B * NUM_PATCHES, IN_CH * PATCH * PATCH)


def prepare_fused_params(params, b_tile):
    """One-time parameter folding:
       - conv bias + cls token + abs-pos embed -> additive `base` slab (one tile's worth)
       - attention scale folded into per-head Wq / bq
       - per-head value weights composed with (Wproj * gamma_1): W~v_h = Wv_h @ Wproj_h*g1
       - gamma_2 folded into fc2
       - per-TILE additive attention bias (rel-pos + cross-image + pad masks), fixed size
       - pooling matrix, lane-dense padded classifier
    """
    r_tile = b_tile * NPAD

    pos = params["pos"][0]                                        # (NTOK, D)
    base1 = jnp.zeros((NPAD, EMBED), jnp.float32)
    base1 = base1.at[0].set(params["cls"][0, 0] + pos[0])         # cls row (no conv term)
    base1 = base1.at[1:NTOK].set(pos[1:] + params["pe_b"][0])     # patch rows: pos + conv bias
    base = jnp.tile(base1, (b_tile, 1))                           # (r_tile, D); pad rows 0

    pool = np.zeros((b_tile, r_tile), np.float32)
    for b in range(b_tile):
        pool[b, b * NPAD + 1: b * NPAD + NTOK] = 1.0 / NUM_PATCHES
    pool = jnp.asarray(pool)

    def stack(fn):
        return jnp.stack([fn(blk) for blk in params["blocks"]], axis=0)

    def split_cols(w):                                            # (D, D) -> (H, D, Dh)
        return jnp.stack([w[:, h * HEAD_DIM:(h + 1) * HEAD_DIM] for h in range(HEADS)], 0)

    def q_w(blk):
        return split_cols(blk["wqkv"][:, :EMBED] * SCALE).astype(jnp.bfloat16)

    def k_w(blk):
        return split_cols(blk["wqkv"][:, EMBED:2 * EMBED]).astype(jnp.bfloat16)

    def q_b(blk):
        bq = blk["bqkv"][0, :EMBED] * SCALE
        return jnp.stack([bq[h * HEAD_DIM:(h + 1) * HEAD_DIM].reshape(1, HEAD_DIM)
                          for h in range(HEADS)], 0)

    def vproj_w(blk):
        wv = blk["wqkv"][:, 2 * EMBED:]
        wproj_g = blk["wproj"] * blk["g1"]
        return jnp.stack([wv[:, h * HEAD_DIM:(h + 1) * HEAD_DIM]
                          @ wproj_g[h * HEAD_DIM:(h + 1) * HEAD_DIM, :]
                          for h in range(HEADS)], 0).astype(jnp.bfloat16)      # (H, D, D)

    def vproj_b(blk):
        bv = blk["bqkv"][0, 2 * EMBED:]
        wproj_g = blk["wproj"] * blk["g1"]
        return jnp.stack([bv[h * HEAD_DIM:(h + 1) * HEAD_DIM].reshape(1, HEAD_DIM)
                          @ wproj_g[h * HEAD_DIM:(h + 1) * HEAD_DIM, :]
                          for h in range(HEADS)], 0)                           # (H, 1, D)

    def make_abias(blk):
        # per-head (NPAD, NPAD) block: rel-pos values on valid tokens, MASK_NEG on pad
        # rows/cols, and an unmasked (0) self-entry for pad rows (needed because the
        # kernel softmax skips max-subtraction -> keeps their exp-sum > 0, no NaN).
        small = np.full((HEADS, NPAD, NPAD), MASK_NEG, np.float32)
        small[:, :NTOK, :NTOK] = np.asarray(blk["relb"], np.float32)
        for t in range(NTOK, NPAD):
            small[:, t, t] = 0.0
        # tile-sized (fixed, independent of total batch) block-diagonal slab
        big = np.full((HEADS, r_tile, r_tile), MASK_NEG, np.float32)
        for b in range(b_tile):
            s = b * NPAD
            big[:, s:s + NPAD, s:s + NPAD] = small
        return jnp.asarray(big)

    return dict(
        pe_w=params["pe_w"].astype(jnp.bfloat16),
        base=base,
        ln1w=stack(lambda k: k["ln1w"]), ln1b=stack(lambda k: k["ln1b"]),
        wq=stack(q_w), bq=stack(q_b), wk=stack(k_w),
        wvp=stack(vproj_w), bvp=stack(vproj_b),
        bproj=stack(lambda k: k["bproj"] * k["g1"]),
        abias=stack(make_abias),
        ln2w=stack(lambda k: k["ln2w"]), ln2b=stack(lambda k: k["ln2b"]),
        w1=stack(lambda k: k["w1"].astype(jnp.bfloat16)), b1=stack(lambda k: k["b1"]),
        w2=stack(lambda k: (k["w2"] * k["g2"]).astype(jnp.bfloat16)),
        b2=stack(lambda k: k["b2"] * k["g2"]),
        fcn_w=params["fcn_w"], fcn_b=params["fcn_b"],
        pool=pool,
        head_w=jnp.pad(params["head_w"],
                       ((0, 0), (0, OUT_PAD - NUM_CLASSES))).astype(jnp.bfloat16),
        head_b=jnp.pad(params["head_b"], ((0, 0), (0, OUT_PAD - NUM_CLASSES))),
    )


def beit_forward(x_img, fused):
    B = x_img.shape[0]
    assert B % B_TILE == 0, "batch must be a multiple of B_TILE"
    n_tiles = B // B_TILE

    patches = patchify(x_img).reshape(B, NUM_PATCHES, KPE)
    # pad token axis: row 0 (cls) and rows NTOK..NPAD-1 are zero; cls/pos/conv-bias enter
    # via the additive `base`, so one matmul produces the assembled token slab.
    patches_pad = jnp.pad(patches, ((0, 0), (1, NPAD - NTOK), (0, 0)))
    patches_pad = patches_pad.reshape(B * NPAD, KPE).astype(jnp.bfloat16)

    weights = (fused["pe_w"], fused["base"],
               fused["ln1w"], fused["ln1b"],
               fused["wq"], fused["bq"], fused["wk"], fused["wvp"], fused["bvp"],
               fused["bproj"], fused["abias"],
               fused["ln2w"], fused["ln2b"],
               fused["w1"], fused["b1"], fused["w2"], fused["b2"],
               fused["fcn_w"], fused["fcn_b"], fused["pool"],
               fused["head_w"], fused["head_b"])

    in_specs = ([pl.BlockSpec((R_TILE, KPE), lambda i: (i, 0))]      # streamed patch rows
                + [_resident_spec(w) for w in weights])              # weights stay resident

    out = pl.pallas_call(
        beit_fused_kernel,
        out_shape=jax.ShapeDtypeStruct((B, OUT_PAD), jnp.float32),
        grid=(n_tiles,),
        in_specs=in_specs,
        out_specs=pl.BlockSpec((B_TILE, OUT_PAD), lambda i: (i, 0)),
        compiler_params=pltpu.CompilerParams(
            dimension_semantics=("parallel",),            # shards across v7x's 2 TCs
            vmem_limit_bytes=32 * 1024 * 1024),           # explicit; usage is only a few MB
    )(patches_pad, *weights)
    return out[:, :NUM_CLASSES]


# ------------------------- relative position index -------------------------
def gen_relative_position_index_np(window_size):
    ws0, ws1 = window_size
    num_relative_distance = (2 * ws0 - 1) * (2 * ws1 - 1) + 3
    wa = ws0 * ws1
    coords = np.stack(np.meshgrid(np.arange(ws0), np.arange(ws1), indexing="ij"))
    coords_flatten = coords.reshape(2, -1)
    rel = coords_flatten[:, :, None] - coords_flatten[:, None, :]
    rel = rel.transpose(1, 2, 0).astype(np.int64).copy()
    rel[:, :, 0] += ws0 - 1
    rel[:, :, 1] += ws1 - 1
    rel[:, :, 0] *= 2 * ws1 - 1
    idx = np.zeros((wa + 1, wa + 1), dtype=np.int64)                # window_size[1] != 1 branch
    idx[1:, 1:] = rel.sum(-1)
    idx[0, 0:] = num_relative_distance - 3
    idx[0:, 0] = num_relative_distance - 2
    idx[0, 0] = num_relative_distance - 1
    return idx


REL_POS_INDEX = gen_relative_position_index_np((GRID_HW, GRID_HW))   # (5, 5)


# ------------------------- deterministic parameter init -------------------------
def make_params(key):
    def nrm(k, shape, std=0.02):
        return std * jax.random.normal(k, shape, jnp.float32)

    ks = iter(jax.random.split(key, 64 + DEPTH * 16))
    p = {}
    p["pe_w"] = nrm(next(ks), (EMBED, IN_CH, PATCH, PATCH)).reshape(EMBED, -1).T   # (K, D)
    p["pe_b"] = nrm(next(ks), (1, EMBED))
    p["cls"] = nrm(next(ks), (1, 1, EMBED))
    p["pos"] = nrm(next(ks), (1, NTOK, EMBED))

    blocks = []
    for li in range(DEPTH):
        rescale = 1.0 / math.sqrt(2.0 * (li + 1))                    # fix_init_weight
        q_bias = nrm(next(ks), (EMBED,))
        v_bias = nrm(next(ks), (EMBED,))
        k_bias = jnp.zeros((EMBED,), jnp.float32)                    # buffer, always zero
        rel_table = nrm(next(ks), (NUM_REL_DIST, HEADS))
        relb = rel_table[REL_POS_INDEX.reshape(-1)].reshape(NTOK, NTOK, HEADS)
        relb = jnp.transpose(relb, (2, 0, 1))                        # (H, N, N)
        blk = dict(
            ln1w=jnp.ones((1, EMBED), jnp.float32), ln1b=jnp.zeros((1, EMBED), jnp.float32),
            wqkv=nrm(next(ks), (3 * EMBED, EMBED)).T,                # (D, 3D)
            bqkv=jnp.concatenate([q_bias, k_bias, v_bias]).reshape(1, 3 * EMBED),
            wproj=(nrm(next(ks), (EMBED, EMBED)) * rescale).T,       # (D, D)
            bproj=nrm(next(ks), (1, EMBED)),
            relb=relb,
            g1=jnp.full((1, EMBED), INIT_VALUES, jnp.float32),
            ln2w=jnp.ones((1, EMBED), jnp.float32), ln2b=jnp.zeros((1, EMBED), jnp.float32),
            w1=nrm(next(ks), (MLP_HIDDEN, EMBED)).T,                 # (D, Dh)
            b1=nrm(next(ks), (1, MLP_HIDDEN)),
            w2=(nrm(next(ks), (EMBED, MLP_HIDDEN)) * rescale).T,     # (Dh, D)
            b2=nrm(next(ks), (1, EMBED)),
            g2=jnp.full((1, EMBED), INIT_VALUES, jnp.float32),
        )
        blocks.append(blk)
    p["blocks"] = blocks

    p["fcn_w"] = jnp.ones((1, EMBED), jnp.float32)
    p["fcn_b"] = jnp.zeros((1, EMBED), jnp.float32)
    p["head_w"] = (nrm(next(ks), (NUM_CLASSES, EMBED)) * 0.001).T    # (D, num_classes)
    p["head_b"] = jnp.zeros((1, NUM_CLASSES), jnp.float32)
    return p


# ------------------------- plain-JAX reference (for self-check) -------------------------
def ref_ln(x, w, b):
    mu = x.mean(-1, keepdims=True)
    xc = x - mu
    var = (xc * xc).mean(-1, keepdims=True)
    return xc / jnp.sqrt(var + EPS) * w + b


def ref_forward(x_img, params):
    B = x_img.shape[0]
    tok = (patchify(x_img) @ params["pe_w"] + params["pe_b"]).reshape(B, NUM_PATCHES, EMBED)
    cls = jnp.broadcast_to(params["cls"], (B, 1, EMBED))
    x = jnp.concatenate([cls, tok], axis=1) + params["pos"]
    for blk in params["blocks"]:
        h = ref_ln(x, blk["ln1w"], blk["ln1b"])
        qkv = h @ blk["wqkv"] + blk["bqkv"]
        qkv = qkv.reshape(B, NTOK, 3, HEADS, HEAD_DIM).transpose(2, 0, 3, 1, 4)
        q, k, v = qkv[0] * SCALE, qkv[1], qkv[2]
        att = jnp.einsum("bhnd,bhmd->bhnm", q, k) + blk["relb"][None]
        att = jax.nn.softmax(att, axis=-1)
        out = jnp.einsum("bhnm,bhmd->bhnd", att, v).transpose(0, 2, 1, 3).reshape(B, NTOK, EMBED)
        out = out @ blk["wproj"] + blk["bproj"]
        x = x + blk["g1"] * out
        h2 = ref_ln(x, blk["ln2w"], blk["ln2b"])
        m = jax.nn.gelu(h2 @ blk["w1"] + blk["b1"], approximate=False)
        m = m @ blk["w2"] + blk["b2"]
        x = x + blk["g2"] * m
    pooled = x[:, 1:].mean(1)
    pooled = ref_ln(pooled, params["fcn_w"], params["fcn_b"])
    return pooled @ params["head_w"] + params["head_b"]


# ------------------------- main -------------------------
if __name__ == "__main__":
    key = jax.random.PRNGKey(0)
    k_img, k_par = jax.random.split(key)
    B = 2 * B_TILE                                   # 32 tiny images -> grid of 2 parallel steps
    x_img = jax.random.normal(k_img, (B, IN_CH, IMG, IMG), jnp.float32)   # NCHW like PyTorch
    params = make_params(k_par)
    fused = prepare_fused_params(params, B_TILE)     # one-time parameter folding

    out = jax.block_until_ready(beit_forward(x_img, fused))
    assert out.shape == (B, NUM_CLASSES) and out.dtype == jnp.float32

    with jax.default_matmul_precision("highest"):
        ref = jax.block_until_ready(ref_forward(x_img, params))
    np.testing.assert_allclose(np.asarray(out), np.asarray(ref), rtol=2e-2, atol=2e-3)

    print("KERNEL_OK")
</pallas_src>

<mosaic_0001>
module attributes {stable_mosaic.version = 11 : i64} {
  func.func @beit_fused_kernel(%arg0: i32, %arg1: memref<128x192xbf16, #tpu.memory_space<vmem>>, %arg2: memref<192x32xbf16, #tpu.memory_space<vmem>>, %arg3: memref<128x32xf32, #tpu.memory_space<vmem>>, %arg4: memref<2x1x32xf32, #tpu.memory_space<vmem>>, %arg5: memref<2x1x32xf32, #tpu.memory_space<vmem>>, %arg6: memref<2x4x32x8xbf16, #tpu.memory_space<vmem>>, %arg7: memref<2x4x1x8xf32, #tpu.memory_space<vmem>>, %arg8: memref<2x4x32x8xbf16, #tpu.memory_space<vmem>>, %arg9: memref<2x4x32x32xbf16, #tpu.memory_space<vmem>>, %arg10: memref<2x4x1x32xf32, #tpu.memory_space<vmem>>, %arg11: memref<2x1x32xf32, #tpu.memory_space<vmem>>, %arg12: memref<2x4x128x128xf32, #tpu.memory_space<vmem>>, %arg13: memref<2x1x32xf32, #tpu.memory_space<vmem>>, %arg14: memref<2x1x32xf32, #tpu.memory_space<vmem>>, %arg15: memref<2x32x128xbf16, #tpu.memory_space<vmem>>, %arg16: memref<2x1x128xf32, #tpu.memory_space<vmem>>, %arg17: memref<2x128x32xbf16, #tpu.memory_space<vmem>>, %arg18: memref<2x1x32xf32, #tpu.memory_space<vmem>>, %arg19: memref<1x32xf32, #tpu.memory_space<vmem>>, %arg20: memref<1x32xf32, #tpu.memory_space<vmem>>, %arg21: memref<16x128xf32, #tpu.memory_space<vmem>>, %arg22: memref<32x128xbf16, #tpu.memory_space<vmem>>, %arg23: memref<1x128xf32, #tpu.memory_space<vmem>>, %arg24: memref<16x128xf32, #tpu.memory_space<vmem>>) attributes {dimension_semantics = [#tpu.dimension_semantics<parallel>], iteration_bounds = array<i64: 2>, scalar_prefetch = 0 : i64, scratch_operands = 0 : i64, tpu.core_type = #tpu.core_type<tc>, window_params = [{transform_indices = @transform_0, window_bounds = array<i64: 128, 192>}, {pipeline_mode = #tpu.pipeline_mode<synchronous>, transform_indices = @transform_1, window_bounds = array<i64: 192, 32>}, {pipeline_mode = #tpu.pipeline_mode<synchronous>, transform_indices = @transform_2, window_bounds = array<i64: 128, 32>}, {pipeline_mode = #tpu.pipeline_mode<synchronous>, transform_indices = @transform_3, window_bounds = array<i64: 2, 1, 32>}, {pipeline_mode = #tpu.pipeline_mode<synchronous>, transform_indices = @transform_4, window_bounds = array<i64: 2, 1, 32>}, {pipeline_mode = #tpu.pipeline_mode<synchronous>, transform_indices = @transform_5, window_bounds = array<i64: 2, 4, 32, 8>}, {pipeline_mode = #tpu.pipeline_mode<synchronous>, transform_indices = @transform_6, window_bounds = array<i64: 2, 4, 1, 8>}, {pipeline_mode = #tpu.pipeline_mode<synchronous>, transform_indices = @transform_7, window_bounds = array<i64: 2, 4, 32, 8>}, {pipeline_mode = #tpu.pipeline_mode<synchronous>, transform_indices = @transform_8, window_bounds = array<i64: 2, 4, 32, 32>}, {pipeline_mode = #tpu.pipeline_mode<synchronous>, transform_indices = @transform_9, window_bounds = array<i64: 2, 4, 1, 32>}, {pipeline_mode = #tpu.pipeline_mode<synchronous>, transform_indices = @transform_10, window_bounds = array<i64: 2, 1, 32>}, {pipeline_mode = #tpu.pipeline_mode<synchronous>, transform_indices = @transform_11, window_bounds = array<i64: 2, 4, 128, 128>}, {pipeline_mode = #tpu.pipeline_mode<synchronous>, transform_indices = @transform_12, window_bounds = array<i64: 2, 1, 32>}, {pipeline_mode = #tpu.pipeline_mode<synchronous>, transform_indices = @transform_13, window_bounds = array<i64: 2, 1, 32>}, {pipeline_mode = #tpu.pipeline_mode<synchronous>, transform_indices = @transform_14, window_bounds = array<i64: 2, 32, 128>}, {pipeline_mode = #tpu.pipeline_mode<synchronous>, transform_indices = @transform_15, window_bounds = array<i64: 2, 1, 128>}, {pipeline_mode = #tpu.pipeline_mode<synchronous>, transform_indices = @transform_16, window_bounds = array<i64: 2, 128, 32>}, {pipeline_mode = #tpu.pipeline_mode<synchronous>, transform_indices = @transform_17, window_bounds = array<i64: 2, 1, 32>}, {pipeline_mode = #tpu.pipeline_mode<synchronous>, transform_indices = @transform_18, window_bounds = array<i64: 1, 32>}, {pipeline_mode = #tpu.pipeline_mode<synchronous>, transform_indices = @transform_19, window_bounds = array<i64: 1, 32>}, {pipeline_mode = #tpu.pipeline_mode<synchronous>, transform_indices = @transform_20, window_bounds = array<i64: 16, 128>}, {pipeline_mode = #tpu.pipeline_mode<synchronous>, transform_indices = @transform_21, window_bounds = array<i64: 32, 128>}, {pipeline_mode = #tpu.pipeline_mode<synchronous>, transform_indices = @transform_22, window_bounds = array<i64: 1, 128>}, {transform_indices = @transform_23, window_bounds = array<i64: 16, 128>}]} {
    %c0 = arith.constant 0 : index
    %c0_0 = arith.constant 0 : index
    %0 = vector.load %arg1[%c0, %c0_0] : memref<128x192xbf16, #tpu.memory_space<vmem>>, vector<128x192xbf16>
    %c0_1 = arith.constant 0 : index
    %c0_2 = arith.constant 0 : index
    %1 = vector.load %arg2[%c0_1, %c0_2] : memref<192x32xbf16, #tpu.memory_space<vmem>>, vector<192x32xbf16>
    %cst = arith.constant dense<0.000000e+00> : vector<128x32xf32>
    %2 = tpu.matmul %0, %1, %cst {dimension_numbers = #tpu.dot_dimension_numbers<[1], [0], [0], [1], [0, 0, 1, 1], [], []>} : vector<128x192xbf16>, vector<192x32xbf16>, vector<128x32xf32> -> vector<128x32xf32>
    %c0_3 = arith.constant 0 : index
    %c0_4 = arith.constant 0 : index
    %3 = vector.load %arg3[%c0_3, %c0_4] : memref<128x32xf32, #tpu.memory_space<vmem>>, vector<128x32xf32>
    %4 = arith.addf %2, %3 : vector<128x32xf32>
    %c0_5 = arith.constant 0 : index
    %c0_6 = arith.constant 0 : index
    %c0_7 = arith.constant 0 : index
    %5 = vector.load %arg4[%c0_5, %c0_6, %c0_7] : memref<2x1x32xf32, #tpu.memory_space<vmem>>, vector<1x1x32xf32>
    %6 = vector.shape_cast %5 : vector<1x1x32xf32> to vector<1x32xf32>
    %c0_8 = arith.constant 0 : index
    %c0_9 = arith.constant 0 : index
    %c0_10 = arith.constant 0 : index
    %7 = vector.load %arg5[%c0_8, %c0_9, %c0_10] : memref<2x1x32xf32, #tpu.memory_space<vmem>>, vector<1x1x32xf32>
    %8 = vector.shape_cast %7 : vector<1x1x32xf32> to vector<1x32xf32>
    %cst_11 = arith.constant dense<0.000000e+00> : vector<128xf32>
    %9 = vector.multi_reduction <add>, %4, %cst_11 [1] : vector<128x32xf32> to vector<128xf32>
    %10 = vector.shape_cast %9 : vector<128xf32> to vector<128x1xf32>
    %cst_12 = arith.constant 3.200000e+01 : f32
    %11 = vector.broadcast %cst_12 : f32 to vector<128x1xf32>
    %12 = arith.divf %10, %11 : vector<128x1xf32>
    %13 = vector.broadcast %12 : vector<128x1xf32> to vector<128x32xf32>
    %14 = arith.subf %4, %13 : vector<128x32xf32>
    %15 = arith.mulf %14, %14 : vector<128x32xf32>
    %cst_13 = arith.constant dense<0.000000e+00> : vector<128xf32>
    %16 = vector.multi_reduction <add>, %15, %cst_13 [1] : vector<128x32xf32> to vector<128xf32>
    %17 = vector.shape_cast %16 : vector<128xf32> to vector<128x1xf32>
    %cst_14 = arith.constant 3.200000e+01 : f32
    %18 = vector.broadcast %cst_14 : f32 to vector<128x1xf32>
    %19 = arith.divf %17, %18 : vector<128x1xf32>
    %cst_15 = arith.constant 9.99999997E-7 : f32
    %20 = vector.broadcast %cst_15 : f32 to vector<128x1xf32>
    %21 = arith.addf %19, %20 : vector<128x1xf32>
    %22 = math.rsqrt %21 : vector<128x1xf32>
    %23 = vector.broadcast %22 : vector<128x1xf32> to vector<128x32xf32>
    %24 = arith.mulf %14, %23 : vector<128x32xf32>
    %25 = vector.broadcast %6 : vector<1x32xf32> to vector<128x32xf32>
    %26 = arith.mulf %24, %25 : vector<128x32xf32>
    %27 = vector.broadcast %8 : vector<1x32xf32> to vector<128x32xf32>
    %28 = arith.addf %26, %27 : vector<128x32xf32>
    %29 = arith.truncf %28 : vector<128x32xf32> to vector<128x32xbf16>
    %c0_16 = arith.constant 0 : index
    %c0_17 = arith.constant 0 : index
    %c0_18 = arith.constant 0 : index
    %c0_19 = arith.constant 0 : index
    %30 = vector.load %arg6[%c0_16, %c0_17, %c0_18, %c0_19] : memref<2x4x32x8xbf16, #tpu.memory_space<vmem>>, vector<1x1x32x8xbf16>
    %31 = vector.shape_cast %30 : vector<1x1x32x8xbf16> to vector<32x8xbf16>
    %cst_20 = arith.constant dense<0.000000e+00> : vector<128x8xf32>
    %32 = tpu.matmul %29, %31, %cst_20 {dimension_numbers = #tpu.dot_dimension_numbers<[1], [0], [0], [1], [0, 0, 1, 1], [], []>} : vector<128x32xbf16>, vector<32x8xbf16>, vector<128x8xf32> -> vector<128x8xf32>
    %c0_21 = arith.constant 0 : index
    %c0_22 = arith.constant 0 : index
    %c0_23 = arith.constant 0 : index
    %c0_24 = arith.constant 0 : index
    %33 = vector.load %arg7[%c0_21, %c0_22, %c0_23, %c0_24] : memref<2x4x1x8xf32, #tpu.memory_space<vmem>>, vector<1x1x1x8xf32>
    %34 = vector.shape_cast %33 : vector<1x1x1x8xf32> to vector<1x8xf32>
    %35 = vector.broadcast %34 : vector<1x8xf32> to vector<128x8xf32>
    %36 = arith.addf %32, %35 : vector<128x8xf32>
    %c0_25 = arith.constant 0 : index
    %c0_26 = arith.constant 0 : index
    %c0_27 = arith.constant 0 : index
    %c0_28 = arith.constant 0 : index
    %37 = vector.load %arg8[%c0_25, %c0_26, %c0_27, %c0_28] : memref<2x4x32x8xbf16, #tpu.memory_space<vmem>>, vector<1x1x32x8xbf16>
    %38 = vector.shape_cast %37 : vector<1x1x32x8xbf16> to vector<32x8xbf16>
    %cst_29 = arith.constant dense<0.000000e+00> : vector<128x8xf32>
    %39 = tpu.matmul %29, %38, %cst_29 {dimension_numbers = #tpu.dot_dimension_numbers<[1], [0], [0], [1], [0, 0, 1, 1], [], []>} : vector<128x32xbf16>, vector<32x8xbf16>, vector<128x8xf32> -> vector<128x8xf32>
    %c0_30 = arith.constant 0 : index
    %c0_31 = arith.constant 0 : index
    %c0_32 = arith.constant 0 : index
    %c0_33 = arith.constant 0 : index
    %40 = vector.load %arg9[%c0_30, %c0_31, %c0_32, %c0_33] : memref<2x4x32x32xbf16, #tpu.memory_space<vmem>>, vector<1x1x32x32xbf16>
    %41 = vector.shape_cast %40 : vector<1x1x32x32xbf16> to vector<32x32xbf16>
    %cst_34 = arith.constant dense<0.000000e+00> : vector<128x32xf32>
    %42 = tpu.matmul %29, %41, %cst_34 {dimension_numbers = #tpu.dot_dimension_numbers<[1], [0], [0], [1], [0, 0, 1, 1], [], []>} : vector<128x32xbf16>, vector<32x32xbf16>, vector<128x32xf32> -> vector<128x32xf32>
    %c0_35 = arith.constant 0 : index
    %c0_36 = arith.constant 0 : index
    %c0_37 = arith.constant 0 : index
    %c0_38 = arith.constant 0 : index
    %43 = vector.load %arg10[%c0_35, %c0_36, %c0_37, %c0_38] : memref<2x4x1x32xf32, #tpu.memory_space<vmem>>, vector<1x1x1x32xf32>
    %44 = vector.shape_cast %43 : vector<1x1x1x32xf32> to vector<1x32xf32>
    %45 = vector.broadcast %44 : vector<1x32xf32> to vector<128x32xf32>
    %46 = arith.addf %42, %45 : vector<128x32xf32>
    %47 = arith.truncf %36 : vector<128x8xf32> to vector<128x8xbf16>
    %48 = arith.truncf %39 : vector<128x8xf32> to vector<128x8xbf16>
    %cst_39 = arith.constant dense<0.000000e+00> : vector<128x128xf32>
    %49 = tpu.matmul %47, %48, %cst_39 {dimension_numbers = #tpu.dot_dimension_numbers<[1], [1], [0], [0], [0, 0, 1, 0], [], []>} : vector<128x8xbf16>, vector<128x8xbf16>, vector<128x128xf32> -> vector<128x128xf32>
    %c0_40 = arith.constant 0 : index
    %c0_41 = arith.constant 0 : index
    %c0_42 = arith.constant 0 : index
    %c0_43 = arith.constant 0 : index
    %50 = vector.load %arg12[%c0_40, %c0_41, %c0_42, %c0_43] : memref<2x4x128x128xf32, #tpu.memory_space<vmem>>, vector<1x1x128x128xf32>
    %51 = vector.shape_cast %50 : vector<1x1x128x128xf32> to vector<128x128xf32>
    %52 = arith.addf %49, %51 : vector<128x128xf32>
    %53 = math.exp %52 : vector<128x128xf32>
    %cst_44 = arith.constant dense<0.000000e+00> : vector<128xf32>
    %54 = vector.multi_reduction <add>, %53, %cst_44 [1] : vector<128x128xf32> to vector<128xf32>
    %55 = vector.shape_cast %54 : vector<128xf32> to vector<128x1xf32>
    %56 = tpu.reciprocal %55 {approx = true} : vector<128x1xf32> -> vector<128x1xf32>
    %57 = vector.broadcast %56 : vector<128x1xf32> to vector<128x128xf32>
    %58 = arith.mulf %53, %57 : vector<128x128xf32>
    %59 = arith.truncf %58 : vector<128x128xf32> to vector<128x128xbf16>
    %60 = arith.truncf %46 : vector<128x32xf32> to vector<128x32xbf16>
    %cst_45 = arith.constant dense<0.000000e+00> : vector<128x32xf32>
    %61 = tpu.matmul %59, %60, %cst_45 {dimension_numbers = #tpu.dot_dimension_numbers<[1], [0], [0], [1], [0, 0, 1, 1], [], []>} : vector<128x128xbf16>, vector<128x32xbf16>, vector<128x32xf32> -> vector<128x32xf32>
    %c0_46 = arith.constant 0 : index
    %c1 = arith.constant 1 : index
    %c0_47 = arith.constant 0 : index
    %c0_48 = arith.constant 0 : index
    %62 = vector.load %arg6[%c0_46, %c1, %c0_47, %c0_48] : memref<2x4x32x8xbf16, #tpu.memory_space<vmem>>, vector<1x1x32x8xbf16>
    %63 = vector.shape_cast %62 : vector<1x1x32x8xbf16> to vector<32x8xbf16>
    %cst_49 = arith.constant dense<0.000000e+00> : vector<128x8xf32>
    %64 = tpu.matmul %29, %63, %cst_49 {dimension_numbers = #tpu.dot_dimension_numbers<[1], [0], [0], [1], [0, 0, 1, 1], [], []>} : vector<128x32xbf16>, vector<32x8xbf16>, vector<128x8xf32> -> vector<128x8xf32>
    %c0_50 = arith.constant 0 : index
    %c1_51 = arith.constant 1 : index
    %c0_52 = arith.constant 0 : index
    %c0_53 = arith.constant 0 : index
    %65 = vector.load %arg7[%c0_50, %c1_51, %c0_52, %c0_53] : memref<2x4x1x8xf32, #tpu.memory_space<vmem>>, vector<1x1x1x8xf32>
    %66 = vector.shape_cast %65 : vector<1x1x1x8xf32> to vector<1x8xf32>
    %67 = vector.broadcast %66 : vector<1x8xf32> to vector<128x8xf32>
    %68 = arith.addf %64, %67 : vector<128x8xf32>
    %c0_54 = arith.constant 0 : index
    %c1_55 = arith.constant 1 : index
    %c0_56 = arith.constant 0 : index
    %c0_57 = arith.constant 0 : index
    %69 = vector.load %arg8[%c0_54, %c1_55, %c0_56, %c0_57] : memref<2x4x32x8xbf16, #tpu.memory_space<vmem>>, vector<1x1x32x8xbf16>
    %70 = vector.shape_cast %69 : vector<1x1x32x8xbf16> to vector<32x8xbf16>
    %cst_58 = arith.constant dense<0.000000e+00> : vector<128x8xf32>
    %71 = tpu.matmul %29, %70, %cst_58 {dimension_numbers = #tpu.dot_dimension_numbers<[1], [0], [0], [1], [0, 0, 1, 1], [], []>} : vector<128x32xbf16>, vector<32x8xbf16>, vector<128x8xf32> -> vector<128x8xf32>
    %c0_59 = arith.constant 0 : index
    %c1_60 = arith.constant 1 : index
    %c0_61 = arith.constant 0 : index
    %c0_62 = arith.constant 0 : index
    %72 = vector.load %arg9[%c0_59, %c1_60, %c0_61, %c0_62] : memref<2x4x32x32xbf16, #tpu.memory_space<vmem>>, vector<1x1x32x32xbf16>
    %73 = vector.shape_cast %72 : vector<1x1x32x32xbf16> to vector<32x32xbf16>
    %cst_63 = arith.constant dense<0.000000e+00> : vector<128x32xf32>
    %74 = tpu.matmul %29, %73, %cst_63 {dimension_numbers = #tpu.dot_dimension_numbers<[1], [0], [0], [1], [0, 0, 1, 1], [], []>} : vector<128x32xbf16>, vector<32x32xbf16>, vector<128x32xf32> -> vector<128x32xf32>
    %c0_64 = arith.constant 0 : index
    %c1_65 = arith.constant 1 : index
    %c0_66 = arith.constant 0 : index
    %c0_67 = arith.constant 0 : index
    %75 = vector.load %arg10[%c0_64, %c1_65, %c0_66, %c0_67] : memref<2x4x1x32xf32, #tpu.memory_space<vmem>>, vector<1x1x1x32xf32>
    %76 = vector.shape_cast %75 : vector<1x1x1x32xf32> to vector<1x32xf32>
    %77 = vector.broadcast %76 : vector<1x32xf32> to vector<128x32xf32>
    %78 = arith.addf %74, %77 : vector<128x32xf32>
    %79 = arith.truncf %68 : vector<128x8xf32> to vector<128x8xbf16>
    %80 = arith.truncf %71 : vector<128x8xf32> to vector<128x8xbf16>
    %cst_68 = arith.constant dense<0.000000e+00> : vector<128x128xf32>
    %81 = tpu.matmul %79, %80, %cst_68 {dimension_numbers = #tpu.dot_dimension_numbers<[1], [1], [0], [0], [0, 0, 1, 0], [], []>} : vector<128x8xbf16>, vector<128x8xbf16>, vector<128x128xf32> -> vector<128x128xf32>
    %c0_69 = arith.constant 0 : index
    %c1_70 = arith.constant 1 : index
    %c0_71 = arith.constant 0 : index
    %c0_72 = arith.constant 0 : index
    %82 = vector.load %arg12[%c0_69, %c1_70, %c0_71, %c0_72] : memref<2x4x128x128xf32, #tpu.memory_space<vmem>>, vector<1x1x128x128xf32>
    %83 = vector.shape_cast %82 : vector<1x1x128x128xf32> to vector<128x128xf32>
    %84 = arith.addf %81, %83 : vector<128x128xf32>
    %85 = math.exp %84 : vector<128x128xf32>
    %cst_73 = arith.constant dense<0.000000e+00> : vector<128xf32>
    %86 = vector.multi_reduction <add>, %85, %cst_73 [1] : vector<128x128xf32> to vector<128xf32>
    %87 = vector.shape_cast %86 : vector<128xf32> to vector<128x1xf32>
    %88 = tpu.reciprocal %87 {approx = true} : vector<128x1xf32> -> vector<128x1xf32>
    %89 = vector.broadcast %88 : vector<128x1xf32> to vector<128x128xf32>
    %90 = arith.mulf %85, %89 : vector<128x128xf32>
    %91 = arith.truncf %90 : vector<128x128xf32> to vector<128x128xbf16>
    %92 = arith.truncf %78 : vector<128x32xf32> to vector<128x32xbf16>
    %cst_74 = arith.constant dense<0.000000e+00> : vector<128x32xf32>
    %93 = tpu.matmul %91, %92, %cst_74 {dimension_numbers = #tpu.dot_dimension_numbers<[1], [0], [0], [1], [0, 0, 1, 1], [], []>} : vector<128x128xbf16>, vector<128x32xbf16>, vector<128x32xf32> -> vector<128x32xf32>
    %94 = arith.addf %61, %93 : vector<128x32xf32>
    %c0_75 = arith.constant 0 : index
    %c2 = arith.constant 2 : index
    %c0_76 = arith.constant 0 : index
    %c0_77 = arith.constant 0 : index
    %95 = vector.load %arg6[%c0_75, %c2, %c0_76, %c0_77] : memref<2x4x32x8xbf16, #tpu.memory_space<vmem>>, vector<1x1x32x8xbf16>
    %96 = vector.shape_cast %95 : vector<1x1x32x8xbf16> to vector<32x8xbf16>
    %cst_78 = arith.constant dense<0.000000e+00> : vector<128x8xf32>
    %97 = tpu.matmul %29, %96, %cst_78 {dimension_numbers = #tpu.dot_dimension_numbers<[1], [0], [0], [1], [0, 0, 1, 1], [], []>} : vector<128x32xbf16>, vector<32x8xbf16>, vector<128x8xf32> -> vector<128x8xf32>
    %c0_79 = arith.constant 0 : index
    %c2_80 = arith.constant 2 : index
    %c0_81 = arith.constant 0 : index
    %c0_82 = arith.constant 0 : index
    %98 = vector.load %arg7[%c0_79, %c2_80, %c0_81, %c0_82] : memref<2x4x1x8xf32, #tpu.memory_space<vmem>>, vector<1x1x1x8xf32>
    %99 = vector.shape_cast %98 : vector<1x1x1x8xf32> to vector<1x8xf32>
    %100 = vector.broadcast %99 : vector<1x8xf32> to vector<128x8xf32>
    %101 = arith.addf %97, %100 : vector<128x8xf32>
    %c0_83 = arith.constant 0 : index
    %c2_84 = arith.constant 2 : index
    %c0_85 = arith.constant 0 : index
    %c0_86 = arith.constant 0 : index
    %102 = vector.load %arg8[%c0_83, %c2_84, %c0_85, %c0_86] : memref<2x4x32x8xbf16, #tpu.memory_space<vmem>>, vector<1x1x32x8xbf16>
    %103 = vector.shape_cast %102 : vector<1x1x32x8xbf16> to vector<32x8xbf16>
    %cst_87 = arith.constant dense<0.000000e+00> : vector<128x8xf32>
    %104 = tpu.matmul %29, %103, %cst_87 {dimension_numbers = #tpu.dot_dimension_numbers<[1], [0], [0], [1], [0, 0, 1, 1], [], []>} : vector<128x32xbf16>, vector<32x8xbf16>, vector<128x8xf32> -> vector<128x8xf32>
    %c0_88 = arith.constant 0 : index
    %c2_89 = arith.constant 2 : index
    %c0_90 = arith.constant 0 : index
    %c0_91 = arith.constant 0 : index
    %105 = vector.load %arg9[%c0_88, %c2_89, %c0_90, %c0_91] : memref<2x4x32x32xbf16, #tpu.memory_space<vmem>>, vector<1x1x32x32xbf16>
    %106 = vector.shape_cast %105 : vector<1x1x32x32xbf16> to vector<32x32xbf16>
    %cst_92 = arith.constant dense<0.000000e+00> : vector<128x32xf32>
    %107 = tpu.matmul %29, %106, %cst_92 {dimension_numbers = #tpu.dot_dimension_numbers<[1], [0], [0], [1], [0, 0, 1, 1], [], []>} : vector<128x32xbf16>, vector<32x32xbf16>, vector<128x32xf32> -> vector<128x32xf32>
    %c0_93 = arith.constant 0 : index
    %c2_94 = arith.constant 2 : index
    %c0_95 = arith.constant 0 : index
    %c0_96 = arith.constant 0 : index
    %108 = vector.load %arg10[%c0_93, %c2_94, %c0_95, %c0_96] : memref<2x4x1x32xf32, #tpu.memory_space<vmem>>, vector<1x1x1x32xf32>
    %109 = vector.shape_cast %108 : vector<1x1x1x32xf32> to vector<1x32xf32>
    %110 = vector.broadcast %109 : vector<1x32xf32> to vector<128x32xf32>
    %111 = arith.addf %107, %110 : vector<128x32xf32>
    %112 = arith.truncf %101 : vector<128x8xf32> to vector<128x8xbf16>
    %113 = arith.truncf %104 : vector<128x8xf32> to vector<128x8xbf16>
    %cst_97 = arith.constant dense<0.000000e+00> : vector<128x128xf32>
    %114 = tpu.matmul %112, %113, %cst_97 {dimension_numbers = #tpu.dot_dimension_numbers<[1], [1], [0], [0], [0, 0, 1, 0], [], []>} : vector<128x8xbf16>, vector<128x8xbf16>, vector<128x128xf32> -> vector<128x128xf32>
    %c0_98 = arith.constant 0 : index
    %c2_99 = arith.constant 2 : index
    %c0_100 = arith.constant 0 : index
    %c0_101 = arith.constant 0 : index
    %115 = vector.load %arg12[%c0_98, %c2_99, %c0_100, %c0_101] : memref<2x4x128x128xf32, #tpu.memory_space<vmem>>, vector<1x1x128x128xf32>
    %116 = vector.shape_cast %115 : vector<1x1x128x128xf32> to vector<128x128xf32>
    %117 = arith.addf %114, %116 : vector<128x128xf32>
    %118 = math.exp %117 : vector<128x128xf32>
    %cst_102 = arith.constant dense<0.000000e+00> : vector<128xf32>
    %119 = vector.multi_reduction <add>, %118, %cst_102 [1] : vector<128x128xf32> to vector<128xf32>
    %120 = vector.shape_cast %119 : vector<128xf32> to vector<128x1xf32>
    %121 = tpu.reciprocal %120 {approx = true} : vector<128x1xf32> -> vector<128x1xf32>
    %122 = vector.broadcast %121 : vector<128x1xf32> to vector<128x128xf32>
    %123 = arith.mulf %118, %122 : vector<128x128xf32>
    %124 = arith.truncf %123 : vector<128x128xf32> to vector<128x128xbf16>
    %125 = arith.truncf %111 : vector<128x32xf32> to vector<128x32xbf16>
    %cst_103 = arith.constant dense<0.000000e+00> : vector<128x32xf32>
    %126 = tpu.matmul %124, %125, %cst_103 {dimension_numbers = #tpu.dot_dimension_numbers<[1], [0], [0], [1], [0, 0, 1, 1], [], []>} : vector<128x128xbf16>, vector<128x32xbf16>, vector<128x32xf32> -> vector<128x32xf32>
    %127 = arith.addf %94, %126 : vector<128x32xf32>
    %c0_104 = arith.constant 0 : index
    %c3 = arith.constant 3 : index
    %c0_105 = arith.constant 0 : index
    %c0_106 = arith.constant 0 : index
    %128 = vector.load %arg6[%c0_104, %c3, %c0_105, %c0_106] : memref<2x4x32x8xbf16, #tpu.memory_space<vmem>>, vector<1x1x32x8xbf16>
    %129 = vector.shape_cast %128 : vector<1x1x32x8xbf16> to vector<32x8xbf16>
    %cst_107 = arith.constant dense<0.000000e+00> : vector<128x8xf32>
    %130 = tpu.matmul %29, %129, %cst_107 {dimension_numbers = #tpu.dot_dimension_numbers<[1], [0], [0], [1], [0, 0, 1, 1], [], []>} : vector<128x32xbf16>, vector<32x8xbf16>, vector<128x8xf32> -> vector<128x8xf32>
    %c0_108 = arith.constant 0 : index
    %c3_109 = arith.constant 3 : index
    %c0_110 = arith.constant 0 : index
    %c0_111 = arith.constant 0 : index
    %131 = vector.load %arg7[%c0_108, %c3_109, %c0_110, %c0_111] : memref<2x4x1x8xf32, #tpu.memory_space<vmem>>, vector<1x1x1x8xf32>
    %132 = vector.shape_cast %131 : vector<1x1x1x8xf32> to vector<1x8xf32>
    %133 = vector.broadcast %132 : vector<1x8xf32> to vector<128x8xf32>
    %134 = arith.addf %130, %133 : vector<128x8xf32>
    %c0_112 = arith.constant 0 : index
    %c3_113 = arith.constant 3 : index
    %c0_114 = arith.constant 0 : index
    %c0_115 = arith.constant 0 : index
    %135 = vector.load %arg8[%c0_112, %c3_113, %c0_114, %c0_115] : memref<2x4x32x8xbf16, #tpu.memory_space<vmem>>, vector<1x1x32x8xbf16>
    %136 = vector.shape_cast %135 : vector<1x1x32x8xbf16> to vector<32x8xbf16>
    %cst_116 = arith.constant dense<0.000000e+00> : vector<128x8xf32>
    %137 = tpu.matmul %29, %136, %cst_116 {dimension_numbers = #tpu.dot_dimension_numbers<[1], [0], [0], [1], [0, 0, 1, 1], [], []>} : vector<128x32xbf16>, vector<32x8xbf16>, vector<128x8xf32> -> vector<128x8xf32>
    %c0_117 = arith.constant 0 : index
    %c3_118 = arith.constant 3 : index
    %c0_119 = arith.constant 0 : index
    %c0_120 = arith.constant 0 : index
    %138 = vector.load %arg9[%c0_117, %c3_118, %c0_119, %c0_120] : memref<2x4x32x32xbf16, #tpu.memory_space<vmem>>, vector<1x1x32x32xbf16>
    %139 = vector.shape_cast %138 : vector<1x1x32x32xbf16> to vector<32x32xbf16>
    %cst_121 = arith.constant dense<0.000000e+00> : vector<128x32xf32>
    %140 = tpu.matmul %29, %139, %cst_121 {dimension_numbers = #tpu.dot_dimension_numbers<[1], [0], [0], [1], [0, 0, 1, 1], [], []>} : vector<128x32xbf16>, vector<32x32xbf16>, vector<128x32xf32> -> vector<128x32xf32>
    %c0_122 = arith.constant 0 : index
    %c3_123 = arith.constant 3 : index
    %c0_124 = arith.constant 0 : index
    %c0_125 = arith.constant 0 : index
    %141 = vector.load %arg10[%c0_122, %c3_123, %c0_124, %c0_125] : memref<2x4x1x32xf32, #tpu.memory_space<vmem>>, vector<1x1x1x32xf32>
    %142 = vector.shape_cast %141 : vector<1x1x1x32xf32> to vector<1x32xf32>
    %143 = vector.broadcast %142 : vector<1x32xf32> to vector<128x32xf32>
    %144 = arith.addf %140, %143 : vector<128x32xf32>
    %145 = arith.truncf %134 : vector<128x8xf32> to vector<128x8xbf16>
    %146 = arith.truncf %137 : vector<128x8xf32> to vector<128x8xbf16>
    %cst_126 = arith.constant dense<0.000000e+00> : vector<128x128xf32>
    %147 = tpu.matmul %145, %146, %cst_126 {dimension_numbers = #tpu.dot_dimension_numbers<[1], [1], [0], [0], [0, 0, 1, 0], [], []>} : vector<128x8xbf16>, vector<128x8xbf16>, vector<128x128xf32> -> vector<128x128xf32>
    %c0_127 = arith.constant 0 : index
    %c3_128 = arith.constant 3 : index
    %c0_129 = arith.constant 0 : index
    %c0_130 = arith.constant 0 : index
    %148 = vector.load %arg12[%c0_127, %c3_128, %c0_129, %c0_130] : memref<2x4x128x128xf32, #tpu.memory_space<vmem>>, vector<1x1x128x128xf32>
    %149 = vector.shape_cast %148 : vector<1x1x128x128xf32> to vector<128x128xf32>
    %150 = arith.addf %147, %149 : vector<128x128xf32>
    %151 = math.exp %150 : vector<128x128xf32>
    %cst_131 = arith.constant dense<0.000000e+00> : vector<128xf32>
    %152 = vector.multi_reduction <add>, %151, %cst_131 [1] : vector<128x128xf32> to vector<128xf32>
    %153 = vector.shape_cast %152 : vector<128xf32> to vector<128x1xf32>
    %154 = tpu.reciprocal %153 {approx = true} : vector<128x1xf32> -> vector<128x1xf32>
    %155 = vector.broadcast %154 : vector<128x1xf32> to vector<128x128xf32>
    %156 = arith.mulf %151, %155 : vector<128x128xf32>
    %157 = arith.truncf %156 : vector<128x128xf32> to vector<128x128xbf16>
    %158 = arith.truncf %144 : vector<128x32xf32> to vector<128x32xbf16>
    %cst_132 = arith.constant dense<0.000000e+00> : vector<128x32xf32>
    %159 = tpu.matmul %157, %158, %cst_132 {dimension_numbers = #tpu.dot_dimension_numbers<[1], [0], [0], [1], [0, 0, 1, 1], [], []>} : vector<128x128xbf16>, vector<128x32xbf16>, vector<128x32xf32> -> vector<128x32xf32>
    %160 = arith.addf %127, %159 : vector<128x32xf32>
    %161 = arith.addf %4, %160 : vector<128x32xf32>
    %c0_133 = arith.constant 0 : index
    %c0_134 = arith.constant 0 : index
    %c0_135 = arith.constant 0 : index
    %162 = vector.load %arg11[%c0_133, %c0_134, %c0_135] : memref<2x1x32xf32, #tpu.memory_space<vmem>>, vector<1x1x32xf32>
    %163 = vector.shape_cast %162 : vector<1x1x32xf32> to vector<1x32xf32>
    %164 = vector.broadcast %163 : vector<1x32xf32> to vector<128x32xf32>
    %165 = arith.addf %161, %164 : vector<128x32xf32>
    %c0_136 = arith.constant 0 : index
    %c0_137 = arith.constant 0 : index
    %c0_138 = arith.constant 0 : index
    %166 = vector.load %arg13[%c0_136, %c0_137, %c0_138] : memref<2x1x32xf32, #tpu.memory_space<vmem>>, vector<1x1x32xf32>
    %167 = vector.shape_cast %166 : vector<1x1x32xf32> to vector<1x32xf32>
    %c0_139 = arith.constant 0 : index
    %c0_140 = arith.constant 0 : index
    %c0_141 = arith.constant 0 : index
    %168 = vector.load %arg14[%c0_139, %c0_140, %c0_141] : memref<2x1x32xf32, #tpu.memory_space<vmem>>, vector<1x1x32xf32>
    %169 = vector.shape_cast %168 : vector<1x1x32xf32> to vector<1x32xf32>
    %cst_142 = arith.constant dense<0.000000e+00> : vector<128xf32>
    %170 = vector.multi_reduction <add>, %165, %cst_142 [1] : vector<128x32xf32> to vector<128xf32>
    %171 = vector.shape_cast %170 : vector<128xf32> to vector<128x1xf32>
    %cst_143 = arith.constant 3.200000e+01 : f32
    %172 = vector.broadcast %cst_143 : f32 to vector<128x1xf32>
    %173 = arith.divf %171, %172 : vector<128x1xf32>
    %174 = vector.broadcast %173 : vector<128x1xf32> to vector<128x32xf32>
    %175 = arith.subf %165, %174 : vector<128x32xf32>
    %176 = arith.mulf %175, %175 : vector<128x32xf32>
    %cst_144 = arith.constant dense<0.000000e+00> : vector<128xf32>
    %177 = vector.multi_reduction <add>, %176, %cst_144 [1] : vector<128x32xf32> to vector<128xf32>
    %178 = vector.shape_cast %177 : vector<128xf32> to vector<128x1xf32>
    %cst_145 = arith.constant 3.200000e+01 : f32
    %179 = vector.broadcast %cst_145 : f32 to vector<128x1xf32>
    %180 = arith.divf %178, %179 : vector<128x1xf32>
    %cst_146 = arith.constant 9.99999997E-7 : f32
    %181 = vector.broadcast %cst_146 : f32 to vector<128x1xf32>
    %182 = arith.addf %180, %181 : vector<128x1xf32>
    %183 = math.rsqrt %182 : vector<128x1xf32>
    %184 = vector.broadcast %183 : vector<128x1xf32> to vector<128x32xf32>
    %185 = arith.mulf %175, %184 : vector<128x32xf32>
    %186 = vector.broadcast %167 : vector<1x32xf32> to vector<128x32xf32>
    %187 = arith.mulf %185, %186 : vector<128x32xf32>
    %188 = vector.broadcast %169 : vector<1x32xf32> to vector<128x32xf32>
    %189 = arith.addf %187, %188 : vector<128x32xf32>
    %190 = arith.truncf %189 : vector<128x32xf32> to vector<128x32xbf16>
    %c0_147 = arith.constant 0 : index
    %c0_148 = arith.constant 0 : index
    %c0_149 = arith.constant 0 : index
    %191 = vector.load %arg15[%c0_147, %c0_148, %c0_149] : memref<2x32x128xbf16, #tpu.memory_space<vmem>>, vector<1x32x128xbf16>
    %192 = vector.shape_cast %191 : vector<1x32x128xbf16> to vector<32x128xbf16>
    %cst_150 = arith.constant dense<0.000000e+00> : vector<128x128xf32>
    %193 = tpu.matmul %190, %192, %cst_150 {dimension_numbers = #tpu.dot_dimension_numbers<[1], [0], [0], [1], [0, 0, 1, 1], [], []>} : vector<128x32xbf16>, vector<32x128xbf16>, vector<128x128xf32> -> vector<128x128xf32>
    %c0_151 = arith.constant 0 : index
    %c0_152 = arith.constant 0 : index
    %c0_153 = arith.constant 0 : index
    %194 = vector.load %arg16[%c0_151, %c0_152, %c0_153] : memref<2x1x128xf32, #tpu.memory_space<vmem>>, vector<1x1x128xf32>
    %195 = vector.shape_cast %194 : vector<1x1x128xf32> to vector<1x128xf32>
    %196 = vector.broadcast %195 : vector<1x128xf32> to vector<128x128xf32>
    %197 = arith.addf %193, %196 : vector<128x128xf32>
    %cst_154 = arith.constant 5.000000e-01 : f32
    %198 = vector.broadcast %cst_154 : f32 to vector<128x128xf32>
    %199 = arith.mulf %198, %197 : vector<128x128xf32>
    %cst_155 = arith.constant 4.471500e-02 : f32
    %200 = vector.broadcast %cst_155 : f32 to vector<128x128xf32>
    %201 = arith.mulf %200, %197 : vector<128x128xf32>
    %202 = arith.mulf %201, %197 : vector<128x128xf32>
    %203 = arith.mulf %202, %197 : vector<128x128xf32>
    %204 = arith.addf %197, %203 : vector<128x128xf32>
    %cst_156 = arith.constant 0.797884583 : f32
    %205 = vector.broadcast %cst_156 : f32 to vector<128x128xf32>
    %206 = arith.mulf %205, %204 : vector<128x128xf32>
    %207 = math.tanh %206 : vector<128x128xf32>
    %cst_157 = arith.constant 1.000000e+00 : f32
    %208 = vector.broadcast %cst_157 : f32 to vector<128x128xf32>
    %209 = arith.addf %208, %207 : vector<128x128xf32>
    %210 = arith.mulf %199, %209 : vector<128x128xf32>
    %211 = arith.truncf %210 : vector<128x128xf32> to vector<128x128xbf16>
    %c0_158 = arith.constant 0 : index
    %c0_159 = arith.constant 0 : index
    %c0_160 = arith.constant 0 : index
    %212 = vector.load %arg17[%c0_158, %c0_159, %c0_160] : memref<2x128x32xbf16, #tpu.memory_space<vmem>>, vector<1x128x32xbf16>
    %213 = vector.shape_cast %212 : vector<1x128x32xbf16> to vector<128x32xbf16>
    %cst_161 = arith.constant dense<0.000000e+00> : vector<128x32xf32>
    %214 = tpu.matmul %211, %213, %cst_161 {dimension_numbers = #tpu.dot_dimension_numbers<[1], [0], [0], [1], [0, 0, 1, 1], [], []>} : vector<128x128xbf16>, vector<128x32xbf16>, vector<128x32xf32> -> vector<128x32xf32>
    %215 = arith.addf %165, %214 : vector<128x32xf32>
    %c0_162 = arith.constant 0 : index
    %c0_163 = arith.constant 0 : index
    %c0_164 = arith.constant 0 : index
    %216 = vector.load %arg18[%c0_162, %c0_163, %c0_164] : memref<2x1x32xf32, #tpu.memory_space<vmem>>, vector<1x1x32xf32>
    %217 = vector.shape_cast %216 : vector<1x1x32xf32> to vector<1x32xf32>
    %218 = vector.broadcast %217 : vector<1x32xf32> to vector<128x32xf32>
    %219 = arith.addf %215, %218 : vector<128x32xf32>
    %c1_165 = arith.constant 1 : index
    %c0_166 = arith.constant 0 : index
    %c0_167 = arith.constant 0 : index
    %220 = vector.load %arg4[%c1_165, %c0_166, %c0_167] : memref<2x1x32xf32, #tpu.memory_space<vmem>>, vector<1x1x32xf32>
    %221 = vector.shape_cast %220 : vector<1x1x32xf32> to vector<1x32xf32>
    %c1_168 = arith.constant 1 : index
    %c0_169 = arith.constant 0 : index
    %c0_170 = arith.constant 0 : index
    %222 = vector.load %arg5[%c1_168, %c0_169, %c0_170] : memref<2x1x32xf32, #tpu.memory_space<vmem>>, vector<1x1x32xf32>
    %223 = vector.shape_cast %222 : vector<1x1x32xf32> to vector<1x32xf32>
    %cst_171 = arith.constant dense<0.000000e+00> : vector<128xf32>
    %224 = vector.multi_reduction <add>, %219, %cst_171 [1] : vector<128x32xf32> to vector<128xf32>
    %225 = vector.shape_cast %224 : vector<128xf32> to vector<128x1xf32>
    %cst_172 = arith.constant 3.200000e+01 : f32
    %226 = vector.broadcast %cst_172 : f32 to vector<128x1xf32>
    %227 = arith.divf %225, %226 : vector<128x1xf32>
    %228 = vector.broadcast %227 : vector<128x1xf32> to vector<128x32xf32>
    %229 = arith.subf %219, %228 : vector<128x32xf32>
    %230 = arith.mulf %229, %229 : vector<128x32xf32>
    %cst_173 = arith.constant dense<0.000000e+00> : vector<128xf32>
    %231 = vector.multi_reduction <add>, %230, %cst_173 [1] : vector<128x32xf32> to vector<128xf32>
    %232 = vector.shape_cast %231 : vector<128xf32> to vector<128x1xf32>
    %cst_174 = arith.constant 3.200000e+01 : f32
    %233 = vector.broadcast %cst_174 : f32 to vector<128x1xf32>
    %234 = arith.divf %232, %233 : vector<128x1xf32>
    %cst_175 = arith.constant 9.99999997E-7 : f32
    %235 = vector.broadcast %cst_175 : f32 to vector<128x1xf32>
    %236 = arith.addf %234, %235 : vector<128x1xf32>
    %237 = math.rsqrt %236 : vector<128x1xf32>
    %238 = vector.broadcast %237 : vector<128x1xf32> to vector<128x32xf32>
    %239 = arith.mulf %229, %238 : vector<128x32xf32>
    %240 = vector.broadcast %221 : vector<1x32xf32> to vector<128x32xf32>
    %241 = arith.mulf %239, %240 : vector<128x32xf32>
    %242 = vector.broadcast %223 : vector<1x32xf32> to vector<128x32xf32>
    %243 = arith.addf %241, %242 : vector<128x32xf32>
    %244 = arith.truncf %243 : vector<128x32xf32> to vector<128x32xbf16>
    %c1_176 = arith.constant 1 : index
    %c0_177 = arith.constant 0 : index
    %c0_178 = arith.constant 0 : index
    %c0_179 = arith.constant 0 : index
    %245 = vector.load %arg6[%c1_176, %c0_177, %c0_178, %c0_179] : memref<2x4x32x8xbf16, #tpu.memory_space<vmem>>, vector<1x1x32x8xbf16>
    %246 = vector.shape_cast %245 : vector<1x1x32x8xbf16> to vector<32x8xbf16>
    %cst_180 = arith.constant dense<0.000000e+00> : vector<128x8xf32>
    %247 = tpu.matmul %244, %246, %cst_180 {dimension_numbers = #tpu.dot_dimension_numbers<[1], [0], [0], [1], [0, 0, 1, 1], [], []>} : vector<128x32xbf16>, vector<32x8xbf16>, vector<128x8xf32> -> vector<128x8xf32>
    %c1_181 = arith.constant 1 : index
    %c0_182 = arith.constant 0 : index
    %c0_183 = arith.constant 0 : index
    %c0_184 = arith.constant 0 : index
    %248 = vector.load %arg7[%c1_181, %c0_182, %c0_183, %c0_184] : memref<2x4x1x8xf32, #tpu.memory_space<vmem>>, vector<1x1x1x8xf32>
    %249 = vector.shape_cast %248 : vector<1x1x1x8xf32> to vector<1x8xf32>
    %250 = vector.broadcast %249 : vector<1x8xf32> to vector<128x8xf32>
    %251 = arith.addf %247, %250 : vector<128x8xf32>
    %c1_185 = arith.constant 1 : index
    %c0_186 = arith.constant 0 : index
    %c0_187 = arith.constant 0 : index
    %c0_188 = arith.constant 0 : index
    %252 = vector.load %arg8[%c1_185, %c0_186, %c0_187, %c0_188] : memref<2x4x32x8xbf16, #tpu.memory_space<vmem>>, vector<1x1x32x8xbf16>
    %253 = vector.shape_cast %252 : vector<1x1x32x8xbf16> to vector<32x8xbf16>
    %cst_189 = arith.constant dense<0.000000e+00> : vector<128x8xf32>
    %254 = tpu.matmul %244, %253, %cst_189 {dimension_numbers = #tpu.dot_dimension_numbers<[1], [0], [0], [1], [0, 0, 1, 1], [], []>} : vector<128x32xbf16>, vector<32x8xbf16>, vector<128x8xf32> -> vector<128x8xf32>
    %c1_190 = arith.constant 1 : index
    %c0_191 = arith.constant 0 : index
    %c0_192 = arith.constant 0 : index
    %c0_193 = arith.constant 0 : index
    %255 = vector.load %arg9[%c1_190, %c0_191, %c0_192, %c0_193] : memref<2x4x32x32xbf16, #tpu.memory_space<vmem>>, vector<1x1x32x32xbf16>
    %256 = vector.shape_cast %255 : vector<1x1x32x32xbf16> to vector<32x32xbf16>
    %cst_194 = arith.constant dense<0.000000e+00> : vector<128x32xf32>
    %257 = tpu.matmul %244, %256, %cst_194 {dimension_numbers = #tpu.dot_dimension_numbers<[1], [0], [0], [1], [0, 0, 1, 1], [], []>} : vector<128x32xbf16>, vector<32x32xbf16>, vector<128x32xf32> -> vector<128x32xf32>
    %c1_195 = arith.constant 1 : index
    %c0_196 = arith.constant 0 : index
    %c0_197 = arith.constant 0 : index
    %c0_198 = arith.constant 0 : index
    %258 = vector.load %arg10[%c1_195, %c0_196, %c0_197, %c0_198] : memref<2x4x1x32xf32, #tpu.memory_space<vmem>>, vector<1x1x1x32xf32>
    %259 = vector.shape_cast %258 : vector<1x1x1x32xf32> to vector<1x32xf32>
    %260 = vector.broadcast %259 : vector<1x32xf32> to vector<128x32xf32>
    %261 = arith.addf %257, %260 : vector<128x32xf32>
    %262 = arith.truncf %251 : vector<128x8xf32> to vector<128x8xbf16>
    %263 = arith.truncf %254 : vector<128x8xf32> to vector<128x8xbf16>
    %cst_199 = arith.constant dense<0.000000e+00> : vector<128x128xf32>
    %264 = tpu.matmul %262, %263, %cst_199 {dimension_numbers = #tpu.dot_dimension_numbers<[1], [1], [0], [0], [0, 0, 1, 0], [], []>} : vector<128x8xbf16>, vector<128x8xbf16>, vector<128x128xf32> -> vector<128x128xf32>
    %c1_200 = arith.constant 1 : index
    %c0_201 = arith.constant 0 : index
    %c0_202 = arith.constant 0 : index
    %c0_203 = arith.constant 0 : index
    %265 = vector.load %arg12[%c1_200, %c0_201, %c0_202, %c0_203] : memref<2x4x128x128xf32, #tpu.memory_space<vmem>>, vector<1x1x128x128xf32>
    %266 = vector.shape_cast %265 : vector<1x1x128x128xf32> to vector<128x128xf32>
    %267 = arith.addf %264, %266 : vector<128x128xf32>
    %268 = math.exp %267 : vector<128x128xf32>
    %cst_204 = arith.constant dense<0.000000e+00> : vector<128xf32>
    %269 = vector.multi_reduction <add>, %268, %cst_204 [1] : vector<128x128xf32> to vector<128xf32>
    %270 = vector.shape_cast %269 : vector<128xf32> to vector<128x1xf32>
    %271 = tpu.reciprocal %270 {approx = true} : vector<128x1xf32> -> vector<128x1xf32>
    %272 = vector.broadcast %271 : vector<128x1xf32> to vector<128x128xf32>
    %273 = arith.mulf %268, %272 : vector<128x128xf32>
    %274 = arith.truncf %273 : vector<128x128xf32> to vector<128x128xbf16>
    %275 = arith.truncf %261 : vector<128x32xf32> to vector<128x32xbf16>
    %cst_205 = arith.constant dense<0.000000e+00> : vector<128x32xf32>
    %276 = tpu.matmul %274, %275, %cst_205 {dimension_numbers = #tpu.dot_dimension_numbers<[1], [0], [0], [1], [0, 0, 1, 1], [], []>} : vector<128x128xbf16>, vector<128x32xbf16>, vector<128x32xf32> -> vector<128x32xf32>
    %c1_206 = arith.constant 1 : index
    %c1_207 = arith.constant 1 : index
    %c0_208 = arith.constant 0 : index
    %c0_209 = arith.constant 0 : index
    %277 = vector.load %arg6[%c1_206, %c1_207, %c0_208, %c0_209] : memref<2x4x32x8xbf16, #tpu.memory_space<vmem>>, vector<1x1x32x8xbf16>
    %278 = vector.shape_cast %277 : vector<1x1x32x8xbf16> to vector<32x8xbf16>
    %cst_210 = arith.constant dense<0.000000e+00> : vector<128x8xf32>
    %279 = tpu.matmul %244, %278, %cst_210 {dimension_numbers = #tpu.dot_dimension_numbers<[1], [0], [0], [1], [0, 0, 1, 1], [], []>} : vector<128x32xbf16>, vector<32x8xbf16>, vector<128x8xf32> -> vector<128x8xf32>
    %c1_211 = arith.constant 1 : index
    %c1_212 = arith.constant 1 : index
    %c0_213 = arith.constant 0 : index
    %c0_214 = arith.constant 0 : index
    %280 = vector.load %arg7[%c1_211, %c1_212, %c0_213, %c0_214] : memref<2x4x1x8xf32, #tpu.memory_space<vmem>>, vector<1x1x1x8xf32>
    %281 = vector.shape_cast %280 : vector<1x1x1x8xf32> to vector<1x8xf32>
    %282 = vector.broadcast %281 : vector<1x8xf32> to vector<128x8xf32>
    %283 = arith.addf %279, %282 : vector<128x8xf32>
    %c1_215 = arith.constant 1 : index
    %c1_216 = arith.constant 1 : index
    %c0_217 = arith.constant 0 : index
    %c0_218 = arith.constant 0 : index
    %284 = vector.load %arg8[%c1_215, %c1_216, %c0_217, %c0_218] : memref<2x4x32x8xbf16, #tpu.memory_space<vmem>>, vector<1x1x32x8xbf16>
    %285 = vector.shape_cast %284 : vector<1x1x32x8xbf16> to vector<32x8xbf16>
    %cst_219 = arith.constant dense<0.000000e+00> : vector<128x8xf32>
    %286 = tpu.matmul %244, %285, %cst_219 {dimension_numbers = #tpu.dot_dimension_numbers<[1], [0], [0], [1], [0, 0, 1, 1], [], []>} : vector<128x32xbf16>, vector<32x8xbf16>, vector<128x8xf32> -> vector<128x8xf32>
    %c1_220 = arith.constant 1 : index
    %c1_221 = arith.constant 1 : index
    %c0_222 = arith.constant 0 : index
    %c0_223 = arith.constant 0 : index
    %287 = vector.load %arg9[%c1_220, %c1_221, %c0_222, %c0_223] : memref<2x4x32x32xbf16, #tpu.memory_space<vmem>>, vector<1x1x32x32xbf16>
    %288 = vector.shape_cast %287 : vector<1x1x32x32xbf16> to vector<32x32xbf16>
    %cst_224 = arith.constant dense<0.000000e+00> : vector<128x32xf32>
    %289 = tpu.matmul %244, %288, %cst_224 {dimension_numbers = #tpu.dot_dimension_numbers<[1], [0], [0], [1], [0, 0, 1, 1], [], []>} : vector<128x32xbf16>, vector<32x32xbf16>, vector<128x32xf32> -> vector<128x32xf32>
    %c1_225 = arith.constant 1 : index
    %c1_226 = arith.constant 1 : index
    %c0_227 = arith.constant 0 : index
    %c0_228 = arith.constant 0 : index
    %290 = vector.load %arg10[%c1_225, %c1_226, %c0_227, %c0_228] : memref<2x4x1x32xf32, #tpu.memory_space<vmem>>, vector<1x1x1x32xf32>
    %291 = vector.shape_cast %290 : vector<1x1x1x32xf32> to vector<1x32xf32>
    %292 = vector.broadcast %291 : vector<1x32xf32> to vector<128x32xf32>
    %293 = arith.addf %289, %292 : vector<128x32xf32>
    %294 = arith.truncf %283 : vector<128x8xf32> to vector<128x8xbf16>
    %295 = arith.truncf %286 : vector<128x8xf32> to vector<128x8xbf16>
    %cst_229 = arith.constant dense<0.000000e+00> : vector<128x128xf32>
    %296 = tpu.matmul %294, %295, %cst_229 {dimension_numbers = #tpu.dot_dimension_numbers<[1], [1], [0], [0], [0, 0, 1, 0], [], []>} : vector<128x8xbf16>, vector<128x8xbf16>, vector<128x128xf32> -> vector<128x128xf32>
    %c1_230 = arith.constant 1 : index
    %c1_231 = arith.constant 1 : index
    %c0_232 = arith.constant 0 : index
    %c0_233 = arith.constant 0 : index
    %297 = vector.load %arg12[%c1_230, %c1_231, %c0_232, %c0_233] : memref<2x4x128x128xf32, #tpu.memory_space<vmem>>, vector<1x1x128x128xf32>
    %298 = vector.shape_cast %297 : vector<1x1x128x128xf32> to vector<128x128xf32>
    %299 = arith.addf %296, %298 : vector<128x128xf32>
    %300 = math.exp %299 : vector<128x128xf32>
    %cst_234 = arith.constant dense<0.000000e+00> : vector<128xf32>
    %301 = vector.multi_reduction <add>, %300, %cst_234 [1] : vector<128x128xf32> to vector<128xf32>
    %302 = vector.shape_cast %301 : vector<128xf32> to vector<128x1xf32>
    %303 = tpu.reciprocal %302 {approx = true} : vector<128x1xf32> -> vector<128x1xf32>
    %304 = vector.broadcast %303 : vector<128x1xf32> to vector<128x128xf32>
    %305 = arith.mulf %300, %304 : vector<128x128xf32>
    %306 = arith.truncf %305 : vector<128x128xf32> to vector<128x128xbf16>
    %307 = arith.truncf %293 : vector<128x32xf32> to vector<128x32xbf16>
    %cst_235 = arith.constant dense<0.000000e+00> : vector<128x32xf32>
    %308 = tpu.matmul %306, %307, %cst_235 {dimension_numbers = #tpu.dot_dimension_numbers<[1], [0], [0], [1], [0, 0, 1, 1], [], []>} : vector<128x128xbf16>, vector<128x32xbf16>, vector<128x32xf32> -> vector<128x32xf32>
    %309 = arith.addf %276, %308 : vector<128x32xf32>
    %c1_236 = arith.constant 1 : index
    %c2_237 = arith.constant 2 : index
    %c0_238 = arith.constant 0 : index
    %c0_239 = arith.constant 0 : index
    %310 = vector.load %arg6[%c1_236, %c2_237, %c0_238, %c0_239] : memref<2x4x32x8xbf16, #tpu.memory_space<vmem>>, vector<1x1x32x8xbf16>
    %311 = vector.shape_cast %310 : vector<1x1x32x8xbf16> to vector<32x8xbf16>
    %cst_240 = arith.constant dense<0.000000e+00> : vector<128x8xf32>
    %312 = tpu.matmul %244, %311, %cst_240 {dimension_numbers = #tpu.dot_dimension_numbers<[1], [0], [0], [1], [0, 0, 1, 1], [], []>} : vector<128x32xbf16>, vector<32x8xbf16>, vector<128x8xf32> -> vector<128x8xf32>
    %c1_241 = arith.constant 1 : index
    %c2_242 = arith.constant 2 : index
    %c0_243 = arith.constant 0 : index
    %c0_244 = arith.constant 0 : index
    %313 = vector.load %arg7[%c1_241, %c2_242, %c0_243, %c0_244] : memref<2x4x1x8xf32, #tpu.memory_space<vmem>>, vector<1x1x1x8xf32>
    %314 = vector.shape_cast %313 : vector<1x1x1x8xf32> to vector<1x8xf32>
    %315 = vector.broadcast %314 : vector<1x8xf32> to vector<128x8xf32>
    %316 = arith.addf %312, %315 : vector<128x8xf32>
    %c1_245 = arith.constant 1 : index
    %c2_246 = arith.constant 2 : index
    %c0_247 = arith.constant 0 : index
    %c0_248 = arith.constant 0 : index
    %317 = vector.load %arg8[%c1_245, %c2_246, %c0_247, %c0_248] : memref<2x4x32x8xbf16, #tpu.memory_space<vmem>>, vector<1x1x32x8xbf16>
    %318 = vector.shape_cast %317 : vector<1x1x32x8xbf16> to vector<32x8xbf16>
    %cst_249 = arith.constant dense<0.000000e+00> : vector<128x8xf32>
    %319 = tpu.matmul %244, %318, %cst_249 {dimension_numbers = #tpu.dot_dimension_numbers<[1], [0], [0], [1], [0, 0, 1, 1], [], []>} : vector<128x32xbf16>, vector<32x8xbf16>, vector<128x8xf32> -> vector<128x8xf32>
    %c1_250 = arith.constant 1 : index
    %c2_251 = arith.constant 2 : index
    %c0_252 = arith.constant 0 : index
    %c0_253 = arith.constant 0 : index
    %320 = vector.load %arg9[%c1_250, %c2_251, %c0_252, %c0_253] : memref<2x4x32x32xbf16, #tpu.memory_space<vmem>>, vector<1x1x32x32xbf16>
    %321 = vector.shape_cast %320 : vector<1x1x32x32xbf16> to vector<32x32xbf16>
    %cst_254 = arith.constant dense<0.000000e+00> : vector<128x32xf32>
    %322 = tpu.matmul %244, %321, %cst_254 {dimension_numbers = #tpu.dot_dimension_numbers<[1], [0], [0], [1], [0, 0, 1, 1], [], []>} : vector<128x32xbf16>, vector<32x32xbf16>, vector<128x32xf32> -> vector<128x32xf32>
    %c1_255 = arith.constant 1 : index
    %c2_256 = arith.constant 2 : index
    %c0_257 = arith.constant 0 : index
    %c0_258 = arith.constant 0 : index
    %323 = vector.load %arg10[%c1_255, %c2_256, %c0_257, %c0_258] : memref<2x4x1x32xf32, #tpu.memory_space<vmem>>, vector<1x1x1x32xf32>
    %324 = vector.shape_cast %323 : vector<1x1x1x32xf32> to vector<1x32xf32>
    %325 = vector.broadcast %324 : vector<1x32xf32> to vector<128x32xf32>
    %326 = arith.addf %322, %325 : vector<128x32xf32>
    %327 = arith.truncf %316 : vector<128x8xf32> to vector<128x8xbf16>
    %328 = arith.truncf %319 : vector<128x8xf32> to vector<128x8xbf16>
    %cst_259 = arith.constant dense<0.000000e+00> : vector<128x128xf32>
    %329 = tpu.matmul %327, %328, %cst_259 {dimension_numbers = #tpu.dot_dimension_numbers<[1], [1], [0], [0], [0, 0, 1, 0], [], []>} : vector<128x8xbf16>, vector<128x8xbf16>, vector<128x128xf32> -> vector<128x128xf32>
    %c1_260 = arith.constant 1 : index
    %c2_261 = arith.constant 2 : index
    %c0_262 = arith.constant 0 : index
    %c0_263 = arith.constant 0 : index
    %330 = vector.load %arg12[%c1_260, %c2_261, %c0_262, %c0_263] : memref<2x4x128x128xf32, #tpu.memory_space<vmem>>, vector<1x1x128x128xf32>
    %331 = vector.shape_cast %330 : vector<1x1x128x128xf32> to vector<128x128xf32>
    %332 = arith.addf %329, %331 : vector<128x128xf32>
    %333 = math.exp %332 : vector<128x128xf32>
    %cst_264 = arith.constant dense<0.000000e+00> : vector<128xf32>
    %334 = vector.multi_reduction <add>, %333, %cst_264 [1] : vector<128x128xf32> to vector<128xf32>
    %335 = vector.shape_cast %334 : vector<128xf32> to vector<128x1xf32>
    %336 = tpu.reciprocal %335 {approx = true} : vector<128x1xf32> -> vector<128x1xf32>
    %337 = vector.broadcast %336 : vector<128x1xf32> to vector<128x128xf32>
    %338 = arith.mulf %333, %337 : vector<128x128xf32>
    %339 = arith.truncf %338 : vector<128x128xf32> to vector<128x128xbf16>
    %340 = arith.truncf %326 : vector<128x32xf32> to vector<128x32xbf16>
    %cst_265 = arith.constant dense<0.000000e+00> : vector<128x32xf32>
    %341 = tpu.matmul %339, %340, %cst_265 {dimension_numbers = #tpu.dot_dimension_numbers<[1], [0], [0], [1], [0, 0, 1, 1], [], []>} : vector<128x128xbf16>, vector<128x32xbf16>, vector<128x32xf32> -> vector<128x32xf32>
    %342 = arith.addf %309, %341 : vector<128x32xf32>
    %c1_266 = arith.constant 1 : index
    %c3_267 = arith.constant 3 : index
    %c0_268 = arith.constant 0 : index
    %c0_269 = arith.constant 0 : index
    %343 = vector.load %arg6[%c1_266, %c3_267, %c0_268, %c0_269] : memref<2x4x32x8xbf16, #tpu.memory_space<vmem>>, vector<1x1x32x8xbf16>
    %344 = vector.shape_cast %343 : vector<1x1x32x8xbf16> to vector<32x8xbf16>
    %cst_270 = arith.constant dense<0.000000e+00> : vector<128x8xf32>
    %345 = tpu.matmul %244, %344, %cst_270 {dimension_numbers = #tpu.dot_dimension_numbers<[1], [0], [0], [1], [0, 0, 1, 1], [], []>} : vector<128x32xbf16>, vector<32x8xbf16>, vector<128x8xf32> -> vector<128x8xf32>
    %c1_271 = arith.constant 1 : index
    %c3_272 = arith.constant 3 : index
    %c0_273 = arith.constant 0 : index
    %c0_274 = arith.constant 0 : index
    %346 = vector.load %arg7[%c1_271, %c3_272, %c0_273, %c0_274] : memref<2x4x1x8xf32, #tpu.memory_space<vmem>>, vector<1x1x1x8xf32>
    %347 = vector.shape_cast %346 : vector<1x1x1x8xf32> to vector<1x8xf32>
    %348 = vector.broadcast %347 : vector<1x8xf32> to vector<128x8xf32>
    %349 = arith.addf %345, %348 : vector<128x8xf32>
    %c1_275 = arith.constant 1 : index
    %c3_276 = arith.constant 3 : index
    %c0_277 = arith.constant 0 : index
    %c0_278 = arith.constant 0 : index
    %350 = vector.load %arg8[%c1_275, %c3_276, %c0_277, %c0_278] : memref<2x4x32x8xbf16, #tpu.memory_space<vmem>>, vector<1x1x32x8xbf16>
    %351 = vector.shape_cast %350 : vector<1x1x32x8xbf16> to vector<32x8xbf16>
    %cst_279 = arith.constant dense<0.000000e+00> : vector<128x8xf32>
    %352 = tpu.matmul %244, %351, %cst_279 {dimension_numbers = #tpu.dot_dimension_numbers<[1], [0], [0], [1], [0, 0, 1, 1], [], []>} : vector<128x32xbf16>, vector<32x8xbf16>, vector<128x8xf32> -> vector<128x8xf32>
    %c1_280 = arith.constant 1 : index
    %c3_281 = arith.constant 3 : index
    %c0_282 = arith.constant 0 : index
    %c0_283 = arith.constant 0 : index
    %353 = vector.load %arg9[%c1_280, %c3_281, %c0_282, %c0_283] : memref<2x4x32x32xbf16, #tpu.memory_space<vmem>>, vector<1x1x32x32xbf16>
    %354 = vector.shape_cast %353 : vector<1x1x32x32xbf16> to vector<32x32xbf16>
    %cst_284 = arith.constant dense<0.000000e+00> : vector<128x32xf32>
    %355 = tpu.matmul %244, %354, %cst_284 {dimension_numbers = #tpu.dot_dimension_numbers<[1], [0], [0], [1], [0, 0, 1, 1], [], []>} : vector<128x32xbf16>, vector<32x32xbf16>, vector<128x32xf32> -> vector<128x32xf32>
    %c1_285 = arith.constant 1 : index
    %c3_286 = arith.constant 3 : index
    %c0_287 = arith.constant 0 : index
    %c0_288 = arith.constant 0 : index
    %356 = vector.load %arg10[%c1_285, %c3_286, %c0_287, %c0_288] : memref<2x4x1x32xf32, #tpu.memory_space<vmem>>, vector<1x1x1x32xf32>
    %357 = vector.shape_cast %356 : vector<1x1x1x32xf32> to vector<1x32xf32>
    %358 = vector.broadcast %357 : vector<1x32xf32> to vector<128x32xf32>
    %359 = arith.addf %355, %358 : vector<128x32xf32>
    %360 = arith.truncf %349 : vector<128x8xf32> to vector<128x8xbf16>
    %361 = arith.truncf %352 : vector<128x8xf32> to vector<128x8xbf16>
    %cst_289 = arith.constant dense<0.000000e+00> : vector<128x128xf32>
    %362 = tpu.matmul %360, %361, %cst_289 {dimension_numbers = #tpu.dot_dimension_numbers<[1], [1], [0], [0], [0, 0, 1, 0], [], []>} : vector<128x8xbf16>, vector<128x8xbf16>, vector<128x128xf32> -> vector<128x128xf32>
    %c1_290 = arith.constant 1 : index
    %c3_291 = arith.constant 3 : index
    %c0_292 = arith.constant 0 : index
    %c0_293 = arith.constant 0 : index
    %363 = vector.load %arg12[%c1_290, %c3_291, %c0_292, %c0_293] : memref<2x4x128x128xf32, #tpu.memory_space<vmem>>, vector<1x1x128x128xf32>
    %364 = vector.shape_cast %363 : vector<1x1x128x128xf32> to vector<128x128xf32>
    %365 = arith.addf %362, %364 : vector<128x128xf32>
    %366 = math.exp %365 : vector<128x128xf32>
    %cst_294 = arith.constant dense<0.000000e+00> : vector<128xf32>
    %367 = vector.multi_reduction <add>, %366, %cst_294 [1] : vector<128x128xf32> to vector<128xf32>
    %368 = vector.shape_cast %367 : vector<128xf32> to vector<128x1xf32>
    %369 = tpu.reciprocal %368 {approx = true} : vector<128x1xf32> -> vector<128x1xf32>
    %370 = vector.broadcast %369 : vector<128x1xf32> to vector<128x128xf32>
    %371 = arith.mulf %366, %370 : vector<128x128xf32>
    %372 = arith.truncf %371 : vector<128x128xf32> to vector<128x128xbf16>
    %373 = arith.truncf %359 : vector<128x32xf32> to vector<128x32xbf16>
    %cst_295 = arith.constant dense<0.000000e+00> : vector<128x32xf32>
    %374 = tpu.matmul %372, %373, %cst_295 {dimension_numbers = #tpu.dot_dimension_numbers<[1], [0], [0], [1], [0, 0, 1, 1], [], []>} : vector<128x128xbf16>, vector<128x32xbf16>, vector<128x32xf32> -> vector<128x32xf32>
    %375 = arith.addf %342, %374 : vector<128x32xf32>
    %376 = arith.addf %219, %375 : vector<128x32xf32>
    %c1_296 = arith.constant 1 : index
    %c0_297 = arith.constant 0 : index
    %c0_298 = arith.constant 0 : index
    %377 = vector.load %arg11[%c1_296, %c0_297, %c0_298] : memref<2x1x32xf32, #tpu.memory_space<vmem>>, vector<1x1x32xf32>
    %378 = vector.shape_cast %377 : vector<1x1x32xf32> to vector<1x32xf32>
    %379 = vector.broadcast %378 : vector<1x32xf32> to vector<128x32xf32>
    %380 = arith.addf %376, %379 : vector<128x32xf32>
    %c1_299 = arith.constant 1 : index
    %c0_300 = arith.constant 0 : index
    %c0_301 = arith.constant 0 : index
    %381 = vector.load %arg13[%c1_299, %c0_300, %c0_301] : memref<2x1x32xf32, #tpu.memory_space<vmem>>, vector<1x1x32xf32>
    %382 = vector.shape_cast %381 : vector<1x1x32xf32> to vector<1x32xf32>
    %c1_302 = arith.constant 1 : index
    %c0_303 = arith.constant 0 : index
    %c0_304 = arith.constant 0 : index
    %383 = vector.load %arg14[%c1_302, %c0_303, %c0_304] : memref<2x1x32xf32, #tpu.memory_space<vmem>>, vector<1x1x32xf32>
    %384 = vector.shape_cast %383 : vector<1x1x32xf32> to vector<1x32xf32>
    %cst_305 = arith.constant dense<0.000000e+00> : vector<128xf32>
    %385 = vector.multi_reduction <add>, %380, %cst_305 [1] : vector<128x32xf32> to vector<128xf32>
    %386 = vector.shape_cast %385 : vector<128xf32> to vector<128x1xf32>
    %cst_306 = arith.constant 3.200000e+01 : f32
    %387 = vector.broadcast %cst_306 : f32 to vector<128x1xf32>
    %388 = arith.divf %386, %387 : vector<128x1xf32>
    %389 = vector.broadcast %388 : vector<128x1xf32> to vector<128x32xf32>
    %390 = arith.subf %380, %389 : vector<128x32xf32>
    %391 = arith.mulf %390, %390 : vector<128x32xf32>
    %cst_307 = arith.constant dense<0.000000e+00> : vector<128xf32>
    %392 = vector.multi_reduction <add>, %391, %cst_307 [1] : vector<128x32xf32> to vector<128xf32>
    %393 = vector.shape_cast %392 : vector<128xf32> to vector<128x1xf32>
    %cst_308 = arith.constant 3.200000e+01 : f32
    %394 = vector.broadcast %cst_308 : f32 to vector<128x1xf32>
    %395 = arith.divf %393, %394 : vector<128x1xf32>
    %cst_309 = arith.constant 9.99999997E-7 : f32
    %396 = vector.broadcast %cst_309 : f32 to vector<128x1xf32>
    %397 = arith.addf %395, %396 : vector<128x1xf32>
    %398 = math.rsqrt %397 : vector<128x1xf32>
    %399 = vector.broadcast %398 : vector<128x1xf32> to vector<128x32xf32>
    %400 = arith.mulf %390, %399 : vector<128x32xf32>
    %401 = vector.broadcast %382 : vector<1x32xf32> to vector<128x32xf32>
    %402 = arith.mulf %400, %401 : vector<128x32xf32>
    %403 = vector.broadcast %384 : vector<1x32xf32> to vector<128x32xf32>
    %404 = arith.addf %402, %403 : vector<128x32xf32>
    %405 = arith.truncf %404 : vector<128x32xf32> to vector<128x32xbf16>
    %c1_310 = arith.constant 1 : index
    %c0_311 = arith.constant 0 : index
    %c0_312 = arith.constant 0 : index
    %406 = vector.load %arg15[%c1_310, %c0_311, %c0_312] : memref<2x32x128xbf16, #tpu.memory_space<vmem>>, vector<1x32x128xbf16>
    %407 = vector.shape_cast %406 : vector<1x32x128xbf16> to vector<32x128xbf16>
    %cst_313 = arith.constant dense<0.000000e+00> : vector<128x128xf32>
    %408 = tpu.matmul %405, %407, %cst_313 {dimension_numbers = #tpu.dot_dimension_numbers<[1], [0], [0], [1], [0, 0, 1, 1], [], []>} : vector<128x32xbf16>, vector<32x128xbf16>, vector<128x128xf32> -> vector<128x128xf32>
    %c1_314 = arith.constant 1 : index
    %c0_315 = arith.constant 0 : index
    %c0_316 = arith.constant 0 : index
    %409 = vector.load %arg16[%c1_314, %c0_315, %c0_316] : memref<2x1x128xf32, #tpu.memory_space<vmem>>, vector<1x1x128xf32>
    %410 = vector.shape_cast %409 : vector<1x1x128xf32> to vector<1x128xf32>
    %411 = vector.broadcast %410 : vector<1x128xf32> to vector<128x128xf32>
    %412 = arith.addf %408, %411 : vector<128x128xf32>
    %cst_317 = arith.constant 5.000000e-01 : f32
    %413 = vector.broadcast %cst_317 : f32 to vector<128x128xf32>
    %414 = arith.mulf %413, %412 : vector<128x128xf32>
    %cst_318 = arith.constant 4.471500e-02 : f32
    %415 = vector.broadcast %cst_318 : f32 to vector<128x128xf32>
    %416 = arith.mulf %415, %412 : vector<128x128xf32>
    %417 = arith.mulf %416, %412 : vector<128x128xf32>
    %418 = arith.mulf %417, %412 : vector<128x128xf32>
    %419 = arith.addf %412, %418 : vector<128x128xf32>
    %cst_319 = arith.constant 0.797884583 : f32
    %420 = vector.broadcast %cst_319 : f32 to vector<128x128xf32>
    %421 = arith.mulf %420, %419 : vector<128x128xf32>
    %422 = math.tanh %421 : vector<128x128xf32>
    %cst_320 = arith.constant 1.000000e+00 : f32
    %423 = vector.broadcast %cst_320 : f32 to vector<128x128xf32>
    %424 = arith.addf %423, %422 : vector<128x128xf32>
    %425 = arith.mulf %414, %424 : vector<128x128xf32>
    %426 = arith.truncf %425 : vector<128x128xf32> to vector<128x128xbf16>
    %c1_321 = arith.constant 1 : index
    %c0_322 = arith.constant 0 : index
    %c0_323 = arith.constant 0 : index
    %427 = vector.load %arg17[%c1_321, %c0_322, %c0_323] : memref<2x128x32xbf16, #tpu.memory_space<vmem>>, vector<1x128x32xbf16>
    %428 = vector.shape_cast %427 : vector<1x128x32xbf16> to vector<128x32xbf16>
    %cst_324 = arith.constant dense<0.000000e+00> : vector<128x32xf32>
    %429 = tpu.matmul %426, %428, %cst_324 {dimension_numbers = #tpu.dot_dimension_numbers<[1], [0], [0], [1], [0, 0, 1, 1], [], []>} : vector<128x128xbf16>, vector<128x32xbf16>, vector<128x32xf32> -> vector<128x32xf32>
    %430 = arith.addf %380, %429 : vector<128x32xf32>
    %c1_325 = arith.constant 1 : index
    %c0_326 = arith.constant 0 : index
    %c0_327 = arith.constant 0 : index
    %431 = vector.load %arg18[%c1_325, %c0_326, %c0_327] : memref<2x1x32xf32, #tpu.memory_space<vmem>>, vector<1x1x32xf32>
    %432 = vector.shape_cast %431 : vector<1x1x32xf32> to vector<1x32xf32>
    %433 = vector.broadcast %432 : vector<1x32xf32> to vector<128x32xf32>
    %434 = arith.addf %430, %433 : vector<128x32xf32>
    %c0_328 = arith.constant 0 : index
    %c0_329 = arith.constant 0 : index
    %435 = vector.load %arg21[%c0_328, %c0_329] : memref<16x128xf32, #tpu.memory_space<vmem>>, vector<16x128xf32>
    %cst_330 = arith.constant dense<0.000000e+00> : vector<16x32xf32>
    %436 = tpu.matmul %435, %434, %cst_330 {dimension_numbers = #tpu.dot_dimension_numbers<[1], [0], [0], [1], [0, 0, 1, 1], [], []>} : vector<16x128xf32>, vector<128x32xf32>, vector<16x32xf32> -> vector<16x32xf32>
    %c0_331 = arith.constant 0 : index
    %c0_332 = arith.constant 0 : index
    %437 = vector.load %arg19[%c0_331, %c0_332] : memref<1x32xf32, #tpu.memory_space<vmem>>, vector<1x32xf32>
    %c0_333 = arith.constant 0 : index
    %c0_334 = arith.constant 0 : index
    %438 = vector.load %arg20[%c0_333, %c0_334] : memref<1x32xf32, #tpu.memory_space<vmem>>, vector<1x32xf32>
    %cst_335 = arith.constant dense<0.000000e+00> : vector<16xf32>
    %439 = vector.multi_reduction <add>, %436, %cst_335 [1] : vector<16x32xf32> to vector<16xf32>
    %440 = vector.shape_cast %439 : vector<16xf32> to vector<16x1xf32>
    %cst_336 = arith.constant 3.200000e+01 : f32
    %441 = vector.broadcast %cst_336 : f32 to vector<16x1xf32>
    %442 = arith.divf %440, %441 : vector<16x1xf32>
    %443 = vector.broadcast %442 : vector<16x1xf32> to vector<16x32xf32>
    %444 = arith.subf %436, %443 : vector<16x32xf32>
    %445 = arith.mulf %444, %444 : vector<16x32xf32>
    %cst_337 = arith.constant dense<0.000000e+00> : vector<16xf32>
    %446 = vector.multi_reduction <add>, %445, %cst_337 [1] : vector<16x32xf32> to vector<16xf32>
    %447 = vector.shape_cast %446 : vector<16xf32> to vector<16x1xf32>
    %cst_338 = arith.constant 3.200000e+01 : f32
    %448 = vector.broadcast %cst_338 : f32 to vector<16x1xf32>
    %449 = arith.divf %447, %448 : vector<16x1xf32>
    %cst_339 = arith.constant 9.99999997E-7 : f32
    %450 = vector.broadcast %cst_339 : f32 to vector<16x1xf32>
    %451 = arith.addf %449, %450 : vector<16x1xf32>
    %452 = math.rsqrt %451 : vector<16x1xf32>
    %453 = vector.broadcast %452 : vector<16x1xf32> to vector<16x32xf32>
    %454 = arith.mulf %444, %453 : vector<16x32xf32>
    %455 = vector.broadcast %437 : vector<1x32xf32> to vector<16x32xf32>
    %456 = arith.mulf %454, %455 : vector<16x32xf32>
    %457 = vector.broadcast %438 : vector<1x32xf32> to vector<16x32xf32>
    %458 = arith.addf %456, %457 : vector<16x32xf32>
    %459 = arith.truncf %458 : vector<16x32xf32> to vector<16x32xbf16>
    %c0_340 = arith.constant 0 : index
    %c0_341 = arith.constant 0 : index
    %460 = vector.load %arg22[%c0_340, %c0_341] : memref<32x128xbf16, #tpu.memory_space<vmem>>, vector<32x128xbf16>
    %cst_342 = arith.constant dense<0.000000e+00> : vector<16x128xf32>
    %461 = tpu.matmul %459, %460, %cst_342 {dimension_numbers = #tpu.dot_dimension_numbers<[1], [0], [0], [1], [0, 0, 1, 1], [], []>} : vector<16x32xbf16>, vector<32x128xbf16>, vector<16x128xf32> -> vector<16x128xf32>
    %c0_343 = arith.constant 0 : index
    %c0_344 = arith.constant 0 : index
    %462 = vector.load %arg23[%c0_343, %c0_344] : memref<1x128xf32, #tpu.memory_space<vmem>>, vector<1x128xf32>
    %463 = vector.broadcast %462 : vector<1x128xf32> to vector<16x128xf32>
    %464 = arith.addf %461, %463 : vector<16x128xf32>
    %c0_345 = arith.constant 0 : index
    %c0_346 = arith.constant 0 : index
    %465 = vector.load %arg24[%c0_345, %c0_346] : memref<16x128xf32, #tpu.memory_space<vmem>>, vector<16x128xf32>
    tpu.vector_store %arg24[%c0_345, %c0_346], %464 {strides = array<i32>} : memref<16x128xf32, #tpu.memory_space<vmem>>, vector<16x128xf32>,
    return
  }
  func.func @transform_0(%arg0: i32) -> (i32, i32) {
    %c0_i32 = arith.constant 0 : i32
    %c0_i32_0 = arith.constant 0 : i32
    return %arg0, %c0_i32 : i32, i32
  }
  func.func @transform_1(%arg0: i32) -> (i32, i32) {
    %c0_i32 = arith.constant 0 : i32
    %c0_i32_0 = arith.constant 0 : i32
    %c0_i32_1 = arith.constant 0 : i32
    return %c0_i32, %c0_i32_0 : i32, i32
  }
  func.func @transform_2(%arg0: i32) -> (i32, i32) {
    %c0_i32 = arith.constant 0 : i32
    %c0_i32_0 = arith.constant 0 : i32
    %c0_i32_1 = arith.constant 0 : i32
    return %c0_i32, %c0_i32_0 : i32, i32
  }
  func.func @transform_3(%arg0: i32) -> (i32, i32, i32) {
    %c0_i32 = arith.constant 0 : i32
    %c0_i32_0 = arith.constant 0 : i32
    %c0_i32_1 = arith.constant 0 : i32
    %c0_i32_2 = arith.constant 0 : i32
    return %c0_i32, %c0_i32_0, %c0_i32_1 : i32, i32, i32
  }
  func.func @transform_4(%arg0: i32) -> (i32, i32, i32) {
    %c0_i32 = arith.constant 0 : i32
    %c0_i32_0 = arith.constant 0 : i32
    %c0_i32_1 = arith.constant 0 : i32
    %c0_i32_2 = arith.constant 0 : i32
    return %c0_i32, %c0_i32_0, %c0_i32_1 : i32, i32, i32
  }
  func.func @transform_5(%arg0: i32) -> (i32, i32, i32, i32) {
    %c0_i32 = arith.constant 0 : i32
    %c0_i32_0 = arith.constant 0 : i32
    %c0_i32_1 = arith.constant 0 : i32
    %c0_i32_2 = arith.constant 0 : i32
    %c0_i32_3 = arith.constant 0 : i32
    return %c0_i32, %c0_i32_0, %c0_i32_1, %c0_i32_2 : i32, i32, i32, i32
  }
  func.func @transform_6(%arg0: i32) -> (i32, i32, i32, i32) {
    %c0_i32 = arith.constant 0 : i32
    %c0_i32_0 = arith.constant 0 : i32
    %c0_i32_1 = arith.constant 0 : i32
    %c0_i32_2 = arith.constant 0 : i32
    %c0_i32_3 = arith.constant 0 : i32
    return %c0_i32, %c0_i32_0, %c0_i32_1, %c0_i32_2 : i32, i32, i32, i32
  }
  func.func @transform_7(%arg0: i32) -> (i32, i32, i32, i32) {
    %c0_i32 = arith.constant 0 : i32
    %c0_i32_0 = arith.constant 0 : i32
    %c0_i32_1 = arith.constant 0 : i32
    %c0_i32_2 = arith.constant 0 : i32
    %c0_i32_3 = arith.constant 0 : i32
    return %c0_i32, %c0_i32_0, %c0_i32_1, %c0_i32_2 : i32, i32, i32, i32
  }
  func.func @transform_8(%arg0: i32) -> (i32, i32, i32, i32) {
    %c0_i32 = arith.constant 0 : i32
    %c0_i32_0 = arith.constant 0 : i32
    %c0_i32_1 = arith.constant 0 : i32
    %c0_i32_2 = arith.constant 0 : i32
    %c0_i32_3 = arith.constant 0 : i32
    return %c0_i32, %c0_i32_0, %c0_i32_1, %c0_i32_2 : i32, i32, i32, i32
  }
  func.func @transform_9(%arg0: i32) -> (i32, i32, i32, i32) {
    %c0_i32 = arith.constant 0 : i32
    %c0_i32_0 = arith.constant 0 : i32
    %c0_i32_1 = arith.constant 0 : i32
    %c0_i32_2 = arith.constant 0 : i32
    %c0_i32_3 = arith.constant 0 : i32
    return %c0_i32, %c0_i32_0, %c0_i32_1, %c0_i32_2 : i32, i32, i32, i32
  }
  func.func @transform_10(%arg0: i32) -> (i32, i32, i32) {
    %c0_i32 = arith.constant 0 : i32
    %c0_i32_0 = arith.constant 0 : i32
    %c0_i32_1 = arith.constant 0 : i32
    %c0_i32_2 = arith.constant 0 : i32
    return %c0_i32, %c0_i32_0, %c0_i32_1 : i32, i32, i32
  }
  func.func @transform_11(%arg0: i32) -> (i32, i32, i32, i32) {
    %c0_i32 = arith.constant 0 : i32
    %c0_i32_0 = arith.constant 0 : i32
    %c0_i32_1 = arith.constant 0 : i32
    %c0_i32_2 = arith.constant 0 : i32
    %c0_i32_3 = arith.constant 0 : i32
    return %c0_i32, %c0_i32_0, %c0_i32_1, %c0_i32_2 : i32, i32, i32, i32
  }
  func.func @transform_12(%arg0: i32) -> (i32, i32, i32) {
    %c0_i32 = arith.constant 0 : i32
    %c0_i32_0 = arith.constant 0 : i32
    %c0_i32_1 = arith.constant 0 : i32
    %c0_i32_2 = arith.constant 0 : i32
    return %c0_i32, %c0_i32_0, %c0_i32_1 : i32, i32, i32
  }
  func.func @transform_13(%arg0: i32) -> (i32, i32, i32) {
    %c0_i32 = arith.constant 0 : i32
    %c0_i32_0 = arith.constant 0 : i32
    %c0_i32_1 = arith.constant 0 : i32
    %c0_i32_2 = arith.constant 0 : i32
    return %c0_i32, %c0_i32_0, %c0_i32_1 : i32, i32, i32
  }
  func.func @transform_14(%arg0: i32) -> (i32, i32, i32) {
    %c0_i32 = arith.constant 0 : i32
    %c0_i32_0 = arith.constant 0 : i32
    %c0_i32_1 = arith.constant 0 : i32
    %c0_i32_2 = arith.constant 0 : i32
    return %c0_i32, %c0_i32_0, %c0_i32_1 : i32, i32, i32
  }
  func.func @transform_15(%arg0: i32) -> (i32, i32, i32) {
    %c0_i32 = arith.constant 0 : i32
    %c0_i32_0 = arith.constant 0 : i32
    %c0_i32_1 = arith.constant 0 : i32
    %c0_i32_2 = arith.constant 0 : i32
    return %c0_i32, %c0_i32_0, %c0_i32_1 : i32, i32, i32
  }
  func.func @transform_16(%arg0: i32) -> (i32, i32, i32) {
    %c0_i32 = arith.constant 0 : i32
    %c0_i32_0 = arith.constant 0 : i32
    %c0_i32_1 = arith.constant 0 : i32
    %c0_i32_2 = arith.constant 0 : i32
    return %c0_i32, %c0_i32_0, %c0_i32_1 : i32, i32, i32
  }
  func.func @transform_17(%arg0: i32) -> (i32, i32, i32) {
    %c0_i32 = arith.constant 0 : i32
    %c0_i32_0 = arith.constant 0 : i32
    %c0_i32_1 = arith.constant 0 : i32
    %c0_i32_2 = arith.constant 0 : i32
    return %c0_i32, %c0_i32_0, %c0_i32_1 : i32, i32, i32
  }
  func.func @transform_18(%arg0: i32) -> (i32, i32) {
    %c0_i32 = arith.constant 0 : i32
    %c0_i32_0 = arith.constant 0 : i32
    %c0_i32_1 = arith.constant 0 : i32
    return %c0_i32, %c0_i32_0 : i32, i32
  }
  func.func @transform_19(%arg0: i32) -> (i32, i32) {
    %c0_i32 = arith.constant 0 : i32
    %c0_i32_0 = arith.constant 0 : i32
    %c0_i32_1 = arith.constant 0 : i32
    return %c0_i32, %c0_i32_0 : i32, i32
  }
  func.func @transform_20(%arg0: i32) -> (i32, i32) {
    %c0_i32 = arith.constant 0 : i32
    %c0_i32_0 = arith.constant 0 : i32
    %c0_i32_1 = arith.constant 0 : i32
    return %c0_i32, %c0_i32_0 : i32, i32
  }
  func.func @transform_21(%arg0: i32) -> (i32, i32) {
    %c0_i32 = arith.constant 0 : i32
    %c0_i32_0 = arith.constant 0 : i32
    %c0_i32_1 = arith.constant 0 : i32
    return %c0_i32, %c0_i32_0 : i32, i32
  }
  func.func @transform_22(%arg0: i32) -> (i32, i32) {
    %c0_i32 = arith.constant 0 : i32
    %c0_i32_0 = arith.constant 0 : i32
    %c0_i32_1 = arith.constant 0 : i32
    return %c0_i32, %c0_i32_0 : i32, i32
  }
  func.func @transform_23(%arg0: i32) -> (i32, i32) {
    %c0_i32 = arith.constant 0 : i32
    %c0_i32_0 = arith.constant 0 : i32
    return %arg0, %c0_i32 : i32, i32
  }
}

</mosaic_0001>

<llo_original>
// kernel: tpu_custom_call.1
$region0: #{tpu_custom_call.1}
  #allocation0 [shape = 'u32[]', space=smem, size = 0x4, offset = 0x4, fixed_abs, tag = 'smem constant byte address 0x4 - core index']
  #allocation1 [shape = 'u32[144,128]{1,0:T(1,128)}', space=vmem, size = 0x12000, scoped, tag = 'internal scratch']
  %s0 = inlined_call_operand.vmem [shape: bf16[256,192], index: 0, kind: input, shape index: {}]
  %s1 = inlined_call_operand.vmem [shape: bf16[192,32], index: 1, kind: input, shape index: {}]
  %s2 = inlined_call_operand.vmem [shape: f32[128,32], index: 2, kind: input, shape index: {}]
  %s3 = inlined_call_operand.vmem [shape: f32[2,1,32], index: 3, kind: input, shape index: {}]
  %s4 = inlined_call_operand.vmem [shape: f32[2,1,32], index: 4, kind: input, shape index: {}]
  %s5 = inlined_call_operand.vmem [shape: bf16[2,4,32,8], index: 5, kind: input, shape index: {}]
  %s6 = inlined_call_operand.vmem [shape: f32[2,4,1,8], index: 6, kind: input, shape index: {}]
  %s7 = inlined_call_operand.vmem [shape: bf16[2,4,32,8], index: 7, kind: input, shape index: {}]
  %s8 = inlined_call_operand.vmem [shape: bf16[2,4,32,32], index: 8, kind: input, shape index: {}]
  %s9 = inlined_call_operand.hbm [shape: f32[2,4,1,32], index: 9, kind: input, shape index: {}]
  %s10 = inlined_call_operand.hbm [shape: f32[2,1,32], index: 10, kind: input, shape index: {}]
  %s11 = inlined_call_operand.vmem [shape: f32[2,4,128,128], index: 11, kind: input, shape index: {}]
  %s12 = inlined_call_operand.hbm [shape: f32[2,1,32], index: 12, kind: input, shape index: {}]
  %s13 = inlined_call_operand.hbm [shape: f32[2,1,32], index: 13, kind: input, shape index: {}]
  %s14 = inlined_call_operand.vmem [shape: bf16[2,32,128], index: 14, kind: input, shape index: {}]
  %s15 = inlined_call_operand.hbm [shape: f32[2,1,128], index: 15, kind: input, shape index: {}]
  %s16 = inlined_call_operand.vmem [shape: bf16[2,128,32], index: 16, kind: input, shape index: {}]
  %s17 = inlined_call_operand.vmem [shape: f32[2,1,32], index: 17, kind: input, shape index: {}]
  %s18 = inlined_call_operand.vmem [shape: f32[1,32], index: 18, kind: input, shape index: {}]
  %s19 = inlined_call_operand.vmem [shape: f32[1,32], index: 19, kind: input, shape index: {}]
  %s20 = inlined_call_operand.vmem [shape: f32[16,128], index: 20, kind: input, shape index: {}]
  %s21 = inlined_call_operand.vmem [shape: bf16[32,128], index: 21, kind: input, shape index: {}]
  %s22 = inlined_call_operand.vmem [shape: f32[1,128], index: 22, kind: input, shape index: {}]
  %s23 = inlined_call_operand.hbm [shape: f32[32,128], index: 23, kind: output, shape index: {}]
  %s24 = sld [smem:[#allocation0]]
  $region145: #{tpu_custom_call.1} parent=0
    _
  %s26 = ssub.s32 1, %s24
  %s27 = scalar_select 0, %s26, %s24
  $region1: #{tpu_custom_call.1} parent=0
    #allocation2 [shape = 'u8[4096]{0}', space=vmem, size = 0x1000, scoped, tag = 'input window, operand 9, single buffered']
    #allocation3 [shape = 's32[2]{0}', space=sflag, size = 0x8, scoped, tag = 'scoped memory for tpu_custom_call.1']
    #allocation4 [shape = 's32[2]{0}', space=sflag, size = 0x8, scoped, tag = 'scoped memory for tpu_custom_call.1']
    #allocation5 [shape = 'u8[1024]{0}', space=vmem, size = 0x400, scoped, tag = 'input window, operand 10, single buffered']
    #allocation6 [shape = 's32[1]{0}', space=sflag, size = 0x4, scoped, tag = 'scoped memory for tpu_custom_call.1']
    #allocation7 [shape = 'u8[1024]{0}', space=vmem, size = 0x400, scoped, tag = 'input window, operand 12, single buffered']
    #allocation8 [shape = 'u8[1024]{0}', space=vmem, size = 0x400, scoped, tag = 'input window, operand 13, single buffered']
    #allocation9 [shape = 's32[1]{0}', space=sflag, size = 0x4, scoped, tag = 'scoped memory for tpu_custom_call.1']
    #allocation10 [shape = 'u8[1024]{0}', space=vmem, size = 0x400, scoped, tag = 'input window, operand 15, single buffered']
    #allocation11 [shape = 'u8[16384]{0}', space=vmem, size = 0x4000, scoped, tag = 'output window, operand 0']
    %28 = vsyncpa [#allocation3], 0
    %29 = vsyncpa [#allocation6], 0
    %30 = vsyncpa [#allocation9], 0
    %31 = vsyncpa [#allocation4], 0
    %s32 = scalar_lea.sflag [#allocation4], 1
    %33 = vsyncpa %s32, 0
    loop: start=0, step=1, limit=4
    $region2: #{tpu_custom_call.1} parent=1 // loop_pre_header
      _
    $region3: #{tpu_custom_call.1} parent=1 // loop_header
      %s35 = sphi 0, %s39
      %p36 = scmp.ge.s32.totalorder %s35, 4
      %s45 = sphi 0, %s47
      %s48 = sphi 0, %s45
      %s49 = sphi 0, %s48
      %s65 = sphi 0, %s49
      %s69 = sphi 0, %s69
      %s71 = sphi 0, %s69
      %s72 = sphi 0, %s71
      %s86 = sphi 0, %s72
      %s90 = sphi 0, %s90
      %s92 = sphi 0, %s90
      %s93 = sphi 0, %s92
      %s107 = sphi 0, %s93
      %s111 = sphi 0, %s111
      %s113 = sphi 0, %s111
      %s114 = sphi 0, %s113
      %s128 = sphi 0, %s114
      %s132 = sphi 0, %s132
      %s134 = sphi 0, %s132
      %s135 = sphi 0, %s134
      %s149 = sphi 0, %s135
      %s153 = sphi 0, %s153
      %s155 = sphi 0, %s153
      %s156 = sphi 0, %s155
      %s170 = sphi 0, %s156
      %s174 = sphi 0, %s174
      %s176 = sphi 0, %s174
      %s177 = sphi 0, %s176
      %s191 = sphi 0, %s177
      %s195 = sphi 0, %s195
      %s197 = sphi 0, %s195
      %s198 = sphi 0, %s197
      %s212 = sphi 0, %s198
      %s216 = sphi 0, %s216
      %s218 = sphi 0, %s216
      %s219 = sphi 0, %s218
      %s233 = sphi 0, %s219
      %s237 = sphi 0, %s237
      %s239 = sphi 0, %s237
      %s240 = sphi 0, %s239
      %s254 = sphi 0, %s240
      %s258 = sphi 0, %s258
      %s260 = sphi 0, %s258
      %s261 = sphi 0, %s260
      %s275 = sphi 0, %s261
      %s279 = sphi 0, %s279
      %s281 = sphi 0, %s279
      %s282 = sphi 0, %s281
      %s296 = sphi 0, %s282
      %s300 = sphi 0, %s300
      %s302 = sphi 0, %s300
      %s303 = sphi 0, %s302
      %s317 = sphi 0, %s303
      %s321 = sphi 0, %s321
      %s323 = sphi 0, %s321
      %s324 = sphi 0, %s323
      %s338 = sphi 0, %s324
      %s342 = sphi 0, %s342
      %s344 = sphi 0, %s342
      %s345 = sphi 0, %s344
      %s359 = sphi 0, %s345
      %s363 = sphi 0, %s363
      %s365 = sphi 0, %s363
      %s366 = sphi 0, %s365
      %s380 = sphi 0, %s366
      %s384 = sphi 0, %s384
      %s386 = sphi 0, %s384
      %s387 = sphi 0, %s386
      %s401 = sphi 0, %s387
      %s405 = sphi 0, %s405
      %s407 = sphi 0, %s405
      %s408 = sphi 0, %s407
      %s422 = sphi 0, %s408
      %s426 = sphi 0, %s426
      %s428 = sphi 0, %s426
      %s429 = sphi 0, %s428
      %s443 = sphi 0, %s429
      %s447 = sphi 0, %s447
      %s449 = sphi 0, %s447
      %s450 = sphi 0, %s449
      %s464 = sphi 0, %s450
      %s468 = sphi 0, %s468
      %s470 = sphi 0, %s468
      %s471 = sphi 0, %s470
      %s485 = sphi 0, %s471
      %s489 = sphi 0, %s489
      %s491 = sphi 0, %s489
      %s492 = sphi 0, %s491
      %s506 = sphi 0, %s492
      %s510 = sphi 0, %s510
      %s512 = sphi 0, %s510
      %s513 = sphi 0, %s512
      %s527 = sphi 0, %s513
      %s533 = sphi 0, %s535
      %s536 = sphi 0, %s533
      %s537 = sphi 0, %s536
      %s553 = sphi 0, %s537
    $region4: #{tpu_custom_call.1} parent=1 // loop_header_branch
      %38 = sbr.rel (%p36) target = $region8
    $region5: #{tpu_custom_call.1} parent=1 // loop_body
      %s40 = ssub.s32 %s35, 1
      %s41 = ssub.s32 %s35, 2
      %s42 = sadd.s32 %s35, 1
      %s43 = ssub.s32 %s35, %s42
      %p44 = scmp.eq.s32.totalorder %s43, 0
      %s46 = sadd.s32 %s45, 1
      %s47 = scalar_select %p44, %s45, %s46
      %p50 = pneg %p44
      %p51 = scmp.eq.s32.totalorder %s35, 1
      %p52 = por %p50, %p51
      %p53 = scmp.ne.s32.totalorder %s45, %s48
      %p54 = scmp.eq.s32.totalorder %s35, 0
      %p55 = por %p53, %p54
      %p56 = scmp.ne.s32.totalorder %s45, %s48
      %p57 = scmp.eq.s32.totalorder %s40, 1
      %p58 = por %p56, %p57
      %p59 = scmp.ne.s32.totalorder %s48, %s49
      %p60 = scmp.eq.s32.totalorder %s40, 0
      %p61 = por %p59, %p60
      %p62 = scmp.ne.s32.totalorder %s48, %s49
      %p63 = scmp.eq.s32.totalorder %s41, 1
      %p64 = por %p62, %p63
      %p66 = scmp.ne.s32.totalorder %s49, %s65
      %p67 = scmp.eq.s32.totalorder %s41, 0
      %p68 = por %p66, %p67
      %s70 = sadd.s32 %s69, 1
      %p73 = scmp.eq.s32.totalorder %s35, 1
      %p74 = scmp.ne.s32.totalorder %s69, %s71
      %p75 = scmp.eq.s32.totalorder %s35, 0
      %p76 = por %p74, %p75
      %p77 = scmp.ne.s32.totalorder %s69, %s71
      %p78 = scmp.eq.s32.totalorder %s40, 1
      %p79 = por %p77, %p78
      %p80 = scmp.ne.s32.totalorder %s71, %s72
      %p81 = scmp.eq.s32.totalorder %s40, 0
      %p82 = por %p80, %p81
      %p83 = scmp.ne.s32.totalorder %s71, %s72
      %p84 = scmp.eq.s32.totalorder %s41, 1
      %p85 = por %p83, %p84
      %p87 = scmp.ne.s32.totalorder %s72, %s86
      %p88 = scmp.eq.s32.totalorder %s41, 0
      %p89 = por %p87, %p88
      %s91 = sadd.s32 %s90, 1
      %p94 = scmp.eq.s32.totalorder %s35, 1
      %p95 = scmp.ne.s32.totalorder %s90, %s92
      %p96 = scmp.eq.s32.totalorder %s35, 0
      %p97 = por %p95, %p96
      %p98 = scmp.ne.s32.totalorder %s90, %s92
      %p99 = scmp.eq.s32.totalorder %s40, 1
      %p100 = por %p98, %p99
      %p101 = scmp.ne.s32.totalorder %s92, %s93
      %p102 = scmp.eq.s32.totalorder %s40, 0
      %p103 = por %p101, %p102
      %p104 = scmp.ne.s32.totalorder %s92, %s93
      %p105 = scmp.eq.s32.totalorder %s41, 1
      %p106 = por %p104, %p105
      %p108 = scmp.ne.s32.totalorder %s93, %s107
      %p109 = scmp.eq.s32.totalorder %s41, 0
      %p110 = por %p108, %p109
      %s112 = sadd.s32 %s111, 1
      %p115 = scmp.eq.s32.totalorder %s35, 1
      %p116 = scmp.ne.s32.totalorder %s111, %s113
      %p117 = scmp.eq.s32.totalorder %s35, 0
      %p118 = por %p116, %p117
      %p119 = scmp.ne.s32.totalorder %s111, %s113
      %p120 = scmp.eq.s32.totalorder %s40, 1
      %p121 = por %p119, %p120
      %p122 = scmp.ne.s32.totalorder %s113, %s114
      %p123 = scmp.eq.s32.totalorder %s40, 0
      %p124 = por %p122, %p123
      %p125 = scmp.ne.s32.totalorder %s113, %s114
      %p126 = scmp.eq.s32.totalorder %s41, 1
      %p127 = por %p125, %p126
      %p129 = scmp.ne.s32.totalorder %s114, %s128
      %p130 = scmp.eq.s32.totalorder %s41, 0
      %p131 = por %p129, %p130
      %s133 = sadd.s32 %s132, 1
      %p136 = scmp.eq.s32.totalorder %s35, 1
      %p137 = scmp.ne.s32.totalorder %s132, %s134
      %p138 = scmp.eq.s32.totalorder %s35, 0
      %p139 = por %p137, %p138
      %p140 = scmp.ne.s32.totalorder %s132, %s134
      %p141 = scmp.eq.s32.totalorder %s40, 1
      %p142 = por %p140, %p141
      %p143 = scmp.ne.s32.totalorder %s134, %s135
      %p144 = scmp.eq.s32.totalorder %s40, 0
      %p145 = por %p143, %p144
      %p146 = scmp.ne.s32.totalorder %s134, %s135
      %p147 = scmp.eq.s32.totalorder %s41, 1
      %p148 = por %p146, %p147
      %p150 = scmp.ne.s32.totalorder %s135, %s149
      %p151 = scmp.eq.s32.totalorder %s41, 0
      %p152 = por %p150, %p151
      %s154 = sadd.s32 %s153, 1
      %p157 = scmp.eq.s32.totalorder %s35, 1
      %p158 = scmp.ne.s32.totalorder %s153, %s155
      %p159 = scmp.eq.s32.totalorder %s35, 0
      %p160 = por %p158, %p159
      %p161 = scmp.ne.s32.totalorder %s153, %s155
      %p162 = scmp.eq.s32.totalorder %s40, 1
      %p163 = por %p161, %p162
      %p164 = scmp.ne.s32.totalorder %s155, %s156
      %p165 = scmp.eq.s32.totalorder %s40, 0
      %p166 = por %p164, %p165
      %p167 = scmp.ne.s32.totalorder %s155, %s156
      %p168 = scmp.eq.s32.totalorder %s41, 1
      %p169 = por %p167, %p168
      %p171 = scmp.ne.s32.totalorder %s156, %s170
      %p172 = scmp.eq.s32.totalorder %s41, 0
      %p173 = por %p171, %p172
      %s175 = sadd.s32 %s174, 1
      %p178 = scmp.eq.s32.totalorder %s35, 1
      %p179 = scmp.ne.s32.totalorder %s174, %s176
      %p180 = scmp.eq.s32.totalorder %s35, 0
      %p181 = por %p179, %p180
      %p182 = scmp.ne.s32.totalorder %s174, %s176
      %p183 = scmp.eq.s32.totalorder %s40, 1
      %p184 = por %p182, %p183
      %p185 = scmp.ne.s32.totalorder %s176, %s177
      %p186 = scmp.eq.s32.totalorder %s40, 0
      %p187 = por %p185, %p186
      %p188 = scmp.ne.s32.totalorder %s176, %s177
      %p189 = scmp.eq.s32.totalorder %s41, 1
      %p190 = por %p188, %p189
      %p192 = scmp.ne.s32.totalorder %s177, %s191
      %p193 = scmp.eq.s32.totalorder %s41, 0
      %p194 = por %p192, %p193
      %s196 = sadd.s32 %s195, 1
      %p199 = scmp.eq.s32.totalorder %s35, 1
      %p200 = scmp.ne.s32.totalorder %s195, %s197
      %p201 = scmp.eq.s32.totalorder %s35, 0
      %p202 = por %p200, %p201
      %p203 = scmp.ne.s32.totalorder %s195, %s197
      %p204 = scmp.eq.s32.totalorder %s40, 1
      %p205 = por %p203, %p204
      %p206 = scmp.ne.s32.totalorder %s197, %s198
      %p207 = scmp.eq.s32.totalorder %s40, 0
      %p208 = por %p206, %p207
      %p209 = scmp.ne.s32.totalorder %s197, %s198
      %p210 = scmp.eq.s32.totalorder %s41, 1
      %p211 = por %p209, %p210
      %p213 = scmp.ne.s32.totalorder %s198, %s212
      %p214 = scmp.eq.s32.totalorder %s41, 0
      %p215 = por %p213, %p214
      %s217 = sadd.s32 %s216, 1
      %p220 = scmp.eq.s32.totalorder %s35, 1
      %p221 = scmp.ne.s32.totalorder %s216, %s218
      %p222 = scmp.eq.s32.totalorder %s35, 0
      %p223 = por %p221, %p222
      %p224 = scmp.ne.s32.totalorder %s216, %s218
      %p225 = scmp.eq.s32.totalorder %s40, 1
      %p226 = por %p224, %p225
      %p227 = scmp.ne.s32.totalorder %s218, %s219
      %p228 = scmp.eq.s32.totalorder %s40, 0
      %p229 = por %p227, %p228
      %p230 = scmp.ne.s32.totalorder %s218, %s219
      %p231 = scmp.eq.s32.totalorder %s41, 1
      %p232 = por %p230, %p231
      %p234 = scmp.ne.s32.totalorder %s219, %s233
      %p235 = scmp.eq.s32.totalorder %s41, 0
      %p236 = por %p234, %p235
      %s238 = sadd.s32 %s237, 1
      %p241 = scmp.eq.s32.totalorder %s35, 1
      %p242 = scmp.ne.s32.totalorder %s237, %s239
      %p243 = scmp.eq.s32.totalorder %s35, 0
      %p244 = por %p242, %p243
      %p245 = scmp.ne.s32.totalorder %s237, %s239
      %p246 = scmp.eq.s32.totalorder %s40, 1
      %p247 = por %p245, %p246
      %p248 = scmp.ne.s32.totalorder %s239, %s240
      %p249 = scmp.eq.s32.totalorder %s40, 0
      %p250 = por %p248, %p249
      %p251 = scmp.ne.s32.totalorder %s239, %s240
      %p252 = scmp.eq.s32.totalorder %s41, 1
      %p253 = por %p251, %p252
      %p255 = scmp.ne.s32.totalorder %s240, %s254
      %p256 = scmp.eq.s32.totalorder %s41, 0
      %p257 = por %p255, %p256
      %s259 = sadd.s32 %s258, 1
      %p262 = scmp.eq.s32.totalorder %s35, 1
      %p263 = scmp.ne.s32.totalorder %s258, %s260
      %p264 = scmp.eq.s32.totalorder %s35, 0
      %p265 = por %p263, %p264
      %p266 = scmp.ne.s32.totalorder %s258, %s260
      %p267 = scmp.eq.s32.totalorder %s40, 1
      %p268 = por %p266, %p267
      %p269 = scmp.ne.s32.totalorder %s260, %s261
      %p270 = scmp.eq.s32.totalorder %s40, 0
      %p271 = por %p269, %p270
      %p272 = scmp.ne.s32.totalorder %s260, %s261
      %p273 = scmp.eq.s32.totalorder %s41, 1
      %p274 = por %p272, %p273
      %p276 = scmp.ne.s32.totalorder %s261, %s275
      %p277 = scmp.eq.s32.totalorder %s41, 0
      %p278 = por %p276, %p277
      %s280 = sadd.s32 %s279, 1
      %p283 = scmp.eq.s32.totalorder %s35, 1
      %p284 = scmp.ne.s32.totalorder %s279, %s281
      %p285 = scmp.eq.s32.totalorder %s35, 0
      %p286 = por %p284, %p285
      %p287 = scmp.ne.s32.totalorder %s279, %s281
      %p288 = scmp.eq.s32.totalorder %s40, 1
      %p289 = por %p287, %p288
      %p290 = scmp.ne.s32.totalorder %s281, %s282
      %p291 = scmp.eq.s32.totalorder %s40, 0
      %p292 = por %p290, %p291
      %p293 = scmp.ne.s32.totalorder %s281, %s282
      %p294 = scmp.eq.s32.totalorder %s41, 1
      %p295 = por %p293, %p294
      %p297 = scmp.ne.s32.totalorder %s282, %s296
      %p298 = scmp.eq.s32.totalorder %s41, 0
      %p299 = por %p297, %p298
      %s301 = sadd.s32 %s300, 1
      %p304 = scmp.eq.s32.totalorder %s35, 1
      %p305 = scmp.ne.s32.totalorder %s300, %s302
      %p306 = scmp.eq.s32.totalorder %s35, 0
      %p307 = por %p305, %p306
      %p308 = scmp.ne.s32.totalorder %s300, %s302
      %p309 = scmp.eq.s32.totalorder %s40, 1
      %p310 = por %p308, %p309
      %p311 = scmp.ne.s32.totalorder %s302, %s303
      %p312 = scmp.eq.s32.totalorder %s40, 0
      %p313 = por %p311, %p312
      %p314 = scmp.ne.s32.totalorder %s302, %s303
      %p315 = scmp.eq.s32.totalorder %s41, 1
      %p316 = por %p314, %p315
      %p318 = scmp.ne.s32.totalorder %s303, %s317
      %p319 = scmp.eq.s32.totalorder %s41, 0
      %p320 = por %p318, %p319
      %s322 = sadd.s32 %s321, 1
      %p325 = scmp.eq.s32.totalorder %s35, 1
      %p326 = scmp.ne.s32.totalorder %s321, %s323
      %p327 = scmp.eq.s32.totalorder %s35, 0
      %p328 = por %p326, %p327
      %p329 = scmp.ne.s32.totalorder %s321, %s323
      %p330 = scmp.eq.s32.totalorder %s40, 1
      %p331 = por %p329, %p330
      %p332 = scmp.ne.s32.totalorder %s323, %s324
      %p333 = scmp.eq.s32.totalorder %s40, 0
      %p334 = por %p332, %p333
      %p335 = scmp.ne.s32.totalorder %s323, %s324
      %p336 = scmp.eq.s32.totalorder %s41, 1
      %p337 = por %p335, %p336
      %p339 = scmp.ne.s32.totalorder %s324, %s338
      %p340 = scmp.eq.s32.totalorder %s41, 0
      %p341 = por %p339, %p340
      %s343 = sadd.s32 %s342, 1
      %p346 = scmp.eq.s32.totalorder %s35, 1
      %p347 = scmp.ne.s32.totalorder %s342, %s344
      %p348 = scmp.eq.s32.totalorder %s35, 0
      %p349 = por %p347, %p348
      %p350 = scmp.ne.s32.totalorder %s342, %s344
      %p351 = scmp.eq.s32.totalorder %s40, 1
      %p352 = por %p350, %p351
      %p353 = scmp.ne.s32.totalorder %s344, %s345
      %p354 = scmp.eq.s32.totalorder %s40, 0
      %p355 = por %p353, %p354
      %p356 = scmp.ne.s32.totalorder %s344, %s345
      %p357 = scmp.eq.s32.totalorder %s41, 1
      %p358 = por %p356, %p357
      %p360 = scmp.ne.s32.totalorder %s345, %s359
      %p361 = scmp.eq.s32.totalorder %s41, 0
      %p362 = por %p360, %p361
      %s364 = sadd.s32 %s363, 1
      %p367 = scmp.eq.s32.totalorder %s35, 1
      %p368 = scmp.ne.s32.totalorder %s363, %s365
      %p369 = scmp.eq.s32.totalorder %s35, 0
      %p370 = por %p368, %p369
      %p371 = scmp.ne.s32.totalorder %s363, %s365
      %p372 = scmp.eq.s32.totalorder %s40, 1
      %p373 = por %p371, %p372
      %p374 = scmp.ne.s32.totalorder %s365, %s366
      %p375 = scmp.eq.s32.totalorder %s40, 0
      %p376 = por %p374, %p375
      %p377 = scmp.ne.s32.totalorder %s365, %s366
      %p378 = scmp.eq.s32.totalorder %s41, 1
      %p379 = por %p377, %p378
      %p381 = scmp.ne.s32.totalorder %s366, %s380
      %p382 = scmp.eq.s32.totalorder %s41, 0
      %p383 = por %p381, %p382
      %s385 = sadd.s32 %s384, 1
      %p388 = scmp.eq.s32.totalorder %s35, 1
      %p389 = scmp.ne.s32.totalorder %s384, %s386
      %p390 = scmp.eq.s32.totalorder %s35, 0
      %p391 = por %p389, %p390
      %p392 = scmp.ne.s32.totalorder %s384, %s386
      %p393 = scmp.eq.s32.totalorder %s40, 1
      %p394 = por %p392, %p393
      %p395 = scmp.ne.s32.totalorder %s386, %s387
      %p396 = scmp.eq.s32.totalorder %s40, 0
      %p397 = por %p395, %p396
      %p398 = scmp.ne.s32.totalorder %s386, %s387
      %p399 = scmp.eq.s32.totalorder %s41, 1
      %p400 = por %p398, %p399
      %p402 = scmp.ne.s32.totalorder %s387, %s401
      %p403 = scmp.eq.s32.totalorder %s41, 0
      %p404 = por %p402, %p403
      %s406 = sadd.s32 %s405, 1
      %p409 = scmp.eq.s32.totalorder %s35, 1
      %p410 = scmp.ne.s32.totalorder %s405, %s407
      %p411 = scmp.eq.s32.totalorder %s35, 0
      %p412 = por %p410, %p411
      %p413 = scmp.ne.s32.totalorder %s405, %s407
      %p414 = scmp.eq.s32.totalorder %s40, 1
      %p415 = por %p413, %p414
      %p416 = scmp.ne.s32.totalorder %s407, %s408
      %p417 = scmp.eq.s32.totalorder %s40, 0
      %p418 = por %p416, %p417
      %p419 = scmp.ne.s32.totalorder %s407, %s408
      %p420 = scmp.eq.s32.totalorder %s41, 1
      %p421 = por %p419, %p420
      %p423 = scmp.ne.s32.totalorder %s408, %s422
      %p424 = scmp.eq.s32.totalorder %s41, 0
      %p425 = por %p423, %p424
      %s427 = sadd.s32 %s426, 1
      %p430 = scmp.eq.s32.totalorder %s35, 1
      %p431 = scmp.ne.s32.totalorder %s426, %s428
      %p432 = scmp.eq.s32.totalorder %s35, 0
      %p433 = por %p431, %p432
      %p434 = scmp.ne.s32.totalorder %s426, %s428
      %p435 = scmp.eq.s32.totalorder %s40, 1
      %p436 = por %p434, %p435
      %p437 = scmp.ne.s32.totalorder %s428, %s429
      %p438 = scmp.eq.s32.totalorder %s40, 0
      %p439 = por %p437, %p438
      %p440 = scmp.ne.s32.totalorder %s428, %s429
      %p441 = scmp.eq.s32.totalorder %s41, 1
      %p442 = por %p440, %p441
      %p444 = scmp.ne.s32.totalorder %s429, %s443
      %p445 = scmp.eq.s32.totalorder %s41, 0
      %p446 = por %p444, %p445
      %s448 = sadd.s32 %s447, 1
      %p451 = scmp.eq.s32.totalorder %s35, 1
      %p452 = scmp.ne.s32.totalorder %s447, %s449
      %p453 = scmp.eq.s32.totalorder %s35, 0
      %p454 = por %p452, %p453
      %p455 = scmp.ne.s32.totalorder %s447, %s449
      %p456 = scmp.eq.s32.totalorder %s40, 1
      %p457 = por %p455, %p456
      %p458 = scmp.ne.s32.totalorder %s449, %s450
      %p459 = scmp.eq.s32.totalorder %s40, 0
      %p460 = por %p458, %p459
      %p461 = scmp.ne.s32.totalorder %s449, %s450
      %p462 = scmp.eq.s32.totalorder %s41, 1
      %p463 = por %p461, %p462
      %p465 = scmp.ne.s32.totalorder %s450, %s464
      %p466 = scmp.eq.s32.totalorder %s41, 0
      %p467 = por %p465, %p466
      %s469 = sadd.s32 %s468, 1
      %p472 = scmp.eq.s32.totalorder %s35, 1
      %p473 = scmp.ne.s32.totalorder %s468, %s470
      %p474 = scmp.eq.s32.totalorder %s35, 0
      %p475 = por %p473, %p474
      %p476 = scmp.ne.s32.totalorder %s468, %s470
      %p477 = scmp.eq.s32.totalorder %s40, 1
      %p478 = por %p476, %p477
      %p479 = scmp.ne.s32.totalorder %s470, %s471
      %p480 = scmp.eq.s32.totalorder %s40, 0
      %p481 = por %p479, %p480
      %p482 = scmp.ne.s32.totalorder %s470, %s471
      %p483 = scmp.eq.s32.totalorder %s41, 1
      %p484 = por %p482, %p483
      %p486 = scmp.ne.s32.totalorder %s471, %s485
      %p487 = scmp.eq.s32.totalorder %s41, 0
      %p488 = por %p486, %p487
      %s490 = sadd.s32 %s489, 1
      %p493 = scmp.eq.s32.totalorder %s35, 1
      %p494 = scmp.ne.s32.totalorder %s489, %s491
      %p495 = scmp.eq.s32.totalorder %s35, 0
      %p496 = por %p494, %p495
      %p497 = scmp.ne.s32.totalorder %s489, %s491
      %p498 = scmp.eq.s32.totalorder %s40, 1
      %p499 = por %p497, %p498
      %p500 = scmp.ne.s32.totalorder %s491, %s492
      %p501 = scmp.eq.s32.totalorder %s40, 0
      %p502 = por %p500, %p501
      %p503 = scmp.ne.s32.totalorder %s491, %s492
      %p504 = scmp.eq.s32.totalorder %s41, 1
      %p505 = por %p503, %p504
      %p507 = scmp.ne.s32.totalorder %s492, %s506
      %p508 = scmp.eq.s32.totalorder %s41, 0
      %p509 = por %p507, %p508
      %s511 = sadd.s32 %s510, 1
      %p514 = scmp.eq.s32.totalorder %s35, 1
      %p515 = scmp.ne.s32.totalorder %s510, %s512
      %p516 = scmp.eq.s32.totalorder %s35, 0
      %p517 = por %p515, %p516
      %p518 = scmp.ne.s32.totalorder %s510, %s512
      %p519 = scmp.eq.s32.totalorder %s40, 1
      %p520 = por %p518, %p519
      %p521 = scmp.ne.s32.totalorder %s512, %s513
      %p522 = scmp.eq.s32.totalorder %s40, 0
      %p523 = por %p521, %p522
      %p524 = scmp.ne.s32.totalorder %s512, %s513
      %p525 = scmp.eq.s32.totalorder %s41, 1
      %p526 = por %p524, %p525
      %p528 = scmp.ne.s32.totalorder %s513, %s527
      %p529 = scmp.eq.s32.totalorder %s41, 0
      %p530 = por %p528, %p529
      %s531 = ssub.s32 %s35, %s42
      %p532 = scmp.eq.s32.totalorder %s531, 0
      %s534 = sadd.s32 %s533, 1
      %s535 = scalar_select %p532, %s533, %s534
      %p538 = pneg %p532
      %p539 = scmp.eq.s32.totalorder %s35, 1
      %p540 = por %p538, %p539
      %p541 = scmp.ne.s32.totalorder %s533, %s536
      %p542 = scmp.eq.s32.totalorder %s35, 0
      %p543 = por %p541, %p542
      %p544 = scmp.ne.s32.totalorder %s533, %s536
      %p545 = scmp.eq.s32.totalorder %s40, 1
      %p546 = por %p544, %p545
      %p547 = scmp.ne.s32.totalorder %s536, %s537
      %p548 = scmp.eq.s32.totalorder %s40, 0
      %p549 = por %p547, %p548
      %p550 = scmp.ne.s32.totalorder %s536, %s537
      %p551 = scmp.eq.s32.totalorder %s41, 1
      %p552 = por %p550, %p551
      %p554 = scmp.ne.s32.totalorder %s537, %s553
      %p555 = scmp.eq.s32.totalorder %s41, 0
      %p556 = por %p554, %p555
      %p557 = scmp.le.s32.totalorder 1, %s35
      %p558 = scmp.lt.s32.totalorder %s35, 3
      %p559 = pnand %p557, %p558
      %p560 = pneg %p559
      // Predicated region
      $region9: #{tpu_custom_call.1} parent=5 // pred_check
        _
      $region10: #{tpu_custom_call.1} parent=5 // pred_check_branch
        %562 = sbr.rel (%p559) target = $region12
      $region11: #{tpu_custom_call.1} parent=5 // pred_region
        %s563 = ssub.s32 %s35, 1
        // Predicated region
        $region13: #{tpu_custom_call.1} parent=11 // pred_check
          %p564 = pneg %p82
        $region14: #{tpu_custom_call.1} parent=11 // pred_check_branch
          %566 = sbr.rel (%p564) target = $region16
        $region15: #{tpu_custom_call.1} parent=11 // pred_region
          _
        $region16: #{tpu_custom_call.1} parent=11 // pred_fallthru
          _
        // Predicated region
        $region17: #{tpu_custom_call.1} parent=11 // pred_check
          %p567 = pneg %p103
        $region18: #{tpu_custom_call.1} parent=11 // pred_check_branch
          %569 = sbr.rel (%p567) target = $region20
        $region19: #{tpu_custom_call.1} parent=11 // pred_region
          _
        $region20: #{tpu_custom_call.1} parent=11 // pred_fallthru
          _
        // Predicated region
        $region21: #{tpu_custom_call.1} parent=11 // pred_check
          %p570 = pneg %p124
        $region22: #{tpu_custom_call.1} parent=11 // pred_check_branch
          %572 = sbr.rel (%p570) target = $region24
        $region23: #{tpu_custom_call.1} parent=11 // pred_region
          _
        $region24: #{tpu_custom_call.1} parent=11 // pred_fallthru
          _
        // Predicated region
        $region25: #{tpu_custom_call.1} parent=11 // pred_check
          %p573 = pneg %p145
        $region26: #{tpu_custom_call.1} parent=11 // pred_check_branch
          %575 = sbr.rel (%p573) target = $region28
        $region27: #{tpu_custom_call.1} parent=11 // pred_region
          _
        $region28: #{tpu_custom_call.1} parent=11 // pred_fallthru
          _
        // Predicated region
        $region29: #{tpu_custom_call.1} parent=11 // pred_check
          %p576 = pneg %p166
        $region30: #{tpu_custom_call.1} parent=11 // pred_check_branch
          %578 = sbr.rel (%p576) target = $region32
        $region31: #{tpu_custom_call.1} parent=11 // pred_region
          _
        $region32: #{tpu_custom_call.1} parent=11 // pred_fallthru
          _
        // Predicated region
        $region33: #{tpu_custom_call.1} parent=11 // pred_check
          %p579 = pneg %p187
        $region34: #{tpu_custom_call.1} parent=11 // pred_check_branch
          %581 = sbr.rel (%p579) target = $region36
        $region35: #{tpu_custom_call.1} parent=11 // pred_region
          _
        $region36: #{tpu_custom_call.1} parent=11 // pred_fallthru
          _
        // Predicated region
        $region37: #{tpu_custom_call.1} parent=11 // pred_check
          %p582 = pneg %p208
        $region38: #{tpu_custom_call.1} parent=11 // pred_check_branch
          %584 = sbr.rel (%p582) target = $region40
        $region39: #{tpu_custom_call.1} parent=11 // pred_region
          _
        $region40: #{tpu_custom_call.1} parent=11 // pred_fallthru
          _
        // Predicated region
        $region41: #{tpu_custom_call.1} parent=11 // pred_check
          %p585 = pneg %p229
        $region42: #{tpu_custom_call.1} parent=11 // pred_check_branch
          %587 = sbr.rel (%p585) target = $region44
        $region43: #{tpu_custom_call.1} parent=11 // pred_region
          _
        $region44: #{tpu_custom_call.1} parent=11 // pred_fallthru
          _
        // Predicated region
        $region45: #{tpu_custom_call.1} parent=11 // pred_check
          %p588 = pneg %p250
        $region46: #{tpu_custom_call.1} parent=11 // pred_check_branch
          %590 = sbr.rel (%p588) target = $region48
        $region47: #{tpu_custom_call.1} parent=11 // pred_region
          %s592 = ssub.s32 128, 128
          %593 = vsyncadd [#allocation3], %s592
          %s594 = sshll.u32 [#allocation2], 4
          %s595 = int_to_ptr.vmem [resolvable:$true] %s594
          %600 = dma.hbm_to_vmem [thread:$0]  %s9, 128, %s595, [#allocation3], 16, 16, 1
        $region48: #{tpu_custom_call.1} parent=11 // pred_fallthru
          _
        // Predicated region
        $region49: #{tpu_custom_call.1} parent=11 // pred_check
          %p601 = pneg %p271
        $region50: #{tpu_custom_call.1} parent=11 // pred_check_branch
          %603 = sbr.rel (%p601) target = $region52
        $region51: #{tpu_custom_call.1} parent=11 // pred_region
          %s605 = ssub.s32 32, 32
          %606 = vsyncadd [#allocation6], %s605
          %s607 = sshll.u32 [#allocation5], 4
          %s608 = int_to_ptr.vmem [resolvable:$true] %s607
          %613 = dma.hbm_to_vmem [thread:$0]  %s10, 32, %s608, [#allocation6], 16, 16, 1
        $region52: #{tpu_custom_call.1} parent=11 // pred_fallthru
          _
        // Predicated region
        $region53: #{tpu_custom_call.1} parent=11 // pred_check
          %p614 = pneg %p292
        $region54: #{tpu_custom_call.1} parent=11 // pred_check_branch
          %616 = sbr.rel (%p614) target = $region56
        $region55: #{tpu_custom_call.1} parent=11 // pred_region
          _
        $region56: #{tpu_custom_call.1} parent=11 // pred_fallthru
          _
        // Predicated region
        $region57: #{tpu_custom_call.1} parent=11 // pred_check
          %p617 = pneg %p313
        $region58: #{tpu_custom_call.1} parent=11 // pred_check_branch
          %619 = sbr.rel (%p617) target = $region60
        $region59: #{tpu_custom_call.1} parent=11 // pred_region
          %s621 = ssub.s32 32, 32
          %622 = vsyncadd [#allocation6], %s621
          %s623 = sshll.u32 [#allocation7], 4
          %s624 = int_to_ptr.vmem [resolvable:$true] %s623
          %629 = dma.hbm_to_vmem [thread:$0]  %s12, 32, %s624, [#allocation6], 16, 16, 1
        $region60: #{tpu_custom_call.1} parent=11 // pred_fallthru
          _
        // Predicated region
        $region61: #{tpu_custom_call.1} parent=11 // pred_check
          %p630 = pneg %p334
        $region62: #{tpu_custom_call.1} parent=11 // pred_check_branch
          %632 = sbr.rel (%p630) target = $region64
        $region63: #{tpu_custom_call.1} parent=11 // pred_region
          %s634 = ssub.s32 32, 32
          %635 = vsyncadd [#allocation9], %s634
          %s636 = sshll.u32 [#allocation8], 4
          %s637 = int_to_ptr.vmem [resolvable:$true] %s636
          %642 = dma.hbm_to_vmem [thread:$0]  %s13, 32, %s637, [#allocation9], 16, 16, 1
        $region64: #{tpu_custom_call.1} parent=11 // pred_fallthru
          _
        // Predicated region
        $region65: #{tpu_custom_call.1} parent=11 // pred_check
          %p643 = pneg %p355
        $region66: #{tpu_custom_call.1} parent=11 // pred_check_branch
          %645 = sbr.rel (%p643) target = $region68
        $region67: #{tpu_custom_call.1} parent=11 // pred_region
          _
        $region68: #{tpu_custom_call.1} parent=11 // pred_fallthru
          _
        // Predicated region
        $region69: #{tpu_custom_call.1} parent=11 // pred_check
          %p646 = pneg %p376
        $region70: #{tpu_custom_call.1} parent=11 // pred_check_branch
          %648 = sbr.rel (%p646) target = $region72
        $region71: #{tpu_custom_call.1} parent=11 // pred_region
          %s650 = ssub.s32 32, 32
          %651 = vsyncadd [#allocation9], %s650
          %s652 = sshll.u32 [#allocation10], 4
          %s653 = int_to_ptr.vmem [resolvable:$true] %s652
          %658 = dma.hbm_to_vmem [thread:$0]  %s15, 32, %s653, [#allocation9], 16, 16, 1
        $region72: #{tpu_custom_call.1} parent=11 // pred_fallthru
          _
        // Predicated region
        $region73: #{tpu_custom_call.1} parent=11 // pred_check
          %p659 = pneg %p397
        $region74: #{tpu_custom_call.1} parent=11 // pred_check_branch
          %661 = sbr.rel (%p659) target = $region76
        $region75: #{tpu_custom_call.1} parent=11 // pred_region
          _
        $region76: #{tpu_custom_call.1} parent=11 // pred_fallthru
          _
        // Predicated region
        $region77: #{tpu_custom_call.1} parent=11 // pred_check
          %p662 = pneg %p418
        $region78: #{tpu_custom_call.1} parent=11 // pred_check_branch
          %664 = sbr.rel (%p662) target = $region80
        $region79: #{tpu_custom_call.1} parent=11 // pred_region
          _
        $region80: #{tpu_custom_call.1} parent=11 // pred_fallthru
          _
        // Predicated region
        $region81: #{tpu_custom_call.1} parent=11 // pred_check
          %p665 = pneg %p439
        $region82: #{tpu_custom_call.1} parent=11 // pred_check_branch
          %667 = sbr.rel (%p665) target = $region84
        $region83: #{tpu_custom_call.1} parent=11 // pred_region
          _
        $region84: #{tpu_custom_call.1} parent=11 // pred_fallthru
          _
        // Predicated region
        $region85: #{tpu_custom_call.1} parent=11 // pred_check
          %p668 = pneg %p460
        $region86: #{tpu_custom_call.1} parent=11 // pred_check_branch
          %670 = sbr.rel (%p668) target = $region88
        $region87: #{tpu_custom_call.1} parent=11 // pred_region
          _
        $region88: #{tpu_custom_call.1} parent=11 // pred_fallthru
          _
        // Predicated region
        $region89: #{tpu_custom_call.1} parent=11 // pred_check
          %p671 = pneg %p481
        $region90: #{tpu_custom_call.1} parent=11 // pred_check_branch
          %673 = sbr.rel (%p671) target = $region92
        $region91: #{tpu_custom_call.1} parent=11 // pred_region
          _
        $region92: #{tpu_custom_call.1} parent=11 // pred_fallthru
          _
        // Predicated region
        $region93: #{tpu_custom_call.1} parent=11 // pred_check
          %p674 = pneg %p502
        $region94: #{tpu_custom_call.1} parent=11 // pred_check_branch
          %676 = sbr.rel (%p674) target = $region96
        $region95: #{tpu_custom_call.1} parent=11 // pred_region
          _
        $region96: #{tpu_custom_call.1} parent=11 // pred_fallthru
          _
        // Predicated region
        $region97: #{tpu_custom_call.1} parent=11 // pred_check
          %p677 = pneg %p523
        $region98: #{tpu_custom_call.1} parent=11 // pred_check_branch
          %679 = sbr.rel (%p677) target = $region100
        $region99: #{tpu_custom_call.1} parent=11 // pred_region
          _
        $region100: #{tpu_custom_call.1} parent=11 // pred_fallthru
          _
      $region12: #{tpu_custom_call.1} parent=5 // pred_fallthru
        _
      %p680 = scmp.lt.s32.totalorder %s35, 2
      // Predicated region
      $region101: #{tpu_custom_call.1} parent=5 // pred_check
        %p681 = pneg %p680
      $region102: #{tpu_custom_call.1} parent=5 // pred_check_branch
        %683 = sbr.rel (%p681) target = $region104
      $region103: #{tpu_custom_call.1} parent=5 // pred_region
        // Predicated region
        $region105: #{tpu_custom_call.1} parent=103 // pred_check
          %p684 = pneg %p55
        $region106: #{tpu_custom_call.1} parent=103 // pred_check_branch
          %686 = sbr.rel (%p684) target = $region108
        $region107: #{tpu_custom_call.1} parent=103 // pred_region
          %s687 = smul.u32 16, %s35
          %p688 = scmp.lt.s32.totalorder %s687, 31
          %s689 = scalar_select %p688, %s687, 31
          %s690 = smul.addr %s689, 2
          %s691 = smul.addr %s690, 4
          %s692 = scalar_lea.vmem %s0, %s691
          %s693 = smul.u32 16, %s35
        $region108: #{tpu_custom_call.1} parent=103 // pred_fallthru
          _
      $region104: #{tpu_custom_call.1} parent=5 // pred_fallthru
        _
      %p694 = scmp.le.s32.totalorder 1, %s35
      %p695 = scmp.lt.s32.totalorder %s35, 3
      %p696 = pnand %p694, %p695
      %p697 = pneg %p696
      // Predicated region
      $region109: #{tpu_custom_call.1} parent=5 // pred_check
        _
      $region110: #{tpu_custom_call.1} parent=5 // pred_check_branch
        %699 = sbr.rel (%p696) target = $region112
      $region111: #{tpu_custom_call.1} parent=5 // pred_region
        %s700 = ssub.s32 %s35, 1
        // Predicated region
        $region113: #{tpu_custom_call.1} parent=111 // pred_check
          %p701 = pneg %p250
        $region114: #{tpu_custom_call.1} parent=111 // pred_check_branch
          %703 = sbr.rel (%p701) target = $region116
        $region115: #{tpu_custom_call.1} parent=111 // pred_region
          %704 = dma.done [#allocation3], 128
        $region116: #{tpu_custom_call.1} parent=111 // pred_fallthru
          _
        // Predicated region
        $region117: #{tpu_custom_call.1} parent=111 // pred_check
          %p705 = pneg %p271
        $region118: #{tpu_custom_call.1} parent=111 // pred_check_branch
          %707 = sbr.rel (%p705) target = $region120
        $region119: #{tpu_custom_call.1} parent=111 // pred_region
          %708 = dma.done [#allocation6], 32
        $region120: #{tpu_custom_call.1} parent=111 // pred_fallthru
          _
        // Predicated region
        $region121: #{tpu_custom_call.1} parent=111 // pred_check
          %p709 = pneg %p313
        $region122: #{tpu_custom_call.1} parent=111 // pred_check_branch
          %711 = sbr.rel (%p709) target = $region124
        $region123: #{tpu_custom_call.1} parent=111 // pred_region
          %712 = dma.done [#allocation6], 32
        $region124: #{tpu_custom_call.1} parent=111 // pred_fallthru
          _
        // Predicated region
        $region125: #{tpu_custom_call.1} parent=111 // pred_check
          %p713 = pneg %p334
        $region126: #{tpu_custom_call.1} parent=111 // pred_check_branch
          %715 = sbr.rel (%p713) target = $region128
        $region127: #{tpu_custom_call.1} parent=111 // pred_region
          %716 = dma.done [#allocation9], 32
        $region128: #{tpu_custom_call.1} parent=111 // pred_fallthru
          _
        // Predicated region
        $region129: #{tpu_custom_call.1} parent=111 // pred_check
          %p717 = pneg %p376
        $region130: #{tpu_custom_call.1} parent=111 // pred_check_branch
          %719 = sbr.rel (%p717) target = $region132
        $region131: #{tpu_custom_call.1} parent=111 // pred_region
          %720 = dma.done [#allocation9], 32
        $region132: #{tpu_custom_call.1} parent=111 // pred_fallthru
          _
        %s721 = smul.u32 16, %s40
        %p722 = scmp.lt.s32.totalorder %s721, 31
        %s723 = scalar_select %p722, %s721, 31
        %s724 = smul.addr %s723, 2
        %s725 = smul.addr %s724, 4
        %s726 = scalar_lea.vmem %s0, %s725
        %p727 = pneg %p61
        %p728 = pneg %p58
        %p729 = pneg %p82
        %p730 = pneg %p79
        %p731 = pneg %p103
        %p732 = pneg %p100
        %p733 = pneg %p124
        %p734 = pneg %p121
        %p735 = pneg %p145
        %p736 = pneg %p142
        %p737 = pneg %p166
        %p738 = pneg %p163
        %p739 = pneg %p187
        %p740 = pneg %p184
        %p741 = pneg %p208
        %p742 = pneg %p205
        %p743 = pneg %p229
        %p744 = pneg %p226
        %p745 = pneg %p250
        %p746 = pneg %p247
        %p747 = pneg %p271
        %p748 = pneg %p268
        %p749 = pneg %p292
        %p750 = pneg %p289
        %p751 = pneg %p313
        %p752 = pneg %p310
        %p753 = pneg %p334
        %p754 = pneg %p331
        %p755 = pneg %p355
        %p756 = pneg %p352
        %p757 = pneg %p376
        %p758 = pneg %p373
        %p759 = pneg %p397
        %p760 = pneg %p394
        %p761 = pneg %p418
        %p762 = pneg %p415
        %p763 = pneg %p439
        %p764 = pneg %p436
        %p765 = pneg %p460
        %p766 = pneg %p457
        %p767 = pneg %p481
        %p768 = pneg %p478
        %p769 = pneg %p502
        %p770 = pneg %p499
        %p771 = pneg %p523
        %p772 = pneg %p520
        %p773 = pneg %p549
        %p774 = pneg %p546
        %s775 = sand.u32 %s536, 1
        %s776 = scalar_lea.sflag [#allocation4], %s775
        %s777 = sand.u32 %s536, 1
        %s778 = smul.addr %s777, 16
        %s779 = scalar_lea.vmem [#allocation11], %s778
        %s780 = smul.u32 16, %s40
        %p781 = scmp.lt.s32.totalorder %s780, 31
        %s782 = scalar_select %p781, %s780, 31
        %s783 = smul.addr %s782, 2
        %s784 = smul.addr %s783, 4
        %s785 = scalar_lea.vmem %s0, %s784
        %s786 = smul.u32 16, %s40
        %s787 = smul.u32 2, %s40
        %v789 = vld [vmem:[%s785] sm:$0xff]
        %v790 = vld [vmem:[%s785 + $0x8] sm:$0xff]
        %v791 = vld [vmem:[%s785 + $0x10] sm:$0xff]
        %v792 = vld [vmem:[%s785 + $0x18] sm:$0xff]
        %v793 = vld [vmem:[%s785 + $0x20] sm:$0xff]
        %v794 = vld [vmem:[%s785 + $0x28] sm:$0xff]
        %v795 = vld [vmem:[%s785 + $0x30] sm:$0xff]
        %v796 = vld [vmem:[%s785 + $0x38] sm:$0xff]
        %v797 = vld [vmem:[%s785 + $0x40] sm:$0xff]
        %v798 = vld [vmem:[%s785 + $0x48] sm:$0xff]
        %v799 = vld [vmem:[%s785 + $0x50] sm:$0xff]
        %v800 = vld [vmem:[%s785 + $0x58] sm:$0xff]
        %v801 = vld [vmem:[%s785 + $0x60] sm:$0xff]
        %v802 = vld [vmem:[%s785 + $0x68] sm:$0xff]
        %v803 = vld [vmem:[%s785 + $0x70] sm:$0xff]
        %v804 = vld [vmem:[%s785 + $0x78] sm:$0xff]
        %v805 = vld [vmem:[%s1] sm:$0xf]
        %v806 = vld [vmem:[%s1 + $0x4] sm:$0xf]
        %v807 = vld [vmem:[%s1 + $0x8] sm:$0xf]
        %v808 = vld [vmem:[%s1 + $0xc] sm:$0xf]
        %v809 = vld [vmem:[%s1 + $0x10] sm:$0xf]
        %v810 = vld [vmem:[%s1 + $0x14] sm:$0xf]
        %v811 = vld [vmem:[%s1 + $0x18] sm:$0xf]
        %v812 = vld [vmem:[%s1 + $0x1c] sm:$0xf]
        %v813 = vld [vmem:[%s1 + $0x20] sm:$0xf]
        %v814 = vld [vmem:[%s1 + $0x24] sm:$0xf]
        %v815 = vld [vmem:[%s1 + $0x28] sm:$0xf]
        %v816 = vld [vmem:[%s1 + $0x2c] sm:$0xf]
        %v817 = vld [vmem:[%s1 + $0x30] sm:$0xf]
        %v818 = vld [vmem:[%s1 + $0x34] sm:$0xf]
        %v819 = vld [vmem:[%s1 + $0x38] sm:$0xf]
        %v820 = vld [vmem:[%s1 + $0x3c] sm:$0xf]
        %v821 = vld [vmem:[%s1 + $0x40] sm:$0xf]
        %v822 = vld [vmem:[%s1 + $0x44] sm:$0xf]
        %v823 = vld [vmem:[%s1 + $0x48] sm:$0xf]
        %v824 = vld [vmem:[%s1 + $0x4c] sm:$0xf]
        %v825 = vld [vmem:[%s1 + $0x50] sm:$0xf]
        %v826 = vld [vmem:[%s1 + $0x54] sm:$0xf]
        %v827 = vld [vmem:[%s1 + $0x58] sm:$0xf]
        %v828 = vld [vmem:[%s1 + $0x5c] sm:$0xf]
        %v829 = vld [vmem:[%s2] sm:$0xff]
        %v830 = vld [vmem:[%s2 + $0x8] sm:$0xff]
        %v831 = vld [vmem:[%s2 + $0x10] sm:$0xff]
        %v832 = vld [vmem:[%s2 + $0x18] sm:$0xff]
        %v833 = vld [vmem:[%s2 + $0x20] sm:$0xff]
        %v834 = vld [vmem:[%s2 + $0x28] sm:$0xff]
        %v835 = vld [vmem:[%s2 + $0x30] sm:$0xff]
        %v836 = vld [vmem:[%s2 + $0x38] sm:$0xff]
        %v837 = vld [vmem:[%s2 + $0x40] sm:$0xff]
        %v838 = vld [vmem:[%s2 + $0x48] sm:$0xff]
        %v839 = vld [vmem:[%s2 + $0x50] sm:$0xff]
        %v840 = vld [vmem:[%s2 + $0x58] sm:$0xff]
        %v841 = vld [vmem:[%s2 + $0x60] sm:$0xff]
        %v842 = vld [vmem:[%s2 + $0x68] sm:$0xff]
        %v843 = vld [vmem:[%s2 + $0x70] sm:$0xff]
        %v844 = vld [vmem:[%s2 + $0x78] sm:$0xff]
        %v861 = vunpack.c.l.b16 %v789
        %v862 = vunpack.c.h.b16 %v789
        %v863 = vunpack.c.l.b16 %v790
        %v864 = vunpack.c.h.b16 %v790
        %v865 = vunpack.c.l.b16 %v791
        %v866 = vunpack.c.h.b16 %v791
        %v867 = vunpack.c.l.b16 %v792
        %v868 = vunpack.c.h.b16 %v792
        %v869 = vunpack.c.l.b16 %v793
        %v870 = vunpack.c.h.b16 %v793
        %v871 = vunpack.c.l.b16 %v794
        %v872 = vunpack.c.h.b16 %v794
        %v873 = vunpack.c.l.b16 %v795
        %v874 = vunpack.c.h.b16 %v795
        %v875 = vunpack.c.l.b16 %v796
        %v876 = vunpack.c.h.b16 %v796
        %v877 = vunpack.c.l.b16 %v797
        %v878 = vunpack.c.h.b16 %v797
        %v879 = vunpack.c.l.b16 %v798
        %v880 = vunpack.c.h.b16 %v798
        %v881 = vunpack.c.l.b16 %v799
        %v882 = vunpack.c.h.b16 %v799
        %v883 = vunpack.c.l.b16 %v800
        %v884 = vunpack.c.h.b16 %v800
        %v885 = vunpack.c.l.b16 %v801
        %v886 = vunpack.c.h.b16 %v801
        %v887 = vunpack.c.l.b16 %v802
        %v888 = vunpack.c.h.b16 %v802
        %v889 = vunpack.c.l.b16 %v803
        %v890 = vunpack.c.h.b16 %v803
        %v891 = vunpack.c.l.b16 %v804
        %v892 = vunpack.c.h.b16 %v804
        %v893 = vpack.c.b16 %v863, %v861
        %v894 = vpack.c.b16 %v864, %v862
        %v895 = vpack.c.b16 %v867, %v865
        %v896 = vpack.c.b16 %v868, %v866
        %v897 = vpack.c.b16 %v871, %v869
        %v898 = vpack.c.b16 %v872, %v870
        %v899 = vpack.c.b16 %v875, %v873
        %v900 = vpack.c.b16 %v876, %v874
        %v901 = vpack.c.b16 %v879, %v877
        %v902 = vpack.c.b16 %v880, %v878
        %v903 = vpack.c.b16 %v883, %v881
        %v904 = vpack.c.b16 %v884, %v882
        %v905 = vpack.c.b16 %v887, %v885
        %v906 = vpack.c.b16 %v888, %v886
        %v907 = vpack.c.b16 %v891, %v889
        %v908 = vpack.c.b16 %v892, %v890
        %v941 = vunpack.c.l.b16 %v805
        %v942 = vunpack.c.l.b16 %v806
        %v943 = vunpack.c.l.b16 %v807
        %v944 = vunpack.c.l.b16 %v808
        %v945 = vunpack.c.l.b16 %v809
        %v946 = vunpack.c.l.b16 %v810
        %v947 = vunpack.c.l.b16 %v811
        %v948 = vunpack.c.l.b16 %v812
        %v949 = vunpack.c.l.b16 %v813
        %v950 = vunpack.c.l.b16 %v814
        %v951 = vunpack.c.l.b16 %v815
        %v952 = vunpack.c.l.b16 %v816
        %v953 = vunpack.c.l.b16 %v817
        %v954 = vunpack.c.l.b16 %v818
        %v955 = vunpack.c.l.b16 %v819
        %v956 = vunpack.c.l.b16 %v820
        %v957 = vunpack.c.l.b16 %v821
        %v958 = vunpack.c.l.b16 %v822
        %v959 = vunpack.c.l.b16 %v823
        %v960 = vunpack.c.l.b16 %v824
        %v961 = vunpack.c.l.b16 %v825
        %v962 = vunpack.c.l.b16 %v826
        %v963 = vunpack.c.l.b16 %v827
        %v964 = vunpack.c.l.b16 %v828
        %v965 = vpack.c.b16 %v942, %v941
        %v966 = vpack.c.b16 %v944, %v943
        %v967 = vpack.c.b16 %v946, %v945
        %v968 = vpack.c.b16 %v948, %v947
        %v969 = vpack.c.b16 %v950, %v949
        %v970 = vpack.c.b16 %v952, %v951
        %v971 = vpack.c.b16 %v954, %v953
        %v972 = vpack.c.b16 %v956, %v955
        %v973 = vpack.c.b16 %v958, %v957
        %v974 = vpack.c.b16 %v960, %v959
        %v975 = vpack.c.b16 %v962, %v961
        %v976 = vpack.c.b16 %v964, %v963
        %vm989 = vcmask 523264
        %v991 = vsel %vm989, %v894, 0
        %v994 = vsel %vm989, %v896, 0
        %v997 = vsel %vm989, %v898, 0
        %v1000 = vsel %vm989, %v900, 0
        %v1003 = vsel %vm989, %v902, 0
        %v1006 = vsel %vm989, %v904, 0
        %v1009 = vsel %vm989, %v906, 0
        %v1012 = vsel %vm989, %v908, 0
        %1014 = vmatprep.subr.bf16.mxu0 0
        %1015 = vmatpush1.bf16.msra.mxu0 %v965
        %1016 = vmatprep.subr.bf16.mxu0 0
        %1017 = vmatpush1.bf16.msra.mxu0 %v966
        %1018 = vmatprep.subr.bf16.mxu0 0
        %1019 = vmatpush1.bf16.msra.mxu0 %v967
        %1020 = vmatprep.subr.bf16.mxu0 0
        %1021 = vmatpush1.bf16.msra.mxu0 %v968
        %1022 = vmatprep.subr.bf16.mxu0 0
        %1023 = vmatpush1.bf16.msra.mxu0 %v969
        %1024 = vmatprep.subr.bf16.mxu0 0
        %1025 = vmatpush1.bf16.msra.mxu0 %v970
        %1026 = vmatprep.subr.bf16.mxu0 0
        %1027 = vmatpush1.bf16.msra.mxu0 %v971
        %1028 = vmatprep.subr.bf16.mxu0 0
        %1029 = vmatpush1.bf16.msra.mxu0 %v972
        %1030 = vmatprep.subr.bf16.mxu0 0
        %1031 = vmatpush1.bf16.msra.mxu0 %v973
        %1032 = vmatprep.subr.bf16.mxu0 0
        %1033 = vmatpush1.bf16.msra.mxu0 %v974
        %1034 = vmatprep.subr.bf16.mxu0 0
        %1035 = vmatpush1.bf16.msra.mxu0 %v975
        %1036 = vmatprep.subr.bf16.mxu0 0
        %1037 = vmatpush1.bf16.msra.mxu0 %v976
        %1038 = vmatprep.subr.bf16.mxu0 0
        %1039 = vmatpush1.bf16.msra.mxu0 0
        %1040 = vmatprep.subr.bf16.mxu0 0
        %1041 = vmatpush1.bf16.msra.mxu0 0
        %1042 = vmatprep.subr.bf16.mxu0 0
        %1043 = vmatpush1.bf16.msra.mxu0 0
        %1044 = vmatprep.subr.bf16.mxu0 0
        %1045 = vmatpush1.bf16.msra.mxu0 0
        %1046 = vmatprep.mubr.bf16.mxu0 %v991
        %1047 = vmatmul.mubr.bf16.gmra.mrb[0].mxu0 %v893
        %v1048 = vpop.f32.mrb[0].mxu0
        %v1049 = vadd.f32 %v829, %v1048
        %v1050 = vpop.f32.mrb[0].mxu0
        %v1051 = vpop.f32.mrb[0].mxu0
        %v1052 = vadd.f32 %v830, %v1051
        %v1053 = vpop.f32.mrb[0].mxu0
        %1054 = vmatprep.mubr.bf16.mxu0 %v994
        %1055 = vmatmul.mubr.bf16.gmra.mrb[0].mxu0 %v895
        %v1056 = vpop.f32.mrb[0].mxu0
        %v1057 = vadd.f32 %v831, %v1056
        %v1058 = vpop.f32.mrb[0].mxu0
        %v1059 = vpop.f32.mrb[0].mxu0
        %v1060 = vadd.f32 %v832, %v1059
        %v1061 = vpop.f32.mrb[0].mxu0
        %1062 = vmatprep.mubr.bf16.mxu0 %v997
        %1063 = vmatmul.mubr.bf16.gmra.mrb[0].mxu0 %v897
        %v1064 = vpop.f32.mrb[0].mxu0
        %v1065 = vadd.f32 %v833, %v1064
        %v1066 = vpop.f32.mrb[0].mxu0
        %v1067 = vpop.f32.mrb[0].mxu0
        %v1068 = vadd.f32 %v834, %v1067
        %v1069 = vpop.f32.mrb[0].mxu0
        %1070 = vmatprep.mubr.bf16.mxu0 %v1000
        %1071 = vmatmul.mubr.bf16.gmra.mrb[0].mxu0 %v899
        %v1072 = vpop.f32.mrb[0].mxu0
        %v1073 = vadd.f32 %v835, %v1072
        %v1074 = vpop.f32.mrb[0].mxu0
        %v1075 = vpop.f32.mrb[0].mxu0
        %v1076 = vadd.f32 %v836, %v1075
        %v1077 = vpop.f32.mrb[0].mxu0
        %1078 = vmatprep.mubr.bf16.mxu0 %v1003
        %1079 = vmatmul.mubr.bf16.gmra.mrb[0].mxu0 %v901
        %v1080 = vpop.f32.mrb[0].mxu0
        %v1081 = vadd.f32 %v837, %v1080
        %v1082 = vpop.f32.mrb[0].mxu0
        %v1083 = vpop.f32.mrb[0].mxu0
        %v1084 = vadd.f32 %v838, %v1083
        %v1085 = vpop.f32.mrb[0].mxu0
        %1086 = vmatprep.mubr.bf16.mxu0 %v1006
        %1087 = vmatmul.mubr.bf16.gmra.mrb[0].mxu0 %v903
        %v1088 = vpop.f32.mrb[0].mxu0
        %v1089 = vadd.f32 %v839, %v1088
        %v1090 = vpop.f32.mrb[0].mxu0
        %v1091 = vpop.f32.mrb[0].mxu0
        %v1092 = vadd.f32 %v840, %v1091
        %v1093 = vpop.f32.mrb[0].mxu0
        %1094 = vmatprep.mubr.bf16.mxu0 %v1009
        %1095 = vmatmul.mubr.bf16.gmra.mrb[0].mxu0 %v905
        %v1096 = vpop.f32.mrb[0].mxu0
        %v1097 = vadd.f32 %v841, %v1096
        %v1098 = vpop.f32.mrb[0].mxu0
        %v1099 = vpop.f32.mrb[0].mxu0
        %v1100 = vadd.f32 %v842, %v1099
        %v1101 = vpop.f32.mrb[0].mxu0
        %1102 = vmatprep.mubr.bf16.mxu0 %v1012
        %1103 = vmatmul.mubr.bf16.gmra.mrb[0].mxu0 %v907
        %v1104 = vpop.f32.mrb[0].mxu0
        %v1105 = vadd.f32 %v843, %v1104
        %v1106 = vpop.f32.mrb[0].mxu0
        %v1107 = vpop.f32.mrb[0].mxu0
        %v1108 = vadd.f32 %v844, %v1107
        %v1109 = vpop.f32.mrb[0].mxu0
        %1110 = vdwg.mxu0
        %v1111 = vld [vmem:[%s3] sm:$0x1]
        %v1112 = vld [vmem:[%s4] sm:$0x1]
        %vm1113 = vcmask 261120
        %v1114 = vsel %vm1113, %v1049, 0.0
        %1115 = vadd.xlane.f32.xlu0 %v1114
        %v1116 = vpop.xlane.xlu0 %1115
        %v1117 = vsel %vm1113, %v1052, 0.0
        %1118 = vadd.xlane.f32.xlu0 %v1117
        %v1119 = vpop.xlane.xlu0 %1118
        %v1120 = vsel %vm1113, %v1057, 0.0
        %1121 = vadd.xlane.f32.xlu0 %v1120
        %v1122 = vpop.xlane.xlu0 %1121
        %v1123 = vsel %vm1113, %v1060, 0.0
        %1124 = vadd.xlane.f32.xlu0 %v1123
        %v1125 = vpop.xlane.xlu0 %1124
        %v1126 = vsel %vm1113, %v1065, 0.0
        %1127 = vadd.xlane.f32.xlu0 %v1126
        %v1128 = vpop.xlane.xlu0 %1127
        %v1129 = vsel %vm1113, %v1068, 0.0
        %1130 = vadd.xlane.f32.xlu0 %v1129
        %v1131 = vpop.xlane.xlu0 %1130
        %v1132 = vsel %vm1113, %v1073, 0.0
        %1133 = vadd.xlane.f32.xlu0 %v1132
        %v1134 = vpop.xlane.xlu0 %1133
        %v1135 = vsel %vm1113, %v1076, 0.0
        %1136 = vadd.xlane.f32.xlu0 %v1135
        %v1137 = vpop.xlane.xlu0 %1136
        %v1138 = vsel %vm1113, %v1081, 0.0
        %1139 = vadd.xlane.f32.xlu0 %v1138
        %v1140 = vpop.xlane.xlu0 %1139
        %v1141 = vsel %vm1113, %v1084, 0.0
        %1142 = vadd.xlane.f32.xlu0 %v1141
        %v1143 = vpop.xlane.xlu0 %1142
        %v1144 = vsel %vm1113, %v1089, 0.0
        %1145 = vadd.xlane.f32.xlu0 %v1144
        %v1146 = vpop.xlane.xlu0 %1145
        %v1147 = vsel %vm1113, %v1092, 0.0
        %1148 = vadd.xlane.f32.xlu0 %v1147
        %v1149 = vpop.xlane.xlu0 %1148
        %v1150 = vsel %vm1113, %v1097, 0.0
        %1151 = vadd.xlane.f32.xlu0 %v1150
        %v1152 = vpop.xlane.xlu0 %1151
        %v1153 = vsel %vm1113, %v1100, 0.0
        %1154 = vadd.xlane.f32.xlu0 %v1153
        %v1155 = vpop.xlane.xlu0 %1154
        %v1156 = vsel %vm1113, %v1105, 0.0
        %1157 = vadd.xlane.f32.xlu0 %v1156
        %v1158 = vpop.xlane.xlu0 %1157
        %v1159 = vsel %vm1113, %v1108, 0.0
        %1160 = vadd.xlane.f32.xlu0 %v1159
        %v1161 = vpop.xlane.xlu0 %1160
        %v1162 = vrcp.pop 32.0
        %v1163 = vmul.f32 %v1116, %v1162
        %v1164 = vmul.f32 %v1119, %v1162
        %v1165 = vmul.f32 %v1122, %v1162
        %v1166 = vmul.f32 %v1125, %v1162
        %v1167 = vmul.f32 %v1128, %v1162
        %v1168 = vmul.f32 %v1131, %v1162
        %v1169 = vmul.f32 %v1134, %v1162
        %v1170 = vmul.f32 %v1137, %v1162
        %v1171 = vmul.f32 %v1140, %v1162
        %v1172 = vmul.f32 %v1143, %v1162
        %v1173 = vmul.f32 %v1146, %v1162
        %v1174 = vmul.f32 %v1149, %v1162
        %v1175 = vmul.f32 %v1152, %v1162
        %v1176 = vmul.f32 %v1155, %v1162
        %v1177 = vmul.f32 %v1158, %v1162
        %v1178 = vmul.f32 %v1161, %v1162
        %v1179 = vsub.f32 %v1049, %v1163
        %v1180 = vsub.f32 %v1052, %v1164
        %v1181 = vsub.f32 %v1057, %v1165
        %v1182 = vsub.f32 %v1060, %v1166
        %v1183 = vsub.f32 %v1065, %v1167
        %v1184 = vsub.f32 %v1068, %v1168
        %v1185 = vsub.f32 %v1073, %v1169
        %v1186 = vsub.f32 %v1076, %v1170
        %v1187 = vsub.f32 %v1081, %v1171
        %v1188 = vsub.f32 %v1084, %v1172
        %v1189 = vsub.f32 %v1089, %v1173
        %v1190 = vsub.f32 %v1092, %v1174
        %v1191 = vsub.f32 %v1097, %v1175
        %v1192 = vsub.f32 %v1100, %v1176
        %v1193 = vsub.f32 %v1105, %v1177
        %v1194 = vsub.f32 %v1108, %v1178
        %v1195 = vmul.f32 %v1179, %v1179
        %v1196 = vmul.f32 %v1180, %v1180
        %v1197 = vmul.f32 %v1181, %v1181
        %v1198 = vmul.f32 %v1182, %v1182
        %v1199 = vmul.f32 %v1183, %v1183
        %v1200 = vmul.f32 %v1184, %v1184
        %v1201 = vmul.f32 %v1185, %v1185
        %v1202 = vmul.f32 %v1186, %v1186
        %v1203 = vmul.f32 %v1187, %v1187
        %v1204 = vmul.f32 %v1188, %v1188
        %v1205 = vmul.f32 %v1189, %v1189
        %v1206 = vmul.f32 %v1190, %v1190
        %v1207 = vmul.f32 %v1191, %v1191
        %v1208 = vmul.f32 %v1192, %v1192
        %v1209 = vmul.f32 %v1193, %v1193
        %v1210 = vmul.f32 %v1194, %v1194
        %v1211 = vsel %vm1113, %v1195, 0.0
        %1212 = vadd.xlane.f32.xlu0 %v1211
        %v1213 = vpop.xlane.xlu0 %1212
        %v1214 = vsel %vm1113, %v1196, 0.0
        %1215 = vadd.xlane.f32.xlu0 %v1214
        %v1216 = vpop.xlane.xlu0 %1215
        %v1217 = vsel %vm1113, %v1197, 0.0
        %1218 = vadd.xlane.f32.xlu0 %v1217
        %v1219 = vpop.xlane.xlu0 %1218
        %v1220 = vsel %vm1113, %v1198, 0.0
        %1221 = vadd.xlane.f32.xlu0 %v1220
        %v1222 = vpop.xlane.xlu0 %1221
        %v1223 = vsel %vm1113, %v1199, 0.0
        %1224 = vadd.xlane.f32.xlu0 %v1223
        %v1225 = vpop.xlane.xlu0 %1224
        %v1226 = vsel %vm1113, %v1200, 0.0
        %1227 = vadd.xlane.f32.xlu0 %v1226
        %v1228 = vpop.xlane.xlu0 %1227
        %v1229 = vsel %vm1113, %v1201, 0.0
        %1230 = vadd.xlane.f32.xlu0 %v1229
        %v1231 = vpop.xlane.xlu0 %1230
        %v1232 = vsel %vm1113, %v1202, 0.0
        %1233 = vadd.xlane.f32.xlu0 %v1232
        %v1234 = vpop.xlane.xlu0 %1233
        %v1235 = vsel %vm1113, %v1203, 0.0
        %1236 = vadd.xlane.f32.xlu0 %v1235
        %v1237 = vpop.xlane.xlu0 %1236
        %v1238 = vsel %vm1113, %v1204, 0.0
        %1239 = vadd.xlane.f32.xlu0 %v1238
        %v1240 = vpop.xlane.xlu0 %1239
        %v1241 = vsel %vm1113, %v1205, 0.0
        %1242 = vadd.xlane.f32.xlu0 %v1241
        %v1243 = vpop.xlane.xlu0 %1242
        %v1244 = vsel %vm1113, %v1206, 0.0
        %1245 = vadd.xlane.f32.xlu0 %v1244
        %v1246 = vpop.xlane.xlu0 %1245
        %v1247 = vsel %vm1113, %v1207, 0.0
        %1248 = vadd.xlane.f32.xlu0 %v1247
        %v1249 = vpop.xlane.xlu0 %1248
        %v1250 = vsel %vm1113, %v1208, 0.0
        %1251 = vadd.xlane.f32.xlu0 %v1250
        %v1252 = vpop.xlane.xlu0 %1251
        %v1253 = vsel %vm1113, %v1209, 0.0
        %1254 = vadd.xlane.f32.xlu0 %v1253
        %v1255 = vpop.xlane.xlu0 %1254
        %v1256 = vsel %vm1113, %v1210, 0.0
        %1257 = vadd.xlane.f32.xlu0 %v1256
        %v1258 = vpop.xlane.xlu0 %1257
        %v1259 = vmul.f32 %v1213, %v1162
        %v1260 = vmul.f32 %v1216, %v1162
        %v1261 = vmul.f32 %v1219, %v1162
        %v1262 = vmul.f32 %v1222, %v1162
        %v1263 = vmul.f32 %v1225, %v1162
        %v1264 = vmul.f32 %v1228, %v1162
        %v1265 = vmul.f32 %v1231, %v1162
        %v1266 = vmul.f32 %v1234, %v1162
        %v1267 = vmul.f32 %v1237, %v1162
        %v1268 = vmul.f32 %v1240, %v1162
        %v1269 = vmul.f32 %v1243, %v1162
        %v1270 = vmul.f32 %v1246, %v1162
        %v1271 = vmul.f32 %v1249, %v1162
        %v1272 = vmul.f32 %v1252, %v1162
        %v1273 = vmul.f32 %v1255, %v1162
        %v1274 = vmul.f32 %v1258, %v1162
        %v1275 = vadd.f32 %v1259, 1e-06
        %v1276 = vadd.f32 %v1260, 1e-06
        %v1277 = vadd.f32 %v1261, 1e-06
        %v1278 = vadd.f32 %v1262, 1e-06
        %v1279 = vadd.f32 %v1263, 1e-06
        %v1280 = vadd.f32 %v1264, 1e-06
        %v1281 = vadd.f32 %v1265, 1e-06
        %v1282 = vadd.f32 %v1266, 1e-06
        %v1283 = vadd.f32 %v1267, 1e-06
        %v1284 = vadd.f32 %v1268, 1e-06
        %v1285 = vadd.f32 %v1269, 1e-06
        %v1286 = vadd.f32 %v1270, 1e-06
        %v1287 = vadd.f32 %v1271, 1e-06
        %v1288 = vadd.f32 %v1272, 1e-06
        %v1289 = vadd.f32 %v1273, 1e-06
        %v1290 = vadd.f32 %v1274, 1e-06
        %v1291 = vrsqrt.pop %v1275
        %v1292 = vrsqrt.pop %v1276
        %v1293 = vrsqrt.pop %v1277
        %v1294 = vrsqrt.pop %v1278
        %v1295 = vrsqrt.pop %v1279
        %v1296 = vrsqrt.pop %v1280
        %v1297 = vrsqrt.pop %v1281
        %v1298 = vrsqrt.pop %v1282
        %v1299 = vrsqrt.pop %v1283
        %v1300 = vrsqrt.pop %v1284
        %v1301 = vrsqrt.pop %v1285
        %v1302 = vrsqrt.pop %v1286
        %v1303 = vrsqrt.pop %v1287
        %v1304 = vrsqrt.pop %v1288
        %v1305 = vrsqrt.pop %v1289
        %v1306 = vrsqrt.pop %v1290
        %v1307 = vmul.f32 %v1179, %v1291
        %v1308 = vmul.f32 %v1180, %v1292
        %v1309 = vmul.f32 %v1181, %v1293
        %v1310 = vmul.f32 %v1182, %v1294
        %v1311 = vmul.f32 %v1183, %v1295
        %v1312 = vmul.f32 %v1184, %v1296
        %v1313 = vmul.f32 %v1185, %v1297
        %v1314 = vmul.f32 %v1186, %v1298
        %v1315 = vmul.f32 %v1187, %v1299
        %v1316 = vmul.f32 %v1188, %v1300
        %v1317 = vmul.f32 %v1189, %v1301
        %v1318 = vmul.f32 %v1190, %v1302
        %v1319 = vmul.f32 %v1191, %v1303
        %v1320 = vmul.f32 %v1192, %v1304
        %v1321 = vmul.f32 %v1193, %v1305
        %v1322 = vmul.f32 %v1194, %v1306
        %v1324 = vlaneseq
        %v1325 = vshrl.u32 %v1324, 7
        %v1326 = vsub.s32 0, %v1325
        %v1327 = vrot.slane %v1111, %v1326
        %v1329 = vmul.f32 %v1307, %v1327
        %v1330 = vmul.f32 %v1308, %v1327
        %v1331 = vmul.f32 %v1309, %v1327
        %v1332 = vmul.f32 %v1310, %v1327
        %v1333 = vmul.f32 %v1311, %v1327
        %v1334 = vmul.f32 %v1312, %v1327
        %v1335 = vmul.f32 %v1313, %v1327
        %v1336 = vmul.f32 %v1314, %v1327
        %v1337 = vmul.f32 %v1315, %v1327
        %v1338 = vmul.f32 %v1316, %v1327
        %v1339 = vmul.f32 %v1317, %v1327
        %v1340 = vmul.f32 %v1318, %v1327
        %v1341 = vmul.f32 %v1319, %v1327
        %v1342 = vmul.f32 %v1320, %v1327
        %v1343 = vmul.f32 %v1321, %v1327
        %v1344 = vmul.f32 %v1322, %v1327
        %v1346 = vlaneseq
        %v1347 = vshrl.u32 %v1346, 7
        %v1348 = vsub.s32 0, %v1347
        %v1349 = vrot.slane %v1112, %v1348
        %v1351 = vadd.f32 %v1329, %v1349
        %v1352 = vadd.f32 %v1330, %v1349
        %v1353 = vadd.f32 %v1331, %v1349
        %v1354 = vadd.f32 %v1332, %v1349
        %v1355 = vadd.f32 %v1333, %v1349
        %v1356 = vadd.f32 %v1334, %v1349
        %v1357 = vadd.f32 %v1335, %v1349
        %v1358 = vadd.f32 %v1336, %v1349
        %v1359 = vadd.f32 %v1337, %v1349
        %v1360 = vadd.f32 %v1338, %v1349
        %v1361 = vadd.f32 %v1339, %v1349
        %v1362 = vadd.f32 %v1340, %v1349
        %v1363 = vadd.f32 %v1341, %v1349
        %v1364 = vadd.f32 %v1342, %v1349
        %v1365 = vadd.f32 %v1343, %v1349
        %v1366 = vadd.f32 %v1344, %v1349
        %v1367 = vpack.c.bf16 %v1352, %v1351
        %v1368 = vpack.c.bf16 %v1354, %v1353
        %v1369 = vpack.c.bf16 %v1356, %v1355
        %v1370 = vpack.c.bf16 %v1358, %v1357
        %v1371 = vpack.c.bf16 %v1360, %v1359
        %v1372 = vpack.c.bf16 %v1362, %v1361
        %v1373 = vpack.c.bf16 %v1364, %v1363
        %v1374 = vpack.c.bf16 %v1366, %v1365
        %v1375 = vld [vmem:[%s5] sm:$0xf]
        %v1376 = vld [vmem:[%s5 + $0x4] sm:$0xf]
        %v1377 = vld [vmem:[%s5 + $0x8] sm:$0xf]
        %v1378 = vld [vmem:[%s5 + $0xc] sm:$0xf]
        %v1379 = vld [vmem:[%s6] sm:$0x1]
        %v1381 = vlaneseq
        %v1382 = vshrl.u32 %v1381, 7
        %v1383 = vsub.s32 0, %v1382
        %v1384 = vrot.slane %v1379, %v1383
        %v1390 = vunpack.c.l.b16 %v1375
        %v1391 = vunpack.c.l.b16 %v1376
        %v1392 = vunpack.c.l.b16 %v1377
        %v1393 = vunpack.c.l.b16 %v1378
        %v1394 = vpack.c.b16 %v1391, %v1390
        %v1395 = vpack.c.b16 %v1393, %v1392
        %v1399 = vsel %vm1113, %v1367, 0
        %v1402 = vsel %vm1113, %v1368, 0
        %v1405 = vsel %vm1113, %v1369, 0
        %v1408 = vsel %vm1113, %v1370, 0
        %v1411 = vsel %vm1113, %v1371, 0
        %v1414 = vsel %vm1113, %v1372, 0
        %v1417 = vsel %vm1113, %v1373, 0
        %v1420 = vsel %vm1113, %v1374, 0
        %1422 = vmatprep.subr.bf16.mxu0 0
        %1423 = vmatpush1.bf16.msra.mxu0 %v1394
        %1424 = vmatprep.subr.bf16.mxu0 0
        %1425 = vmatpush1.bf16.msra.mxu0 %v1395
        %1426 = vmatprep.subr.bf16.mxu0 0
        %1427 = vmatpush1.bf16.msra.mxu0 0
        %1428 = vmatprep.subr.bf16.mxu0 0
        %1429 = vmatpush1.bf16.msra.mxu0 0
        %1430 = vmatprep.subr.bf16.mxu0 0
        %1431 = vmatpush1.bf16.msra.mxu0 0
        %1432 = vmatprep.subr.bf16.mxu0 0
        %1433 = vmatpush1.bf16.msra.mxu0 0
        %1434 = vmatprep.subr.bf16.mxu0 0
        %1435 = vmatpush1.bf16.msra.mxu0 0
        %1436 = vmatprep.subr.bf16.mxu0 0
        %1437 = vmatpush1.bf16.msra.mxu0 0
        %1438 = vmatprep.subr.bf16.mxu0 0
        %1439 = vmatpush1.bf16.msra.mxu0 0
        %1440 = vmatprep.subr.bf16.mxu0 0
        %1441 = vmatpush1.bf16.msra.mxu0 0
        %1442 = vmatprep.subr.bf16.mxu0 0
        %1443 = vmatpush1.bf16.msra.mxu0 0
        %1444 = vmatprep.subr.bf16.mxu0 0
        %1445 = vmatpush1.bf16.msra.mxu0 0
        %1446 = vmatprep.subr.bf16.mxu0 0
        %1447 = vmatpush1.bf16.msra.mxu0 0
        %1448 = vmatprep.subr.bf16.mxu0 0
        %1449 = vmatpush1.bf16.msra.mxu0 0
        %1450 = vmatprep.subr.bf16.mxu0 0
        %1451 = vmatpush1.bf16.msra.mxu0 0
        %1452 = vmatprep.subr.bf16.mxu0 0
        %1453 = vmatpush1.bf16.msra.mxu0 0
        %1454 = vmatprep.mubr.bf16.mxu0 0
        %1455 = vmatmul.mubr.bf16.gmra.mrb[0].mxu0 %v1399
        %v1456 = vpop.f32.mrb[0].mxu0
        %v1457 = vadd.f32 %v1384, %v1456
        %v1458 = vpop.f32.mrb[0].mxu0
        %v1459 = vpop.f32.mrb[0].mxu0
        %v1460 = vadd.f32 %v1384, %v1459
        %v1461 = vpop.f32.mrb[0].mxu0
        %1462 = vmatprep.mubr.bf16.mxu0 0
        %1463 = vmatmul.mubr.bf16.gmra.mrb[0].mxu0 %v1402
        %v1464 = vpop.f32.mrb[0].mxu0
        %v1465 = vadd.f32 %v1384, %v1464
        %v1466 = vpop.f32.mrb[0].mxu0
        %v1467 = vpop.f32.mrb[0].mxu0
        %v1468 = vadd.f32 %v1384, %v1467
        %v1469 = vpop.f32.mrb[0].mxu0
        %1470 = vmatprep.mubr.bf16.mxu0 0
        %1471 = vmatmul.mubr.bf16.gmra.mrb[0].mxu0 %v1405
        %v1472 = vpop.f32.mrb[0].mxu0
        %v1473 = vadd.f32 %v1384, %v1472
        %v1474 = vpop.f32.mrb[0].mxu0
        %v1475 = vpop.f32.mrb[0].mxu0
        %v1476 = vadd.f32 %v1384, %v1475
        %v1477 = vpop.f32.mrb[0].mxu0
        %1478 = vmatprep.mubr.bf16.mxu0 0
        %1479 = vmatmul.mubr.bf16.gmra.mrb[0].mxu0 %v1408
        %v1480 = vpop.f32.mrb[0].mxu0
        %v1481 = vadd.f32 %v1384, %v1480
        %v1482 = vpop.f32.mrb[0].mxu0
        %v1483 = vpop.f32.mrb[0].mxu0
        %v1484 = vadd.f32 %v1384, %v1483
        %v1485 = vpop.f32.mrb[0].mxu0
        %1486 = vmatprep.mubr.bf16.mxu0 0
        %1487 = vmatmul.mubr.bf16.gmra.mrb[0].mxu0 %v1411
        %v1488 = vpop.f32.mrb[0].mxu0
        %v1489 = vadd.f32 %v1384, %v1488
        %v1490 = vpop.f32.mrb[0].mxu0
        %v1491 = vpop.f32.mrb[0].mxu0
        %v1492 = vadd.f32 %v1384, %v1491
        %v1493 = vpop.f32.mrb[0].mxu0
        %1494 = vmatprep.mubr.bf16.mxu0 0
        %1495 = vmatmul.mubr.bf16.gmra.mrb[0].mxu0 %v1414
        %v1496 = vpop.f32.mrb[0].mxu0
        %v1497 = vadd.f32 %v1384, %v1496
        %v1498 = vpop.f32.mrb[0].mxu0
        %v1499 = vpop.f32.mrb[0].mxu0
        %v1500 = vadd.f32 %v1384, %v1499
        %v1501 = vpop.f32.mrb[0].mxu0
        %1502 = vmatprep.mubr.bf16.mxu0 0
        %1503 = vmatmul.mubr.bf16.gmra.mrb[0].mxu0 %v1417
        %v1504 = vpop.f32.mrb[0].mxu0
        %v1505 = vadd.f32 %v1384, %v1504
        %v1506 = vpop.f32.mrb[0].mxu0
        %v1507 = vpop.f32.mrb[0].mxu0
        %v1508 = vadd.f32 %v1384, %v1507
        %v1509 = vpop.f32.mrb[0].mxu0
        %1510 = vmatprep.mubr.bf16.mxu0 0
        %1511 = vmatmul.mubr.bf16.gmra.mrb[0].mxu0 %v1420
        %v1512 = vpop.f32.mrb[0].mxu0
        %v1513 = vadd.f32 %v1384, %v1512
        %v1514 = vpop.f32.mrb[0].mxu0
        %v1515 = vpop.f32.mrb[0].mxu0
        %v1516 = vadd.f32 %v1384, %v1515
        %v1517 = vpop.f32.mrb[0].mxu0
        %1518 = vdwg.mxu0
        %v1519 = vld [vmem:[%s7] sm:$0xf]
        %v1520 = vld [vmem:[%s7 + $0x4] sm:$0xf]
        %v1521 = vld [vmem:[%s7 + $0x8] sm:$0xf]
        %v1522 = vld [vmem:[%s7 + $0xc] sm:$0xf]
        %v1527 = vunpack.c.l.b16 %v1519
        %v1528 = vunpack.c.l.b16 %v1520
        %v1529 = vunpack.c.l.b16 %v1521
        %v1530 = vunpack.c.l.b16 %v1522
        %v1531 = vpack.c.b16 %v1528, %v1527
        %v1532 = vpack.c.b16 %v1530, %v1529
        %1535 = vmatprep.subr.bf16.mxu0 0
        %1536 = vmatpush1.bf16.msra.mxu0 %v1531
        %1537 = vmatprep.subr.bf16.mxu0 0
        %1538 = vmatpush1.bf16.msra.mxu0 %v1532
        %1539 = vmatprep.subr.bf16.mxu0 0
        %1540 = vmatpush1.bf16.msra.mxu0 0
        %1541 = vmatprep.subr.bf16.mxu0 0
        %1542 = vmatpush1.bf16.msra.mxu0 0
        %1543 = vmatprep.subr.bf16.mxu0 0
        %1544 = vmatpush1.bf16.msra.mxu0 0
        %1545 = vmatprep.subr.bf16.mxu0 0
        %1546 = vmatpush1.bf16.msra.mxu0 0
        %1547 = vmatprep.subr.bf16.mxu0 0
        %1548 = vmatpush1.bf16.msra.mxu0 0
        %1549 = vmatprep.subr.bf16.mxu0 0
        %1550 = vmatpush1.bf16.msra.mxu0 0
        %1551 = vmatprep.subr.bf16.mxu0 0
        %1552 = vmatpush1.bf16.msra.mxu0 0
        %1553 = vmatprep.subr.bf16.mxu0 0
        %1554 = vmatpush1.bf16.msra.mxu0 0
        %1555 = vmatprep.subr.bf16.mxu0 0
        %1556 = vmatpush1.bf16.msra.mxu0 0
        %1557 = vmatprep.subr.bf16.mxu0 0
        %1558 = vmatpush1.bf16.msra.mxu0 0
        %1559 = vmatprep.subr.bf16.mxu0 0
        %1560 = vmatpush1.bf16.msra.mxu0 0
        %1561 = vmatprep.subr.bf16.mxu0 0
        %1562 = vmatpush1.bf16.msra.mxu0 0
        %1563 = vmatprep.subr.bf16.mxu0 0
        %1564 = vmatpush1.bf16.msra.mxu0 0
        %1565 = vmatprep.subr.bf16.mxu0 0
        %1566 = vmatpush1.bf16.msra.mxu0 0
        %1567 = vmatprep.mubr.bf16.mxu0 0
        %1568 = vmatmul.mubr.bf16.gmra.mrb[0].mxu0 %v1399
        %v1569 = vpop.f32.mrb[0].mxu0
        %v1570 = vadd.f32 0.0, %v1569
        %v1571 = vpop.f32.mrb[0].mxu0
        %v1572 = vpop.f32.mrb[0].mxu0
        %v1573 = vadd.f32 0.0, %v1572
        %v1574 = vpop.f32.mrb[0].mxu0
        %1575 = vmatprep.mubr.bf16.mxu0 0
        %1576 = vmatmul.mubr.bf16.gmra.mrb[0].mxu0 %v1402
        %v1577 = vpop.f32.mrb[0].mxu0
        %v1578 = vadd.f32 0.0, %v1577
        %v1579 = vpop.f32.mrb[0].mxu0
        %v1580 = vpop.f32.mrb[0].mxu0
        %v1581 = vadd.f32 0.0, %v1580
        %v1582 = vpop.f32.mrb[0].mxu0
        %1583 = vmatprep.mubr.bf16.mxu0 0
        %1584 = vmatmul.mubr.bf16.gmra.mrb[0].mxu0 %v1405
        %v1585 = vpop.f32.mrb[0].mxu0
        %v1586 = vadd.f32 0.0, %v1585
        %v1587 = vpop.f32.mrb[0].mxu0
        %v1588 = vpop.f32.mrb[0].mxu0
        %v1589 = vadd.f32 0.0, %v1588
        %v1590 = vpop.f32.mrb[0].mxu0
        %1591 = vmatprep.mubr.bf16.mxu0 0
        %1592 = vmatmul.mubr.bf16.gmra.mrb[0].mxu0 %v1408
        %v1593 = vpop.f32.mrb[0].mxu0
        %v1594 = vadd.f32 0.0, %v1593
        %v1595 = vpop.f32.mrb[0].mxu0
        %v1596 = vpop.f32.mrb[0].mxu0
        %v1597 = vadd.f32 0.0, %v1596
        %v1598 = vpop.f32.mrb[0].mxu0
        %1599 = vmatprep.mubr.bf16.mxu0 0
        %1600 = vmatmul.mubr.bf16.gmra.mrb[0].mxu0 %v1411
        %v1601 = vpop.f32.mrb[0].mxu0
        %v1602 = vadd.f32 0.0, %v1601
        %v1603 = vpop.f32.mrb[0].mxu0
        %v1604 = vpop.f32.mrb[0].mxu0
        %v1605 = vadd.f32 0.0, %v1604
        %v1606 = vpop.f32.mrb[0].mxu0
        %1607 = vmatprep.mubr.bf16.mxu0 0
        %1608 = vmatmul.mubr.bf16.gmra.mrb[0].mxu0 %v1414
        %v1609 = vpop.f32.mrb[0].mxu0
        %v1610 = vadd.f32 0.0, %v1609
        %v1611 = vpop.f32.mrb[0].mxu0
        %v1612 = vpop.f32.mrb[0].mxu0
        %v1613 = vadd.f32 0.0, %v1612
        %v1614 = vpop.f32.mrb[0].mxu0
        %1615 = vmatprep.mubr.bf16.mxu0 0
        %1616 = vmatmul.mubr.bf16.gmra.mrb[0].mxu0 %v1417
        %v1617 = vpop.f32.mrb[0].mxu0
        %v1618 = vadd.f32 0.0, %v1617
        %v1619 = vpop.f32.mrb[0].mxu0
        %v1620 = vpop.f32.mrb[0].mxu0
        %v1621 = vadd.f32 0.0, %v1620
        %v1622 = vpop.f32.mrb[0].mxu0
        %1623 = vmatprep.mubr.bf16.mxu0 0
        %1624 = vmatmul.mubr.bf16.gmra.mrb[0].mxu0 %v1420
        %v1625 = vpop.f32.mrb[0].mxu0
        %v1626 = vadd.f32 0.0, %v1625
        %v1627 = vpop.f32.mrb[0].mxu0
        %v1628 = vpop.f32.mrb[0].mxu0
        %v1629 = vadd.f32 0.0, %v1628
        %v1630 = vpop.f32.mrb[0].mxu0
        %1631 = vdwg.mxu0
        %v1632 = vld [vmem:[%s8] sm:$0xf]
        %v1633 = vld [vmem:[%s8 + $0x4] sm:$0xf]
        %v1634 = vld [vmem:[%s8 + $0x8] sm:$0xf]
        %v1635 = vld [vmem:[%s8 + $0xc] sm:$0xf]
        %v1636 = vld [vmem:[#allocation2] sm:$0x1]
        %v1638 = vlaneseq
        %v1639 = vshrl.u32 %v1638, 7
        %v1640 = vsub.s32 0, %v1639
        %v1641 = vrot.slane %v1636, %v1640
        %v1647 = vunpack.c.l.b16 %v1632
        %v1648 = vunpack.c.l.b16 %v1633
        %v1649 = vunpack.c.l.b16 %v1634
        %v1650 = vunpack.c.l.b16 %v1635
        %v1651 = vpack.c.b16 %v1648, %v1647
        %v1652 = vpack.c.b16 %v1650, %v1649
        %1655 = vmatprep.subr.bf16.mxu0 0
        %1656 = vmatpush1.bf16.msra.mxu0 %v1651
        %1657 = vmatprep.subr.bf16.mxu0 0
        %1658 = vmatpush1.bf16.msra.mxu0 %v1652
        %1659 = vmatprep.subr.bf16.mxu0 0
        %1660 = vmatpush1.bf16.msra.mxu0 0
        %1661 = vmatprep.subr.bf16.mxu0 0
        %1662 = vmatpush1.bf16.msra.mxu0 0
        %1663 = vmatprep.subr.bf16.mxu0 0
        %1664 = vmatpush1.bf16.msra.mxu0 0
        %1665 = vmatprep.subr.bf16.mxu0 0
        %1666 = vmatpush1.bf16.msra.mxu0 0
        %1667 = vmatprep.subr.bf16.mxu0 0
        %1668 = vmatpush1.bf16.msra.mxu0 0
        %1669 = vmatprep.subr.bf16.mxu0 0
        %1670 = vmatpush1.bf16.msra.mxu0 0
        %1671 = vmatprep.subr.bf16.mxu0 0
        %1672 = vmatpush1.bf16.msra.mxu0 0
        %1673 = vmatprep.subr.bf16.mxu0 0
        %1674 = vmatpush1.bf16.msra.mxu0 0
        %1675 = vmatprep.subr.bf16.mxu0 0
        %1676 = vmatpush1.bf16.msra.mxu0 0
        %1677 = vmatprep.subr.bf16.mxu0 0
        %1678 = vmatpush1.bf16.msra.mxu0 0
        %1679 = vmatprep.subr.bf16.mxu0 0
        %1680 = vmatpush1.bf16.msra.mxu0 0
        %1681 = vmatprep.subr.bf16.mxu0 0
        %1682 = vmatpush1.bf16.msra.mxu0 0
        %1683 = vmatprep.subr.bf16.mxu0 0
        %1684 = vmatpush1.bf16.msra.mxu0 0
        %1685 = vmatprep.subr.bf16.mxu0 0
        %1686 = vmatpush1.bf16.msra.mxu0 0
        %1687 = vmatprep.mubr.bf16.mxu0 0
        %1688 = vmatmul.mubr.bf16.gmra.mrb[0].mxu0 %v1399
        %v1689 = vpop.f32.mrb[0].mxu0
        %v1690 = vadd.f32 %v1641, %v1689
        %v1691 = vpop.f32.mrb[0].mxu0
        %v1692 = vpop.f32.mrb[0].mxu0
        %v1693 = vadd.f32 %v1641, %v1692
        %v1694 = vpop.f32.mrb[0].mxu0
        %1695 = vmatprep.mubr.bf16.mxu0 0
        %1696 = vmatmul.mubr.bf16.gmra.mrb[0].mxu0 %v1402
        %v1697 = vpop.f32.mrb[0].mxu0
        %v1698 = vadd.f32 %v1641, %v1697
        %v1699 = vpop.f32.mrb[0].mxu0
        %v1700 = vpop.f32.mrb[0].mxu0
        %v1701 = vadd.f32 %v1641, %v1700
        %v1702 = vpop.f32.mrb[0].mxu0
        %1703 = vmatprep.mubr.bf16.mxu0 0
        %1704 = vmatmul.mubr.bf16.gmra.mrb[0].mxu0 %v1405
        %v1705 = vpop.f32.mrb[0].mxu0
        %v1706 = vadd.f32 %v1641, %v1705
        %v1707 = vpop.f32.mrb[0].mxu0
        %v1708 = vpop.f32.mrb[0].mxu0
        %v1709 = vadd.f32 %v1641, %v1708
        %v1710 = vpop.f32.mrb[0].mxu0
        %1711 = vmatprep.mubr.bf16.mxu0 0
        %1712 = vmatmul.mubr.bf16.gmra.mrb[0].mxu0 %v1408
        %v1713 = vpop.f32.mrb[0].mxu0
        %v1714 = vadd.f32 %v1641, %v1713
        %v1715 = vpop.f32.mrb[0].mxu0
        %v1716 = vpop.f32.mrb[0].mxu0
        %v1717 = vadd.f32 %v1641, %v1716
        %v1718 = vpop.f32.mrb[0].mxu0
        %1719 = vmatprep.mubr.bf16.mxu0 0
        %1720 = vmatmul.mubr.bf16.gmra.mrb[0].mxu0 %v1411
        %v1721 = vpop.f32.mrb[0].mxu0
        %v1722 = vadd.f32 %v1641, %v1721
        %v1723 = vpop.f32.mrb[0].mxu0
        %v1724 = vpop.f32.mrb[0].mxu0
        %v1725 = vadd.f32 %v1641, %v1724
        %v1726 = vpop.f32.mrb[0].mxu0
        %1727 = vmatprep.mubr.bf16.mxu0 0
        %1728 = vmatmul.mubr.bf16.gmra.mrb[0].mxu0 %v1414
        %v1729 = vpop.f32.mrb[0].mxu0
        %v1730 = vadd.f32 %v1641, %v1729
        %v1731 = vpop.f32.mrb[0].mxu0
        %v1732 = vpop.f32.mrb[0].mxu0
        %v1733 = vadd.f32 %v1641, %v1732
        %v1734 = vpop.f32.mrb[0].mxu0
        %1735 = vmatprep.mubr.bf16.mxu0 0
        %1736 = vmatmul.mubr.bf16.gmra.mrb[0].mxu0 %v1417
        %v1737 = vpop.f32.mrb[0].mxu0
        %v1738 = vadd.f32 %v1641, %v1737
        %v1739 = vpop.f32.mrb[0].mxu0
        %v1740 = vpop.f32.mrb[0].mxu0
        %v1741 = vadd.f32 %v1641, %v1740
        %v1742 = vpop.f32.mrb[0].mxu0
        %1743 = vmatprep.mubr.bf16.mxu0 0
        %1744 = vmatmul.mubr.bf16.gmra.mrb[0].mxu0 %v1420
        %v1745 = vpop.f32.mrb[0].mxu0
        %v1746 = vadd.f32 %v1641, %v1745
        %v1747 = vpop.f32.mrb[0].mxu0
        %v1748 = vpop.f32.mrb[0].mxu0
        %v1749 = vadd.f32 %v1641, %v1748
        %v1750 = vpop.f32.mrb[0].mxu0
        %1751 = vdwg.mxu0
        %v1752 = vpack.c.bf16 %v1460, %v1457
        %v1753 = vpack.c.bf16 %v1468, %v1465
        %v1754 = vpack.c.bf16 %v1476, %v1473
        %v1755 = vpack.c.bf16 %v1484, %v1481
        %v1756 = vpack.c.bf16 %v1492, %v1489
        %v1757 = vpack.c.bf16 %v1500, %v1497
        %v1758 = vpack.c.bf16 %v1508, %v1505
        %v1759 = vpack.c.bf16 %v1516, %v1513
        %v1760 = vpack.c.bf16 %v1573, %v1570
        %v1761 = vpack.c.bf16 %v1581, %v1578
        %v1762 = vpack.c.bf16 %v1589, %v1586
        %v1763 = vpack.c.bf16 %v1597, %v1594
        %v1764 = vpack.c.bf16 %v1605, %v1602
        %v1765 = vpack.c.bf16 %v1613, %v1610
        %v1766 = vpack.c.bf16 %v1621, %v1618
        %v1767 = vpack.c.bf16 %v1629, %v1626
        %v1768 = vld [vmem:[%s11] sm:$0xff]
        %v1769 = vld [vmem:[%s11 + $0x8] sm:$0xff]
        %v1770 = vld [vmem:[%s11 + $0x10] sm:$0xff]
        %v1771 = vld [vmem:[%s11 + $0x18] sm:$0xff]
        %v1772 = vld [vmem:[%s11 + $0x20] sm:$0xff]
        %v1773 = vld [vmem:[%s11 + $0x28] sm:$0xff]
        %v1774 = vld [vmem:[%s11 + $0x30] sm:$0xff]
        %v1775 = vld [vmem:[%s11 + $0x38] sm:$0xff]
        %v1776 = vld [vmem:[%s11 + $0x40] sm:$0xff]
        %v1777 = vld [vmem:[%s11 + $0x48] sm:$0xff]
        %v1778 = vld [vmem:[%s11 + $0x50] sm:$0xff]
        %v1779 = vld [vmem:[%s11 + $0x58] sm:$0xff]
        %v1780 = vld [vmem:[%s11 + $0x60] sm:$0xff]
        %v1781 = vld [vmem:[%s11 + $0x68] sm:$0xff]
        %v1782 = vld [vmem:[%s11 + $0x70] sm:$0xff]
        %v1783 = vld [vmem:[%s11 + $0x78] sm:$0xff]
        %vm1784 = vcmask 64512
        %v1786 = vsel %vm1784, %v1752, 0
        %v1789 = vsel %vm1784, %v1753, 0
        %v1792 = vsel %vm1784, %v1754, 0
        %v1795 = vsel %vm1784, %v1755, 0
        %v1798 = vsel %vm1784, %v1756, 0
        %v1801 = vsel %vm1784, %v1757, 0
        %v1804 = vsel %vm1784, %v1758, 0
        %v1807 = vsel %vm1784, %v1759, 0
        %v1810 = vsel %vm1784, %v1760, 0
        %v1813 = vsel %vm1784, %v1761, 0
        %v1816 = vsel %vm1784, %v1762, 0
        %v1819 = vsel %vm1784, %v1763, 0
        %v1822 = vsel %vm1784, %v1764, 0
        %v1825 = vsel %vm1784, %v1765, 0
        %v1828 = vsel %vm1784, %v1766, 0
        %v1831 = vsel %vm1784, %v1767, 0
        %1833 = vmatprep.subr.bf16.mxu0 0
        %1834 = vmatpush1.bf16.xpose.msra.mxu0 %v1810
        %1835 = vmatprep.subr.bf16.mxu0 0
        %1836 = vmatpush1.bf16.xpose.msra.mxu0 %v1813
        %1837 = vmatprep.subr.bf16.mxu0 0
        %1838 = vmatpush1.bf16.xpose.msra.mxu0 %v1816
        %1839 = vmatprep.subr.bf16.mxu0 0
        %1840 = vmatpush1.bf16.xpose.msra.mxu0 %v1819
        %1841 = vmatprep.subr.bf16.mxu0 0
        %1842 = vmatpush1.bf16.xpose.msra.mxu0 %v1822
        %1843 = vmatprep.subr.bf16.mxu0 0
        %1844 = vmatpush1.bf16.xpose.msra.mxu0 %v1825
        %1845 = vmatprep.subr.bf16.mxu0 0
        %1846 = vmatpush1.bf16.xpose.msra.mxu0 %v1828
        %1847 = vmatprep.subr.bf16.mxu0 0
        %1848 = vmatpush1.bf16.xpose.msra.mxu0 %v1831
        %1849 = vmatprep.subr.bf16.mxu0 0
        %1850 = vmatpush1.bf16.xpose.msra.mxu0 0
        %1851 = vmatprep.subr.bf16.mxu0 0
        %1852 = vmatpush1.bf16.xpose.msra.mxu0 0
        %1853 = vmatprep.subr.bf16.mxu0 0
        %1854 = vmatpush1.bf16.xpose.msra.mxu0 0
        %1855 = vmatprep.subr.bf16.mxu0 0
        %1856 = vmatpush1.bf16.xpose.msra.mxu0 0
        %1857 = vmatprep.subr.bf16.mxu0 0
        %1858 = vmatpush1.bf16.xpose.msra.mxu0 0
        %1859 = vmatprep.subr.bf16.mxu0 0
        %1860 = vmatpush1.bf16.xpose.msra.mxu0 0
        %1861 = vmatprep.subr.bf16.mxu0 0
        %1862 = vmatpush1.bf16.xpose.msra.mxu0 0
        %1863 = vmatprep.subr.bf16.mxu0 0
        %1864 = vmatpush1.bf16.xpose.msra.mxu0 0
        %1865 = vmatprep.mubr.bf16.mxu0 0
        %1866 = vmatmul.mubr.bf16.gmra.mrb[0].mxu0 %v1786
        %v1867 = vpop.f32.mrb[0].mxu0
        %v1868 = vadd.f32 %v1768, %v1867
        %v1869 = vpop.f32.mrb[0].mxu0
        %v1870 = vpop.f32.mrb[0].mxu0
        %v1871 = vadd.f32 %v1769, %v1870
        %v1872 = vpop.f32.mrb[0].mxu0
        %1873 = vmatprep.mubr.bf16.mxu0 0
        %1874 = vmatmul.mubr.bf16.gmra.mrb[0].mxu0 %v1789
        %v1875 = vpop.f32.mrb[0].mxu0
        %v1876 = vadd.f32 %v1770, %v1875
        %v1877 = vpop.f32.mrb[0].mxu0
        %v1878 = vpop.f32.mrb[0].mxu0
        %v1879 = vadd.f32 %v1771, %v1878
        %v1880 = vpop.f32.mrb[0].mxu0
        %1881 = vmatprep.mubr.bf16.mxu0 0
        %1882 = vmatmul.mubr.bf16.gmra.mrb[0].mxu0 %v1792
        %v1883 = vpop.f32.mrb[0].mxu0
        %v1884 = vadd.f32 %v1772, %v1883
        %v1885 = vpop.f32.mrb[0].mxu0
        %v1886 = vpop.f32.mrb[0].mxu0
        %v1887 = vadd.f32 %v1773, %v1886
        %v1888 = vpop.f32.mrb[0].mxu0
        %1889 = vmatprep.mubr.bf16.mxu0 0
        %1890 = vmatmul.mubr.bf16.gmra.mrb[0].mxu0 %v1795
        %v1891 = vpop.f32.mrb[0].mxu0
        %v1892 = vadd.f32 %v1774, %v1891
        %v1893 = vpop.f32.mrb[0].mxu0
        %v1894 = vpop.f32.mrb[0].mxu0
        %v1895 = vadd.f32 %v1775, %v1894
        %v1896 = vpop.f32.mrb[0].mxu0
        %1897 = vmatprep.mubr.bf16.mxu0 0
        %1898 = vmatmul.mubr.bf16.gmra.mrb[0].mxu0 %v1798
        %v1899 = vpop.f32.mrb[0].mxu0
        %v1900 = vadd.f32 %v1776, %v1899
        %v1901 = vpop.f32.mrb[0].mxu0
        %v1902 = vpop.f32.mrb[0].mxu0
        %v1903 = vadd.f32 %v1777, %v1902
        %v1904 = vpop.f32.mrb[0].mxu0
        %1905 = vmatprep.mubr.bf16.mxu0 0
        %1906 = vmatmul.mubr.bf16.gmra.mrb[0].mxu0 %v1801
        %v1907 = vpop.f32.mrb[0].mxu0
        %v1908 = vadd.f32 %v1778, %v1907
        %v1909 = vpop.f32.mrb[0].mxu0
        %v1910 = vpop.f32.mrb[0].mxu0
        %v1911 = vadd.f32 %v1779, %v1910
        %v1912 = vpop.f32.mrb[0].mxu0
        %1913 = vmatprep.mubr.bf16.mxu0 0
        %1914 = vmatmul.mubr.bf16.gmra.mrb[0].mxu0 %v1804
        %v1915 = vpop.f32.mrb[0].mxu0
        %v1916 = vadd.f32 %v1780, %v1915
        %v1917 = vpop.f32.mrb[0].mxu0
        %v1918 = vpop.f32.mrb[0].mxu0
        %v1919 = vadd.f32 %v1781, %v1918
        %v1920 = vpop.f32.mrb[0].mxu0
        %1921 = vmatprep.mubr.bf16.mxu0 0
        %1922 = vmatmul.mubr.bf16.gmra.mrb[0].mxu0 %v1807
        %v1923 = vpop.f32.mrb[0].mxu0
        %v1924 = vadd.f32 %v1782, %v1923
        %v1925 = vpop.f32.mrb[0].mxu0
        %v1926 = vpop.f32.mrb[0].mxu0
        %v1927 = vadd.f32 %v1783, %v1926
        %v1928 = vpop.f32.mrb[0].mxu0
        %1929 = vdwg.mxu0
        %v1930 = vmul.f32 %v1868, 1.442695
        %v1931 = vpow.pop %v1930
        %v1932 = vmul.f32 %v1871, 1.442695
        %v1933 = vpow.pop %v1932
        %v1934 = vmul.f32 %v1876, 1.442695
        %v1935 = vpow.pop %v1934
        %v1936 = vmul.f32 %v1879, 1.442695
        %v1937 = vpow.pop %v1936
        %v1938 = vmul.f32 %v1884, 1.442695
        %v1939 = vpow.pop %v1938
        %v1940 = vmul.f32 %v1887, 1.442695
        %v1941 = vpow.pop %v1940
        %v1942 = vmul.f32 %v1892, 1.442695
        %v1943 = vpow.pop %v1942
        %v1944 = vmul.f32 %v1895, 1.442695
        %v1945 = vpow.pop %v1944
        %v1946 = vmul.f32 %v1900, 1.442695
        %v1947 = vpow.pop %v1946
        %v1948 = vmul.f32 %v1903, 1.442695
        %v1949 = vpow.pop %v1948
        %v1950 = vmul.f32 %v1908, 1.442695
        %v1951 = vpow.pop %v1950
        %v1952 = vmul.f32 %v1911, 1.442695
        %v1953 = vpow.pop %v1952
        %v1954 = vmul.f32 %v1916, 1.442695
        %v1955 = vpow.pop %v1954
        %v1956 = vmul.f32 %v1919, 1.442695
        %v1957 = vpow.pop %v1956
        %v1958 = vmul.f32 %v1924, 1.442695
        %v1959 = vpow.pop %v1958
        %v1960 = vmul.f32 %v1927, 1.442695
        %v1961 = vpow.pop %v1960
        %1962 = vadd.xlane.f32.xlu0 %v1931
        %v1963 = vpop.xlane.xlu0 %1962
        %1964 = vadd.xlane.f32.xlu0 %v1933
        %v1965 = vpop.xlane.xlu0 %1964
        %1966 = vadd.xlane.f32.xlu0 %v1935
        %v1967 = vpop.xlane.xlu0 %1966
        %1968 = vadd.xlane.f32.xlu0 %v1937
        %v1969 = vpop.xlane.xlu0 %1968
        %1970 = vadd.xlane.f32.xlu0 %v1939
        %v1971 = vpop.xlane.xlu0 %1970
        %1972 = vadd.xlane.f32.xlu0 %v1941
        %v1973 = vpop.xlane.xlu0 %1972
        %1974 = vadd.xlane.f32.xlu0 %v1943
        %v1975 = vpop.xlane.xlu0 %1974
        %1976 = vadd.xlane.f32.xlu0 %v1945
        %v1977 = vpop.xlane.xlu0 %1976
        %1978 = vadd.xlane.f32.xlu0 %v1947
        %v1979 = vpop.xlane.xlu0 %1978
        %1980 = vadd.xlane.f32.xlu0 %v1949
        %v1981 = vpop.xlane.xlu0 %1980
        %1982 = vadd.xlane.f32.xlu0 %v1951
        %v1983 = vpop.xlane.xlu0 %1982
        %1984 = vadd.xlane.f32.xlu0 %v1953
        %v1985 = vpop.xlane.xlu0 %1984
        %1986 = vadd.xlane.f32.xlu0 %v1955
        %v1987 = vpop.xlane.xlu0 %1986
        %1988 = vadd.xlane.f32.xlu0 %v1957
        %v1989 = vpop.xlane.xlu0 %1988
        %1990 = vadd.xlane.f32.xlu0 %v1959
        %v1991 = vpop.xlane.xlu0 %1990
        %1992 = vadd.xlane.f32.xlu0 %v1961
        %v1993 = vpop.xlane.xlu0 %1992
        %v1994 = vrcp.pop %v1963
        %v1995 = vrcp.pop %v1965
        %v1996 = vrcp.pop %v1967
        %v1997 = vrcp.pop %v1969
        %v1998 = vrcp.pop %v1971
        %v1999 = vrcp.pop %v1973
        %v2000 = vrcp.pop %v1975
        %v2001 = vrcp.pop %v1977
        %v2002 = vrcp.pop %v1979
        %v2003 = vrcp.pop %v1981
        %v2004 = vrcp.pop %v1983
        %v2005 = vrcp.pop %v1985
        %v2006 = vrcp.pop %v1987
        %v2007 = vrcp.pop %v1989
        %v2008 = vrcp.pop %v1991
        %v2009 = vrcp.pop %v1993
        %v2010 = vmul.f32 %v1931, %v1994
        %v2011 = vmul.f32 %v1933, %v1995
        %v2012 = vmul.f32 %v1935, %v1996
        %v2013 = vmul.f32 %v1937, %v1997
        %v2014 = vmul.f32 %v1939, %v1998
        %v2015 = vmul.f32 %v1941, %v1999
        %v2016 = vmul.f32 %v1943, %v2000
        %v2017 = vmul.f32 %v1945, %v2001
        %v2018 = vmul.f32 %v1947, %v2002
        %v2019 = vmul.f32 %v1949, %v2003
        %v2020 = vmul.f32 %v1951, %v2004
        %v2021 = vmul.f32 %v1953, %v2005
        %v2022 = vmul.f32 %v1955, %v2006
        %v2023 = vmul.f32 %v1957, %v2007
        %v2024 = vmul.f32 %v1959, %v2008
        %v2025 = vmul.f32 %v1961, %v2009
        %v2026 = vpack.c.bf16 %v2011, %v2010
        %v2027 = vpack.c.bf16 %v2013, %v2012
        %v2028 = vpack.c.bf16 %v2015, %v2014
        %v2029 = vpack.c.bf16 %v2017, %v2016
        %v2030 = vpack.c.bf16 %v2019, %v2018
        %v2031 = vpack.c.bf16 %v2021, %v2020
        %v2032 = vpack.c.bf16 %v2023, %v2022
        %v2033 = vpack.c.bf16 %v2025, %v2024
        %v2034 = vpack.c.bf16 %v1693, %v1690
        %v2035 = vpack.c.bf16 %v1701, %v1698
        %v2036 = vpack.c.bf16 %v1709, %v1706
        %v2037 = vpack.c.bf16 %v1717, %v1714
        %v2038 = vpack.c.bf16 %v1725, %v1722
        %v2039 = vpack.c.bf16 %v1733, %v1730
        %v2040 = vpack.c.bf16 %v1741, %v1738
        %v2041 = vpack.c.bf16 %v1749, %v1746
        %s2042 = scalar_lea.vmem %s5, 16
        %v2043 = vld [vmem:[%s2042] sm:$0xf]
        %v2044 = vld [vmem:[%s2042 + $0x4] sm:$0xf]
        %v2045 = vld [vmem:[%s2042 + $0x8] sm:$0xf]
        %v2046 = vld [vmem:[%s2042 + $0xc] sm:$0xf]
        %s2047 = scalar_lea.vmem %s6, 1
        %v2048 = vld [vmem:[%s2047] sm:$0x1]
        %v2050 = vlaneseq
        %v2051 = vshrl.u32 %v2050, 7
        %v2052 = vsub.s32 0, %v2051
        %v2053 = vrot.slane %v2048, %v2052
        %v2059 = vunpack.c.l.b16 %v2043
        %v2060 = vunpack.c.l.b16 %v2044
        %v2061 = vunpack.c.l.b16 %v2045
        %v2062 = vunpack.c.l.b16 %v2046
        %v2063 = vpack.c.b16 %v2060, %v2059
        %v2064 = vpack.c.b16 %v2062, %v2061
        %2067 = vmatprep.subr.bf16.mxu0 0
        %2068 = vmatpush1.bf16.msra.mxu0 %v2063
        %2069 = vmatprep.subr.bf16.mxu0 0
        %2070 = vmatpush1.bf16.msra.mxu0 %v2064
        %2071 = vmatprep.subr.bf16.mxu0 0
        %2072 = vmatpush1.bf16.msra.mxu0 0
        %2073 = vmatprep.subr.bf16.mxu0 0
        %2074 = vmatpush1.bf16.msra.mxu0 0
        %2075 = vmatprep.subr.bf16.mxu0 0
        %2076 = vmatpush1.bf16.msra.mxu0 0
        %2077 = vmatprep.subr.bf16.mxu0 0
        %2078 = vmatpush1.bf16.msra.mxu0 0
        %2079 = vmatprep.subr.bf16.mxu0 0
        %2080 = vmatpush1.bf16.msra.mxu0 0
        %2081 = vmatprep.subr.bf16.mxu0 0
        %2082 = vmatpush1.bf16.msra.mxu0 0
        %2083 = vmatprep.subr.bf16.mxu0 0
        %2084 = vmatpush1.bf16.msra.mxu0 0
        %2085 = vmatprep.subr.bf16.mxu0 0
        %2086 = vmatpush1.bf16.msra.mxu0 0
        %2087 = vmatprep.subr.bf16.mxu0 0
        %2088 = vmatpush1.bf16.msra.mxu0 0
        %2089 = vmatprep.subr.bf16.mxu0 0
        %2090 = vmatpush1.bf16.msra.mxu0 0
        %2091 = vmatprep.subr.bf16.mxu0 0
        %2092 = vmatpush1.bf16.msra.mxu0 0
        %2093 = vmatprep.subr.bf16.mxu0 0
        %2094 = vmatpush1.bf16.msra.mxu0 0
        %2095 = vmatprep.subr.bf16.mxu0 0
        %2096 = vmatpush1.bf16.msra.mxu0 0
        %2097 = vmatprep.subr.bf16.mxu0 0
        %2098 = vmatpush1.bf16.msra.mxu0 0
        %2099 = vmatprep.mubr.bf16.mxu0 0
        %2100 = vmatmul.mubr.bf16.gmra.mrb[0].mxu0 %v1399
        %v2101 = vpop.f32.mrb[0].mxu0
        %v2102 = vadd.f32 %v2053, %v2101
        %v2103 = vpop.f32.mrb[0].mxu0
        %v2104 = vpop.f32.mrb[0].mxu0
        %v2105 = vadd.f32 %v2053, %v2104
        %v2106 = vpop.f32.mrb[0].mxu0
        %2107 = vmatprep.mubr.bf16.mxu0 0
        %2108 = vmatmul.mubr.bf16.gmra.mrb[0].mxu0 %v1402
        %v2109 = vpop.f32.mrb[0].mxu0
        %v2110 = vadd.f32 %v2053, %v2109
        %v2111 = vpop.f32.mrb[0].mxu0
        %v2112 = vpop.f32.mrb[0].mxu0
        %v2113 = vadd.f32 %v2053, %v2112
        %v2114 = vpop.f32.mrb[0].mxu0
        %2115 = vmatprep.mubr.bf16.mxu0 0
        %2116 = vmatmul.mubr.bf16.gmra.mrb[0].mxu0 %v1405
        %v2117 = vpop.f32.mrb[0].mxu0
        %v2118 = vadd.f32 %v2053, %v2117
        %v2119 = vpop.f32.mrb[0].mxu0
        %v2120 = vpop.f32.mrb[0].mxu0
        %v2121 = vadd.f32 %v2053, %v2120
        %v2122 = vpop.f32.mrb[0].mxu0
        %2123 = vmatprep.mubr.bf16.mxu0 0
        %2124 = vmatmul.mubr.bf16.gmra.mrb[0].mxu0 %v1408
        %v2125 = vpop.f32.mrb[0].mxu0
        %v2126 = vadd.f32 %v2053, %v2125
        %v2127 = vpop.f32.mrb[0].mxu0
        %v2128 = vpop.f32.mrb[0].mxu0
        %v2129 = vadd.f32 %v2053, %v2128
        %v2130 = vpop.f32.mrb[0].mxu0
        %2131 = vmatprep.mubr.bf16.mxu0 0
        %2132 = vmatmul.mubr.bf16.gmra.mrb[0].mxu0 %v1411
        %v2133 = vpop.f32.mrb[0].mxu0
        %v2134 = vadd.f32 %v2053, %v2133
        %v2135 = vpop.f32.mrb[0].mxu0
        %v2136 = vpop.f32.mrb[0].mxu0
        %v2137 = vadd.f32 %v2053, %v2136
        %v2138 = vpop.f32.mrb[0].mxu0
        %2139 = vmatprep.mubr.bf16.mxu0 0
        %2140 = vmatmul.mubr.bf16.gmra.mrb[0].mxu0 %v1414
        %v2141 = vpop.f32.mrb[0].mxu0
        %v2142 = vadd.f32 %v2053, %v2141
        %v2143 = vpop.f32.mrb[0].mxu0
        %v2144 = vpop.f32.mrb[0].mxu0
        %v2145 = vadd.f32 %v2053, %v2144
        %v2146 = vpop.f32.mrb[0].mxu0
        %2147 = vmatprep.mubr.bf16.mxu0 0
        %2148 = vmatmul.mubr.bf16.gmra.mrb[0].mxu0 %v1417
        %v2149 = vpop.f32.mrb[0].mxu0
        %v2150 = vadd.f32 %v2053, %v2149
        %v2151 = vpop.f32.mrb[0].mxu0
        %v2152 = vpop.f32.mrb[0].mxu0
        %v2153 = vadd.f32 %v2053, %v2152
        %v2154 = vpop.f32.mrb[0].mxu0
        %2155 = vmatprep.mubr.bf16.mxu0 0
        %2156 = vmatmul.mubr.bf16.gmra.mrb[0].mxu0 %v1420
        %v2157 = vpop.f32.mrb[0].mxu0
        %v2158 = vadd.f32 %v2053, %v2157
        %v2159 = vpop.f32.mrb[0].mxu0
        %v2160 = vpop.f32.mrb[0].mxu0
        %v2161 = vadd.f32 %v2053, %v2160
        %v2162 = vpop.f32.mrb[0].mxu0
        %2163 = vdwg.mxu0
        %s2164 = scalar_lea.vmem %s7, 16
        %v2165 = vld [vmem:[%s2164] sm:$0xf]
        %v2166 = vld [vmem:[%s2164 + $0x4] sm:$0xf]
        %v2167 = vld [vmem:[%s2164 + $0x8] sm:$0xf]
        %v2168 = vld [vmem:[%s2164 + $0xc] sm:$0xf]
        %v2173 = vunpack.c.l.b16 %v2165
        %v2174 = vunpack.c.l.b16 %v2166
        %v2175 = vunpack.c.l.b16 %v2167
        %v2176 = vunpack.c.l.b16 %v2168
        %v2177 = vpack.c.b16 %v2174, %v2173
        %v2178 = vpack.c.b16 %v2176, %v2175
        %2181 = vmatprep.subr.bf16.mxu0 0
        %2182 = vmatpush1.bf16.msra.mxu0 %v2177
        %2183 = vmatprep.subr.bf16.mxu0 0
        %2184 = vmatpush1.bf16.msra.mxu0 %v2178
        %2185 = vmatprep.subr.bf16.mxu0 0
        %2186 = vmatpush1.bf16.msra.mxu0 0
        %2187 = vmatprep.subr.bf16.mxu0 0
        %2188 = vmatpush1.bf16.msra.mxu0 0
        %2189 = vmatprep.subr.bf16.mxu0 0
        %2190 = vmatpush1.bf16.msra.mxu0 0
        %2191 = vmatprep.subr.bf16.mxu0 0
        %2192 = vmatpush1.bf16.msra.mxu0 0
        %2193 = vmatprep.subr.bf16.mxu0 0
        %2194 = vmatpush1.bf16.msra.mxu0 0
        %2195 = vmatprep.subr.bf16.mxu0 0
        %2196 = vmatpush1.bf16.msra.mxu0 0
        %2197 = vmatprep.subr.bf16.mxu0 0
        %2198 = vmatpush1.bf16.msra.mxu0 0
        %2199 = vmatprep.subr.bf16.mxu0 0
        %2200 = vmatpush1.bf16.msra.mxu0 0
        %2201 = vmatprep.subr.bf16.mxu0 0
        %2202 = vmatpush1.bf16.msra.mxu0 0
        %2203 = vmatprep.subr.bf16.mxu0 0
        %2204 = vmatpush1.bf16.msra.mxu0 0
        %2205 = vmatprep.subr.bf16.mxu0 0
        %2206 = vmatpush1.bf16.msra.mxu0 0
        %2207 = vmatprep.subr.bf16.mxu0 0
        %2208 = vmatpush1.bf16.msra.mxu0 0
        %2209 = vmatprep.subr.bf16.mxu0 0
        %2210 = vmatpush1.bf16.msra.mxu0 0
        %2211 = vmatprep.subr.bf16.mxu0 0
        %2212 = vmatpush1.bf16.msra.mxu0 0
        %2213 = vmatprep.mubr.bf16.mxu0 0
        %2214 = vmatmul.mubr.bf16.gmra.mrb[0].mxu0 %v1399
        %v2215 = vpop.f32.mrb[0].mxu0
        %v2216 = vadd.f32 0.0, %v2215
        %v2217 = vpop.f32.mrb[0].mxu0
        %v2218 = vpop.f32.mrb[0].mxu0
        %v2219 = vadd.f32 0.0, %v2218
        %v2220 = vpop.f32.mrb[0].mxu0
        %2221 = vmatprep.mubr.bf16.mxu0 0
        %2222 = vmatmul.mubr.bf16.gmra.mrb[0].mxu0 %v1402
        %v2223 = vpop.f32.mrb[0].mxu0
        %v2224 = vadd.f32 0.0, %v2223
        %v2225 = vpop.f32.mrb[0].mxu0
        %v2226 = vpop.f32.mrb[0].mxu0
        %v2227 = vadd.f32 0.0, %v2226
        %v2228 = vpop.f32.mrb[0].mxu0
        %2229 = vmatprep.mubr.bf16.mxu0 0
        %2230 = vmatmul.mubr.bf16.gmra.mrb[0].mxu0 %v1405
        %v2231 = vpop.f32.mrb[0].mxu0
        %v2232 = vadd.f32 0.0, %v2231
        %v2233 = vpop.f32.mrb[0].mxu0
        %v2234 = vpop.f32.mrb[0].mxu0
        %v2235 = vadd.f32 0.0, %v2234
        %v2236 = vpop.f32.mrb[0].mxu0
        %2237 = vmatprep.mubr.bf16.mxu0 0
        %2238 = vmatmul.mubr.bf16.gmra.mrb[0].mxu0 %v1408
        %v2239 = vpop.f32.mrb[0].mxu0
        %v2240 = vadd.f32 0.0, %v2239
        %v2241 = vpop.f32.mrb[0].mxu0
        %v2242 = vpop.f32.mrb[0].mxu0
        %v2243 = vadd.f32 0.0, %v2242
        %v2244 = vpop.f32.mrb[0].mxu0
        %2245 = vmatprep.mubr.bf16.mxu0 0
        %2246 = vmatmul.mubr.bf16.gmra.mrb[0].mxu0 %v1411
        %v2247 = vpop.f32.mrb[0].mxu0
        %v2248 = vadd.f32 0.0, %v2247
        %v2249 = vpop.f32.mrb[0].mxu0
        %v2250 = vpop.f32.mrb[0].mxu0
        %v2251 = vadd.f32 0.0, %v2250
        %v2252 = vpop.f32.mrb[0].mxu0
        %2253 = vmatprep.mubr.bf16.mxu0 0
        %2254 = vmatmul.mubr.bf16.gmra.mrb[0].mxu0 %v1414
        %v2255 = vpop.f32.mrb[0].mxu0
        %v2256 = vadd.f32 0.0, %v2255
        %v2257 = vpop.f32.mrb[0].mxu0
        %v2258 = vpop.f32.mrb[0].mxu0
        %v2259 = vadd.f32 0.0, %v2258
        %v2260 = vpop.f32.mrb[0].mxu0
        %2261 = vmatprep.mubr.bf16.mxu0 0
        %2262 = vmatmul.mubr.bf16.gmra.mrb[0].mxu0 %v1417
        %v2263 = vpop.f32.mrb[0].mxu0
        %v2264 = vadd.f32 0.0, %v2263
        %v2265 = vpop.f32.mrb[0].mxu0
        %v2266 = vpop.f32.mrb[0].mxu0
        %v2267 = vadd.f32 0.0, %v2266
        %v2268 = vpop.f32.mrb[0].mxu0
        %2269 = vmatprep.mubr.bf16.mxu0 0
        %2270 = vmatmul.mubr.bf16.gmra.mrb[0].mxu0 %v1420
        %v2271 = vpop.f32.mrb[0].mxu0
        %v2272 = vadd.f32 0.0, %v2271
        %v2273 = vpop.f32.mrb[0].mxu0
        %v2274 = vpop.f32.mrb[0].mxu0
        %v2275 = vadd.f32 0.0, %v2274
        %v2276 = vpop.f32.mrb[0].mxu0
        %2277 = vdwg.mxu0
        %s2278 = scalar_lea.vmem %s8, 16
        %v2279 = vld [vmem:[%s2278] sm:$0xf]
        %v2280 = vld [vmem:[%s2278 + $0x4] sm:$0xf]
        %v2281 = vld [vmem:[%s2278 + $0x8] sm:$0xf]
        %v2282 = vld [vmem:[%s2278 + $0xc] sm:$0xf]
        %s2283 = scalar_lea.vmem [#allocation2], 1
        %v2284 = vld [vmem:[%s2283] sm:$0x1]
        %v2286 = vlaneseq
        %v2287 = vshrl.u32 %v2286, 7
        %v2288 = vsub.s32 0, %v2287
        %v2289 = vrot.slane %v2284, %v2288
        %v2295 = vunpack.c.l.b16 %v2279
        %v2296 = vunpack.c.l.b16 %v2280
        %v2297 = vunpack.c.l.b16 %v2281
        %v2298 = vunpack.c.l.b16 %v2282
        %v2299 = vpack.c.b16 %v2296, %v2295
        %v2300 = vpack.c.b16 %v2298, %v2297
        %2303 = vmatprep.subr.bf16.mxu0 0
        %2304 = vmatpush1.bf16.msra.mxu0 %v2299
        %2305 = vmatprep.subr.bf16.mxu0 0
        %2306 = vmatpush1.bf16.msra.mxu0 %v2300
        %2307 = vmatprep.subr.bf16.mxu0 0
        %2308 = vmatpush1.bf16.msra.mxu0 0
        %2309 = vmatprep.subr.bf16.mxu0 0
        %2310 = vmatpush1.bf16.msra.mxu0 0
        %2311 = vmatprep.subr.bf16.mxu0 0
        %2312 = vmatpush1.bf16.msra.mxu0 0
        %2313 = vmatprep.subr.bf16.mxu0 0
        %2314 = vmatpush1.bf16.msra.mxu0 0
        %2315 = vmatprep.subr.bf16.mxu0 0
        %2316 = vmatpush1.bf16.msra.mxu0 0
        %2317 = vmatprep.subr.bf16.mxu0 0
        %2318 = vmatpush1.bf16.msra.mxu0 0
        %2319 = vmatprep.subr.bf16.mxu0 0
        %2320 = vmatpush1.bf16.msra.mxu0 0
        %2321 = vmatprep.subr.bf16.mxu0 0
        %2322 = vmatpush1.bf16.msra.mxu0 0
        %2323 = vmatprep.subr.bf16.mxu0 0
        %2324 = vmatpush1.bf16.msra.mxu0 0
        %2325 = vmatprep.subr.bf16.mxu0 0
        %2326 = vmatpush1.bf16.msra.mxu0 0
        %2327 = vmatprep.subr.bf16.mxu0 0
        %2328 = vmatpush1.bf16.msra.mxu0 0
        %2329 = vmatprep.subr.bf16.mxu0 0
        %2330 = vmatpush1.bf16.msra.mxu0 0
        %2331 = vmatprep.subr.bf16.mxu0 0
        %2332 = vmatpush1.bf16.msra.mxu0 0
        %2333 = vmatprep.subr.bf16.mxu0 0
        %2334 = vmatpush1.bf16.msra.mxu0 0
        %2335 = vmatprep.mubr.bf16.mxu0 0
        %2336 = vmatmul.mubr.bf16.gmra.mrb[0].mxu0 %v1399
        %v2337 = vpop.f32.mrb[0].mxu0
        %v2338 = vadd.f32 %v2289, %v2337
        %v2339 = vpop.f32.mrb[0].mxu0
        %v2340 = vpop.f32.mrb[0].mxu0
        %v2341 = vadd.f32 %v2289, %v2340
        %v2342 = vpop.f32.mrb[0].mxu0
        %2343 = vmatprep.mubr.bf16.mxu0 0
        %2344 = vmatmul.mubr.bf16.gmra.mrb[0].mxu0 %v1402
        %v2345 = vpop.f32.mrb[0].mxu0
        %v2346 = vadd.f32 %v2289, %v2345
        %v2347 = vpop.f32.mrb[0].mxu0
        %v2348 = vpop.f32.mrb[0].mxu0
        %v2349 = vadd.f32 %v2289, %v2348
        %v2350 = vpop.f32.mrb[0].mxu0
        %2351 = vmatprep.mubr.bf16.mxu0 0
        %2352 = vmatmul.mubr.bf16.gmra.mrb[0].mxu0 %v1405
        %v2353 = vpop.f32.mrb[0].mxu0
        %v2354 = vadd.f32 %v2289, %v2353
        %v2355 = vpop.f32.mrb[0].mxu0
        %v2356 = vpop.f32.mrb[0].mxu0
        %v2357 = vadd.f32 %v2289, %v2356
        %v2358 = vpop.f32.mrb[0].mxu0
        %2359 = vmatprep.mubr.bf16.mxu0 0
        %2360 = vmatmul.mubr.bf16.gmra.mrb[0].mxu0 %v1408
        %v2361 = vpop.f32.mrb[0].mxu0
        %v2362 = vadd.f32 %v2289, %v2361
        %v2363 = vpop.f32.mrb[0].mxu0
        %v2364 = vpop.f32.mrb[0].mxu0
        %v2365 = vadd.f32 %v2289, %v2364
        %v2366 = vpop.f32.mrb[0].mxu0
        %2367 = vmatprep.mubr.bf16.mxu0 0
        %2368 = vmatmul.mubr.bf16.gmra.mrb[0].mxu0 %v1411
        %v2369 = vpop.f32.mrb[0].mxu0
        %v2370 = vadd.f32 %v2289, %v2369
        %v2371 = vpop.f32.mrb[0].mxu0
        %v2372 = vpop.f32.mrb[0].mxu0
        %v2373 = vadd.f32 %v2289, %v2372
        %v2374 = vpop.f32.mrb[0].mxu0
        %2375 = vmatprep.mubr.bf16.mxu0 0
        %2376 = vmatmul.mubr.bf16.gmra.mrb[0].mxu0 %v1414
        %v2377 = vpop.f32.mrb[0].mxu0
        %v2378 = vadd.f32 %v2289, %v2377
        %v2379 = vpop.f32.mrb[0].mxu0
        %v2380 = vpop.f32.mrb[0].mxu0
        %v2381 = vadd.f32 %v2289, %v2380
        %v2382 = vpop.f32.mrb[0].mxu0
        %2383 = vmatprep.mubr.bf16.mxu0 0
        %2384 = vmatmul.mubr.bf16.gmra.mrb[0].mxu0 %v1417
        %v2385 = vpop.f32.mrb[0].mxu0
        %v2386 = vadd.f32 %v2289, %v2385
        %v2387 = vpop.f32.mrb[0].mxu0
        %v2388 = vpop.f32.mrb[0].mxu0
        %v2389 = vadd.f32 %v2289, %v2388
        %v2390 = vpop.f32.mrb[0].mxu0
        %2391 = vmatprep.mubr.bf16.mxu0 0
        %2392 = vmatmul.mubr.bf16.gmra.mrb[0].mxu0 %v1420
        %v2393 = vpop.f32.mrb[0].mxu0
        %v2394 = vadd.f32 %v2289, %v2393
        %v2395 = vpop.f32.mrb[0].mxu0
        %v2396 = vpop.f32.mrb[0].mxu0
        %v2397 = vadd.f32 %v2289, %v2396
        %v2398 = vpop.f32.mrb[0].mxu0
        %2399 = vdwg.mxu0
        %v2400 = vpack.c.bf16 %v2105, %v2102
        %v2401 = vpack.c.bf16 %v2113, %v2110
        %v2402 = vpack.c.bf16 %v2121, %v2118
        %v2403 = vpack.c.bf16 %v2129, %v2126
        %v2404 = vpack.c.bf16 %v2137, %v2134
        %v2405 = vpack.c.bf16 %v2145, %v2142
        %v2406 = vpack.c.bf16 %v2153, %v2150
        %v2407 = vpack.c.bf16 %v2161, %v2158
        %v2408 = vpack.c.bf16 %v2219, %v2216
        %v2409 = vpack.c.bf16 %v2227, %v2224
        %v2410 = vpack.c.bf16 %v2235, %v2232
        %v2411 = vpack.c.bf16 %v2243, %v2240
        %v2412 = vpack.c.bf16 %v2251, %v2248
        %v2413 = vpack.c.bf16 %v2259, %v2256
        %v2414 = vpack.c.bf16 %v2267, %v2264
        %v2415 = vpack.c.bf16 %v2275, %v2272
        %s2416 = scalar_lea.vmem %s11, 128
        %v2417 = vld [vmem:[%s2416] sm:$0xff]
        %v2418 = vld [vmem:[%s2416 + $0x8] sm:$0xff]
        %v2419 = vld [vmem:[%s2416 + $0x10] sm:$0xff]
        %v2420 = vld [vmem:[%s2416 + $0x18] sm:$0xff]
        %v2421 = vld [vmem:[%s2416 + $0x20] sm:$0xff]
        %v2422 = vld [vmem:[%s2416 + $0x28] sm:$0xff]
        %v2423 = vld [vmem:[%s2416 + $0x30] sm:$0xff]
        %v2424 = vld [vmem:[%s2416 + $0x38] sm:$0xff]
        %v2425 = vld [vmem:[%s2416 + $0x40] sm:$0xff]
        %v2426 = vld [vmem:[%s2416 + $0x48] sm:$0xff]
        %v2427 = vld [vmem:[%s2416 + $0x50] sm:$0xff]
        %v2428 = vld [vmem:[%s2416 + $0x58] sm:$0xff]
        %v2429 = vld [vmem:[%s2416 + $0x60] sm:$0xff]
        %v2430 = vld [vmem:[%s2416 + $0x68] sm:$0xff]
        %v2431 = vld [vmem:[%s2416 + $0x70] sm:$0xff]
        %v2432 = vld [vmem:[%s2416 + $0x78] sm:$0xff]
        %v2434 = vsel %vm1784, %v2400, 0
        %v2437 = vsel %vm1784, %v2401, 0
        %v2440 = vsel %vm1784, %v2402, 0
        %v2443 = vsel %vm1784, %v2403, 0
        %v2446 = vsel %vm1784, %v2404, 0
        %v2449 = vsel %vm1784, %v2405, 0
        %v2452 = vsel %vm1784, %v2406, 0
        %v2455 = vsel %vm1784, %v2407, 0
        %v2458 = vsel %vm1784, %v2408, 0
        %v2461 = vsel %vm1784, %v2409, 0
        %v2464 = vsel %vm1784, %v2410, 0
        %v2467 = vsel %vm1784, %v2411, 0
        %v2470 = vsel %vm1784, %v2412, 0
        %v2473 = vsel %vm1784, %v2413, 0
        %v2476 = vsel %vm1784, %v2414, 0
        %v2479 = vsel %vm1784, %v2415, 0
        %2481 = vmatprep.subr.bf16.mxu0 0
        %2482 = vmatpush1.bf16.xpose.msra.mxu0 %v2458
        %2483 = vmatprep.subr.bf16.mxu0 0
        %2484 = vmatpush1.bf16.xpose.msra.mxu0 %v2461
        %2485 = vmatprep.subr.bf16.mxu0 0
        %2486 = vmatpush1.bf16.xpose.msra.mxu0 %v2464
        %2487 = vmatprep.subr.bf16.mxu0 0
        %2488 = vmatpush1.bf16.xpose.msra.mxu0 %v2467
        %2489 = vmatprep.subr.bf16.mxu0 0
        %2490 = vmatpush1.bf16.xpose.msra.mxu0 %v2470
        %2491 = vmatprep.subr.bf16.mxu0 0
        %2492 = vmatpush1.bf16.xpose.msra.mxu0 %v2473
        %2493 = vmatprep.subr.bf16.mxu0 0
        %2494 = vmatpush1.bf16.xpose.msra.mxu0 %v2476
        %2495 = vmatprep.subr.bf16.mxu0 0
        %2496 = vmatpush1.bf16.xpose.msra.mxu0 %v2479
        %2497 = vmatprep.subr.bf16.mxu0 0
        %2498 = vmatpush1.bf16.xpose.msra.mxu0 0
        %2499 = vmatprep.subr.bf16.mxu0 0
        %2500 = vmatpush1.bf16.xpose.msra.mxu0 0
        %2501 = vmatprep.subr.bf16.mxu0 0
        %2502 = vmatpush1.bf16.xpose.msra.mxu0 0
        %2503 = vmatprep.subr.bf16.mxu0 0
        %2504 = vmatpush1.bf16.xpose.msra.mxu0 0
        %2505 = vmatprep.subr.bf16.mxu0 0
        %2506 = vmatpush1.bf16.xpose.msra.mxu0 0
        %2507 = vmatprep.subr.bf16.mxu0 0
        %2508 = vmatpush1.bf16.xpose.msra.mxu0 0
        %2509 = vmatprep.subr.bf16.mxu0 0
        %2510 = vmatpush1.bf16.xpose.msra.mxu0 0
        %2511 = vmatprep.subr.bf16.mxu0 0
        %2512 = vmatpush1.bf16.xpose.msra.mxu0 0
        %2513 = vmatprep.mubr.bf16.mxu0 0
        %2514 = vmatmul.mubr.bf16.gmra.mrb[0].mxu0 %v2434
        %v2515 = vpop.f32.mrb[0].mxu0
        %v2516 = vadd.f32 %v2417, %v2515
        %v2517 = vpop.f32.mrb[0].mxu0
        %v2518 = vpop.f32.mrb[0].mxu0
        %v2519 = vadd.f32 %v2418, %v2518
        %v2520 = vpop.f32.mrb[0].mxu0
        %2521 = vmatprep.mubr.bf16.mxu0 0
        %2522 = vmatmul.mubr.bf16.gmra.mrb[0].mxu0 %v2437
        %v2523 = vpop.f32.mrb[0].mxu0
        %v2524 = vadd.f32 %v2419, %v2523
        %v2525 = vpop.f32.mrb[0].mxu0
        %v2526 = vpop.f32.mrb[0].mxu0
        %v2527 = vadd.f32 %v2420, %v2526
        %v2528 = vpop.f32.mrb[0].mxu0
        %2529 = vmatprep.mubr.bf16.mxu0 0
        %2530 = vmatmul.mubr.bf16.gmra.mrb[0].mxu0 %v2440
        %v2531 = vpop.f32.mrb[0].mxu0
        %v2532 = vadd.f32 %v2421, %v2531
        %v2533 = vpop.f32.mrb[0].mxu0
        %v2534 = vpop.f32.mrb[0].mxu0
        %v2535 = vadd.f32 %v2422, %v2534
        %v2536 = vpop.f32.mrb[0].mxu0
        %2537 = vmatprep.mubr.bf16.mxu0 0
        %2538 = vmatmul.mubr.bf16.gmra.mrb[0].mxu0 %v2443
        %v2539 = vpop.f32.mrb[0].mxu0
        %v2540 = vadd.f32 %v2423, %v2539
        %v2541 = vpop.f32.mrb[0].mxu0
        %v2542 = vpop.f32.mrb[0].mxu0
        %v2543 = vadd.f32 %v2424, %v2542
        %v2544 = vpop.f32.mrb[0].mxu0
        %2545 = vmatprep.mubr.bf16.mxu0 0
        %2546 = vmatmul.mubr.bf16.gmra.mrb[0].mxu0 %v2446
        %v2547 = vpop.f32.mrb[0].mxu0
        %v2548 = vadd.f32 %v2425, %v2547
        %v2549 = vpop.f32.mrb[0].mxu0
        %v2550 = vpop.f32.mrb[0].mxu0
        %v2551 = vadd.f32 %v2426, %v2550
        %v2552 = vpop.f32.mrb[0].mxu0
        %2553 = vmatprep.mubr.bf16.mxu0 0
        %2554 = vmatmul.mubr.bf16.gmra.mrb[0].mxu0 %v2449
        %v2555 = vpop.f32.mrb[0].mxu0
        %v2556 = vadd.f32 %v2427, %v2555
        %v2557 = vpop.f32.mrb[0].mxu0
        %v2558 = vpop.f32.mrb[0].mxu0
        %v2559 = vadd.f32 %v2428, %v2558
        %v2560 = vpop.f32.mrb[0].mxu0
        %2561 = vmatprep.mubr.bf16.mxu0 0
        %2562 = vmatmul.mubr.bf16.gmra.mrb[0].mxu0 %v2452
        %v2563 = vpop.f32.mrb[0].mxu0
        %v2564 = vadd.f32 %v2429, %v2563
        %v2565 = vpop.f32.mrb[0].mxu0
        %v2566 = vpop.f32.mrb[0].mxu0
        %v2567 = vadd.f32 %v2430, %v2566
        %v2568 = vpop.f32.mrb[0].mxu0
        %2569 = vmatprep.mubr.bf16.mxu0 0
        %2570 = vmatmul.mubr.bf16.gmra.mrb[0].mxu0 %v2455
        %v2571 = vpop.f32.mrb[0].mxu0
        %v2572 = vadd.f32 %v2431, %v2571
        %v2573 = vpop.f32.mrb[0].mxu0
        %v2574 = vpop.f32.mrb[0].mxu0
        %v2575 = vadd.f32 %v2432, %v2574
        %v2576 = vpop.f32.mrb[0].mxu0
        %2577 = vdwg.mxu0
        %v2578 = vmul.f32 %v2516, 1.442695
        %v2579 = vpow.pop %v2578
        %v2580 = vmul.f32 %v2519, 1.442695
        %v2581 = vpow.pop %v2580
        %v2582 = vmul.f32 %v2524, 1.442695
        %v2583 = vpow.pop %v2582
        %v2584 = vmul.f32 %v2527, 1.442695
        %v2585 = vpow.pop %v2584
        %v2586 = vmul.f32 %v2532, 1.442695
        %v2587 = vpow.pop %v2586
        %v2588 = vmul.f32 %v2535, 1.442695
        %v2589 = vpow.pop %v2588
        %v2590 = vmul.f32 %v2540, 1.442695
        %v2591 = vpow.pop %v2590
        %v2592 = vmul.f32 %v2543, 1.442695
        %v2593 = vpow.pop %v2592
        %v2594 = vmul.f32 %v2548, 1.442695
        %v2595 = vpow.pop %v2594
        %v2596 = vmul.f32 %v2551, 1.442695
        %v2597 = vpow.pop %v2596
        %v2598 = vmul.f32 %v2556, 1.442695
        %v2599 = vpow.pop %v2598
        %v2600 = vmul.f32 %v2559, 1.442695
        %v2601 = vpow.pop %v2600
        %v2602 = vmul.f32 %v2564, 1.442695
        %v2603 = vpow.pop %v2602
        %v2604 = vmul.f32 %v2567, 1.442695
        %v2605 = vpow.pop %v2604
        %v2606 = vmul.f32 %v2572, 1.442695
        %v2607 = vpow.pop %v2606
        %v2608 = vmul.f32 %v2575, 1.442695
        %v2609 = vpow.pop %v2608
        %2610 = vadd.xlane.f32.xlu0 %v2579
        %v2611 = vpop.xlane.xlu0 %2610
        %2612 = vadd.xlane.f32.xlu0 %v2581
        %v2613 = vpop.xlane.xlu0 %2612
        %2614 = vadd.xlane.f32.xlu0 %v2583
        %v2615 = vpop.xlane.xlu0 %2614
        %2616 = vadd.xlane.f32.xlu0 %v2585
        %v2617 = vpop.xlane.xlu0 %2616
        %2618 = vadd.xlane.f32.xlu0 %v2587
        %v2619 = vpop.xlane.xlu0 %2618
        %2620 = vadd.xlane.f32.xlu0 %v2589
        %v2621 = vpop.xlane.xlu0 %2620
        %2622 = vadd.xlane.f32.xlu0 %v2591
        %v2623 = vpop.xlane.xlu0 %2622
        %2624 = vadd.xlane.f32.xlu0 %v2593
        %v2625 = vpop.xlane.xlu0 %2624
        %2626 = vadd.xlane.f32.xlu0 %v2595
        %v2627 = vpop.xlane.xlu0 %2626
        %2628 = vadd.xlane.f32.xlu0 %v2597
        %v2629 = vpop.xlane.xlu0 %2628
        %2630 = vadd.xlane.f32.xlu0 %v2599
        %v2631 = vpop.xlane.xlu0 %2630
        %2632 = vadd.xlane.f32.xlu0 %v2601
        %v2633 = vpop.xlane.xlu0 %2632
        %2634 = vadd.xlane.f32.xlu0 %v2603
        %v2635 = vpop.xlane.xlu0 %2634
        %2636 = vadd.xlane.f32.xlu0 %v2605
        %v2637 = vpop.xlane.xlu0 %2636
        %2638 = vadd.xlane.f32.xlu0 %v2607
        %v2639 = vpop.xlane.xlu0 %2638
        %2640 = vadd.xlane.f32.xlu0 %v2609
        %v2641 = vpop.xlane.xlu0 %2640
        %v2642 = vrcp.pop %v2611
        %v2643 = vrcp.pop %v2613
        %v2644 = vrcp.pop %v2615
        %v2645 = vrcp.pop %v2617
        %v2646 = vrcp.pop %v2619
        %v2647 = vrcp.pop %v2621
        %v2648 = vrcp.pop %v2623
        %v2649 = vrcp.pop %v2625
        %v2650 = vrcp.pop %v2627
        %v2651 = vrcp.pop %v2629
        %v2652 = vrcp.pop %v2631
        %v2653 = vrcp.pop %v2633
        %v2654 = vrcp.pop %v2635
        %v2655 = vrcp.pop %v2637
        %v2656 = vrcp.pop %v2639
        %v2657 = vrcp.pop %v2641
        %v2658 = vmul.f32 %v2579, %v2642
        %v2659 = vmul.f32 %v2581, %v2643
        %v2660 = vmul.f32 %v2583, %v2644
        %v2661 = vmul.f32 %v2585, %v2645
        %v2662 = vmul.f32 %v2587, %v2646
        %v2663 = vmul.f32 %v2589, %v2647
        %v2664 = vmul.f32 %v2591, %v2648
        %v2665 = vmul.f32 %v2593, %v2649
        %v2666 = vmul.f32 %v2595, %v2650
        %v2667 = vmul.f32 %v2597, %v2651
        %v2668 = vmul.f32 %v2599, %v2652
        %v2669 = vmul.f32 %v2601, %v2653
        %v2670 = vmul.f32 %v2603, %v2654
        %v2671 = vmul.f32 %v2605, %v2655
        %v2672 = vmul.f32 %v2607, %v2656
        %v2673 = vmul.f32 %v2609, %v2657
        %v2674 = vpack.c.bf16 %v2659, %v2658
        %v2675 = vpack.c.bf16 %v2661, %v2660
        %v2676 = vpack.c.bf16 %v2663, %v2662
        %v2677 = vpack.c.bf16 %v2665, %v2664
        %v2678 = vpack.c.bf16 %v2667, %v2666
        %v2679 = vpack.c.bf16 %v2669, %v2668
        %v2680 = vpack.c.bf16 %v2671, %v2670
        %v2681 = vpack.c.bf16 %v2673, %v2672
        %v2682 = vpack.c.bf16 %v2341, %v2338
        %v2683 = vpack.c.bf16 %v2349, %v2346
        %v2684 = vpack.c.bf16 %v2357, %v2354
        %v2685 = vpack.c.bf16 %v2365, %v2362
        %v2686 = vpack.c.bf16 %v2373, %v2370
        %v2687 = vpack.c.bf16 %v2381, %v2378
        %v2688 = vpack.c.bf16 %v2389, %v2386
        %v2689 = vpack.c.bf16 %v2397, %v2394
        %2690 = vmatprep.subr.bf16.mxu0 0
        %2691 = vmatpush1.bf16.msra.mxu0 %v2682
        %2692 = vmatprep.subr.bf16.mxu0 0
        %2693 = vmatpush1.bf16.msra.mxu0 %v2683
        %2694 = vmatprep.subr.bf16.mxu0 0
        %2695 = vmatpush1.bf16.msra.mxu0 %v2684
        %2696 = vmatprep.subr.bf16.mxu0 0
        %2697 = vmatpush1.bf16.msra.mxu0 %v2685
        %2698 = vmatprep.subr.bf16.mxu0 0
        %2699 = vmatpush1.bf16.msra.mxu0 %v2686
        %2700 = vmatprep.subr.bf16.mxu0 0
        %2701 = vmatpush1.bf16.msra.mxu0 %v2687
        %2702 = vmatprep.subr.bf16.mxu0 0
        %2703 = vmatpush1.bf16.msra.mxu0 %v2688
        %2704 = vmatprep.subr.bf16.mxu0 0
        %2705 = vmatpush1.bf16.msra.mxu0 %v2689
        %2706 = vmatprep.subr.bf16.mxu0 0
        %2707 = vmatpush1.bf16.msra.mxu0 0
        %2708 = vmatprep.subr.bf16.mxu0 0
        %2709 = vmatpush1.bf16.msra.mxu0 0
        %2710 = vmatprep.subr.bf16.mxu0 0
        %2711 = vmatpush1.bf16.msra.mxu0 0
        %2712 = vmatprep.subr.bf16.mxu0 0
        %2713 = vmatpush1.bf16.msra.mxu0 0
        %2714 = vmatprep.subr.bf16.mxu0 0
        %2715 = vmatpush1.bf16.msra.mxu0 0
        %2716 = vmatprep.subr.bf16.mxu0 0
        %2717 = vmatpush1.bf16.msra.mxu0 0
        %2718 = vmatprep.subr.bf16.mxu0 0
        %2719 = vmatpush1.bf16.msra.mxu0 0
        %2720 = vmatprep.subr.bf16.mxu0 0
        %2721 = vmatpush1.bf16.msra.mxu0 0
        %2722 = vmatprep.mubr.bf16.mxu0 0
        %2723 = vmatmul.mubr.bf16.gmra.mrb[0].mxu0 %v2674
        %v2724 = vpop.f32.mrb[0].mxu0
        %v2725 = vadd.f32 0.0, %v2724
        %v2726 = vpop.f32.mrb[0].mxu0
        %v2727 = vpop.f32.mrb[0].mxu0
        %v2728 = vadd.f32 0.0, %v2727
        %v2729 = vpop.f32.mrb[0].mxu0
        %2730 = vmatprep.mubr.bf16.mxu0 0
        %2731 = vmatmul.mubr.bf16.gmra.mrb[0].mxu0 %v2675
        %v2732 = vpop.f32.mrb[0].mxu0
        %v2733 = vadd.f32 0.0, %v2732
        %v2734 = vpop.f32.mrb[0].mxu0
        %v2735 = vpop.f32.mrb[0].mxu0
        %v2736 = vadd.f32 0.0, %v2735
        %v2737 = vpop.f32.mrb[0].mxu0
        %2738 = vmatprep.mubr.bf16.mxu0 0
        %2739 = vmatmul.mubr.bf16.gmra.mrb[0].mxu0 %v2676
        %v2740 = vpop.f32.mrb[0].mxu0
        %v2741 = vadd.f32 0.0, %v2740
        %v2742 = vpop.f32.mrb[0].mxu0
        %v2743 = vpop.f32.mrb[0].mxu0
        %v2744 = vadd.f32 0.0, %v2743
        %v2745 = vpop.f32.mrb[0].mxu0
        %2746 = vmatprep.mubr.bf16.mxu0 0
        %2747 = vmatmul.mubr.bf16.gmra.mrb[0].mxu0 %v2677
        %v2748 = vpop.f32.mrb[0].mxu0
        %v2749 = vadd.f32 0.0, %v2748
        %v2750 = vpop.f32.mrb[0].mxu0
        %v2751 = vpop.f32.mrb[0].mxu0
        %v2752 = vadd.f32 0.0, %v2751
        %v2753 = vpop.f32.mrb[0].mxu0
        %2754 = vmatprep.mubr.bf16.mxu0 0
        %2755 = vmatmul.mubr.bf16.gmra.mrb[0].mxu0 %v2678
        %v2756 = vpop.f32.mrb[0].mxu0
        %v2757 = vadd.f32 0.0, %v2756
        %v2758 = vpop.f32.mrb[0].mxu0
        %v2759 = vpop.f32.mrb[0].mxu0
        %v2760 = vadd.f32 0.0, %v2759
        %v2761 = vpop.f32.mrb[0].mxu0
        %2762 = vmatprep.mubr.bf16.mxu0 0
        %2763 = vmatmul.mubr.bf16.gmra.mrb[0].mxu0 %v2679
        %v2764 = vpop.f32.mrb[0].mxu0
        %v2765 = vadd.f32 0.0, %v2764
        %v2766 = vpop.f32.mrb[0].mxu0
        %v2767 = vpop.f32.mrb[0].mxu0
        %v2768 = vadd.f32 0.0, %v2767
        %v2769 = vpop.f32.mrb[0].mxu0
        %2770 = vmatprep.mubr.bf16.mxu0 0
        %2771 = vmatmul.mubr.bf16.gmra.mrb[0].mxu0 %v2680
        %v2772 = vpop.f32.mrb[0].mxu0
        %v2773 = vadd.f32 0.0, %v2772
        %v2774 = vpop.f32.mrb[0].mxu0
        %v2775 = vpop.f32.mrb[0].mxu0
        %v2776 = vadd.f32 0.0, %v2775
        %v2777 = vpop.f32.mrb[0].mxu0
        %2778 = vmatprep.mubr.bf16.mxu0 0
        %2779 = vmatmul.mubr.bf16.gmra.mrb[0].mxu0 %v2681
        %v2780 = vpop.f32.mrb[0].mxu0
        %v2781 = vadd.f32 0.0, %v2780
        %v2782 = vpop.f32.mrb[0].mxu0
        %v2783 = vpop.f32.mrb[0].mxu0
        %v2784 = vadd.f32 0.0, %v2783
        %v2785 = vpop.f32.mrb[0].mxu0
        %2786 = vdwg.mxu0
        %2787 = vmatprep.subr.bf16.mxu0 0
        %2788 = vmatpush1.bf16.msra.mxu0 %v2034
        %2789 = vmatprep.subr.bf16.mxu0 0
        %2790 = vmatpush1.bf16.msra.mxu0 %v2035
        %2791 = vmatprep.subr.bf16.mxu0 0
        %2792 = vmatpush1.bf16.msra.mxu0 %v2036
        %2793 = vmatprep.subr.bf16.mxu0 0
        %2794 = vmatpush1.bf16.msra.mxu0 %v2037
        %2795 = vmatprep.subr.bf16.mxu0 0
        %2796 = vmatpush1.bf16.msra.mxu0 %v2038
        %2797 = vmatprep.subr.bf16.mxu0 0
        %2798 = vmatpush1.bf16.msra.mxu0 %v2039
        %2799 = vmatprep.subr.bf16.mxu0 0
        %2800 = vmatpush1.bf16.msra.mxu0 %v2040
        %2801 = vmatprep.subr.bf16.mxu0 0
        %2802 = vmatpush1.bf16.msra.mxu0 %v2041
        %2803 = vmatprep.subr.bf16.mxu0 0
        %2804 = vmatpush1.bf16.msra.mxu0 0
        %2805 = vmatprep.subr.bf16.mxu0 0
        %2806 = vmatpush1.bf16.msra.mxu0 0
        %2807 = vmatprep.subr.bf16.mxu0 0
        %2808 = vmatpush1.bf16.msra.mxu0 0
        %2809 = vmatprep.subr.bf16.mxu0 0
        %2810 = vmatpush1.bf16.msra.mxu0 0
        %2811 = vmatprep.subr.bf16.mxu0 0
        %2812 = vmatpush1.bf16.msra.mxu0 0
        %2813 = vmatprep.subr.bf16.mxu0 0
        %2814 = vmatpush1.bf16.msra.mxu0 0
        %2815 = vmatprep.subr.bf16.mxu0 0
        %2816 = vmatpush1.bf16.msra.mxu0 0
        %2817 = vmatprep.subr.bf16.mxu0 0
        %2818 = vmatpush1.bf16.msra.mxu0 0
        %2819 = vmatprep.mubr.bf16.mxu0 0
        %2820 = vmatmul.mubr.bf16.gmra.mrb[0].mxu0 %v2026
        %v2821 = vpop.f32.mrb[0].mxu0
        %v2822 = vadd.f32 %v2725, %v2821
        %v2823 = vpop.f32.mrb[0].mxu0
        %v2824 = vpop.f32.mrb[0].mxu0
        %v2825 = vadd.f32 %v2728, %v2824
        %v2826 = vpop.f32.mrb[0].mxu0
        %2827 = vmatprep.mubr.bf16.mxu0 0
        %2828 = vmatmul.mubr.bf16.gmra.mrb[0].mxu0 %v2027
        %v2829 = vpop.f32.mrb[0].mxu0
        %v2830 = vadd.f32 %v2733, %v2829
        %v2831 = vpop.f32.mrb[0].mxu0
        %v2832 = vpop.f32.mrb[0].mxu0
        %v2833 = vadd.f32 %v2736, %v2832
        %v2834 = vpop.f32.mrb[0].mxu0
        %2835 = vmatprep.mubr.bf16.mxu0 0
        %2836 = vmatmul.mubr.bf16.gmra.mrb[0].mxu0 %v2028
        %v2837 = vpop.f32.mrb[0].mxu0
        %v2838 = vadd.f32 %v2741, %v2837
        %v2839 = vpop.f32.mrb[0].mxu0
        %v2840 = vpop.f32.mrb[0].mxu0
        %v2841 = vadd.f32 %v2744, %v2840
        %v2842 = vpop.f32.mrb[0].mxu0
        %2843 = vmatprep.mubr.bf16.mxu0 0
        %2844 = vmatmul.mubr.bf16.gmra.mrb[0].mxu0 %v2029
        %v2845 = vpop.f32.mrb[0].mxu0
        %v2846 = vadd.f32 %v2749, %v2845
        %v2847 = vpop.f32.mrb[0].mxu0
        %v2848 = vpop.f32.mrb[0].mxu0
        %v2849 = vadd.f32 %v2752, %v2848
        %v2850 = vpop.f32.mrb[0].mxu0
        %2851 = vmatprep.mubr.bf16.mxu0 0
        %2852 = vmatmul.mubr.bf16.gmra.mrb[0].mxu0 %v2030
        %v2853 = vpop.f32.mrb[0].mxu0
        %v2854 = vadd.f32 %v2757, %v2853
        %v2855 = vpop.f32.mrb[0].mxu0
        %v2856 = vpop.f32.mrb[0].mxu0
        %v2857 = vadd.f32 %v2760, %v2856
        %v2858 = vpop.f32.mrb[0].mxu0
        %2859 = vmatprep.mubr.bf16.mxu0 0
        %2860 = vmatmul.mubr.bf16.gmra.mrb[0].mxu0 %v2031
        %v2861 = vpop.f32.mrb[0].mxu0
        %v2862 = vadd.f32 %v2765, %v2861
        %v2863 = vpop.f32.mrb[0].mxu0
        %v2864 = vpop.f32.mrb[0].mxu0
        %v2865 = vadd.f32 %v2768, %v2864
        %v2866 = vpop.f32.mrb[0].mxu0
        %2867 = vmatprep.mubr.bf16.mxu0 0
        %2868 = vmatmul.mubr.bf16.gmra.mrb[0].mxu0 %v2032
        %v2869 = vpop.f32.mrb[0].mxu0
        %v2870 = vadd.f32 %v2773, %v2869
        %v2871 = vpop.f32.mrb[0].mxu0
        %v2872 = vpop.f32.mrb[0].mxu0
        %v2873 = vadd.f32 %v2776, %v2872
        %v2874 = vpop.f32.mrb[0].mxu0
        %2875 = vmatprep.mubr.bf16.mxu0 0
        %2876 = vmatmul.mubr.bf16.gmra.mrb[0].mxu0 %v2033
        %v2877 = vpop.f32.mrb[0].mxu0
        %v2878 = vadd.f32 %v2781, %v2877
        %v2879 = vpop.f32.mrb[0].mxu0
        %v2880 = vpop.f32.mrb[0].mxu0
        %v2881 = vadd.f32 %v2784, %v2880
        %v2882 = vpop.f32.mrb[0].mxu0
        %2883 = vdwg.mxu0
        %s2884 = scalar_lea.vmem %s5, 32
        %v2885 = vld [vmem:[%s2884] sm:$0xf]
        %v2886 = vld [vmem:[%s2884 + $0x4] sm:$0xf]
        %v2887 = vld [vmem:[%s2884 + $0x8] sm:$0xf]
        %v2888 = vld [vmem:[%s2884 + $0xc] sm:$0xf]
        %s2889 = scalar_lea.vmem %s6, 2
        %v2890 = vld [vmem:[%s2889] sm:$0x1]
        %v2892 = vlaneseq
        %v2893 = vshrl.u32 %v2892, 7
        %v2894 = vsub.s32 0, %v2893
        %v2895 = vrot.slane %v2890, %v2894
        %v2901 = vunpack.c.l.b16 %v2885
        %v2902 = vunpack.c.l.b16 %v2886
        %v2903 = vunpack.c.l.b16 %v2887
        %v2904 = vunpack.c.l.b16 %v2888
        %v2905 = vpack.c.b16 %v2902, %v2901
        %v2906 = vpack.c.b16 %v2904, %v2903
        %2909 = vmatprep.subr.bf16.mxu0 0
        %2910 = vmatpush1.bf16.msra.mxu0 %v2905
        %2911 = vmatprep.subr.bf16.mxu0 0
        %2912 = vmatpush1.bf16.msra.mxu0 %v2906
        %2913 = vmatprep.subr.bf16.mxu0 0
        %2914 = vmatpush1.bf16.msra.mxu0 0
        %2915 = vmatprep.subr.bf16.mxu0 0
        %2916 = vmatpush1.bf16.msra.mxu0 0
        %2917 = vmatprep.subr.bf16.mxu0 0
        %2918 = vmatpush1.bf16.msra.mxu0 0
        %2919 = vmatprep.subr.bf16.mxu0 0
        %2920 = vmatpush1.bf16.msra.mxu0 0
        %2921 = vmatprep.subr.bf16.mxu0 0
        %2922 = vmatpush1.bf16.msra.mxu0 0
        %2923 = vmatprep.subr.bf16.mxu0 0
        %2924 = vmatpush1.bf16.msra.mxu0 0
        %2925 = vmatprep.subr.bf16.mxu0 0
        %2926 = vmatpush1.bf16.msra.mxu0 0
        %2927 = vmatprep.subr.bf16.mxu0 0
        %2928 = vmatpush1.bf16.msra.mxu0 0
        %2929 = vmatprep.subr.bf16.mxu0 0
        %2930 = vmatpush1.bf16.msra.mxu0 0
        %2931 = vmatprep.subr.bf16.mxu0 0
        %2932 = vmatpush1.bf16.msra.mxu0 0
        %2933 = vmatprep.subr.bf16.mxu0 0
        %2934 = vmatpush1.bf16.msra.mxu0 0
        %2935 = vmatprep.subr.bf16.mxu0 0
        %2936 = vmatpush1.bf16.msra.mxu0 0
        %2937 = vmatprep.subr.bf16.mxu0 0
        %2938 = vmatpush1.bf16.msra.mxu0 0
        %2939 = vmatprep.subr.bf16.mxu0 0
        %2940 = vmatpush1.bf16.msra.mxu0 0
        %2941 = vmatprep.mubr.bf16.mxu0 0
        %2942 = vmatmul.mubr.bf16.gmra.mrb[0].mxu0 %v1399
        %v2943 = vpop.f32.mrb[0].mxu0
        %v2944 = vadd.f32 %v2895, %v2943
        %v2945 = vpop.f32.mrb[0].mxu0
        %v2946 = vpop.f32.mrb[0].mxu0
        %v2947 = vadd.f32 %v2895, %v2946
        %v2948 = vpop.f32.mrb[0].mxu0
        %2949 = vmatprep.mubr.bf16.mxu0 0
        %2950 = vmatmul.mubr.bf16.gmra.mrb[0].mxu0 %v1402
        %v2951 = vpop.f32.mrb[0].mxu0
        %v2952 = vadd.f32 %v2895, %v2951
        %v2953 = vpop.f32.mrb[0].mxu0
        %v2954 = vpop.f32.mrb[0].mxu0
        %v2955 = vadd.f32 %v2895, %v2954
        %v2956 = vpop.f32.mrb[0].mxu0
        %2957 = vmatprep.mubr.bf16.mxu0 0
        %2958 = vmatmul.mubr.bf16.gmra.mrb[0].mxu0 %v1405
        %v2959 = vpop.f32.mrb[0].mxu0
        %v2960 = vadd.f32 %v2895, %v2959
        %v2961 = vpop.f32.mrb[0].mxu0
        %v2962 = vpop.f32.mrb[0].mxu0
        %v2963 = vadd.f32 %v2895, %v2962
        %v2964 = vpop.f32.mrb[0].mxu0
        %2965 = vmatprep.mubr.bf16.mxu0 0
        %2966 = vmatmul.mubr.bf16.gmra.mrb[0].mxu0 %v1408
        %v2967 = vpop.f32.mrb[0].mxu0
        %v2968 = vadd.f32 %v2895, %v2967
        %v2969 = vpop.f32.mrb[0].mxu0
        %v2970 = vpop.f32.mrb[0].mxu0
        %v2971 = vadd.f32 %v2895, %v2970
        %v2972 = vpop.f32.mrb[0].mxu0
        %2973 = vmatprep.mubr.bf16.mxu0 0
        %2974 = vmatmul.mubr.bf16.gmra.mrb[0].mxu0 %v1411
        %v2975 = vpop.f32.mrb[0].mxu0
        %v2976 = vadd.f32 %v2895, %v2975
        %v2977 = vpop.f32.mrb[0].mxu0
        %v2978 = vpop.f32.mrb[0].mxu0
        %v2979 = vadd.f32 %v2895, %v2978
        %v2980 = vpop.f32.mrb[0].mxu0
        %2981 = vmatprep.mubr.bf16.mxu0 0
        %2982 = vmatmul.mubr.bf16.gmra.mrb[0].mxu0 %v1414
        %v2983 = vpop.f32.mrb[0].mxu0
        %v2984 = vadd.f32 %v2895, %v2983
        %v2985 = vpop.f32.mrb[0].mxu0
        %v2986 = vpop.f32.mrb[0].mxu0
        %v2987 = vadd.f32 %v2895, %v2986
        %v2988 = vpop.f32.mrb[0].mxu0
        %2989 = vmatprep.mubr.bf16.mxu0 0
        %2990 = vmatmul.mubr.bf16.gmra.mrb[0].mxu0 %v1417
        %v2991 = vpop.f32.mrb[0].mxu0
        %v2992 = vadd.f32 %v2895, %v2991
        %v2993 = vpop.f32.mrb[0].mxu0
        %v2994 = vpop.f32.mrb[0].mxu0
        %v2995 = vadd.f32 %v2895, %v2994
        %v2996 = vpop.f32.mrb[0].mxu0
        %2997 = vmatprep.mubr.bf16.mxu0 0
        %2998 = vmatmul.mubr.bf16.gmra.mrb[0].mxu0 %v1420
        %v2999 = vpop.f32.mrb[0].mxu0
        %v3000 = vadd.f32 %v2895, %v2999
        %v3001 = vpop.f32.mrb[0].mxu0
        %v3002 = vpop.f32.mrb[0].mxu0
        %v3003 = vadd.f32 %v2895, %v3002
        %v3004 = vpop.f32.mrb[0].mxu0
        %3005 = vdwg.mxu0
        %s3006 = scalar_lea.vmem %s7, 32
        %v3007 = vld [vmem:[%s3006] sm:$0xf]
        %v3008 = vld [vmem:[%s3006 + $0x4] sm:$0xf]
        %v3009 = vld [vmem:[%s3006 + $0x8] sm:$0xf]
        %v3010 = vld [vmem:[%s3006 + $0xc] sm:$0xf]
        %v3015 = vunpack.c.l.b16 %v3007
        %v3016 = vunpack.c.l.b16 %v3008
        %v3017 = vunpack.c.l.b16 %v3009
        %v3018 = vunpack.c.l.b16 %v3010
        %v3019 = vpack.c.b16 %v3016, %v3015
        %v3020 = vpack.c.b16 %v3018, %v3017
        %3023 = vmatprep.subr.bf16.mxu0 0
        %3024 = vmatpush1.bf16.msra.mxu0 %v3019
        %3025 = vmatprep.subr.bf16.mxu0 0
        %3026 = vmatpush1.bf16.msra.mxu0 %v3020
        %3027 = vmatprep.subr.bf16.mxu0 0
        %3028 = vmatpush1.bf16.msra.mxu0 0
        %3029 = vmatprep.subr.bf16.mxu0 0
        %3030 = vmatpush1.bf16.msra.mxu0 0
        %3031 = vmatprep.subr.bf16.mxu0 0
        %3032 = vmatpush1.bf16.msra.mxu0 0
        %3033 = vmatprep.subr.bf16.mxu0 0
        %3034 = vmatpush1.bf16.msra.mxu0 0
        %3035 = vmatprep.subr.bf16.mxu0 0
        %3036 = vmatpush1.bf16.msra.mxu0 0
        %3037 = vmatprep.subr.bf16.mxu0 0
        %3038 = vmatpush1.bf16.msra.mxu0 0
        %3039 = vmatprep.subr.bf16.mxu0 0
        %3040 = vmatpush1.bf16.msra.mxu0 0
        %3041 = vmatprep.subr.bf16.mxu0 0
        %3042 = vmatpush1.bf16.msra.mxu0 0
        %3043 = vmatprep.subr.bf16.mxu0 0
        %3044 = vmatpush1.bf16.msra.mxu0 0
        %3045 = vmatprep.subr.bf16.mxu0 0
        %3046 = vmatpush1.bf16.msra.mxu0 0
        %3047 = vmatprep.subr.bf16.mxu0 0
        %3048 = vmatpush1.bf16.msra.mxu0 0
        %3049 = vmatprep.subr.bf16.mxu0 0
        %3050 = vmatpush1.bf16.msra.mxu0 0
        %3051 = vmatprep.subr.bf16.mxu0 0
        %3052 = vmatpush1.bf16.msra.mxu0 0
        %3053 = vmatprep.subr.bf16.mxu0 0
        %3054 = vmatpush1.bf16.msra.mxu0 0
        %3055 = vmatprep.mubr.bf16.mxu0 0
        %3056 = vmatmul.mubr.bf16.gmra.mrb[0].mxu0 %v1399
        %v3057 = vpop.f32.mrb[0].mxu0
        %v3058 = vadd.f32 0.0, %v3057
        %v3059 = vpop.f32.mrb[0].mxu0
        %v3060 = vpop.f32.mrb[0].mxu0
        %v3061 = vadd.f32 0.0, %v3060
        %v3062 = vpop.f32.mrb[0].mxu0
        %3063 = vmatprep.mubr.bf16.mxu0 0
        %3064 = vmatmul.mubr.bf16.gmra.mrb[0].mxu0 %v1402
        %v3065 = vpop.f32.mrb[0].mxu0
        %v3066 = vadd.f32 0.0, %v3065
        %v3067 = vpop.f32.mrb[0].mxu0
        %v3068 = vpop.f32.mrb[0].mxu0
        %v3069 = vadd.f32 0.0, %v3068
        %v3070 = vpop.f32.mrb[0].mxu0
        %3071 = vmatprep.mubr.bf16.mxu0 0
        %3072 = vmatmul.mubr.bf16.gmra.mrb[0].mxu0 %v1405
        %v3073 = vpop.f32.mrb[0].mxu0
        %v3074 = vadd.f32 0.0, %v3073
        %v3075 = vpop.f32.mrb[0].mxu0
        %v3076 = vpop.f32.mrb[0].mxu0
        %v3077 = vadd.f32 0.0, %v3076
        %v3078 = vpop.f32.mrb[0].mxu0
        %3079 = vmatprep.mubr.bf16.mxu0 0
        %3080 = vmatmul.mubr.bf16.gmra.mrb[0].mxu0 %v1408
        %v3081 = vpop.f32.mrb[0].mxu0
        %v3082 = vadd.f32 0.0, %v3081
        %v3083 = vpop.f32.mrb[0].mxu0
        %v3084 = vpop.f32.mrb[0].mxu0
        %v3085 = vadd.f32 0.0, %v3084
        %v3086 = vpop.f32.mrb[0].mxu0
        %3087 = vmatprep.mubr.bf16.mxu0 0
        %3088 = vmatmul.mubr.bf16.gmra.mrb[0].mxu0 %v1411
        %v3089 = vpop.f32.mrb[0].mxu0
        %v3090 = vadd.f32 0.0, %v3089
        %v3091 = vpop.f32.mrb[0].mxu0
        %v3092 = vpop.f32.mrb[0].mxu0
        %v3093 = vadd.f32 0.0, %v3092
        %v3094 = vpop.f32.mrb[0].mxu0
        %3095 = vmatprep.mubr.bf16.mxu0 0
        %3096 = vmatmul.mubr.bf16.gmra.mrb[0].mxu0 %v1414
        %v3097 = vpop.f32.mrb[0].mxu0
        %v3098 = vadd.f32 0.0, %v3097
        %v3099 = vpop.f32.mrb[0].mxu0
        %v3100 = vpop.f32.mrb[0].mxu0
        %v3101 = vadd.f32 0.0, %v3100
        %v3102 = vpop.f32.mrb[0].mxu0
        %3103 = vmatprep.mubr.bf16.mxu0 0
        %3104 = vmatmul.mubr.bf16.gmra.mrb[0].mxu0 %v1417
        %v3105 = vpop.f32.mrb[0].mxu0
        %v3106 = vadd.f32 0.0, %v3105
        %v3107 = vpop.f32.mrb[0].mxu0
        %v3108 = vpop.f32.mrb[0].mxu0
        %v3109 = vadd.f32 0.0, %v3108
        %v3110 = vpop.f32.mrb[0].mxu0
        %3111 = vmatprep.mubr.bf16.mxu0 0
        %3112 = vmatmul.mubr.bf16.gmra.mrb[0].mxu0 %v1420
        %v3113 = vpop.f32.mrb[0].mxu0
        %v3114 = vadd.f32 0.0, %v3113
        %v3115 = vpop.f32.mrb[0].mxu0
        %v3116 = vpop.f32.mrb[0].mxu0
        %v3117 = vadd.f32 0.0, %v3116
        %v3118 = vpop.f32.mrb[0].mxu0
        %3119 = vdwg.mxu0
        %s3120 = scalar_lea.vmem %s8, 32
        %v3121 = vld [vmem:[%s3120] sm:$0xf]
        %v3122 = vld [vmem:[%s3120 + $0x4] sm:$0xf]
        %v3123 = vld [vmem:[%s3120 + $0x8] sm:$0xf]
        %v3124 = vld [vmem:[%s3120 + $0xc] sm:$0xf]
        %s3125 = scalar_lea.vmem [#allocation2], 2
        %v3126 = vld [vmem:[%s3125] sm:$0x1]
        %v3128 = vlaneseq
        %v3129 = vshrl.u32 %v3128, 7
        %v3130 = vsub.s32 0, %v3129
        %v3131 = vrot.slane %v3126, %v3130
        %v3137 = vunpack.c.l.b16 %v3121
        %v3138 = vunpack.c.l.b16 %v3122
        %v3139 = vunpack.c.l.b16 %v3123
        %v3140 = vunpack.c.l.b16 %v3124
        %v3141 = vpack.c.b16 %v3138, %v3137
        %v3142 = vpack.c.b16 %v3140, %v3139
        %3145 = vmatprep.subr.bf16.mxu0 0
        %3146 = vmatpush1.bf16.msra.mxu0 %v3141
        %3147 = vmatprep.subr.bf16.mxu0 0
        %3148 = vmatpush1.bf16.msra.mxu0 %v3142
        %3149 = vmatprep.subr.bf16.mxu0 0
        %3150 = vmatpush1.bf16.msra.mxu0 0
        %3151 = vmatprep.subr.bf16.mxu0 0
        %3152 = vmatpush1.bf16.msra.mxu0 0
        %3153 = vmatprep.subr.bf16.mxu0 0
        %3154 = vmatpush1.bf16.msra.mxu0 0
        %3155 = vmatprep.subr.bf16.mxu0 0
        %3156 = vmatpush1.bf16.msra.mxu0 0
        %3157 = vmatprep.subr.bf16.mxu0 0
        %3158 = vmatpush1.bf16.msra.mxu0 0
        %3159 = vmatprep.subr.bf16.mxu0 0
        %3160 = vmatpush1.bf16.msra.mxu0 0
        %3161 = vmatprep.subr.bf16.mxu0 0
        %3162 = vmatpush1.bf16.msra.mxu0 0
        %3163 = vmatprep.subr.bf16.mxu0 0
        %3164 = vmatpush1.bf16.msra.mxu0 0
        %3165 = vmatprep.subr.bf16.mxu0 0
        %3166 = vmatpush1.bf16.msra.mxu0 0
        %3167 = vmatprep.subr.bf16.mxu0 0
        %3168 = vmatpush1.bf16.msra.mxu0 0
        %3169 = vmatprep.subr.bf16.mxu0 0
        %3170 = vmatpush1.bf16.msra.mxu0 0
        %3171 = vmatprep.subr.bf16.mxu0 0
        %3172 = vmatpush1.bf16.msra.mxu0 0
        %3173 = vmatprep.subr.bf16.mxu0 0
        %3174 = vmatpush1.bf16.msra.mxu0 0
        %3175 = vmatprep.subr.bf16.mxu0 0
        %3176 = vmatpush1.bf16.msra.mxu0 0
        %3177 = vmatprep.mubr.bf16.mxu0 0
        %3178 = vmatmul.mubr.bf16.gmra.mrb[0].mxu0 %v1399
        %v3179 = vpop.f32.mrb[0].mxu0
        %v3180 = vadd.f32 %v3131, %v3179
        %v3181 = vpop.f32.mrb[0].mxu0
        %v3182 = vpop.f32.mrb[0].mxu0
        %v3183 = vadd.f32 %v3131, %v3182
        %v3184 = vpop.f32.mrb[0].mxu0
        %3185 = vmatprep.mubr.bf16.mxu0 0
        %3186 = vmatmul.mubr.bf16.gmra.mrb[0].mxu0 %v1402
        %v3187 = vpop.f32.mrb[0].mxu0
        %v3188 = vadd.f32 %v3131, %v3187
        %v3189 = vpop.f32.mrb[0].mxu0
        %v3190 = vpop.f32.mrb[0].mxu0
        %v3191 = vadd.f32 %v3131, %v3190
        %v3192 = vpop.f32.mrb[0].mxu0
        %3193 = vmatprep.mubr.bf16.mxu0 0
        %3194 = vmatmul.mubr.bf16.gmra.mrb[0].mxu0 %v1405
        %v3195 = vpop.f32.mrb[0].mxu0
        %v3196 = vadd.f32 %v3131, %v3195
        %v3197 = vpop.f32.mrb[0].mxu0
        %v3198 = vpop.f32.mrb[0].mxu0
        %v3199 = vadd.f32 %v3131, %v3198
        %v3200 = vpop.f32.mrb[0].mxu0
        %3201 = vmatprep.mubr.bf16.mxu0 0
        %3202 = vmatmul.mubr.bf16.gmra.mrb[0].mxu0 %v1408
        %v3203 = vpop.f32.mrb[0].mxu0
        %v3204 = vadd.f32 %v3131, %v3203
        %v3205 = vpop.f32.mrb[0].mxu0
        %v3206 = vpop.f32.mrb[0].mxu0
        %v3207 = vadd.f32 %v3131, %v3206
        %v3208 = vpop.f32.mrb[0].mxu0
        %3209 = vmatprep.mubr.bf16.mxu0 0
        %3210 = vmatmul.mubr.bf16.gmra.mrb[0].mxu0 %v1411
        %v3211 = vpop.f32.mrb[0].mxu0
        %v3212 = vadd.f32 %v3131, %v3211
        %v3213 = vpop.f32.mrb[0].mxu0
        %v3214 = vpop.f32.mrb[0].mxu0
        %v3215 = vadd.f32 %v3131, %v3214
        %v3216 = vpop.f32.mrb[0].mxu0
        %3217 = vmatprep.mubr.bf16.mxu0 0
        %3218 = vmatmul.mubr.bf16.gmra.mrb[0].mxu0 %v1414
        %v3219 = vpop.f32.mrb[0].mxu0
        %v3220 = vadd.f32 %v3131, %v3219
        %v3221 = vpop.f32.mrb[0].mxu0
        %v3222 = vpop.f32.mrb[0].mxu0
        %v3223 = vadd.f32 %v3131, %v3222
        %v3224 = vpop.f32.mrb[0].mxu0
        %3225 = vmatprep.mubr.bf16.mxu0 0
        %3226 = vmatmul.mubr.bf16.gmra.mrb[0].mxu0 %v1417
        %v3227 = vpop.f32.mrb[0].mxu0
        %v3228 = vadd.f32 %v3131, %v3227
        %v3229 = vpop.f32.mrb[0].mxu0
        %v3230 = vpop.f32.mrb[0].mxu0
        %v3231 = vadd.f32 %v3131, %v3230
        %v3232 = vpop.f32.mrb[0].mxu0
        %3233 = vmatprep.mubr.bf16.mxu0 0
        %3234 = vmatmul.mubr.bf16.gmra.mrb[0].mxu0 %v1420
        %v3235 = vpop.f32.mrb[0].mxu0
        %v3236 = vadd.f32 %v3131, %v3235
        %v3237 = vpop.f32.mrb[0].mxu0
        %v3238 = vpop.f32.mrb[0].mxu0
        %v3239 = vadd.f32 %v3131, %v3238
        %v3240 = vpop.f32.mrb[0].mxu0
        %3241 = vdwg.mxu0
        %v3242 = vpack.c.bf16 %v2947, %v2944
        %v3243 = vpack.c.bf16 %v2955, %v2952
        %v3244 = vpack.c.bf16 %v2963, %v2960
        %v3245 = vpack.c.bf16 %v2971, %v2968
        %v3246 = vpack.c.bf16 %v2979, %v2976
        %v3247 = vpack.c.bf16 %v2987, %v2984
        %v3248 = vpack.c.bf16 %v2995, %v2992
        %v3249 = vpack.c.bf16 %v3003, %v3000
        %v3250 = vpack.c.bf16 %v3061, %v3058
        %v3251 = vpack.c.bf16 %v3069, %v3066
        %v3252 = vpack.c.bf16 %v3077, %v3074
        %v3253 = vpack.c.bf16 %v3085, %v3082
        %v3254 = vpack.c.bf16 %v3093, %v3090
        %v3255 = vpack.c.bf16 %v3101, %v3098
        %v3256 = vpack.c.bf16 %v3109, %v3106
        %v3257 = vpack.c.bf16 %v3117, %v3114
        %s3258 = scalar_lea.vmem %s11, 256
        %v3259 = vld [vmem:[%s3258] sm:$0xff]
        %v3260 = vld [vmem:[%s3258 + $0x8] sm:$0xff]
        %v3261 = vld [vmem:[%s3258 + $0x10] sm:$0xff]
        %v3262 = vld [vmem:[%s3258 + $0x18] sm:$0xff]
        %v3263 = vld [vmem:[%s3258 + $0x20] sm:$0xff]
        %v3264 = vld [vmem:[%s3258 + $0x28] sm:$0xff]
        %v3265 = vld [vmem:[%s3258 + $0x30] sm:$0xff]
        %v3266 = vld [vmem:[%s3258 + $0x38] sm:$0xff]
        %v3267 = vld [vmem:[%s3258 + $0x40] sm:$0xff]
        %v3268 = vld [vmem:[%s3258 + $0x48] sm:$0xff]
        %v3269 = vld [vmem:[%s3258 + $0x50] sm:$0xff]
        %v3270 = vld [vmem:[%s3258 + $0x58] sm:$0xff]
        %v3271 = vld [vmem:[%s3258 + $0x60] sm:$0xff]
        %v3272 = vld [vmem:[%s3258 + $0x68] sm:$0xff]
        %v3273 = vld [vmem:[%s3258 + $0x70] sm:$0xff]
        %v3274 = vld [vmem:[%s3258 + $0x78] sm:$0xff]
        %v3276 = vsel %vm1784, %v3242, 0
        %v3279 = vsel %vm1784, %v3243, 0
        %v3282 = vsel %vm1784, %v3244, 0
        %v3285 = vsel %vm1784, %v3245, 0
        %v3288 = vsel %vm1784, %v3246, 0
        %v3291 = vsel %vm1784, %v3247, 0
        %v3294 = vsel %vm1784, %v3248, 0
        %v3297 = vsel %vm1784, %v3249, 0
        %v3300 = vsel %vm1784, %v3250, 0
        %v3303 = vsel %vm1784, %v3251, 0
        %v3306 = vsel %vm1784, %v3252, 0
        %v3309 = vsel %vm1784, %v3253, 0
        %v3312 = vsel %vm1784, %v3254, 0
        %v3315 = vsel %vm1784, %v3255, 0
        %v3318 = vsel %vm1784, %v3256, 0
        %v3321 = vsel %vm1784, %v3257, 0
        %3323 = vmatprep.subr.bf16.mxu0 0
        %3324 = vmatpush1.bf16.xpose.msra.mxu0 %v3300
        %3325 = vmatprep.subr.bf16.mxu0 0
        %3326 = vmatpush1.bf16.xpose.msra.mxu0 %v3303
        %3327 = vmatprep.subr.bf16.mxu0 0
        %3328 = vmatpush1.bf16.xpose.msra.mxu0 %v3306
        %3329 = vmatprep.subr.bf16.mxu0 0
        %3330 = vmatpush1.bf16.xpose.msra.mxu0 %v3309
        %3331 = vmatprep.subr.bf16.mxu0 0
        %3332 = vmatpush1.bf16.xpose.msra.mxu0 %v3312
        %3333 = vmatprep.subr.bf16.mxu0 0
        %3334 = vmatpush1.bf16.xpose.msra.mxu0 %v3315
        %3335 = vmatprep.subr.bf16.mxu0 0
        %3336 = vmatpush1.bf16.xpose.msra.mxu0 %v3318
        %3337 = vmatprep.subr.bf16.mxu0 0
        %3338 = vmatpush1.bf16.xpose.msra.mxu0 %v3321
        %3339 = vmatprep.subr.bf16.mxu0 0
        %3340 = vmatpush1.bf16.xpose.msra.mxu0 0
        %3341 = vmatprep.subr.bf16.mxu0 0
        %3342 = vmatpush1.bf16.xpose.msra.mxu0 0
        %3343 = vmatprep.subr.bf16.mxu0 0
        %3344 = vmatpush1.bf16.xpose.msra.mxu0 0
        %3345 = vmatprep.subr.bf16.mxu0 0
        %3346 = vmatpush1.bf16.xpose.msra.mxu0 0
        %3347 = vmatprep.subr.bf16.mxu0 0
        %3348 = vmatpush1.bf16.xpose.msra.mxu0 0
        %3349 = vmatprep.subr.bf16.mxu0 0
        %3350 = vmatpush1.bf16.xpose.msra.mxu0 0
        %3351 = vmatprep.subr.bf16.mxu0 0
        %3352 = vmatpush1.bf16.xpose.msra.mxu0 0
        %3353 = vmatprep.subr.bf16.mxu0 0
        %3354 = vmatpush1.bf16.xpose.msra.mxu0 0
        %3355 = vmatprep.mubr.bf16.mxu0 0
        %3356 = vmatmul.mubr.bf16.gmra.mrb[0].mxu0 %v3276
        %v3357 = vpop.f32.mrb[0].mxu0
        %v3358 = vadd.f32 %v3259, %v3357
        %v3359 = vpop.f32.mrb[0].mxu0
        %v3360 = vpop.f32.mrb[0].mxu0
        %v3361 = vadd.f32 %v3260, %v3360
        %v3362 = vpop.f32.mrb[0].mxu0
        %3363 = vmatprep.mubr.bf16.mxu0 0
        %3364 = vmatmul.mubr.bf16.gmra.mrb[0].mxu0 %v3279
        %v3365 = vpop.f32.mrb[0].mxu0
        %v3366 = vadd.f32 %v3261, %v3365
        %v3367 = vpop.f32.mrb[0].mxu0
        %v3368 = vpop.f32.mrb[0].mxu0
        %v3369 = vadd.f32 %v3262, %v3368
        %v3370 = vpop.f32.mrb[0].mxu0
        %3371 = vmatprep.mubr.bf16.mxu0 0
        %3372 = vmatmul.mubr.bf16.gmra.mrb[0].mxu0 %v3282
        %v3373 = vpop.f32.mrb[0].mxu0
        %v3374 = vadd.f32 %v3263, %v3373
        %v3375 = vpop.f32.mrb[0].mxu0
        %v3376 = vpop.f32.mrb[0].mxu0
        %v3377 = vadd.f32 %v3264, %v3376
        %v3378 = vpop.f32.mrb[0].mxu0
        %3379 = vmatprep.mubr.bf16.mxu0 0
        %3380 = vmatmul.mubr.bf16.gmra.mrb[0].mxu0 %v3285
        %v3381 = vpop.f32.mrb[0].mxu0
        %v3382 = vadd.f32 %v3265, %v3381
        %v3383 = vpop.f32.mrb[0].mxu0
        %v3384 = vpop.f32.mrb[0].mxu0
        %v3385 = vadd.f32 %v3266, %v3384
        %v3386 = vpop.f32.mrb[0].mxu0
        %3387 = vmatprep.mubr.bf16.mxu0 0
        %3388 = vmatmul.mubr.bf16.gmra.mrb[0].mxu0 %v3288
        %v3389 = vpop.f32.mrb[0].mxu0
        %v3390 = vadd.f32 %v3267, %v3389
        %v3391 = vpop.f32.mrb[0].mxu0
        %v3392 = vpop.f32.mrb[0].mxu0
        %v3393 = vadd.f32 %v3268, %v3392
        %v3394 = vpop.f32.mrb[0].mxu0
        %3395 = vmatprep.mubr.bf16.mxu0 0
        %3396 = vmatmul.mubr.bf16.gmra.mrb[0].mxu0 %v3291
        %v3397 = vpop.f32.mrb[0].mxu0
        %v3398 = vadd.f32 %v3269, %v3397
        %v3399 = vpop.f32.mrb[0].mxu0
        %v3400 = vpop.f32.mrb[0].mxu0
        %v3401 = vadd.f32 %v3270, %v3400
        %v3402 = vpop.f32.mrb[0].mxu0
        %3403 = vmatprep.mubr.bf16.mxu0 0
        %3404 = vmatmul.mubr.bf16.gmra.mrb[0].mxu0 %v3294
        %v3405 = vpop.f32.mrb[0].mxu0
        %v3406 = vadd.f32 %v3271, %v3405
        %v3407 = vpop.f32.mrb[0].mxu0
        %v3408 = vpop.f32.mrb[0].mxu0
        %v3409 = vadd.f32 %v3272, %v3408
        %v3410 = vpop.f32.mrb[0].mxu0
        %3411 = vmatprep.mubr.bf16.mxu0 0
        %3412 = vmatmul.mubr.bf16.gmra.mrb[0].mxu0 %v3297
        %v3413 = vpop.f32.mrb[0].mxu0
        %v3414 = vadd.f32 %v3273, %v3413
        %v3415 = vpop.f32.mrb[0].mxu0
        %v3416 = vpop.f32.mrb[0].mxu0
        %v3417 = vadd.f32 %v3274, %v3416
        %v3418 = vpop.f32.mrb[0].mxu0
        %3419 = vdwg.mxu0
        %v3420 = vmul.f32 %v3358, 1.442695
        %v3421 = vpow.pop %v3420
        %v3422 = vmul.f32 %v3361, 1.442695
        %v3423 = vpow.pop %v3422
        %v3424 = vmul.f32 %v3366, 1.442695
        %v3425 = vpow.pop %v3424
        %v3426 = vmul.f32 %v3369, 1.442695
        %v3427 = vpow.pop %v3426
        %v3428 = vmul.f32 %v3374, 1.442695
        %v3429 = vpow.pop %v3428
        %v3430 = vmul.f32 %v3377, 1.442695
        %v3431 = vpow.pop %v3430
        %v3432 = vmul.f32 %v3382, 1.442695
        %v3433 = vpow.pop %v3432
        %v3434 = vmul.f32 %v3385, 1.442695
        %v3435 = vpow.pop %v3434
        %v3436 = vmul.f32 %v3390, 1.442695
        %v3437 = vpow.pop %v3436
        %v3438 = vmul.f32 %v3393, 1.442695
        %v3439 = vpow.pop %v3438
        %v3440 = vmul.f32 %v3398, 1.442695
        %v3441 = vpow.pop %v3440
        %v3442 = vmul.f32 %v3401, 1.442695
        %v3443 = vpow.pop %v3442
        %v3444 = vmul.f32 %v3406, 1.442695
        %v3445 = vpow.pop %v3444
        %v3446 = vmul.f32 %v3409, 1.442695
        %v3447 = vpow.pop %v3446
        %v3448 = vmul.f32 %v3414, 1.442695
        %v3449 = vpow.pop %v3448
        %v3450 = vmul.f32 %v3417, 1.442695
        %v3451 = vpow.pop %v3450
        %3452 = vadd.xlane.f32.xlu0 %v3421
        %v3453 = vpop.xlane.xlu0 %3452
        %3454 = vadd.xlane.f32.xlu0 %v3423
        %v3455 = vpop.xlane.xlu0 %3454
        %3456 = vadd.xlane.f32.xlu0 %v3425
        %v3457 = vpop.xlane.xlu0 %3456
        %3458 = vadd.xlane.f32.xlu0 %v3427
        %v3459 = vpop.xlane.xlu0 %3458
        %3460 = vadd.xlane.f32.xlu0 %v3429
        %v3461 = vpop.xlane.xlu0 %3460
        %3462 = vadd.xlane.f32.xlu0 %v3431
        %v3463 = vpop.xlane.xlu0 %3462
        %3464 = vadd.xlane.f32.xlu0 %v3433
        %v3465 = vpop.xlane.xlu0 %3464
        %3466 = vadd.xlane.f32.xlu0 %v3435
        %v3467 = vpop.xlane.xlu0 %3466
        %3468 = vadd.xlane.f32.xlu0 %v3437
        %v3469 = vpop.xlane.xlu0 %3468
        %3470 = vadd.xlane.f32.xlu0 %v3439
        %v3471 = vpop.xlane.xlu0 %3470
        %3472 = vadd.xlane.f32.xlu0 %v3441
        %v3473 = vpop.xlane.xlu0 %3472
        %3474 = vadd.xlane.f32.xlu0 %v3443
        %v3475 = vpop.xlane.xlu0 %3474
        %3476 = vadd.xlane.f32.xlu0 %v3445
        %v3477 = vpop.xlane.xlu0 %3476
        %3478 = vadd.xlane.f32.xlu0 %v3447
        %v3479 = vpop.xlane.xlu0 %3478
        %3480 = vadd.xlane.f32.xlu0 %v3449
        %v3481 = vpop.xlane.xlu0 %3480
        %3482 = vadd.xlane.f32.xlu0 %v3451
        %v3483 = vpop.xlane.xlu0 %3482
        %v3484 = vrcp.pop %v3453
        %v3485 = vrcp.pop %v3455
        %v3486 = vrcp.pop %v3457
        %v3487 = vrcp.pop %v3459
        %v3488 = vrcp.pop %v3461
        %v3489 = vrcp.pop %v3463
        %v3490 = vrcp.pop %v3465
        %v3491 = vrcp.pop %v3467
        %v3492 = vrcp.pop %v3469
        %v3493 = vrcp.pop %v3471
        %v3494 = vrcp.pop %v3473
        %v3495 = vrcp.pop %v3475
        %v3496 = vrcp.pop %v3477
        %v3497 = vrcp.pop %v3479
        %v3498 = vrcp.pop %v3481
        %v3499 = vrcp.pop %v3483
        %v3500 = vmul.f32 %v3421, %v3484
        %v3501 = vmul.f32 %v3423, %v3485
        %v3502 = vmul.f32 %v3425, %v3486
        %v3503 = vmul.f32 %v3427, %v3487
        %v3504 = vmul.f32 %v3429, %v3488
        %v3505 = vmul.f32 %v3431, %v3489
        %v3506 = vmul.f32 %v3433, %v3490
        %v3507 = vmul.f32 %v3435, %v3491
        %v3508 = vmul.f32 %v3437, %v3492
        %v3509 = vmul.f32 %v3439, %v3493
        %v3510 = vmul.f32 %v3441, %v3494
        %v3511 = vmul.f32 %v3443, %v3495
        %v3512 = vmul.f32 %v3445, %v3496
        %v3513 = vmul.f32 %v3447, %v3497
        %v3514 = vmul.f32 %v3449, %v3498
        %v3515 = vmul.f32 %v3451, %v3499
        %v3516 = vpack.c.bf16 %v3501, %v3500
        %v3517 = vpack.c.bf16 %v3503, %v3502
        %v3518 = vpack.c.bf16 %v3505, %v3504
        %v3519 = vpack.c.bf16 %v3507, %v3506
        %v3520 = vpack.c.bf16 %v3509, %v3508
        %v3521 = vpack.c.bf16 %v3511, %v3510
        %v3522 = vpack.c.bf16 %v3513, %v3512
        %v3523 = vpack.c.bf16 %v3515, %v3514
        %v3524 = vpack.c.bf16 %v3183, %v3180
        %v3525 = vpack.c.bf16 %v3191, %v3188
        %v3526 = vpack.c.bf16 %v3199, %v3196
        %v3527 = vpack.c.bf16 %v3207, %v3204
        %v3528 = vpack.c.bf16 %v3215, %v3212
        %v3529 = vpack.c.bf16 %v3223, %v3220
        %v3530 = vpack.c.bf16 %v3231, %v3228
        %v3531 = vpack.c.bf16 %v3239, %v3236
        %3532 = vmatprep.subr.bf16.mxu0 0
        %3533 = vmatpush1.bf16.msra.mxu0 %v3524
        %3534 = vmatprep.subr.bf16.mxu0 0
        %3535 = vmatpush1.bf16.msra.mxu0 %v3525
        %3536 = vmatprep.subr.bf16.mxu0 0
        %3537 = vmatpush1.bf16.msra.mxu0 %v3526
        %3538 = vmatprep.subr.bf16.mxu0 0
        %3539 = vmatpush1.bf16.msra.mxu0 %v3527
        %3540 = vmatprep.subr.bf16.mxu0 0
        %3541 = vmatpush1.bf16.msra.mxu0 %v3528
        %3542 = vmatprep.subr.bf16.mxu0 0
        %3543 = vmatpush1.bf16.msra.mxu0 %v3529
        %3544 = vmatprep.subr.bf16.mxu0 0
        %3545 = vmatpush1.bf16.msra.mxu0 %v3530
        %3546 = vmatprep.subr.bf16.mxu0 0
        %3547 = vmatpush1.bf16.msra.mxu0 %v3531
        %3548 = vmatprep.subr.bf16.mxu0 0
        %3549 = vmatpush1.bf16.msra.mxu0 0
        %3550 = vmatprep.subr.bf16.mxu0 0
        %3551 = vmatpush1.bf16.msra.mxu0 0
        %3552 = vmatprep.subr.bf16.mxu0 0
        %3553 = vmatpush1.bf16.msra.mxu0 0
        %3554 = vmatprep.subr.bf16.mxu0 0
        %3555 = vmatpush1.bf16.msra.mxu0 0
        %3556 = vmatprep.subr.bf16.mxu0 0
        %3557 = vmatpush1.bf16.msra.mxu0 0
        %3558 = vmatprep.subr.bf16.mxu0 0
        %3559 = vmatpush1.bf16.msra.mxu0 0
        %3560 = vmatprep.subr.bf16.mxu0 0
        %3561 = vmatpush1.bf16.msra.mxu0 0
        %3562 = vmatprep.subr.bf16.mxu0 0
        %3563 = vmatpush1.bf16.msra.mxu0 0
        %3564 = vmatprep.mubr.bf16.mxu0 0
        %3565 = vmatmul.mubr.bf16.gmra.mrb[0].mxu0 %v3516
        %v3566 = vpop.f32.mrb[0].mxu0
        %v3567 = vadd.f32 0.0, %v3566
        %v3568 = vpop.f32.mrb[0].mxu0
        %v3569 = vpop.f32.mrb[0].mxu0
        %v3570 = vadd.f32 0.0, %v3569
        %v3571 = vpop.f32.mrb[0].mxu0
        %3572 = vmatprep.mubr.bf16.mxu0 0
        %3573 = vmatmul.mubr.bf16.gmra.mrb[0].mxu0 %v3517
        %v3574 = vpop.f32.mrb[0].mxu0
        %v3575 = vadd.f32 0.0, %v3574
        %v3576 = vpop.f32.mrb[0].mxu0
        %v3577 = vpop.f32.mrb[0].mxu0
        %v3578 = vadd.f32 0.0, %v3577
        %v3579 = vpop.f32.mrb[0].mxu0
        %3580 = vmatprep.mubr.bf16.mxu0 0
        %3581 = vmatmul.mubr.bf16.gmra.mrb[0].mxu0 %v3518
        %v3582 = vpop.f32.mrb[0].mxu0
        %v3583 = vadd.f32 0.0, %v3582
        %v3584 = vpop.f32.mrb[0].mxu0
        %v3585 = vpop.f32.mrb[0].mxu0
        %v3586 = vadd.f32 0.0, %v3585
        %v3587 = vpop.f32.mrb[0].mxu0
        %3588 = vmatprep.mubr.bf16.mxu0 0
        %3589 = vmatmul.mubr.bf16.gmra.mrb[0].mxu0 %v3519
        %v3590 = vpop.f32.mrb[0].mxu0
        %v3591 = vadd.f32 0.0, %v3590
        %v3592 = vpop.f32.mrb[0].mxu0
        %v3593 = vpop.f32.mrb[0].mxu0
        %v3594 = vadd.f32 0.0, %v3593
        %v3595 = vpop.f32.mrb[0].mxu0
        %3596 = vmatprep.mubr.bf16.mxu0 0
        %3597 = vmatmul.mubr.bf16.gmra.mrb[0].mxu0 %v3520
        %v3598 = vpop.f32.mrb[0].mxu0
        %v3599 = vadd.f32 0.0, %v3598
        %v3600 = vpop.f32.mrb[0].mxu0
        %v3601 = vpop.f32.mrb[0].mxu0
        %v3602 = vadd.f32 0.0, %v3601
        %v3603 = vpop.f32.mrb[0].mxu0
        %3604 = vmatprep.mubr.bf16.mxu0 0
        %3605 = vmatmul.mubr.bf16.gmra.mrb[0].mxu0 %v3521
        %v3606 = vpop.f32.mrb[0].mxu0
        %v3607 = vadd.f32 0.0, %v3606
        %v3608 = vpop.f32.mrb[0].mxu0
        %v3609 = vpop.f32.mrb[0].mxu0
        %v3610 = vadd.f32 0.0, %v3609
        %v3611 = vpop.f32.mrb[0].mxu0
        %3612 = vmatprep.mubr.bf16.mxu0 0
        %3613 = vmatmul.mubr.bf16.gmra.mrb[0].mxu0 %v3522
        %v3614 = vpop.f32.mrb[0].mxu0
        %v3615 = vadd.f32 0.0, %v3614
        %v3616 = vpop.f32.mrb[0].mxu0
        %v3617 = vpop.f32.mrb[0].mxu0
        %v3618 = vadd.f32 0.0, %v3617
        %v3619 = vpop.f32.mrb[0].mxu0
        %3620 = vmatprep.mubr.bf16.mxu0 0
        %3621 = vmatmul.mubr.bf16.gmra.mrb[0].mxu0 %v3523
        %v3622 = vpop.f32.mrb[0].mxu0
        %v3623 = vadd.f32 0.0, %v3622
        %v3624 = vpop.f32.mrb[0].mxu0
        %v3625 = vpop.f32.mrb[0].mxu0
        %v3626 = vadd.f32 0.0, %v3625
        %v3627 = vpop.f32.mrb[0].mxu0
        %3628 = vdwg.mxu0
        %v3629 = vadd.f32 %v2822, %v3567
        %v3630 = vadd.f32 %v2825, %v3570
        %v3631 = vadd.f32 %v2830, %v3575
        %v3632 = vadd.f32 %v2833, %v3578
        %v3633 = vadd.f32 %v2838, %v3583
        %v3634 = vadd.f32 %v2841, %v3586
        %v3635 = vadd.f32 %v2846, %v3591
        %v3636 = vadd.f32 %v2849, %v3594
        %v3637 = vadd.f32 %v2854, %v3599
        %v3638 = vadd.f32 %v2857, %v3602
        %v3639 = vadd.f32 %v2862, %v3607
        %v3640 = vadd.f32 %v2865, %v3610
        %v3641 = vadd.f32 %v2870, %v3615
        %v3642 = vadd.f32 %v2873, %v3618
        %v3643 = vadd.f32 %v2878, %v3623
        %v3644 = vadd.f32 %v2881, %v3626
        %s3645 = scalar_lea.vmem %s5, 48
        %v3646 = vld [vmem:[%s3645] sm:$0xf]
        %v3647 = vld [vmem:[%s3645 + $0x4] sm:$0xf]
        %v3648 = vld [vmem:[%s3645 + $0x8] sm:$0xf]
        %v3649 = vld [vmem:[%s3645 + $0xc] sm:$0xf]
        %s3650 = scalar_lea.vmem %s6, 3
        %v3651 = vld [vmem:[%s3650] sm:$0x1]
        %v3653 = vlaneseq
        %v3654 = vshrl.u32 %v3653, 7
        %v3655 = vsub.s32 0, %v3654
        %v3656 = vrot.slane %v3651, %v3655
        %v3662 = vunpack.c.l.b16 %v3646
        %v3663 = vunpack.c.l.b16 %v3647
        %v3664 = vunpack.c.l.b16 %v3648
        %v3665 = vunpack.c.l.b16 %v3649
        %v3666 = vpack.c.b16 %v3663, %v3662
        %v3667 = vpack.c.b16 %v3665, %v3664
        %3670 = vmatprep.subr.bf16.mxu0 0
        %3671 = vmatpush1.bf16.msra.mxu0 %v3666
        %3672 = vmatprep.subr.bf16.mxu0 0
        %3673 = vmatpush1.bf16.msra.mxu0 %v3667
        %3674 = vmatprep.subr.bf16.mxu0 0
        %3675 = vmatpush1.bf16.msra.mxu0 0
        %3676 = vmatprep.subr.bf16.mxu0 0
        %3677 = vmatpush1.bf16.msra.mxu0 0
        %3678 = vmatprep.subr.bf16.mxu0 0
        %3679 = vmatpush1.bf16.msra.mxu0 0
        %3680 = vmatprep.subr.bf16.mxu0 0
        %3681 = vmatpush1.bf16.msra.mxu0 0
        %3682 = vmatprep.subr.bf16.mxu0 0
        %3683 = vmatpush1.bf16.msra.mxu0 0
        %3684 = vmatprep.subr.bf16.mxu0 0
        %3685 = vmatpush1.bf16.msra.mxu0 0
        %3686 = vmatprep.subr.bf16.mxu0 0
        %3687 = vmatpush1.bf16.msra.mxu0 0
        %3688 = vmatprep.subr.bf16.mxu0 0
        %3689 = vmatpush1.bf16.msra.mxu0 0
        %3690 = vmatprep.subr.bf16.mxu0 0
        %3691 = vmatpush1.bf16.msra.mxu0 0
        %3692 = vmatprep.subr.bf16.mxu0 0
        %3693 = vmatpush1.bf16.msra.mxu0 0
        %3694 = vmatprep.subr.bf16.mxu0 0
        %3695 = vmatpush1.bf16.msra.mxu0 0
        %3696 = vmatprep.subr.bf16.mxu0 0
        %3697 = vmatpush1.bf16.msra.mxu0 0
        %3698 = vmatprep.subr.bf16.mxu0 0
        %3699 = vmatpush1.bf16.msra.mxu0 0
        %3700 = vmatprep.subr.bf16.mxu0 0
        %3701 = vmatpush1.bf16.msra.mxu0 0
        %3702 = vmatprep.mubr.bf16.mxu0 0
        %3703 = vmatmul.mubr.bf16.gmra.mrb[0].mxu0 %v1399
        %v3704 = vpop.f32.mrb[0].mxu0
        %v3705 = vadd.f32 %v3656, %v3704
        %v3706 = vpop.f32.mrb[0].mxu0
        %v3707 = vpop.f32.mrb[0].mxu0
        %v3708 = vadd.f32 %v3656, %v3707
        %v3709 = vpop.f32.mrb[0].mxu0
        %3710 = vmatprep.mubr.bf16.mxu0 0
        %3711 = vmatmul.mubr.bf16.gmra.mrb[0].mxu0 %v1402
        %v3712 = vpop.f32.mrb[0].mxu0
        %v3713 = vadd.f32 %v3656, %v3712
        %v3714 = vpop.f32.mrb[0].mxu0
        %v3715 = vpop.f32.mrb[0].mxu0
        %v3716 = vadd.f32 %v3656, %v3715
        %v3717 = vpop.f32.mrb[0].mxu0
        %3718 = vmatprep.mubr.bf16.mxu0 0
        %3719 = vmatmul.mubr.bf16.gmra.mrb[0].mxu0 %v1405
        %v3720 = vpop.f32.mrb[0].mxu0
        %v3721 = vadd.f32 %v3656, %v3720
        %v3722 = vpop.f32.mrb[0].mxu0
        %v3723 = vpop.f32.mrb[0].mxu0
        %v3724 = vadd.f32 %v3656, %v3723
        %v3725 = vpop.f32.mrb[0].mxu0
        %3726 = vmatprep.mubr.bf16.mxu0 0
        %3727 = vmatmul.mubr.bf16.gmra.mrb[0].mxu0 %v1408
        %v3728 = vpop.f32.mrb[0].mxu0
        %v3729 = vadd.f32 %v3656, %v3728
        %v3730 = vpop.f32.mrb[0].mxu0
        %v3731 = vpop.f32.mrb[0].mxu0
        %v3732 = vadd.f32 %v3656, %v3731
        %v3733 = vpop.f32.mrb[0].mxu0
        %3734 = vmatprep.mubr.bf16.mxu0 0
        %3735 = vmatmul.mubr.bf16.gmra.mrb[0].mxu0 %v1411
        %v3736 = vpop.f32.mrb[0].mxu0
        %v3737 = vadd.f32 %v3656, %v3736
        %v3738 = vpop.f32.mrb[0].mxu0
        %v3739 = vpop.f32.mrb[0].mxu0
        %v3740 = vadd.f32 %v3656, %v3739
        %v3741 = vpop.f32.mrb[0].mxu0
        %3742 = vmatprep.mubr.bf16.mxu0 0
        %3743 = vmatmul.mubr.bf16.gmra.mrb[0].mxu0 %v1414
        %v3744 = vpop.f32.mrb[0].mxu0
        %v3745 = vadd.f32 %v3656, %v3744
        %v3746 = vpop.f32.mrb[0].mxu0
        %v3747 = vpop.f32.mrb[0].mxu0
        %v3748 = vadd.f32 %v3656, %v3747
        %v3749 = vpop.f32.mrb[0].mxu0
        %3750 = vmatprep.mubr.bf16.mxu0 0
        %3751 = vmatmul.mubr.bf16.gmra.mrb[0].mxu0 %v1417
        %v3752 = vpop.f32.mrb[0].mxu0
        %v3753 = vadd.f32 %v3656, %v3752
        %v3754 = vpop.f32.mrb[0].mxu0
        %v3755 = vpop.f32.mrb[0].mxu0
        %v3756 = vadd.f32 %v3656, %v3755
        %v3757 = vpop.f32.mrb[0].mxu0
        %3758 = vmatprep.mubr.bf16.mxu0 0
        %3759 = vmatmul.mubr.bf16.gmra.mrb[0].mxu0 %v1420
        %v3760 = vpop.f32.mrb[0].mxu0
        %v3761 = vadd.f32 %v3656, %v3760
        %v3762 = vpop.f32.mrb[0].mxu0
        %v3763 = vpop.f32.mrb[0].mxu0
        %v3764 = vadd.f32 %v3656, %v3763
        %v3765 = vpop.f32.mrb[0].mxu0
        %3766 = vdwg.mxu0
        %s3767 = scalar_lea.vmem %s7, 48
        %v3768 = vld [vmem:[%s3767] sm:$0xf]
        %v3769 = vld [vmem:[%s3767 + $0x4] sm:$0xf]
        %v3770 = vld [vmem:[%s3767 + $0x8] sm:$0xf]
        %v3771 = vld [vmem:[%s3767 + $0xc] sm:$0xf]
        %v3776 = vunpack.c.l.b16 %v3768
        %v3777 = vunpack.c.l.b16 %v3769
        %v3778 = vunpack.c.l.b16 %v3770
        %v3779 = vunpack.c.l.b16 %v3771
        %v3780 = vpack.c.b16 %v3777, %v3776
        %v3781 = vpack.c.b16 %v3779, %v3778
        %3784 = vmatprep.subr.bf16.mxu0 0
        %3785 = vmatpush1.bf16.msra.mxu0 %v3780
        %3786 = vmatprep.subr.bf16.mxu0 0
        %3787 = vmatpush1.bf16.msra.mxu0 %v3781
        %3788 = vmatprep.subr.bf16.mxu0 0
        %3789 = vmatpush1.bf16.msra.mxu0 0
        %3790 = vmatprep.subr.bf16.mxu0 0
        %3791 = vmatpush1.bf16.msra.mxu0 0
        %3792 = vmatprep.subr.bf16.mxu0 0
        %3793 = vmatpush1.bf16.msra.mxu0 0
        %3794 = vmatprep.subr.bf16.mxu0 0
        %3795 = vmatpush1.bf16.msra.mxu0 0
        %3796 = vmatprep.subr.bf16.mxu0 0
        %3797 = vmatpush1.bf16.msra.mxu0 0
        %3798 = vmatprep.subr.bf16.mxu0 0
        %3799 = vmatpush1.bf16.msra.mxu0 0
        %3800 = vmatprep.subr.bf16.mxu0 0
        %3801 = vmatpush1.bf16.msra.mxu0 0
        %3802 = vmatprep.subr.bf16.mxu0 0
        %3803 = vmatpush1.bf16.msra.mxu0 0
        %3804 = vmatprep.subr.bf16.mxu0 0
        %3805 = vmatpush1.bf16.msra.mxu0 0
        %3806 = vmatprep.subr.bf16.mxu0 0
        %3807 = vmatpush1.bf16.msra.mxu0 0
        %3808 = vmatprep.subr.bf16.mxu0 0
        %3809 = vmatpush1.bf16.msra.mxu0 0
        %3810 = vmatprep.subr.bf16.mxu0 0
        %3811 = vmatpush1.bf16.msra.mxu0 0
        %3812 = vmatprep.subr.bf16.mxu0 0
        %3813 = vmatpush1.bf16.msra.mxu0 0
        %3814 = vmatprep.subr.bf16.mxu0 0
        %3815 = vmatpush1.bf16.msra.mxu0 0
        %3816 = vmatprep.mubr.bf16.mxu0 0
        %3817 = vmatmul.mubr.bf16.gmra.mrb[0].mxu0 %v1399
        %v3818 = vpop.f32.mrb[0].mxu0
        %v3819 = vadd.f32 0.0, %v3818
        %v3820 = vpop.f32.mrb[0].mxu0
        %v3821 = vpop.f32.mrb[0].mxu0
        %v3822 = vadd.f32 0.0, %v3821
        %v3823 = vpop.f32.mrb[0].mxu0
        %3824 = vmatprep.mubr.bf16.mxu0 0
        %3825 = vmatmul.mubr.bf16.gmra.mrb[0].mxu0 %v1402
        %v3826 = vpop.f32.mrb[0].mxu0
        %v3827 = vadd.f32 0.0, %v3826
        %v3828 = vpop.f32.mrb[0].mxu0
        %v3829 = vpop.f32.mrb[0].mxu0
        %v3830 = vadd.f32 0.0, %v3829
        %v3831 = vpop.f32.mrb[0].mxu0
        %3832 = vmatprep.mubr.bf16.mxu0 0
        %3833 = vmatmul.mubr.bf16.gmra.mrb[0].mxu0 %v1405
        %v3834 = vpop.f32.mrb[0].mxu0
        %v3835 = vadd.f32 0.0, %v3834
        %v3836 = vpop.f32.mrb[0].mxu0
        %v3837 = vpop.f32.mrb[0].mxu0
        %v3838 = vadd.f32 0.0, %v3837
        %v3839 = vpop.f32.mrb[0].mxu0
        %3840 = vmatprep.mubr.bf16.mxu0 0
        %3841 = vmatmul.mubr.bf16.gmra.mrb[0].mxu0 %v1408
        %v3842 = vpop.f32.mrb[0].mxu0
        %v3843 = vadd.f32 0.0, %v3842
        %v3844 = vpop.f32.mrb[0].mxu0
        %v3845 = vpop.f32.mrb[0].mxu0
        %v3846 = vadd.f32 0.0, %v3845
        %v3847 = vpop.f32.mrb[0].mxu0
        %3848 = vmatprep.mubr.bf16.mxu0 0
        %3849 = vmatmul.mubr.bf16.gmra.mrb[0].mxu0 %v1411
        %v3850 = vpop.f32.mrb[0].mxu0
        %v3851 = vadd.f32 0.0, %v3850
        %v3852 = vpop.f32.mrb[0].mxu0
        %v3853 = vpop.f32.mrb[0].mxu0
        %v3854 = vadd.f32 0.0, %v3853
        %v3855 = vpop.f32.mrb[0].mxu0
        %3856 = vmatprep.mubr.bf16.mxu0 0
        %3857 = vmatmul.mubr.bf16.gmra.mrb[0].mxu0 %v1414
        %v3858 = vpop.f32.mrb[0].mxu0
        %v3859 = vadd.f32 0.0, %v3858
        %v3860 = vpop.f32.mrb[0].mxu0
        %v3861 = vpop.f32.mrb[0].mxu0
        %v3862 = vadd.f32 0.0, %v3861
        %v3863 = vpop.f32.mrb[0].mxu0
        %3864 = vmatprep.mubr.bf16.mxu0 0
        %3865 = vmatmul.mubr.bf16.gmra.mrb[0].mxu0 %v1417
        %v3866 = vpop.f32.mrb[0].mxu0
        %v3867 = vadd.f32 0.0, %v3866
        %v3868 = vpop.f32.mrb[0].mxu0
        %v3869 = vpop.f32.mrb[0].mxu0
        %v3870 = vadd.f32 0.0, %v3869
        %v3871 = vpop.f32.mrb[0].mxu0
        %3872 = vmatprep.mubr.bf16.mxu0 0
        %3873 = vmatmul.mubr.bf16.gmra.mrb[0].mxu0 %v1420
        %v3874 = vpop.f32.mrb[0].mxu0
        %v3875 = vadd.f32 0.0, %v3874
        %v3876 = vpop.f32.mrb[0].mxu0
        %v3877 = vpop.f32.mrb[0].mxu0
        %v3878 = vadd.f32 0.0, %v3877
        %v3879 = vpop.f32.mrb[0].mxu0
        %3880 = vdwg.mxu0
        %s3881 = scalar_lea.vmem %s8, 48
        %v3882 = vld [vmem:[%s3881] sm:$0xf]
        %v3883 = vld [vmem:[%s3881 + $0x4] sm:$0xf]
        %v3884 = vld [vmem:[%s3881 + $0x8] sm:$0xf]
        %v3885 = vld [vmem:[%s3881 + $0xc] sm:$0xf]
        %s3886 = scalar_lea.vmem [#allocation2], 3
        %v3887 = vld [vmem:[%s3886] sm:$0x1]
        %v3889 = vlaneseq
        %v3890 = vshrl.u32 %v3889, 7
        %v3891 = vsub.s32 0, %v3890
        %v3892 = vrot.slane %v3887, %v3891
        %v3898 = vunpack.c.l.b16 %v3882
        %v3899 = vunpack.c.l.b16 %v3883
        %v3900 = vunpack.c.l.b16 %v3884
        %v3901 = vunpack.c.l.b16 %v3885
        %v3902 = vpack.c.b16 %v3899, %v3898
        %v3903 = vpack.c.b16 %v3901, %v3900
        %3906 = vmatprep.subr.bf16.mxu0 0
        %3907 = vmatpush1.bf16.msra.mxu0 %v3902
        %3908 = vmatprep.subr.bf16.mxu0 0
        %3909 = vmatpush1.bf16.msra.mxu0 %v3903
        %3910 = vmatprep.subr.bf16.mxu0 0
        %3911 = vmatpush1.bf16.msra.mxu0 0
        %3912 = vmatprep.subr.bf16.mxu0 0
        %3913 = vmatpush1.bf16.msra.mxu0 0
        %3914 = vmatprep.subr.bf16.mxu0 0
        %3915 = vmatpush1.bf16.msra.mxu0 0
        %3916 = vmatprep.subr.bf16.mxu0 0
        %3917 = vmatpush1.bf16.msra.mxu0 0
        %3918 = vmatprep.subr.bf16.mxu0 0
        %3919 = vmatpush1.bf16.msra.mxu0 0
        %3920 = vmatprep.subr.bf16.mxu0 0
        %3921 = vmatpush1.bf16.msra.mxu0 0
        %3922 = vmatprep.subr.bf16.mxu0 0
        %3923 = vmatpush1.bf16.msra.mxu0 0
        %3924 = vmatprep.subr.bf16.mxu0 0
        %3925 = vmatpush1.bf16.msra.mxu0 0
        %3926 = vmatprep.subr.bf16.mxu0 0
        %3927 = vmatpush1.bf16.msra.mxu0 0
        %3928 = vmatprep.subr.bf16.mxu0 0
        %3929 = vmatpush1.bf16.msra.mxu0 0
        %3930 = vmatprep.subr.bf16.mxu0 0
        %3931 = vmatpush1.bf16.msra.mxu0 0
        %3932 = vmatprep.subr.bf16.mxu0 0
        %3933 = vmatpush1.bf16.msra.mxu0 0
        %3934 = vmatprep.subr.bf16.mxu0 0
        %3935 = vmatpush1.bf16.msra.mxu0 0
        %3936 = vmatprep.subr.bf16.mxu0 0
        %3937 = vmatpush1.bf16.msra.mxu0 0
        %3938 = vmatprep.mubr.bf16.mxu0 0
        %3939 = vmatmul.mubr.bf16.gmra.mrb[0].mxu0 %v1399
        %v3940 = vpop.f32.mrb[0].mxu0
        %v3941 = vadd.f32 %v3892, %v3940
        %v3942 = vpop.f32.mrb[0].mxu0
        %v3943 = vpop.f32.mrb[0].mxu0
        %v3944 = vadd.f32 %v3892, %v3943
        %v3945 = vpop.f32.mrb[0].mxu0
        %3946 = vmatprep.mubr.bf16.mxu0 0
        %3947 = vmatmul.mubr.bf16.gmra.mrb[0].mxu0 %v1402
        %v3948 = vpop.f32.mrb[0].mxu0
        %v3949 = vadd.f32 %v3892, %v3948
        %v3950 = vpop.f32.mrb[0].mxu0
        %v3951 = vpop.f32.mrb[0].mxu0
        %v3952 = vadd.f32 %v3892, %v3951
        %v3953 = vpop.f32.mrb[0].mxu0
        %3954 = vmatprep.mubr.bf16.mxu0 0
        %3955 = vmatmul.mubr.bf16.gmra.mrb[0].mxu0 %v1405
        %v3956 = vpop.f32.mrb[0].mxu0
        %v3957 = vadd.f32 %v3892, %v3956
        %v3958 = vpop.f32.mrb[0].mxu0
        %v3959 = vpop.f32.mrb[0].mxu0
        %v3960 = vadd.f32 %v3892, %v3959
        %v3961 = vpop.f32.mrb[0].mxu0
        %3962 = vmatprep.mubr.bf16.mxu0 0
        %3963 = vmatmul.mubr.bf16.gmra.mrb[0].mxu0 %v1408
        %v3964 = vpop.f32.mrb[0].mxu0
        %v3965 = vadd.f32 %v3892, %v3964
        %v3966 = vpop.f32.mrb[0].mxu0
        %v3967 = vpop.f32.mrb[0].mxu0
        %v3968 = vadd.f32 %v3892, %v3967
        %v3969 = vpop.f32.mrb[0].mxu0
        %3970 = vmatprep.mubr.bf16.mxu0 0
        %3971 = vmatmul.mubr.bf16.gmra.mrb[0].mxu0 %v1411
        %v3972 = vpop.f32.mrb[0].mxu0
        %v3973 = vadd.f32 %v3892, %v3972
        %v3974 = vpop.f32.mrb[0].mxu0
        %v3975 = vpop.f32.mrb[0].mxu0
        %v3976 = vadd.f32 %v3892, %v3975
        %v3977 = vpop.f32.mrb[0].mxu0
        %3978 = vmatprep.mubr.bf16.mxu0 0
        %3979 = vmatmul.mubr.bf16.gmra.mrb[0].mxu0 %v1414
        %v3980 = vpop.f32.mrb[0].mxu0
        %v3981 = vadd.f32 %v3892, %v3980
        %v3982 = vpop.f32.mrb[0].mxu0
        %v3983 = vpop.f32.mrb[0].mxu0
        %v3984 = vadd.f32 %v3892, %v3983
        %v3985 = vpop.f32.mrb[0].mxu0
        %3986 = vmatprep.mubr.bf16.mxu0 0
        %3987 = vmatmul.mubr.bf16.gmra.mrb[0].mxu0 %v1417
        %v3988 = vpop.f32.mrb[0].mxu0
        %v3989 = vadd.f32 %v3892, %v3988
        %v3990 = vpop.f32.mrb[0].mxu0
        %v3991 = vpop.f32.mrb[0].mxu0
        %v3992 = vadd.f32 %v3892, %v3991
        %v3993 = vpop.f32.mrb[0].mxu0
        %3994 = vmatprep.mubr.bf16.mxu0 0
        %3995 = vmatmul.mubr.bf16.gmra.mrb[0].mxu0 %v1420
        %v3996 = vpop.f32.mrb[0].mxu0
        %v3997 = vadd.f32 %v3892, %v3996
        %v3998 = vpop.f32.mrb[0].mxu0
        %v3999 = vpop.f32.mrb[0].mxu0
        %v4000 = vadd.f32 %v3892, %v3999
        %v4001 = vpop.f32.mrb[0].mxu0
        %4002 = vdwg.mxu0
        %v4003 = vpack.c.bf16 %v3708, %v3705
        %v4004 = vpack.c.bf16 %v3716, %v3713
        %v4005 = vpack.c.bf16 %v3724, %v3721
        %v4006 = vpack.c.bf16 %v3732, %v3729
        %v4007 = vpack.c.bf16 %v3740, %v3737
        %v4008 = vpack.c.bf16 %v3748, %v3745
        %v4009 = vpack.c.bf16 %v3756, %v3753
        %v4010 = vpack.c.bf16 %v3764, %v3761
        %v4011 = vpack.c.bf16 %v3822, %v3819
        %v4012 = vpack.c.bf16 %v3830, %v3827
        %v4013 = vpack.c.bf16 %v3838, %v3835
        %v4014 = vpack.c.bf16 %v3846, %v3843
        %v4015 = vpack.c.bf16 %v3854, %v3851
        %v4016 = vpack.c.bf16 %v3862, %v3859
        %v4017 = vpack.c.bf16 %v3870, %v3867
        %v4018 = vpack.c.bf16 %v3878, %v3875
        %s4019 = scalar_lea.vmem %s11, 384
        %v4020 = vld [vmem:[%s4019] sm:$0xff]
        %v4021 = vld [vmem:[%s4019 + $0x8] sm:$0xff]
        %v4022 = vld [vmem:[%s4019 + $0x10] sm:$0xff]
        %v4023 = vld [vmem:[%s4019 + $0x18] sm:$0xff]
        %v4024 = vld [vmem:[%s4019 + $0x20] sm:$0xff]
        %v4025 = vld [vmem:[%s4019 + $0x28] sm:$0xff]
        %v4026 = vld [vmem:[%s4019 + $0x30] sm:$0xff]
        %v4027 = vld [vmem:[%s4019 + $0x38] sm:$0xff]
        %v4028 = vld [vmem:[%s4019 + $0x40] sm:$0xff]
        %v4029 = vld [vmem:[%s4019 + $0x48] sm:$0xff]
        %v4030 = vld [vmem:[%s4019 + $0x50] sm:$0xff]
        %v4031 = vld [vmem:[%s4019 + $0x58] sm:$0xff]
        %v4032 = vld [vmem:[%s4019 + $0x60] sm:$0xff]
        %v4033 = vld [vmem:[%s4019 + $0x68] sm:$0xff]
        %v4034 = vld [vmem:[%s4019 + $0x70] sm:$0xff]
        %v4035 = vld [vmem:[%s4019 + $0x78] sm:$0xff]
        %v4037 = vsel %vm1784, %v4003, 0
        %v4040 = vsel %vm1784, %v4004, 0
        %v4043 = vsel %vm1784, %v4005, 0
        %v4046 = vsel %vm1784, %v4006, 0
        %v4049 = vsel %vm1784, %v4007, 0
        %v4052 = vsel %vm1784, %v4008, 0
        %v4055 = vsel %vm1784, %v4009, 0
        %v4058 = vsel %vm1784, %v4010, 0
        %v4061 = vsel %vm1784, %v4011, 0
        %v4064 = vsel %vm1784, %v4012, 0
        %v4067 = vsel %vm1784, %v4013, 0
        %v4070 = vsel %vm1784, %v4014, 0
        %v4073 = vsel %vm1784, %v4015, 0
        %v4076 = vsel %vm1784, %v4016, 0
        %v4079 = vsel %vm1784, %v4017, 0
        %v4082 = vsel %vm1784, %v4018, 0
        %4084 = vmatprep.subr.bf16.mxu0 0
        %4085 = vmatpush1.bf16.xpose.msra.mxu0 %v4061
        %4086 = vmatprep.subr.bf16.mxu0 0
        %4087 = vmatpush1.bf16.xpose.msra.mxu0 %v4064
        %4088 = vmatprep.subr.bf16.mxu0 0
        %4089 = vmatpush1.bf16.xpose.msra.mxu0 %v4067
        %4090 = vmatprep.subr.bf16.mxu0 0
        %4091 = vmatpush1.bf16.xpose.msra.mxu0 %v4070
        %4092 = vmatprep.subr.bf16.mxu0 0
        %4093 = vmatpush1.bf16.xpose.msra.mxu0 %v4073
        %4094 = vmatprep.subr.bf16.mxu0 0
        %4095 = vmatpush1.bf16.xpose.msra.mxu0 %v4076
        %4096 = vmatprep.subr.bf16.mxu0 0
        %4097 = vmatpush1.bf16.xpose.msra.mxu0 %v4079
        %4098 = vmatprep.subr.bf16.mxu0 0
        %4099 = vmatpush1.bf16.xpose.msra.mxu0 %v4082
        %4100 = vmatprep.subr.bf16.mxu0 0
        %4101 = vmatpush1.bf16.xpose.msra.mxu0 0
        %4102 = vmatprep.subr.bf16.mxu0 0
        %4103 = vmatpush1.bf16.xpose.msra.mxu0 0
        %4104 = vmatprep.subr.bf16.mxu0 0
        %4105 = vmatpush1.bf16.xpose.msra.mxu0 0
        %4106 = vmatprep.subr.bf16.mxu0 0
        %4107 = vmatpush1.bf16.xpose.msra.mxu0 0
        %4108 = vmatprep.subr.bf16.mxu0 0
        %4109 = vmatpush1.bf16.xpose.msra.mxu0 0
        %4110 = vmatprep.subr.bf16.mxu0 0
        %4111 = vmatpush1.bf16.xpose.msra.mxu0 0
        %4112 = vmatprep.subr.bf16.mxu0 0
        %4113 = vmatpush1.bf16.xpose.msra.mxu0 0
        %4114 = vmatprep.subr.bf16.mxu0 0
        %4115 = vmatpush1.bf16.xpose.msra.mxu0 0
        %4116 = vmatprep.mubr.bf16.mxu0 0
        %4117 = vmatmul.mubr.bf16.gmra.mrb[0].mxu0 %v4037
        %v4118 = vpop.f32.mrb[0].mxu0
        %v4119 = vadd.f32 %v4020, %v4118
        %v4120 = vpop.f32.mrb[0].mxu0
        %v4121 = vpop.f32.mrb[0].mxu0
        %v4122 = vadd.f32 %v4021, %v4121
        %v4123 = vpop.f32.mrb[0].mxu0
        %4124 = vmatprep.mubr.bf16.mxu0 0
        %4125 = vmatmul.mubr.bf16.gmra.mrb[0].mxu0 %v4040
        %v4126 = vpop.f32.mrb[0].mxu0
        %v4127 = vadd.f32 %v4022, %v4126
        %v4128 = vpop.f32.mrb[0].mxu0
        %v4129 = vpop.f32.mrb[0].mxu0
        %v4130 = vadd.f32 %v4023, %v4129
        %v4131 = vpop.f32.mrb[0].mxu0
        %4132 = vmatprep.mubr.bf16.mxu0 0
        %4133 = vmatmul.mubr.bf16.gmra.mrb[0].mxu0 %v4043
        %v4134 = vpop.f32.mrb[0].mxu0
        %v4135 = vadd.f32 %v4024, %v4134
        %v4136 = vpop.f32.mrb[0].mxu0
        %v4137 = vpop.f32.mrb[0].mxu0
        %v4138 = vadd.f32 %v4025, %v4137
        %v4139 = vpop.f32.mrb[0].mxu0
        %4140 = vmatprep.mubr.bf16.mxu0 0
        %4141 = vmatmul.mubr.bf16.gmra.mrb[0].mxu0 %v4046
        %v4142 = vpop.f32.mrb[0].mxu0
        %v4143 = vadd.f32 %v4026, %v4142
        %v4144 = vpop.f32.mrb[0].mxu0
        %v4145 = vpop.f32.mrb[0].mxu0
        %v4146 = vadd.f32 %v4027, %v4145
        %v4147 = vpop.f32.mrb[0].mxu0
        %4148 = vmatprep.mubr.bf16.mxu0 0
        %4149 = vmatmul.mubr.bf16.gmra.mrb[0].mxu0 %v4049
        %v4150 = vpop.f32.mrb[0].mxu0
        %v4151 = vadd.f32 %v4028, %v4150
        %v4152 = vpop.f32.mrb[0].mxu0
        %v4153 = vpop.f32.mrb[0].mxu0
        %v4154 = vadd.f32 %v4029, %v4153
        %v4155 = vpop.f32.mrb[0].mxu0
        %4156 = vmatprep.mubr.bf16.mxu0 0
        %4157 = vmatmul.mubr.bf16.gmra.mrb[0].mxu0 %v4052
        %v4158 = vpop.f32.mrb[0].mxu0
        %v4159 = vadd.f32 %v4030, %v4158
        %v4160 = vpop.f32.mrb[0].mxu0
        %v4161 = vpop.f32.mrb[0].mxu0
        %v4162 = vadd.f32 %v4031, %v4161
        %v4163 = vpop.f32.mrb[0].mxu0
        %4164 = vmatprep.mubr.bf16.mxu0 0
        %4165 = vmatmul.mubr.bf16.gmra.mrb[0].mxu0 %v4055
        %v4166 = vpop.f32.mrb[0].mxu0
        %v4167 = vadd.f32 %v4032, %v4166
        %v4168 = vpop.f32.mrb[0].mxu0
        %v4169 = vpop.f32.mrb[0].mxu0
        %v4170 = vadd.f32 %v4033, %v4169
        %v4171 = vpop.f32.mrb[0].mxu0
        %4172 = vmatprep.mubr.bf16.mxu0 0
        %4173 = vmatmul.mubr.bf16.gmra.mrb[0].mxu0 %v4058
        %v4174 = vpop.f32.mrb[0].mxu0
        %v4175 = vadd.f32 %v4034, %v4174
        %v4176 = vpop.f32.mrb[0].mxu0
        %v4177 = vpop.f32.mrb[0].mxu0
        %v4178 = vadd.f32 %v4035, %v4177
        %v4179 = vpop.f32.mrb[0].mxu0
        %4180 = vdwg.mxu0
        %v4181 = vmul.f32 %v4119, 1.442695
        %v4182 = vpow.pop %v4181
        %v4183 = vmul.f32 %v4122, 1.442695
        %v4184 = vpow.pop %v4183
        %v4185 = vmul.f32 %v4127, 1.442695
        %v4186 = vpow.pop %v4185
        %v4187 = vmul.f32 %v4130, 1.442695
        %v4188 = vpow.pop %v4187
        %v4189 = vmul.f32 %v4135, 1.442695
        %v4190 = vpow.pop %v4189
        %v4191 = vmul.f32 %v4138, 1.442695
        %v4192 = vpow.pop %v4191
        %v4193 = vmul.f32 %v4143, 1.442695
        %v4194 = vpow.pop %v4193
        %v4195 = vmul.f32 %v4146, 1.442695
        %v4196 = vpow.pop %v4195
        %v4197 = vmul.f32 %v4151, 1.442695
        %v4198 = vpow.pop %v4197
        %v4199 = vmul.f32 %v4154, 1.442695
        %v4200 = vpow.pop %v4199
        %v4201 = vmul.f32 %v4159, 1.442695
        %v4202 = vpow.pop %v4201
        %v4203 = vmul.f32 %v4162, 1.442695
        %v4204 = vpow.pop %v4203
        %v4205 = vmul.f32 %v4167, 1.442695
        %v4206 = vpow.pop %v4205
        %v4207 = vmul.f32 %v4170, 1.442695
        %v4208 = vpow.pop %v4207
        %v4209 = vmul.f32 %v4175, 1.442695
        %v4210 = vpow.pop %v4209
        %v4211 = vmul.f32 %v4178, 1.442695
        %v4212 = vpow.pop %v4211
        %4213 = vadd.xlane.f32.xlu0 %v4182
        %v4214 = vpop.xlane.xlu0 %4213
        %4215 = vadd.xlane.f32.xlu0 %v4184
        %v4216 = vpop.xlane.xlu0 %4215
        %4217 = vadd.xlane.f32.xlu0 %v4186
        %v4218 = vpop.xlane.xlu0 %4217
        %4219 = vadd.xlane.f32.xlu0 %v4188
        %v4220 = vpop.xlane.xlu0 %4219
        %4221 = vadd.xlane.f32.xlu0 %v4190
        %v4222 = vpop.xlane.xlu0 %4221
        %4223 = vadd.xlane.f32.xlu0 %v4192
        %v4224 = vpop.xlane.xlu0 %4223
        %4225 = vadd.xlane.f32.xlu0 %v4194
        %v4226 = vpop.xlane.xlu0 %4225
        %4227 = vadd.xlane.f32.xlu0 %v4196
        %v4228 = vpop.xlane.xlu0 %4227
        %4229 = vadd.xlane.f32.xlu0 %v4198
        %v4230 = vpop.xlane.xlu0 %4229
        %4231 = vadd.xlane.f32.xlu0 %v4200
        %v4232 = vpop.xlane.xlu0 %4231
        %4233 = vadd.xlane.f32.xlu0 %v4202
        %v4234 = vpop.xlane.xlu0 %4233
        %4235 = vadd.xlane.f32.xlu0 %v4204
        %v4236 = vpop.xlane.xlu0 %4235
        %4237 = vadd.xlane.f32.xlu0 %v4206
        %v4238 = vpop.xlane.xlu0 %4237
        %4239 = vadd.xlane.f32.xlu0 %v4208
        %v4240 = vpop.xlane.xlu0 %4239
        %4241 = vadd.xlane.f32.xlu0 %v4210
        %v4242 = vpop.xlane.xlu0 %4241
        %4243 = vadd.xlane.f32.xlu0 %v4212
        %v4244 = vpop.xlane.xlu0 %4243
        %v4245 = vrcp.pop %v4214
        %v4246 = vrcp.pop %v4216
        %v4247 = vrcp.pop %v4218
        %v4248 = vrcp.pop %v4220
        %v4249 = vrcp.pop %v4222
        %v4250 = vrcp.pop %v4224
        %v4251 = vrcp.pop %v4226
        %v4252 = vrcp.pop %v4228
        %v4253 = vrcp.pop %v4230
        %v4254 = vrcp.pop %v4232
        %v4255 = vrcp.pop %v4234
        %v4256 = vrcp.pop %v4236
        %v4257 = vrcp.pop %v4238
        %v4258 = vrcp.pop %v4240
        %v4259 = vrcp.pop %v4242
        %v4260 = vrcp.pop %v4244
        %v4261 = vmul.f32 %v4182, %v4245
        %v4262 = vmul.f32 %v4184, %v4246
        %v4263 = vmul.f32 %v4186, %v4247
        %v4264 = vmul.f32 %v4188, %v4248
        %v4265 = vmul.f32 %v4190, %v4249
        %v4266 = vmul.f32 %v4192, %v4250
        %v4267 = vmul.f32 %v4194, %v4251
        %v4268 = vmul.f32 %v4196, %v4252
        %v4269 = vmul.f32 %v4198, %v4253
        %v4270 = vmul.f32 %v4200, %v4254
        %v4271 = vmul.f32 %v4202, %v4255
        %v4272 = vmul.f32 %v4204, %v4256
        %v4273 = vmul.f32 %v4206, %v4257
        %v4274 = vmul.f32 %v4208, %v4258
        %v4275 = vmul.f32 %v4210, %v4259
        %v4276 = vmul.f32 %v4212, %v4260
        %v4277 = vpack.c.bf16 %v4262, %v4261
        %v4278 = vpack.c.bf16 %v4264, %v4263
        %v4279 = vpack.c.bf16 %v4266, %v4265
        %v4280 = vpack.c.bf16 %v4268, %v4267
        %v4281 = vpack.c.bf16 %v4270, %v4269
        %v4282 = vpack.c.bf16 %v4272, %v4271
        %v4283 = vpack.c.bf16 %v4274, %v4273
        %v4284 = vpack.c.bf16 %v4276, %v4275
        %v4285 = vpack.c.bf16 %v3944, %v3941
        %v4286 = vpack.c.bf16 %v3952, %v3949
        %v4287 = vpack.c.bf16 %v3960, %v3957
        %v4288 = vpack.c.bf16 %v3968, %v3965
        %v4289 = vpack.c.bf16 %v3976, %v3973
        %v4290 = vpack.c.bf16 %v3984, %v3981
        %v4291 = vpack.c.bf16 %v3992, %v3989
        %v4292 = vpack.c.bf16 %v4000, %v3997
        %4293 = vmatprep.subr.bf16.mxu0 0
        %4294 = vmatpush1.bf16.msra.mxu0 %v4285
        %4295 = vmatprep.subr.bf16.mxu0 0
        %4296 = vmatpush1.bf16.msra.mxu0 %v4286
        %4297 = vmatprep.subr.bf16.mxu0 0
        %4298 = vmatpush1.bf16.msra.mxu0 %v4287
        %4299 = vmatprep.subr.bf16.mxu0 0
        %4300 = vmatpush1.bf16.msra.mxu0 %v4288
        %4301 = vmatprep.subr.bf16.mxu0 0
        %4302 = vmatpush1.bf16.msra.mxu0 %v4289
        %4303 = vmatprep.subr.bf16.mxu0 0
        %4304 = vmatpush1.bf16.msra.mxu0 %v4290
        %4305 = vmatprep.subr.bf16.mxu0 0
        %4306 = vmatpush1.bf16.msra.mxu0 %v4291
        %4307 = vmatprep.subr.bf16.mxu0 0
        %4308 = vmatpush1.bf16.msra.mxu0 %v4292
        %4309 = vmatprep.subr.bf16.mxu0 0
        %4310 = vmatpush1.bf16.msra.mxu0 0
        %4311 = vmatprep.subr.bf16.mxu0 0
        %4312 = vmatpush1.bf16.msra.mxu0 0
        %4313 = vmatprep.subr.bf16.mxu0 0
        %4314 = vmatpush1.bf16.msra.mxu0 0
        %4315 = vmatprep.subr.bf16.mxu0 0
        %4316 = vmatpush1.bf16.msra.mxu0 0
        %4317 = vmatprep.subr.bf16.mxu0 0
        %4318 = vmatpush1.bf16.msra.mxu0 0
        %4319 = vmatprep.subr.bf16.mxu0 0
        %4320 = vmatpush1.bf16.msra.mxu0 0
        %4321 = vmatprep.subr.bf16.mxu0 0
        %4322 = vmatpush1.bf16.msra.mxu0 0
        %4323 = vmatprep.subr.bf16.mxu0 0
        %4324 = vmatpush1.bf16.msra.mxu0 0
        %4325 = vmatprep.mubr.bf16.mxu0 0
        %4326 = vmatmul.mubr.bf16.gmra.mrb[0].mxu0 %v4277
        %v4327 = vpop.f32.mrb[0].mxu0
        %v4328 = vadd.f32 0.0, %v4327
        %v4329 = vpop.f32.mrb[0].mxu0
        %v4330 = vpop.f32.mrb[0].mxu0
        %v4331 = vadd.f32 0.0, %v4330
        %v4332 = vpop.f32.mrb[0].mxu0
        %4333 = vmatprep.mubr.bf16.mxu0 0
        %4334 = vmatmul.mubr.bf16.gmra.mrb[0].mxu0 %v4278
        %v4335 = vpop.f32.mrb[0].mxu0
        %v4336 = vadd.f32 0.0, %v4335
        %v4337 = vpop.f32.mrb[0].mxu0
        %v4338 = vpop.f32.mrb[0].mxu0
        %v4339 = vadd.f32 0.0, %v4338
        %v4340 = vpop.f32.mrb[0].mxu0
        %4341 = vmatprep.mubr.bf16.mxu0 0
        %4342 = vmatmul.mubr.bf16.gmra.mrb[0].mxu0 %v4279
        %v4343 = vpop.f32.mrb[0].mxu0
        %v4344 = vadd.f32 0.0, %v4343
        %v4345 = vpop.f32.mrb[0].mxu0
        %v4346 = vpop.f32.mrb[0].mxu0
        %v4347 = vadd.f32 0.0, %v4346
        %v4348 = vpop.f32.mrb[0].mxu0
        %4349 = vmatprep.mubr.bf16.mxu0 0
        %4350 = vmatmul.mubr.bf16.gmra.mrb[0].mxu0 %v4280
        %v4351 = vpop.f32.mrb[0].mxu0
        %v4352 = vadd.f32 0.0, %v4351
        %v4353 = vpop.f32.mrb[0].mxu0
        %v4354 = vpop.f32.mrb[0].mxu0
        %v4355 = vadd.f32 0.0, %v4354
        %v4356 = vpop.f32.mrb[0].mxu0
        %4357 = vmatprep.mubr.bf16.mxu0 0
        %4358 = vmatmul.mubr.bf16.gmra.mrb[0].mxu0 %v4281
        %v4359 = vpop.f32.mrb[0].mxu0
        %v4360 = vadd.f32 0.0, %v4359
        %v4361 = vpop.f32.mrb[0].mxu0
        %v4362 = vpop.f32.mrb[0].mxu0
        %v4363 = vadd.f32 0.0, %v4362
        %v4364 = vpop.f32.mrb[0].mxu0
        %4365 = vmatprep.mubr.bf16.mxu0 0
        %4366 = vmatmul.mubr.bf16.gmra.mrb[0].mxu0 %v4282
        %v4367 = vpop.f32.mrb[0].mxu0
        %v4368 = vadd.f32 0.0, %v4367
        %v4369 = vpop.f32.mrb[0].mxu0
        %v4370 = vpop.f32.mrb[0].mxu0
        %v4371 = vadd.f32 0.0, %v4370
        %v4372 = vpop.f32.mrb[0].mxu0
        %4373 = vmatprep.mubr.bf16.mxu0 0
        %4374 = vmatmul.mubr.bf16.gmra.mrb[0].mxu0 %v4283
        %v4375 = vpop.f32.mrb[0].mxu0
        %v4376 = vadd.f32 0.0, %v4375
        %v4377 = vpop.f32.mrb[0].mxu0
        %v4378 = vpop.f32.mrb[0].mxu0
        %v4379 = vadd.f32 0.0, %v4378
        %v4380 = vpop.f32.mrb[0].mxu0
        %4381 = vmatprep.mubr.bf16.mxu0 0
        %4382 = vmatmul.mubr.bf16.gmra.mrb[0].mxu0 %v4284
        %v4383 = vpop.f32.mrb[0].mxu0
        %v4384 = vadd.f32 0.0, %v4383
        %v4385 = vpop.f32.mrb[0].mxu0
        %v4386 = vpop.f32.mrb[0].mxu0
        %v4387 = vadd.f32 0.0, %v4386
        %v4388 = vpop.f32.mrb[0].mxu0
        %4389 = vdwg.mxu0
        %v4390 = vadd.f32 %v3629, %v4328
        %v4391 = vadd.f32 %v3630, %v4331
        %v4392 = vadd.f32 %v3631, %v4336
        %v4393 = vadd.f32 %v3632, %v4339
        %v4394 = vadd.f32 %v3633, %v4344
        %v4395 = vadd.f32 %v3634, %v4347
        %v4396 = vadd.f32 %v3635, %v4352
        %v4397 = vadd.f32 %v3636, %v4355
        %v4398 = vadd.f32 %v3637, %v4360
        %v4399 = vadd.f32 %v3638, %v4363
        %v4400 = vadd.f32 %v3639, %v4368
        %v4401 = vadd.f32 %v3640, %v4371
        %v4402 = vadd.f32 %v3641, %v4376
        %v4403 = vadd.f32 %v3642, %v4379
        %v4404 = vadd.f32 %v3643, %v4384
        %v4405 = vadd.f32 %v3644, %v4387
        %v4406 = vadd.f32 %v1049, %v4390
        %v4407 = vadd.f32 %v1052, %v4391
        %v4408 = vadd.f32 %v1057, %v4392
        %v4409 = vadd.f32 %v1060, %v4393
        %v4410 = vadd.f32 %v1065, %v4394
        %v4411 = vadd.f32 %v1068, %v4395
        %v4412 = vadd.f32 %v1073, %v4396
        %v4413 = vadd.f32 %v1076, %v4397
        %v4414 = vadd.f32 %v1081, %v4398
        %v4415 = vadd.f32 %v1084, %v4399
        %v4416 = vadd.f32 %v1089, %v4400
        %v4417 = vadd.f32 %v1092, %v4401
        %v4418 = vadd.f32 %v1097, %v4402
        %v4419 = vadd.f32 %v1100, %v4403
        %v4420 = vadd.f32 %v1105, %v4404
        %v4421 = vadd.f32 %v1108, %v4405
        %v4422 = vld [vmem:[#allocation5] sm:$0x1]
        %v4424 = vlaneseq
        %v4425 = vshrl.u32 %v4424, 7
        %v4426 = vsub.s32 0, %v4425
        %v4427 = vrot.slane %v4422, %v4426
        %v4429 = vadd.f32 %v4406, %v4427
        %v4430 = vadd.f32 %v4407, %v4427
        %v4431 = vadd.f32 %v4408, %v4427
        %v4432 = vadd.f32 %v4409, %v4427
        %v4433 = vadd.f32 %v4410, %v4427
        %v4434 = vadd.f32 %v4411, %v4427
        %v4435 = vadd.f32 %v4412, %v4427
        %v4436 = vadd.f32 %v4413, %v4427
        %v4437 = vadd.f32 %v4414, %v4427
        %v4438 = vadd.f32 %v4415, %v4427
        %v4439 = vadd.f32 %v4416, %v4427
        %v4440 = vadd.f32 %v4417, %v4427
        %v4441 = vadd.f32 %v4418, %v4427
        %v4442 = vadd.f32 %v4419, %v4427
        %v4443 = vadd.f32 %v4420, %v4427
        %v4444 = vadd.f32 %v4421, %v4427
        %v4445 = vld [vmem:[#allocation7] sm:$0x1]
        %v4446 = vld [vmem:[#allocation8] sm:$0x1]
        %v4447 = vsel %vm1113, %v4429, 0.0
        %4448 = vadd.xlane.f32.xlu0 %v4447
        %v4449 = vpop.xlane.xlu0 %4448
        %v4450 = vsel %vm1113, %v4430, 0.0
        %4451 = vadd.xlane.f32.xlu0 %v4450
        %v4452 = vpop.xlane.xlu0 %4451
        %v4453 = vsel %vm1113, %v4431, 0.0
        %4454 = vadd.xlane.f32.xlu0 %v4453
        %v4455 = vpop.xlane.xlu0 %4454
        %v4456 = vsel %vm1113, %v4432, 0.0
        %4457 = vadd.xlane.f32.xlu0 %v4456
        %v4458 = vpop.xlane.xlu0 %4457
        %v4459 = vsel %vm1113, %v4433, 0.0
        %4460 = vadd.xlane.f32.xlu0 %v4459
        %v4461 = vpop.xlane.xlu0 %4460
        %v4462 = vsel %vm1113, %v4434, 0.0
        %4463 = vadd.xlane.f32.xlu0 %v4462
        %v4464 = vpop.xlane.xlu0 %4463
        %v4465 = vsel %vm1113, %v4435, 0.0
        %4466 = vadd.xlane.f32.xlu0 %v4465
        %v4467 = vpop.xlane.xlu0 %4466
        %v4468 = vsel %vm1113, %v4436, 0.0
        %4469 = vadd.xlane.f32.xlu0 %v4468
        %v4470 = vpop.xlane.xlu0 %4469
        %v4471 = vsel %vm1113, %v4437, 0.0
        %4472 = vadd.xlane.f32.xlu0 %v4471
        %v4473 = vpop.xlane.xlu0 %4472
        %v4474 = vsel %vm1113, %v4438, 0.0
        %4475 = vadd.xlane.f32.xlu0 %v4474
        %v4476 = vpop.xlane.xlu0 %4475
        %v4477 = vsel %vm1113, %v4439, 0.0
        %4478 = vadd.xlane.f32.xlu0 %v4477
        %v4479 = vpop.xlane.xlu0 %4478
        %v4480 = vsel %vm1113, %v4440, 0.0
        %4481 = vadd.xlane.f32.xlu0 %v4480
        %v4482 = vpop.xlane.xlu0 %4481
        %v4483 = vsel %vm1113, %v4441, 0.0
        %4484 = vadd.xlane.f32.xlu0 %v4483
        %v4485 = vpop.xlane.xlu0 %4484
        %v4486 = vsel %vm1113, %v4442, 0.0
        %4487 = vadd.xlane.f32.xlu0 %v4486
        %v4488 = vpop.xlane.xlu0 %4487
        %v4489 = vsel %vm1113, %v4443, 0.0
        %4490 = vadd.xlane.f32.xlu0 %v4489
        %v4491 = vpop.xlane.xlu0 %4490
        %v4492 = vsel %vm1113, %v4444, 0.0
        %4493 = vadd.xlane.f32.xlu0 %v4492
        %v4494 = vpop.xlane.xlu0 %4493
        %v4495 = vmul.f32 %v4449, %v1162
        %v4496 = vmul.f32 %v4452, %v1162
        %v4497 = vmul.f32 %v4455, %v1162
        %v4498 = vmul.f32 %v4458, %v1162
        %v4499 = vmul.f32 %v4461, %v1162
        %v4500 = vmul.f32 %v4464, %v1162
        %v4501 = vmul.f32 %v4467, %v1162
        %v4502 = vmul.f32 %v4470, %v1162
        %v4503 = vmul.f32 %v4473, %v1162
        %v4504 = vmul.f32 %v4476, %v1162
        %v4505 = vmul.f32 %v4479, %v1162
        %v4506 = vmul.f32 %v4482, %v1162
        %v4507 = vmul.f32 %v4485, %v1162
        %v4508 = vmul.f32 %v4488, %v1162
        %v4509 = vmul.f32 %v4491, %v1162
        %v4510 = vmul.f32 %v4494, %v1162
        %v4511 = vsub.f32 %v4429, %v4495
        %v4512 = vsub.f32 %v4430, %v4496
        %v4513 = vsub.f32 %v4431, %v4497
        %v4514 = vsub.f32 %v4432, %v4498
        %v4515 = vsub.f32 %v4433, %v4499
        %v4516 = vsub.f32 %v4434, %v4500
        %v4517 = vsub.f32 %v4435, %v4501
        %v4518 = vsub.f32 %v4436, %v4502
        %v4519 = vsub.f32 %v4437, %v4503
        %v4520 = vsub.f32 %v4438, %v4504
        %v4521 = vsub.f32 %v4439, %v4505
        %v4522 = vsub.f32 %v4440, %v4506
        %v4523 = vsub.f32 %v4441, %v4507
        %v4524 = vsub.f32 %v4442, %v4508
        %v4525 = vsub.f32 %v4443, %v4509
        %v4526 = vsub.f32 %v4444, %v4510
        %v4527 = vmul.f32 %v4511, %v4511
        %v4528 = vmul.f32 %v4512, %v4512
        %v4529 = vmul.f32 %v4513, %v4513
        %v4530 = vmul.f32 %v4514, %v4514
        %v4531 = vmul.f32 %v4515, %v4515
        %v4532 = vmul.f32 %v4516, %v4516
        %v4533 = vmul.f32 %v4517, %v4517
        %v4534 = vmul.f32 %v4518, %v4518
        %v4535 = vmul.f32 %v4519, %v4519
        %v4536 = vmul.f32 %v4520, %v4520
        %v4537 = vmul.f32 %v4521, %v4521
        %v4538 = vmul.f32 %v4522, %v4522
        %v4539 = vmul.f32 %v4523, %v4523
        %v4540 = vmul.f32 %v4524, %v4524
        %v4541 = vmul.f32 %v4525, %v4525
        %v4542 = vmul.f32 %v4526, %v4526
        %v4543 = vsel %vm1113, %v4527, 0.0
        %4544 = vadd.xlane.f32.xlu0 %v4543
        %v4545 = vpop.xlane.xlu0 %4544
        %v4546 = vsel %vm1113, %v4528, 0.0
        %4547 = vadd.xlane.f32.xlu0 %v4546
        %v4548 = vpop.xlane.xlu0 %4547
        %v4549 = vsel %vm1113, %v4529, 0.0
        %4550 = vadd.xlane.f32.xlu0 %v4549
        %v4551 = vpop.xlane.xlu0 %4550
        %v4552 = vsel %vm1113, %v4530, 0.0
        %4553 = vadd.xlane.f32.xlu0 %v4552
        %v4554 = vpop.xlane.xlu0 %4553
        %v4555 = vsel %vm1113, %v4531, 0.0
        %4556 = vadd.xlane.f32.xlu0 %v4555
        %v4557 = vpop.xlane.xlu0 %4556
        %v4558 = vsel %vm1113, %v4532, 0.0
        %4559 = vadd.xlane.f32.xlu0 %v4558
        %v4560 = vpop.xlane.xlu0 %4559
        %v4561 = vsel %vm1113, %v4533, 0.0
        %4562 = vadd.xlane.f32.xlu0 %v4561
        %v4563 = vpop.xlane.xlu0 %4562
        %v4564 = vsel %vm1113, %v4534, 0.0
        %4565 = vadd.xlane.f32.xlu0 %v4564
        %v4566 = vpop.xlane.xlu0 %4565
        %v4567 = vsel %vm1113, %v4535, 0.0
        %4568 = vadd.xlane.f32.xlu0 %v4567
        %v4569 = vpop.xlane.xlu0 %4568
        %v4570 = vsel %vm1113, %v4536, 0.0
        %4571 = vadd.xlane.f32.xlu0 %v4570
        %v4572 = vpop.xlane.xlu0 %4571
        %v4573 = vsel %vm1113, %v4537, 0.0
        %4574 = vadd.xlane.f32.xlu0 %v4573
        %v4575 = vpop.xlane.xlu0 %4574
        %v4576 = vsel %vm1113, %v4538, 0.0
        %4577 = vadd.xlane.f32.xlu0 %v4576
        %v4578 = vpop.xlane.xlu0 %4577
        %v4579 = vsel %vm1113, %v4539, 0.0
        %4580 = vadd.xlane.f32.xlu0 %v4579
        %v4581 = vpop.xlane.xlu0 %4580
        %v4582 = vsel %vm1113, %v4540, 0.0
        %4583 = vadd.xlane.f32.xlu0 %v4582
        %v4584 = vpop.xlane.xlu0 %4583
        %v4585 = vsel %vm1113, %v4541, 0.0
        %4586 = vadd.xlane.f32.xlu0 %v4585
        %v4587 = vpop.xlane.xlu0 %4586
        %v4588 = vsel %vm1113, %v4542, 0.0
        %4589 = vadd.xlane.f32.xlu0 %v4588
        %v4590 = vpop.xlane.xlu0 %4589
        %v4591 = vmul.f32 %v4545, %v1162
        %v4592 = vmul.f32 %v4548, %v1162
        %v4593 = vmul.f32 %v4551, %v1162
        %v4594 = vmul.f32 %v4554, %v1162
        %v4595 = vmul.f32 %v4557, %v1162
        %v4596 = vmul.f32 %v4560, %v1162
        %v4597 = vmul.f32 %v4563, %v1162
        %v4598 = vmul.f32 %v4566, %v1162
        %v4599 = vmul.f32 %v4569, %v1162
        %v4600 = vmul.f32 %v4572, %v1162
        %v4601 = vmul.f32 %v4575, %v1162
        %v4602 = vmul.f32 %v4578, %v1162
        %v4603 = vmul.f32 %v4581, %v1162
        %v4604 = vmul.f32 %v4584, %v1162
        %v4605 = vmul.f32 %v4587, %v1162
        %v4606 = vmul.f32 %v4590, %v1162
        %v4607 = vadd.f32 %v4591, 1e-06
        %v4608 = vadd.f32 %v4592, 1e-06
        %v4609 = vadd.f32 %v4593, 1e-06
        %v4610 = vadd.f32 %v4594, 1e-06
        %v4611 = vadd.f32 %v4595, 1e-06
        %v4612 = vadd.f32 %v4596, 1e-06
        %v4613 = vadd.f32 %v4597, 1e-06
        %v4614 = vadd.f32 %v4598, 1e-06
        %v4615 = vadd.f32 %v4599, 1e-06
        %v4616 = vadd.f32 %v4600, 1e-06
        %v4617 = vadd.f32 %v4601, 1e-06
        %v4618 = vadd.f32 %v4602, 1e-06
        %v4619 = vadd.f32 %v4603, 1e-06
        %v4620 = vadd.f32 %v4604, 1e-06
        %v4621 = vadd.f32 %v4605, 1e-06
        %v4622 = vadd.f32 %v4606, 1e-06
        %v4623 = vrsqrt.pop %v4607
        %v4624 = vrsqrt.pop %v4608
        %v4625 = vrsqrt.pop %v4609
        %v4626 = vrsqrt.pop %v4610
        %v4627 = vrsqrt.pop %v4611
        %v4628 = vrsqrt.pop %v4612
        %v4629 = vrsqrt.pop %v4613
        %v4630 = vrsqrt.pop %v4614
        %v4631 = vrsqrt.pop %v4615
        %v4632 = vrsqrt.pop %v4616
        %v4633 = vrsqrt.pop %v4617
        %v4634 = vrsqrt.pop %v4618
        %v4635 = vrsqrt.pop %v4619
        %v4636 = vrsqrt.pop %v4620
        %v4637 = vrsqrt.pop %v4621
        %v4638 = vrsqrt.pop %v4622
        %v4639 = vmul.f32 %v4511, %v4623
        %v4640 = vmul.f32 %v4512, %v4624
        %v4641 = vmul.f32 %v4513, %v4625
        %v4642 = vmul.f32 %v4514, %v4626
        %v4643 = vmul.f32 %v4515, %v4627
        %v4644 = vmul.f32 %v4516, %v4628
        %v4645 = vmul.f32 %v4517, %v4629
        %v4646 = vmul.f32 %v4518, %v4630
        %v4647 = vmul.f32 %v4519, %v4631
        %v4648 = vmul.f32 %v4520, %v4632
        %v4649 = vmul.f32 %v4521, %v4633
        %v4650 = vmul.f32 %v4522, %v4634
        %v4651 = vmul.f32 %v4523, %v4635
        %v4652 = vmul.f32 %v4524, %v4636
        %v4653 = vmul.f32 %v4525, %v4637
        %v4654 = vmul.f32 %v4526, %v4638
        %v4656 = vlaneseq
        %v4657 = vshrl.u32 %v4656, 7
        %v4658 = vsub.s32 0, %v4657
        %v4659 = vrot.slane %v4445, %v4658
        %v4661 = vmul.f32 %v4639, %v4659
        %v4662 = vmul.f32 %v4640, %v4659
        %v4663 = vmul.f32 %v4641, %v4659
        %v4664 = vmul.f32 %v4642, %v4659
        %v4665 = vmul.f32 %v4643, %v4659
        %v4666 = vmul.f32 %v4644, %v4659
        %v4667 = vmul.f32 %v4645, %v4659
        %v4668 = vmul.f32 %v4646, %v4659
        %v4669 = vmul.f32 %v4647, %v4659
        %v4670 = vmul.f32 %v4648, %v4659
        %v4671 = vmul.f32 %v4649, %v4659
        %v4672 = vmul.f32 %v4650, %v4659
        %v4673 = vmul.f32 %v4651, %v4659
        %v4674 = vmul.f32 %v4652, %v4659
        %v4675 = vmul.f32 %v4653, %v4659
        %v4676 = vmul.f32 %v4654, %v4659
        %v4678 = vlaneseq
        %v4679 = vshrl.u32 %v4678, 7
        %v4680 = vsub.s32 0, %v4679
        %v4681 = vrot.slane %v4446, %v4680
        %v4683 = vadd.f32 %v4661, %v4681
        %v4684 = vadd.f32 %v4662, %v4681
        %v4685 = vadd.f32 %v4663, %v4681
        %v4686 = vadd.f32 %v4664, %v4681
        %v4687 = vadd.f32 %v4665, %v4681
        %v4688 = vadd.f32 %v4666, %v4681
        %v4689 = vadd.f32 %v4667, %v4681
        %v4690 = vadd.f32 %v4668, %v4681
        %v4691 = vadd.f32 %v4669, %v4681
        %v4692 = vadd.f32 %v4670, %v4681
        %v4693 = vadd.f32 %v4671, %v4681
        %v4694 = vadd.f32 %v4672, %v4681
        %v4695 = vadd.f32 %v4673, %v4681
        %v4696 = vadd.f32 %v4674, %v4681
        %v4697 = vadd.f32 %v4675, %v4681
        %v4698 = vadd.f32 %v4676, %v4681
        %v4699 = vpack.c.bf16 %v4684, %v4683
        %v4700 = vpack.c.bf16 %v4686, %v4685
        %v4701 = vpack.c.bf16 %v4688, %v4687
        %v4702 = vpack.c.bf16 %v4690, %v4689
        %v4703 = vpack.c.bf16 %v4692, %v4691
        %v4704 = vpack.c.bf16 %v4694, %v4693
        %v4705 = vpack.c.bf16 %v4696, %v4695
        %v4706 = vpack.c.bf16 %v4698, %v4697
        %v4707 = vld [vmem:[%s14] sm:$0xf]
        %v4708 = vld [vmem:[%s14 + $0x4] sm:$0xf]
        %v4709 = vld [vmem:[%s14 + $0x8] sm:$0xf]
        %v4710 = vld [vmem:[%s14 + $0xc] sm:$0xf]
        %v4711 = vld [vmem:[#allocation10] sm:$0x1]
        %v4713 = vlaneseq
        %v4714 = vshrl.u32 %v4713, 7
        %v4715 = vsub.s32 0, %v4714
        %v4716 = vrot.slane %v4711, %v4715
        %v4722 = vunpack.c.l.b16 %v4707
        %v4723 = vunpack.c.l.b16 %v4708
        %v4724 = vunpack.c.l.b16 %v4709
        %v4725 = vunpack.c.l.b16 %v4710
        %v4726 = vpack.c.b16 %v4723, %v4722
        %v4727 = vpack.c.b16 %v4725, %v4724
        %v4731 = vsel %vm1113, %v4699, 0
        %v4734 = vsel %vm1113, %v4700, 0
        %v4737 = vsel %vm1113, %v4701, 0
        %v4740 = vsel %vm1113, %v4702, 0
        %v4743 = vsel %vm1113, %v4703, 0
        %v4746 = vsel %vm1113, %v4704, 0
        %v4749 = vsel %vm1113, %v4705, 0
        %v4752 = vsel %vm1113, %v4706, 0
        %4754 = vmatprep.subr.bf16.mxu0 0
        %4755 = vmatpush1.bf16.msra.mxu0 %v4726
        %4756 = vmatprep.subr.bf16.mxu0 0
        %4757 = vmatpush1.bf16.msra.mxu0 %v4727
        %4758 = vmatprep.subr.bf16.mxu0 0
        %4759 = vmatpush1.bf16.msra.mxu0 0
        %4760 = vmatprep.subr.bf16.mxu0 0
        %4761 = vmatpush1.bf16.msra.mxu0 0
        %4762 = vmatprep.subr.bf16.mxu0 0
        %4763 = vmatpush1.bf16.msra.mxu0 0
        %4764 = vmatprep.subr.bf16.mxu0 0
        %4765 = vmatpush1.bf16.msra.mxu0 0
        %4766 = vmatprep.subr.bf16.mxu0 0
        %4767 = vmatpush1.bf16.msra.mxu0 0
        %4768 = vmatprep.subr.bf16.mxu0 0
        %4769 = vmatpush1.bf16.msra.mxu0 0
        %4770 = vmatprep.subr.bf16.mxu0 0
        %4771 = vmatpush1.bf16.msra.mxu0 0
        %4772 = vmatprep.subr.bf16.mxu0 0
        %4773 = vmatpush1.bf16.msra.mxu0 0
        %4774 = vmatprep.subr.bf16.mxu0 0
        %4775 = vmatpush1.bf16.msra.mxu0 0
        %4776 = vmatprep.subr.bf16.mxu0 0
        %4777 = vmatpush1.bf16.msra.mxu0 0
        %4778 = vmatprep.subr.bf16.mxu0 0
        %4779 = vmatpush1.bf16.msra.mxu0 0
        %4780 = vmatprep.subr.bf16.mxu0 0
        %4781 = vmatpush1.bf16.msra.mxu0 0
        %4782 = vmatprep.subr.bf16.mxu0 0
        %4783 = vmatpush1.bf16.msra.mxu0 0
        %4784 = vmatprep.subr.bf16.mxu0 0
        %4785 = vmatpush1.bf16.msra.mxu0 0
        %4786 = vmatprep.mubr.bf16.mxu0 0
        %4787 = vmatmul.mubr.bf16.gmra.mrb[0].mxu0 %v4731
        %v4788 = vpop.f32.mrb[0].mxu0
        %v4789 = vadd.f32 %v4716, %v4788
        %v4790 = vpop.f32.mrb[0].mxu0
        %v4791 = vpop.f32.mrb[0].mxu0
        %v4792 = vadd.f32 %v4716, %v4791
        %v4793 = vpop.f32.mrb[0].mxu0
        %4794 = vmatprep.mubr.bf16.mxu0 0
        %4795 = vmatmul.mubr.bf16.gmra.mrb[0].mxu0 %v4734
        %v4796 = vpop.f32.mrb[0].mxu0
        %v4797 = vadd.f32 %v4716, %v4796
        %v4798 = vpop.f32.mrb[0].mxu0
        %v4799 = vpop.f32.mrb[0].mxu0
        %v4800 = vadd.f32 %v4716, %v4799
        %v4801 = vpop.f32.mrb[0].mxu0
        %4802 = vmatprep.mubr.bf16.mxu0 0
        %4803 = vmatmul.mubr.bf16.gmra.mrb[0].mxu0 %v4737
        %v4804 = vpop.f32.mrb[0].mxu0
        %v4805 = vadd.f32 %v4716, %v4804
        %v4806 = vpop.f32.mrb[0].mxu0
        %v4807 = vpop.f32.mrb[0].mxu0
        %v4808 = vadd.f32 %v4716, %v4807
        %v4809 = vpop.f32.mrb[0].mxu0
        %4810 = vmatprep.mubr.bf16.mxu0 0
        %4811 = vmatmul.mubr.bf16.gmra.mrb[0].mxu0 %v4740
        %v4812 = vpop.f32.mrb[0].mxu0
        %v4813 = vadd.f32 %v4716, %v4812
        %v4814 = vpop.f32.mrb[0].mxu0
        %v4815 = vpop.f32.mrb[0].mxu0
        %v4816 = vadd.f32 %v4716, %v4815
        %v4817 = vpop.f32.mrb[0].mxu0
        %4818 = vmatprep.mubr.bf16.mxu0 0
        %4819 = vmatmul.mubr.bf16.gmra.mrb[0].mxu0 %v4743
        %v4820 = vpop.f32.mrb[0].mxu0
        %v4821 = vadd.f32 %v4716, %v4820
        %v4822 = vpop.f32.mrb[0].mxu0
        %v4823 = vpop.f32.mrb[0].mxu0
        %v4824 = vadd.f32 %v4716, %v4823
        %v4825 = vpop.f32.mrb[0].mxu0
        %4826 = vmatprep.mubr.bf16.mxu0 0
        %4827 = vmatmul.mubr.bf16.gmra.mrb[0].mxu0 %v4746
        %v4828 = vpop.f32.mrb[0].mxu0
        %v4829 = vadd.f32 %v4716, %v4828
        %v4830 = vpop.f32.mrb[0].mxu0
        %v4831 = vpop.f32.mrb[0].mxu0
        %v4832 = vadd.f32 %v4716, %v4831
        %v4833 = vpop.f32.mrb[0].mxu0
        %4834 = vmatprep.mubr.bf16.mxu0 0
        %4835 = vmatmul.mubr.bf16.gmra.mrb[0].mxu0 %v4749
        %v4836 = vpop.f32.mrb[0].mxu0
        %v4837 = vadd.f32 %v4716, %v4836
        %v4838 = vpop.f32.mrb[0].mxu0
        %v4839 = vpop.f32.mrb[0].mxu0
        %v4840 = vadd.f32 %v4716, %v4839
        %v4841 = vpop.f32.mrb[0].mxu0
        %4842 = vmatprep.mubr.bf16.mxu0 0
        %4843 = vmatmul.mubr.bf16.gmra.mrb[0].mxu0 %v4752
        %v4844 = vpop.f32.mrb[0].mxu0
        %v4845 = vadd.f32 %v4716, %v4844
        %v4846 = vpop.f32.mrb[0].mxu0
        %v4847 = vpop.f32.mrb[0].mxu0
        %v4848 = vadd.f32 %v4716, %v4847
        %v4849 = vpop.f32.mrb[0].mxu0
        %4850 = vdwg.mxu0
        %v4851 = vmul.f32 %v4789, 0.5
        %v4852 = vmul.f32 %v4792, 0.5
        %v4853 = vmul.f32 %v4797, 0.5
        %v4854 = vmul.f32 %v4800, 0.5
        %v4855 = vmul.f32 %v4805, 0.5
        %v4856 = vmul.f32 %v4808, 0.5
        %v4857 = vmul.f32 %v4813, 0.5
        %v4858 = vmul.f32 %v4816, 0.5
        %v4859 = vmul.f32 %v4821, 0.5
        %v4860 = vmul.f32 %v4824, 0.5
        %v4861 = vmul.f32 %v4829, 0.5
        %v4862 = vmul.f32 %v4832, 0.5
        %v4863 = vmul.f32 %v4837, 0.5
        %v4864 = vmul.f32 %v4840, 0.5
        %v4865 = vmul.f32 %v4845, 0.5
        %v4866 = vmul.f32 %v4848, 0.5
        %v4867 = vmul.f32 %v4789, 0.044715
        %v4868 = vmul.f32 %v4792, 0.044715
        %v4869 = vmul.f32 %v4797, 0.044715
        %v4870 = vmul.f32 %v4800, 0.044715
        %v4871 = vmul.f32 %v4805, 0.044715
        %v4872 = vmul.f32 %v4808, 0.044715
        %v4873 = vmul.f32 %v4813, 0.044715
        %v4874 = vmul.f32 %v4816, 0.044715
        %v4875 = vmul.f32 %v4821, 0.044715
        %v4876 = vmul.f32 %v4824, 0.044715
        %v4877 = vmul.f32 %v4829, 0.044715
        %v4878 = vmul.f32 %v4832, 0.044715
        %v4879 = vmul.f32 %v4837, 0.044715
        %v4880 = vmul.f32 %v4840, 0.044715
        %v4881 = vmul.f32 %v4845, 0.044715
        %v4882 = vmul.f32 %v4848, 0.044715
        %v4883 = vmul.f32 %v4867, %v4789
        %v4884 = vmul.f32 %v4868, %v4792
        %v4885 = vmul.f32 %v4869, %v4797
        %v4886 = vmul.f32 %v4870, %v4800
        %v4887 = vmul.f32 %v4871, %v4805
        %v4888 = vmul.f32 %v4872, %v4808
        %v4889 = vmul.f32 %v4873, %v4813
        %v4890 = vmul.f32 %v4874, %v4816
        %v4891 = vmul.f32 %v4875, %v4821
        %v4892 = vmul.f32 %v4876, %v4824
        %v4893 = vmul.f32 %v4877, %v4829
        %v4894 = vmul.f32 %v4878, %v4832
        %v4895 = vmul.f32 %v4879, %v4837
        %v4896 = vmul.f32 %v4880, %v4840
        %v4897 = vmul.f32 %v4881, %v4845
        %v4898 = vmul.f32 %v4882, %v4848
        %v4899 = vmul.f32 %v4883, %v4789
        %v4900 = vmul.f32 %v4884, %v4792
        %v4901 = vmul.f32 %v4885, %v4797
        %v4902 = vmul.f32 %v4886, %v4800
        %v4903 = vmul.f32 %v4887, %v4805
        %v4904 = vmul.f32 %v4888, %v4808
        %v4905 = vmul.f32 %v4889, %v4813
        %v4906 = vmul.f32 %v4890, %v4816
        %v4907 = vmul.f32 %v4891, %v4821
        %v4908 = vmul.f32 %v4892, %v4824
        %v4909 = vmul.f32 %v4893, %v4829
        %v4910 = vmul.f32 %v4894, %v4832
        %v4911 = vmul.f32 %v4895, %v4837
        %v4912 = vmul.f32 %v4896, %v4840
        %v4913 = vmul.f32 %v4897, %v4845
        %v4914 = vmul.f32 %v4898, %v4848
        %v4915 = vadd.f32 %v4789, %v4899
        %v4916 = vadd.f32 %v4792, %v4900
        %v4917 = vadd.f32 %v4797, %v4901
        %v4918 = vadd.f32 %v4800, %v4902
        %v4919 = vadd.f32 %v4805, %v4903
        %v4920 = vadd.f32 %v4808, %v4904
        %v4921 = vadd.f32 %v4813, %v4905
        %v4922 = vadd.f32 %v4816, %v4906
        %v4923 = vadd.f32 %v4821, %v4907
        %v4924 = vadd.f32 %v4824, %v4908
        %v4925 = vadd.f32 %v4829, %v4909
        %v4926 = vadd.f32 %v4832, %v4910
        %v4927 = vadd.f32 %v4837, %v4911
        %v4928 = vadd.f32 %v4840, %v4912
        %v4929 = vadd.f32 %v4845, %v4913
        %v4930 = vadd.f32 %v4848, %v4914
        %v4931 = vmul.f32 %v4915, 0.7978846
        %v4932 = vmul.f32 %v4916, 0.7978846
        %v4933 = vmul.f32 %v4917, 0.7978846
        %v4934 = vmul.f32 %v4918, 0.7978846
        %v4935 = vmul.f32 %v4919, 0.7978846
        %v4936 = vmul.f32 %v4920, 0.7978846
        %v4937 = vmul.f32 %v4921, 0.7978846
        %v4938 = vmul.f32 %v4922, 0.7978846
        %v4939 = vmul.f32 %v4923, 0.7978846
        %v4940 = vmul.f32 %v4924, 0.7978846
        %v4941 = vmul.f32 %v4925, 0.7978846
        %v4942 = vmul.f32 %v4926, 0.7978846
        %v4943 = vmul.f32 %v4927, 0.7978846
        %v4944 = vmul.f32 %v4928, 0.7978846
        %v4945 = vmul.f32 %v4929, 0.7978846
        %v4946 = vmul.f32 %v4930, 0.7978846
        %v4947 = vtanh.pop %v4931
        %v4948 = vtanh.pop %v4932
        %v4949 = vtanh.pop %v4933
        %v4950 = vtanh.pop %v4934
        %v4951 = vtanh.pop %v4935
        %v4952 = vtanh.pop %v4936
        %v4953 = vtanh.pop %v4937
        %v4954 = vtanh.pop %v4938
        %v4955 = vtanh.pop %v4939
        %v4956 = vtanh.pop %v4940
        %v4957 = vtanh.pop %v4941
        %v4958 = vtanh.pop %v4942
        %v4959 = vtanh.pop %v4943
        %v4960 = vtanh.pop %v4944
        %v4961 = vtanh.pop %v4945
        %v4962 = vtanh.pop %v4946
        %v4963 = vadd.f32 %v4947, 1.0
        %v4964 = vadd.f32 %v4948, 1.0
        %v4965 = vadd.f32 %v4949, 1.0
        %v4966 = vadd.f32 %v4950, 1.0
        %v4967 = vadd.f32 %v4951, 1.0
        %v4968 = vadd.f32 %v4952, 1.0
        %v4969 = vadd.f32 %v4953, 1.0
        %v4970 = vadd.f32 %v4954, 1.0
        %v4971 = vadd.f32 %v4955, 1.0
        %v4972 = vadd.f32 %v4956, 1.0
        %v4973 = vadd.f32 %v4957, 1.0
        %v4974 = vadd.f32 %v4958, 1.0
        %v4975 = vadd.f32 %v4959, 1.0
        %v4976 = vadd.f32 %v4960, 1.0
        %v4977 = vadd.f32 %v4961, 1.0
        %v4978 = vadd.f32 %v4962, 1.0
        %v4979 = vmul.f32 %v4851, %v4963
        %v4980 = vmul.f32 %v4852, %v4964
        %v4981 = vmul.f32 %v4853, %v4965
        %v4982 = vmul.f32 %v4854, %v4966
        %v4983 = vmul.f32 %v4855, %v4967
        %v4984 = vmul.f32 %v4856, %v4968
        %v4985 = vmul.f32 %v4857, %v4969
        %v4986 = vmul.f32 %v4858, %v4970
        %v4987 = vmul.f32 %v4859, %v4971
        %v4988 = vmul.f32 %v4860, %v4972
        %v4989 = vmul.f32 %v4861, %v4973
        %v4990 = vmul.f32 %v4862, %v4974
        %v4991 = vmul.f32 %v4863, %v4975
        %v4992 = vmul.f32 %v4864, %v4976
        %v4993 = vmul.f32 %v4865, %v4977
        %v4994 = vmul.f32 %v4866, %v4978
        %v4995 = vpack.c.bf16 %v4980, %v4979
        %v4996 = vpack.c.bf16 %v4982, %v4981
        %v4997 = vpack.c.bf16 %v4984, %v4983
        %v4998 = vpack.c.bf16 %v4986, %v4985
        %v4999 = vpack.c.bf16 %v4988, %v4987
        %v5000 = vpack.c.bf16 %v4990, %v4989
        %v5001 = vpack.c.bf16 %v4992, %v4991
        %v5002 = vpack.c.bf16 %v4994, %v4993
        %v5003 = vld [vmem:[%s16] sm:$0xf]
        %v5004 = vld [vmem:[%s16 + $0x4] sm:$0xf]
        %v5005 = vld [vmem:[%s16 + $0x8] sm:$0xf]
        %v5006 = vld [vmem:[%s16 + $0xc] sm:$0xf]
        %v5007 = vld [vmem:[%s16 + $0x10] sm:$0xf]
        %v5008 = vld [vmem:[%s16 + $0x14] sm:$0xf]
        %v5009 = vld [vmem:[%s16 + $0x18] sm:$0xf]
        %v5010 = vld [vmem:[%s16 + $0x1c] sm:$0xf]
        %v5011 = vld [vmem:[%s16 + $0x20] sm:$0xf]
        %v5012 = vld [vmem:[%s16 + $0x24] sm:$0xf]
        %v5013 = vld [vmem:[%s16 + $0x28] sm:$0xf]
        %v5014 = vld [vmem:[%s16 + $0x2c] sm:$0xf]
        %v5015 = vld [vmem:[%s16 + $0x30] sm:$0xf]
        %v5016 = vld [vmem:[%s16 + $0x34] sm:$0xf]
        %v5017 = vld [vmem:[%s16 + $0x38] sm:$0xf]
        %v5018 = vld [vmem:[%s16 + $0x3c] sm:$0xf]
        %v5035 = vunpack.c.l.b16 %v5003
        %v5036 = vunpack.c.l.b16 %v5004
        %v5037 = vunpack.c.l.b16 %v5005
        %v5038 = vunpack.c.l.b16 %v5006
        %v5039 = vunpack.c.l.b16 %v5007
        %v5040 = vunpack.c.l.b16 %v5008
        %v5041 = vunpack.c.l.b16 %v5009
        %v5042 = vunpack.c.l.b16 %v5010
        %v5043 = vunpack.c.l.b16 %v5011
        %v5044 = vunpack.c.l.b16 %v5012
        %v5045 = vunpack.c.l.b16 %v5013
        %v5046 = vunpack.c.l.b16 %v5014
        %v5047 = vunpack.c.l.b16 %v5015
        %v5048 = vunpack.c.l.b16 %v5016
        %v5049 = vunpack.c.l.b16 %v5017
        %v5050 = vunpack.c.l.b16 %v5018
        %v5051 = vpack.c.b16 %v5036, %v5035
        %v5052 = vpack.c.b16 %v5038, %v5037
        %v5053 = vpack.c.b16 %v5040, %v5039
        %v5054 = vpack.c.b16 %v5042, %v5041
        %v5055 = vpack.c.b16 %v5044, %v5043
        %v5056 = vpack.c.b16 %v5046, %v5045
        %v5057 = vpack.c.b16 %v5048, %v5047
        %v5058 = vpack.c.b16 %v5050, %v5049
        %5067 = vmatprep.subr.bf16.mxu0 0
        %5068 = vmatpush1.bf16.msra.mxu0 %v5051
        %5069 = vmatprep.subr.bf16.mxu0 0
        %5070 = vmatpush1.bf16.msra.mxu0 %v5052
        %5071 = vmatprep.subr.bf16.mxu0 0
        %5072 = vmatpush1.bf16.msra.mxu0 %v5053
        %5073 = vmatprep.subr.bf16.mxu0 0
        %5074 = vmatpush1.bf16.msra.mxu0 %v5054
        %5075 = vmatprep.subr.bf16.mxu0 0
        %5076 = vmatpush1.bf16.msra.mxu0 %v5055
        %5077 = vmatprep.subr.bf16.mxu0 0
        %5078 = vmatpush1.bf16.msra.mxu0 %v5056
        %5079 = vmatprep.subr.bf16.mxu0 0
        %5080 = vmatpush1.bf16.msra.mxu0 %v5057
        %5081 = vmatprep.subr.bf16.mxu0 0
        %5082 = vmatpush1.bf16.msra.mxu0 %v5058
        %5083 = vmatprep.subr.bf16.mxu0 0
        %5084 = vmatpush1.bf16.msra.mxu0 0
        %5085 = vmatprep.subr.bf16.mxu0 0
        %5086 = vmatpush1.bf16.msra.mxu0 0
        %5087 = vmatprep.subr.bf16.mxu0 0
        %5088 = vmatpush1.bf16.msra.mxu0 0
        %5089 = vmatprep.subr.bf16.mxu0 0
        %5090 = vmatpush1.bf16.msra.mxu0 0
        %5091 = vmatprep.subr.bf16.mxu0 0
        %5092 = vmatpush1.bf16.msra.mxu0 0
        %5093 = vmatprep.subr.bf16.mxu0 0
        %5094 = vmatpush1.bf16.msra.mxu0 0
        %5095 = vmatprep.subr.bf16.mxu0 0
        %5096 = vmatpush1.bf16.msra.mxu0 0
        %5097 = vmatprep.subr.bf16.mxu0 0
        %5098 = vmatpush1.bf16.msra.mxu0 0
        %5099 = vmatprep.mubr.bf16.mxu0 0
        %5100 = vmatmul.mubr.bf16.gmra.mrb[0].mxu0 %v4995
        %v5101 = vpop.f32.mrb[0].mxu0
        %v5102 = vadd.f32 0.0, %v5101
        %v5103 = vpop.f32.mrb[0].mxu0
        %v5104 = vpop.f32.mrb[0].mxu0
        %v5105 = vadd.f32 0.0, %v5104
        %v5106 = vpop.f32.mrb[0].mxu0
        %5107 = vmatprep.mubr.bf16.mxu0 0
        %5108 = vmatmul.mubr.bf16.gmra.mrb[0].mxu0 %v4996
        %v5109 = vpop.f32.mrb[0].mxu0
        %v5110 = vadd.f32 0.0, %v5109
        %v5111 = vpop.f32.mrb[0].mxu0
        %v5112 = vpop.f32.mrb[0].mxu0
        %v5113 = vadd.f32 0.0, %v5112
        %v5114 = vpop.f32.mrb[0].mxu0
        %5115 = vmatprep.mubr.bf16.mxu0 0
        %5116 = vmatmul.mubr.bf16.gmra.mrb[0].mxu0 %v4997
        %v5117 = vpop.f32.mrb[0].mxu0
        %v5118 = vadd.f32 0.0, %v5117
        %v5119 = vpop.f32.mrb[0].mxu0
        %v5120 = vpop.f32.mrb[0].mxu0
        %v5121 = vadd.f32 0.0, %v5120
        %v5122 = vpop.f32.mrb[0].mxu0
        %5123 = vmatprep.mubr.bf16.mxu0 0
        %5124 = vmatmul.mubr.bf16.gmra.mrb[0].mxu0 %v4998
        %v5125 = vpop.f32.mrb[0].mxu0
        %v5126 = vadd.f32 0.0, %v5125
        %v5127 = vpop.f32.mrb[0].mxu0
        %v5128 = vpop.f32.mrb[0].mxu0
        %v5129 = vadd.f32 0.0, %v5128
        %v5130 = vpop.f32.mrb[0].mxu0
        %5131 = vmatprep.mubr.bf16.mxu0 0
        %5132 = vmatmul.mubr.bf16.gmra.mrb[0].mxu0 %v4999
        %v5133 = vpop.f32.mrb[0].mxu0
        %v5134 = vadd.f32 0.0, %v5133
        %v5135 = vpop.f32.mrb[0].mxu0
        %v5136 = vpop.f32.mrb[0].mxu0
        %v5137 = vadd.f32 0.0, %v5136
        %v5138 = vpop.f32.mrb[0].mxu0
        %5139 = vmatprep.mubr.bf16.mxu0 0
        %5140 = vmatmul.mubr.bf16.gmra.mrb[0].mxu0 %v5000
        %v5141 = vpop.f32.mrb[0].mxu0
        %v5142 = vadd.f32 0.0, %v5141
        %v5143 = vpop.f32.mrb[0].mxu0
        %v5144 = vpop.f32.mrb[0].mxu0
        %v5145 = vadd.f32 0.0, %v5144
        %v5146 = vpop.f32.mrb[0].mxu0
        %5147 = vmatprep.mubr.bf16.mxu0 0
        %5148 = vmatmul.mubr.bf16.gmra.mrb[0].mxu0 %v5001
        %v5149 = vpop.f32.mrb[0].mxu0
        %v5150 = vadd.f32 0.0, %v5149
        %v5151 = vpop.f32.mrb[0].mxu0
        %v5152 = vpop.f32.mrb[0].mxu0
        %v5153 = vadd.f32 0.0, %v5152
        %v5154 = vpop.f32.mrb[0].mxu0
        %5155 = vmatprep.mubr.bf16.mxu0 0
        %5156 = vmatmul.mubr.bf16.gmra.mrb[0].mxu0 %v5002
        %v5157 = vpop.f32.mrb[0].mxu0
        %v5158 = vadd.f32 0.0, %v5157
        %v5159 = vpop.f32.mrb[0].mxu0
        %v5160 = vpop.f32.mrb[0].mxu0
        %v5161 = vadd.f32 0.0, %v5160
        %v5162 = vpop.f32.mrb[0].mxu0
        %5163 = vdwg.mxu0
        %v5164 = vadd.f32 %v4429, %v5102
        %v5165 = vadd.f32 %v4430, %v5105
        %v5166 = vadd.f32 %v4431, %v5110
        %v5167 = vadd.f32 %v4432, %v5113
        %v5168 = vadd.f32 %v4433, %v5118
        %v5169 = vadd.f32 %v4434, %v5121
        %v5170 = vadd.f32 %v4435, %v5126
        %v5171 = vadd.f32 %v4436, %v5129
        %v5172 = vadd.f32 %v4437, %v5134
        %v5173 = vadd.f32 %v4438, %v5137
        %v5174 = vadd.f32 %v4439, %v5142
        %v5175 = vadd.f32 %v4440, %v5145
        %v5176 = vadd.f32 %v4441, %v5150
        %v5177 = vadd.f32 %v4442, %v5153
        %v5178 = vadd.f32 %v4443, %v5158
        %v5179 = vadd.f32 %v4444, %v5161
        %v5180 = vld [vmem:[%s17] sm:$0x1]
        %v5182 = vlaneseq
        %v5183 = vshrl.u32 %v5182, 7
        %v5184 = vsub.s32 0, %v5183
        %v5185 = vrot.slane %v5180, %v5184
        %v5187 = vadd.f32 %v5164, %v5185
        %v5188 = vadd.f32 %v5165, %v5185
        %v5189 = vadd.f32 %v5166, %v5185
        %v5190 = vadd.f32 %v5167, %v5185
        %v5191 = vadd.f32 %v5168, %v5185
        %v5192 = vadd.f32 %v5169, %v5185
        %v5193 = vadd.f32 %v5170, %v5185
        %v5194 = vadd.f32 %v5171, %v5185
        %v5195 = vadd.f32 %v5172, %v5185
        %v5196 = vadd.f32 %v5173, %v5185
        %v5197 = vadd.f32 %v5174, %v5185
        %v5198 = vadd.f32 %v5175, %v5185
        %v5199 = vadd.f32 %v5176, %v5185
        %v5200 = vadd.f32 %v5177, %v5185
        %v5201 = vadd.f32 %v5178, %v5185
        %v5202 = vadd.f32 %v5179, %v5185
        %s5203 = scalar_lea.vmem %s3, 1
        %v5204 = vld [vmem:[%s5203] sm:$0x1]
        %s5205 = scalar_lea.vmem %s4, 1
        %v5206 = vld [vmem:[%s5205] sm:$0x1]
        %v5207 = vsel %vm1113, %v5187, 0.0
        %5208 = vadd.xlane.f32.xlu0 %v5207
        %v5209 = vpop.xlane.xlu0 %5208
        %v5210 = vsel %vm1113, %v5188, 0.0
        %5211 = vadd.xlane.f32.xlu0 %v5210
        %v5212 = vpop.xlane.xlu0 %5211
        %v5213 = vsel %vm1113, %v5189, 0.0
        %5214 = vadd.xlane.f32.xlu0 %v5213
        %v5215 = vpop.xlane.xlu0 %5214
        %v5216 = vsel %vm1113, %v5190, 0.0
        %5217 = vadd.xlane.f32.xlu0 %v5216
        %v5218 = vpop.xlane.xlu0 %5217
        %v5219 = vsel %vm1113, %v5191, 0.0
        %5220 = vadd.xlane.f32.xlu0 %v5219
        %v5221 = vpop.xlane.xlu0 %5220
        %v5222 = vsel %vm1113, %v5192, 0.0
        %5223 = vadd.xlane.f32.xlu0 %v5222
        %v5224 = vpop.xlane.xlu0 %5223
        %v5225 = vsel %vm1113, %v5193, 0.0
        %5226 = vadd.xlane.f32.xlu0 %v5225
        %v5227 = vpop.xlane.xlu0 %5226
        %v5228 = vsel %vm1113, %v5194, 0.0
        %5229 = vadd.xlane.f32.xlu0 %v5228
        %v5230 = vpop.xlane.xlu0 %5229
        %v5231 = vsel %vm1113, %v5195, 0.0
        %5232 = vadd.xlane.f32.xlu0 %v5231
        %v5233 = vpop.xlane.xlu0 %5232
        %v5234 = vsel %vm1113, %v5196, 0.0
        %5235 = vadd.xlane.f32.xlu0 %v5234
        %v5236 = vpop.xlane.xlu0 %5235
        %v5237 = vsel %vm1113, %v5197, 0.0
        %5238 = vadd.xlane.f32.xlu0 %v5237
        %v5239 = vpop.xlane.xlu0 %5238
        %v5240 = vsel %vm1113, %v5198, 0.0
        %5241 = vadd.xlane.f32.xlu0 %v5240
        %v5242 = vpop.xlane.xlu0 %5241
        %v5243 = vsel %vm1113, %v5199, 0.0
        %5244 = vadd.xlane.f32.xlu0 %v5243
        %v5245 = vpop.xlane.xlu0 %5244
        %v5246 = vsel %vm1113, %v5200, 0.0
        %5247 = vadd.xlane.f32.xlu0 %v5246
        %v5248 = vpop.xlane.xlu0 %5247
        %v5249 = vsel %vm1113, %v5201, 0.0
        %5250 = vadd.xlane.f32.xlu0 %v5249
        %v5251 = vpop.xlane.xlu0 %5250
        %v5252 = vsel %vm1113, %v5202, 0.0
        %5253 = vadd.xlane.f32.xlu0 %v5252
        %v5254 = vpop.xlane.xlu0 %5253
        %v5255 = vmul.f32 %v5209, %v1162
        %v5256 = vmul.f32 %v5212, %v1162
        %v5257 = vmul.f32 %v5215, %v1162
        %v5258 = vmul.f32 %v5218, %v1162
        %v5259 = vmul.f32 %v5221, %v1162
        %v5260 = vmul.f32 %v5224, %v1162
        %v5261 = vmul.f32 %v5227, %v1162
        %v5262 = vmul.f32 %v5230, %v1162
        %v5263 = vmul.f32 %v5233, %v1162
        %v5264 = vmul.f32 %v5236, %v1162
        %v5265 = vmul.f32 %v5239, %v1162
        %v5266 = vmul.f32 %v5242, %v1162
        %v5267 = vmul.f32 %v5245, %v1162
        %v5268 = vmul.f32 %v5248, %v1162
        %v5269 = vmul.f32 %v5251, %v1162
        %v5270 = vmul.f32 %v5254, %v1162
        %v5271 = vsub.f32 %v5187, %v5255
        %v5272 = vsub.f32 %v5188, %v5256
        %v5273 = vsub.f32 %v5189, %v5257
        %v5274 = vsub.f32 %v5190, %v5258
        %v5275 = vsub.f32 %v5191, %v5259
        %v5276 = vsub.f32 %v5192, %v5260
        %v5277 = vsub.f32 %v5193, %v5261
        %v5278 = vsub.f32 %v5194, %v5262
        %v5279 = vsub.f32 %v5195, %v5263
        %v5280 = vsub.f32 %v5196, %v5264
        %v5281 = vsub.f32 %v5197, %v5265
        %v5282 = vsub.f32 %v5198, %v5266
        %v5283 = vsub.f32 %v5199, %v5267
        %v5284 = vsub.f32 %v5200, %v5268
        %v5285 = vsub.f32 %v5201, %v5269
        %v5286 = vsub.f32 %v5202, %v5270
        %v5287 = vmul.f32 %v5271, %v5271
        %v5288 = vmul.f32 %v5272, %v5272
        %v5289 = vmul.f32 %v5273, %v5273
        %v5290 = vmul.f32 %v5274, %v5274
        %v5291 = vmul.f32 %v5275, %v5275
        %v5292 = vmul.f32 %v5276, %v5276
        %v5293 = vmul.f32 %v5277, %v5277
        %v5294 = vmul.f32 %v5278, %v5278
        %v5295 = vmul.f32 %v5279, %v5279
        %v5296 = vmul.f32 %v5280, %v5280
        %v5297 = vmul.f32 %v5281, %v5281
        %v5298 = vmul.f32 %v5282, %v5282
        %v5299 = vmul.f32 %v5283, %v5283
        %v5300 = vmul.f32 %v5284, %v5284
        %v5301 = vmul.f32 %v5285, %v5285
        %v5302 = vmul.f32 %v5286, %v5286
        %v5303 = vsel %vm1113, %v5287, 0.0
        %5304 = vadd.xlane.f32.xlu0 %v5303
        %v5305 = vpop.xlane.xlu0 %5304
        %v5306 = vsel %vm1113, %v5288, 0.0
        %5307 = vadd.xlane.f32.xlu0 %v5306
        %v5308 = vpop.xlane.xlu0 %5307
        %v5309 = vsel %vm1113, %v5289, 0.0
        %5310 = vadd.xlane.f32.xlu0 %v5309
        %v5311 = vpop.xlane.xlu0 %5310
        %v5312 = vsel %vm1113, %v5290, 0.0
        %5313 = vadd.xlane.f32.xlu0 %v5312
        %v5314 = vpop.xlane.xlu0 %5313
        %v5315 = vsel %vm1113, %v5291, 0.0
        %5316 = vadd.xlane.f32.xlu0 %v5315
        %v5317 = vpop.xlane.xlu0 %5316
        %v5318 = vsel %vm1113, %v5292, 0.0
        %5319 = vadd.xlane.f32.xlu0 %v5318
        %v5320 = vpop.xlane.xlu0 %5319
        %v5321 = vsel %vm1113, %v5293, 0.0
        %5322 = vadd.xlane.f32.xlu0 %v5321
        %v5323 = vpop.xlane.xlu0 %5322
        %v5324 = vsel %vm1113, %v5294, 0.0
        %5325 = vadd.xlane.f32.xlu0 %v5324
        %v5326 = vpop.xlane.xlu0 %5325
        %v5327 = vsel %vm1113, %v5295, 0.0
        %5328 = vadd.xlane.f32.xlu0 %v5327
        %v5329 = vpop.xlane.xlu0 %5328
        %v5330 = vsel %vm1113, %v5296, 0.0
        %5331 = vadd.xlane.f32.xlu0 %v5330
        %v5332 = vpop.xlane.xlu0 %5331
        %v5333 = vsel %vm1113, %v5297, 0.0
        %5334 = vadd.xlane.f32.xlu0 %v5333
        %v5335 = vpop.xlane.xlu0 %5334
        %v5336 = vsel %vm1113, %v5298, 0.0
        %5337 = vadd.xlane.f32.xlu0 %v5336
        %v5338 = vpop.xlane.xlu0 %5337
        %v5339 = vsel %vm1113, %v5299, 0.0
        %5340 = vadd.xlane.f32.xlu0 %v5339
        %v5341 = vpop.xlane.xlu0 %5340
        %v5342 = vsel %vm1113, %v5300, 0.0
        %5343 = vadd.xlane.f32.xlu0 %v5342
        %v5344 = vpop.xlane.xlu0 %5343
        %v5345 = vsel %vm1113, %v5301, 0.0
        %5346 = vadd.xlane.f32.xlu0 %v5345
        %v5347 = vpop.xlane.xlu0 %5346
        %v5348 = vsel %vm1113, %v5302, 0.0
        %5349 = vadd.xlane.f32.xlu0 %v5348
        %v5350 = vpop.xlane.xlu0 %5349
        %v5351 = vmul.f32 %v5305, %v1162
        %v5352 = vmul.f32 %v5308, %v1162
        %v5353 = vmul.f32 %v5311, %v1162
        %v5354 = vmul.f32 %v5314, %v1162
        %v5355 = vmul.f32 %v5317, %v1162
        %v5356 = vmul.f32 %v5320, %v1162
        %v5357 = vmul.f32 %v5323, %v1162
        %v5358 = vmul.f32 %v5326, %v1162
        %v5359 = vmul.f32 %v5329, %v1162
        %v5360 = vmul.f32 %v5332, %v1162
        %v5361 = vmul.f32 %v5335, %v1162
        %v5362 = vmul.f32 %v5338, %v1162
        %v5363 = vmul.f32 %v5341, %v1162
        %v5364 = vmul.f32 %v5344, %v1162
        %v5365 = vmul.f32 %v5347, %v1162
        %v5366 = vmul.f32 %v5350, %v1162
        %v5367 = vadd.f32 %v5351, 1e-06
        %v5368 = vadd.f32 %v5352, 1e-06
        %v5369 = vadd.f32 %v5353, 1e-06
        %v5370 = vadd.f32 %v5354, 1e-06
        %v5371 = vadd.f32 %v5355, 1e-06
        %v5372 = vadd.f32 %v5356, 1e-06
        %v5373 = vadd.f32 %v5357, 1e-06
        %v5374 = vadd.f32 %v5358, 1e-06
        %v5375 = vadd.f32 %v5359, 1e-06
        %v5376 = vadd.f32 %v5360, 1e-06
        %v5377 = vadd.f32 %v5361, 1e-06
        %v5378 = vadd.f32 %v5362, 1e-06
        %v5379 = vadd.f32 %v5363, 1e-06
        %v5380 = vadd.f32 %v5364, 1e-06
        %v5381 = vadd.f32 %v5365, 1e-06
        %v5382 = vadd.f32 %v5366, 1e-06
        %v5383 = vrsqrt.pop %v5367
        %v5384 = vrsqrt.pop %v5368
        %v5385 = vrsqrt.pop %v5369
        %v5386 = vrsqrt.pop %v5370
        %v5387 = vrsqrt.pop %v5371
        %v5388 = vrsqrt.pop %v5372
        %v5389 = vrsqrt.pop %v5373
        %v5390 = vrsqrt.pop %v5374
        %v5391 = vrsqrt.pop %v5375
        %v5392 = vrsqrt.pop %v5376
        %v5393 = vrsqrt.pop %v5377
        %v5394 = vrsqrt.pop %v5378
        %v5395 = vrsqrt.pop %v5379
        %v5396 = vrsqrt.pop %v5380
        %v5397 = vrsqrt.pop %v5381
        %v5398 = vrsqrt.pop %v5382
        %v5399 = vmul.f32 %v5271, %v5383
        %v5400 = vmul.f32 %v5272, %v5384
        %v5401 = vmul.f32 %v5273, %v5385
        %v5402 = vmul.f32 %v5274, %v5386
        %v5403 = vmul.f32 %v5275, %v5387
        %v5404 = vmul.f32 %v5276, %v5388
        %v5405 = vmul.f32 %v5277, %v5389
        %v5406 = vmul.f32 %v5278, %v5390
        %v5407 = vmul.f32 %v5279, %v5391
        %v5408 = vmul.f32 %v5280, %v5392
        %v5409 = vmul.f32 %v5281, %v5393
        %v5410 = vmul.f32 %v5282, %v5394
        %v5411 = vmul.f32 %v5283, %v5395
        %v5412 = vmul.f32 %v5284, %v5396
        %v5413 = vmul.f32 %v5285, %v5397
        %v5414 = vmul.f32 %v5286, %v5398
        %v5416 = vlaneseq
        %v5417 = vshrl.u32 %v5416, 7
        %v5418 = vsub.s32 0, %v5417
        %v5419 = vrot.slane %v5204, %v5418
        %v5421 = vmul.f32 %v5399, %v5419
        %v5422 = vmul.f32 %v5400, %v5419
        %v5423 = vmul.f32 %v5401, %v5419
        %v5424 = vmul.f32 %v5402, %v5419
        %v5425 = vmul.f32 %v5403, %v5419
        %v5426 = vmul.f32 %v5404, %v5419
        %v5427 = vmul.f32 %v5405, %v5419
        %v5428 = vmul.f32 %v5406, %v5419
        %v5429 = vmul.f32 %v5407, %v5419
        %v5430 = vmul.f32 %v5408, %v5419
        %v5431 = vmul.f32 %v5409, %v5419
        %v5432 = vmul.f32 %v5410, %v5419
        %v5433 = vmul.f32 %v5411, %v5419
        %v5434 = vmul.f32 %v5412, %v5419
        %v5435 = vmul.f32 %v5413, %v5419
        %v5436 = vmul.f32 %v5414, %v5419
        %v5438 = vlaneseq
        %v5439 = vshrl.u32 %v5438, 7
        %v5440 = vsub.s32 0, %v5439
        %v5441 = vrot.slane %v5206, %v5440
        %v5443 = vadd.f32 %v5421, %v5441
        %v5444 = vadd.f32 %v5422, %v5441
        %v5445 = vadd.f32 %v5423, %v5441
        %v5446 = vadd.f32 %v5424, %v5441
        %v5447 = vadd.f32 %v5425, %v5441
        %v5448 = vadd.f32 %v5426, %v5441
        %v5449 = vadd.f32 %v5427, %v5441
        %v5450 = vadd.f32 %v5428, %v5441
        %v5451 = vadd.f32 %v5429, %v5441
        %v5452 = vadd.f32 %v5430, %v5441
        %v5453 = vadd.f32 %v5431, %v5441
        %v5454 = vadd.f32 %v5432, %v5441
        %v5455 = vadd.f32 %v5433, %v5441
        %v5456 = vadd.f32 %v5434, %v5441
        %v5457 = vadd.f32 %v5435, %v5441
        %v5458 = vadd.f32 %v5436, %v5441
        %v5459 = vpack.c.bf16 %v5444, %v5443
        %v5460 = vpack.c.bf16 %v5446, %v5445
        %v5461 = vpack.c.bf16 %v5448, %v5447
        %v5462 = vpack.c.bf16 %v5450, %v5449
        %v5463 = vpack.c.bf16 %v5452, %v5451
        %v5464 = vpack.c.bf16 %v5454, %v5453
        %v5465 = vpack.c.bf16 %v5456, %v5455
        %v5466 = vpack.c.bf16 %v5458, %v5457
        %s5467 = scalar_lea.vmem %s5, 64
        %v5468 = vld [vmem:[%s5467] sm:$0xf]
        %v5469 = vld [vmem:[%s5467 + $0x4] sm:$0xf]
        %v5470 = vld [vmem:[%s5467 + $0x8] sm:$0xf]
        %v5471 = vld [vmem:[%s5467 + $0xc] sm:$0xf]
        %s5472 = scalar_lea.vmem %s6, 4
        %v5473 = vld [vmem:[%s5472] sm:$0x1]
        %v5475 = vlaneseq
        %v5476 = vshrl.u32 %v5475, 7
        %v5477 = vsub.s32 0, %v5476
        %v5478 = vrot.slane %v5473, %v5477
        %v5484 = vunpack.c.l.b16 %v5468
        %v5485 = vunpack.c.l.b16 %v5469
        %v5486 = vunpack.c.l.b16 %v5470
        %v5487 = vunpack.c.l.b16 %v5471
        %v5488 = vpack.c.b16 %v5485, %v5484
        %v5489 = vpack.c.b16 %v5487, %v5486
        %v5493 = vsel %vm1113, %v5459, 0
        %v5496 = vsel %vm1113, %v5460, 0
        %v5499 = vsel %vm1113, %v5461, 0
        %v5502 = vsel %vm1113, %v5462, 0
        %v5505 = vsel %vm1113, %v5463, 0
        %v5508 = vsel %vm1113, %v5464, 0
        %v5511 = vsel %vm1113, %v5465, 0
        %v5514 = vsel %vm1113, %v5466, 0
        %5516 = vmatprep.subr.bf16.mxu0 0
        %5517 = vmatpush1.bf16.msra.mxu0 %v5488
        %5518 = vmatprep.subr.bf16.mxu0 0
        %5519 = vmatpush1.bf16.msra.mxu0 %v5489
        %5520 = vmatprep.subr.bf16.mxu0 0
        %5521 = vmatpush1.bf16.msra.mxu0 0
        %5522 = vmatprep.subr.bf16.mxu0 0
        %5523 = vmatpush1.bf16.msra.mxu0 0
        %5524 = vmatprep.subr.bf16.mxu0 0
        %5525 = vmatpush1.bf16.msra.mxu0 0
        %5526 = vmatprep.subr.bf16.mxu0 0
        %5527 = vmatpush1.bf16.msra.mxu0 0
        %5528 = vmatprep.subr.bf16.mxu0 0
        %5529 = vmatpush1.bf16.msra.mxu0 0
        %5530 = vmatprep.subr.bf16.mxu0 0
        %5531 = vmatpush1.bf16.msra.mxu0 0
        %5532 = vmatprep.subr.bf16.mxu0 0
        %5533 = vmatpush1.bf16.msra.mxu0 0
        %5534 = vmatprep.subr.bf16.mxu0 0
        %5535 = vmatpush1.bf16.msra.mxu0 0
        %5536 = vmatprep.subr.bf16.mxu0 0
        %5537 = vmatpush1.bf16.msra.mxu0 0
        %5538 = vmatprep.subr.bf16.mxu0 0
        %5539 = vmatpush1.bf16.msra.mxu0 0
        %5540 = vmatprep.subr.bf16.mxu0 0
        %5541 = vmatpush1.bf16.msra.mxu0 0
        %5542 = vmatprep.subr.bf16.mxu0 0
        %5543 = vmatpush1.bf16.msra.mxu0 0
        %5544 = vmatprep.subr.bf16.mxu0 0
        %5545 = vmatpush1.bf16.msra.mxu0 0
        %5546 = vmatprep.subr.bf16.mxu0 0
        %5547 = vmatpush1.bf16.msra.mxu0 0
        %5548 = vmatprep.mubr.bf16.mxu0 0
        %5549 = vmatmul.mubr.bf16.gmra.mrb[0].mxu0 %v5493
        %v5550 = vpop.f32.mrb[0].mxu0
        %v5551 = vadd.f32 %v5478, %v5550
        %v5552 = vpop.f32.mrb[0].mxu0
        %v5553 = vpop.f32.mrb[0].mxu0
        %v5554 = vadd.f32 %v5478, %v5553
        %v5555 = vpop.f32.mrb[0].mxu0
        %5556 = vmatprep.mubr.bf16.mxu0 0
        %5557 = vmatmul.mubr.bf16.gmra.mrb[0].mxu0 %v5496
        %v5558 = vpop.f32.mrb[0].mxu0
        %v5559 = vadd.f32 %v5478, %v5558
        %v5560 = vpop.f32.mrb[0].mxu0
        %v5561 = vpop.f32.mrb[0].mxu0
        %v5562 = vadd.f32 %v5478, %v5561
        %v5563 = vpop.f32.mrb[0].mxu0
        %5564 = vmatprep.mubr.bf16.mxu0 0
        %5565 = vmatmul.mubr.bf16.gmra.mrb[0].mxu0 %v5499
        %v5566 = vpop.f32.mrb[0].mxu0
        %v5567 = vadd.f32 %v5478, %v5566
        %v5568 = vpop.f32.mrb[0].mxu0
        %v5569 = vpop.f32.mrb[0].mxu0
        %v5570 = vadd.f32 %v5478, %v5569
        %v5571 = vpop.f32.mrb[0].mxu0
        %5572 = vmatprep.mubr.bf16.mxu0 0
        %5573 = vmatmul.mubr.bf16.gmra.mrb[0].mxu0 %v5502
        %v5574 = vpop.f32.mrb[0].mxu0
        %v5575 = vadd.f32 %v5478, %v5574
        %v5576 = vpop.f32.mrb[0].mxu0
        %v5577 = vpop.f32.mrb[0].mxu0
        %v5578 = vadd.f32 %v5478, %v5577
        %v5579 = vpop.f32.mrb[0].mxu0
        %5580 = vmatprep.mubr.bf16.mxu0 0
        %5581 = vmatmul.mubr.bf16.gmra.mrb[0].mxu0 %v5505
        %v5582 = vpop.f32.mrb[0].mxu0
        %v5583 = vadd.f32 %v5478, %v5582
        %v5584 = vpop.f32.mrb[0].mxu0
        %v5585 = vpop.f32.mrb[0].mxu0
        %v5586 = vadd.f32 %v5478, %v5585
        %v5587 = vpop.f32.mrb[0].mxu0
        %5588 = vmatprep.mubr.bf16.mxu0 0
        %5589 = vmatmul.mubr.bf16.gmra.mrb[0].mxu0 %v5508
        %v5590 = vpop.f32.mrb[0].mxu0
        %v5591 = vadd.f32 %v5478, %v5590
        %v5592 = vpop.f32.mrb[0].mxu0
        %v5593 = vpop.f32.mrb[0].mxu0
        %v5594 = vadd.f32 %v5478, %v5593
        %v5595 = vpop.f32.mrb[0].mxu0
        %5596 = vmatprep.mubr.bf16.mxu0 0
        %5597 = vmatmul.mubr.bf16.gmra.mrb[0].mxu0 %v5511
        %v5598 = vpop.f32.mrb[0].mxu0
        %v5599 = vadd.f32 %v5478, %v5598
        %v5600 = vpop.f32.mrb[0].mxu0
        %v5601 = vpop.f32.mrb[0].mxu0
        %v5602 = vadd.f32 %v5478, %v5601
        %v5603 = vpop.f32.mrb[0].mxu0
        %5604 = vmatprep.mubr.bf16.mxu0 0
        %5605 = vmatmul.mubr.bf16.gmra.mrb[0].mxu0 %v5514
        %v5606 = vpop.f32.mrb[0].mxu0
        %v5607 = vadd.f32 %v5478, %v5606
        %v5608 = vpop.f32.mrb[0].mxu0
        %v5609 = vpop.f32.mrb[0].mxu0
        %v5610 = vadd.f32 %v5478, %v5609
        %v5611 = vpop.f32.mrb[0].mxu0
        %5612 = vdwg.mxu0
        %s5613 = scalar_lea.vmem %s7, 64
        %v5614 = vld [vmem:[%s5613] sm:$0xf]
        %v5615 = vld [vmem:[%s5613 + $0x4] sm:$0xf]
        %v5616 = vld [vmem:[%s5613 + $0x8] sm:$0xf]
        %v5617 = vld [vmem:[%s5613 + $0xc] sm:$0xf]
        %v5622 = vunpack.c.l.b16 %v5614
        %v5623 = vunpack.c.l.b16 %v5615
        %v5624 = vunpack.c.l.b16 %v5616
        %v5625 = vunpack.c.l.b16 %v5617
        %v5626 = vpack.c.b16 %v5623, %v5622
        %v5627 = vpack.c.b16 %v5625, %v5624
        %5630 = vmatprep.subr.bf16.mxu0 0
        %5631 = vmatpush1.bf16.msra.mxu0 %v5626
        %5632 = vmatprep.subr.bf16.mxu0 0
        %5633 = vmatpush1.bf16.msra.mxu0 %v5627
        %5634 = vmatprep.subr.bf16.mxu0 0
        %5635 = vmatpush1.bf16.msra.mxu0 0
        %5636 = vmatprep.subr.bf16.mxu0 0
        %5637 = vmatpush1.bf16.msra.mxu0 0
        %5638 = vmatprep.subr.bf16.mxu0 0
        %5639 = vmatpush1.bf16.msra.mxu0 0
        %5640 = vmatprep.subr.bf16.mxu0 0
        %5641 = vmatpush1.bf16.msra.mxu0 0
        %5642 = vmatprep.subr.bf16.mxu0 0
        %5643 = vmatpush1.bf16.msra.mxu0 0
        %5644 = vmatprep.subr.bf16.mxu0 0
        %5645 = vmatpush1.bf16.msra.mxu0 0
        %5646 = vmatprep.subr.bf16.mxu0 0
        %5647 = vmatpush1.bf16.msra.mxu0 0
        %5648 = vmatprep.subr.bf16.mxu0 0
        %5649 = vmatpush1.bf16.msra.mxu0 0
        %5650 = vmatprep.subr.bf16.mxu0 0
        %5651 = vmatpush1.bf16.msra.mxu0 0
        %5652 = vmatprep.subr.bf16.mxu0 0
        %5653 = vmatpush1.bf16.msra.mxu0 0
        %5654 = vmatprep.subr.bf16.mxu0 0
        %5655 = vmatpush1.bf16.msra.mxu0 0
        %5656 = vmatprep.subr.bf16.mxu0 0
        %5657 = vmatpush1.bf16.msra.mxu0 0
        %5658 = vmatprep.subr.bf16.mxu0 0
        %5659 = vmatpush1.bf16.msra.mxu0 0
        %5660 = vmatprep.subr.bf16.mxu0 0
        %5661 = vmatpush1.bf16.msra.mxu0 0
        %5662 = vmatprep.mubr.bf16.mxu0 0
        %5663 = vmatmul.mubr.bf16.gmra.mrb[0].mxu0 %v5493
        %v5664 = vpop.f32.mrb[0].mxu0
        %v5665 = vadd.f32 0.0, %v5664
        %v5666 = vpop.f32.mrb[0].mxu0
        %v5667 = vpop.f32.mrb[0].mxu0
        %v5668 = vadd.f32 0.0, %v5667
        %v5669 = vpop.f32.mrb[0].mxu0
        %5670 = vmatprep.mubr.bf16.mxu0 0
        %5671 = vmatmul.mubr.bf16.gmra.mrb[0].mxu0 %v5496
        %v5672 = vpop.f32.mrb[0].mxu0
        %v5673 = vadd.f32 0.0, %v5672
        %v5674 = vpop.f32.mrb[0].mxu0
        %v5675 = vpop.f32.mrb[0].mxu0
        %v5676 = vadd.f32 0.0, %v5675
        %v5677 = vpop.f32.mrb[0].mxu0
        %5678 = vmatprep.mubr.bf16.mxu0 0
        %5679 = vmatmul.mubr.bf16.gmra.mrb[0].mxu0 %v5499
        %v5680 = vpop.f32.mrb[0].mxu0
        %v5681 = vadd.f32 0.0, %v5680
        %v5682 = vpop.f32.mrb[0].mxu0
        %v5683 = vpop.f32.mrb[0].mxu0
        %v5684 = vadd.f32 0.0, %v5683
        %v5685 = vpop.f32.mrb[0].mxu0
        %5686 = vmatprep.mubr.bf16.mxu0 0
        %5687 = vmatmul.mubr.bf16.gmra.mrb[0].mxu0 %v5502
        %v5688 = vpop.f32.mrb[0].mxu0
        %v5689 = vadd.f32 0.0, %v5688
        %v5690 = vpop.f32.mrb[0].mxu0
        %v5691 = vpop.f32.mrb[0].mxu0
        %v5692 = vadd.f32 0.0, %v5691
        %v5693 = vpop.f32.mrb[0].mxu0
        %5694 = vmatprep.mubr.bf16.mxu0 0
        %5695 = vmatmul.mubr.bf16.gmra.mrb[0].mxu0 %v5505
        %v5696 = vpop.f32.mrb[0].mxu0
        %v5697 = vadd.f32 0.0, %v5696
        %v5698 = vpop.f32.mrb[0].mxu0
        %v5699 = vpop.f32.mrb[0].mxu0
        %v5700 = vadd.f32 0.0, %v5699
        %v5701 = vpop.f32.mrb[0].mxu0
        %5702 = vmatprep.mubr.bf16.mxu0 0
        %5703 = vmatmul.mubr.bf16.gmra.mrb[0].mxu0 %v5508
        %v5704 = vpop.f32.mrb[0].mxu0
        %v5705 = vadd.f32 0.0, %v5704
        %v5706 = vpop.f32.mrb[0].mxu0
        %v5707 = vpop.f32.mrb[0].mxu0
        %v5708 = vadd.f32 0.0, %v5707
        %v5709 = vpop.f32.mrb[0].mxu0
        %5710 = vmatprep.mubr.bf16.mxu0 0
        %5711 = vmatmul.mubr.bf16.gmra.mrb[0].mxu0 %v5511
        %v5712 = vpop.f32.mrb[0].mxu0
        %v5713 = vadd.f32 0.0, %v5712
        %v5714 = vpop.f32.mrb[0].mxu0
        %v5715 = vpop.f32.mrb[0].mxu0
        %v5716 = vadd.f32 0.0, %v5715
        %v5717 = vpop.f32.mrb[0].mxu0
        %5718 = vmatprep.mubr.bf16.mxu0 0
        %5719 = vmatmul.mubr.bf16.gmra.mrb[0].mxu0 %v5514
        %v5720 = vpop.f32.mrb[0].mxu0
        %v5721 = vadd.f32 0.0, %v5720
        %v5722 = vpop.f32.mrb[0].mxu0
        %v5723 = vpop.f32.mrb[0].mxu0
        %v5724 = vadd.f32 0.0, %v5723
        %v5725 = vpop.f32.mrb[0].mxu0
        %5726 = vdwg.mxu0
        %s5727 = scalar_lea.vmem %s8, 64
        %v5728 = vld [vmem:[%s5727] sm:$0xf]
        %v5729 = vld [vmem:[%s5727 + $0x4] sm:$0xf]
        %v5730 = vld [vmem:[%s5727 + $0x8] sm:$0xf]
        %v5731 = vld [vmem:[%s5727 + $0xc] sm:$0xf]
        %s5732 = scalar_lea.vmem [#allocation2], 4
        %v5733 = vld [vmem:[%s5732] sm:$0x1]
        %v5735 = vlaneseq
        %v5736 = vshrl.u32 %v5735, 7
        %v5737 = vsub.s32 0, %v5736
        %v5738 = vrot.slane %v5733, %v5737
        %v5744 = vunpack.c.l.b16 %v5728
        %v5745 = vunpack.c.l.b16 %v5729
        %v5746 = vunpack.c.l.b16 %v5730
        %v5747 = vunpack.c.l.b16 %v5731
        %v5748 = vpack.c.b16 %v5745, %v5744
        %v5749 = vpack.c.b16 %v5747, %v5746
        %5752 = vmatprep.subr.bf16.mxu0 0
        %5753 = vmatpush1.bf16.msra.mxu0 %v5748
        %5754 = vmatprep.subr.bf16.mxu0 0
        %5755 = vmatpush1.bf16.msra.mxu0 %v5749
        %5756 = vmatprep.subr.bf16.mxu0 0
        %5757 = vmatpush1.bf16.msra.mxu0 0
        %5758 = vmatprep.subr.bf16.mxu0 0
        %5759 = vmatpush1.bf16.msra.mxu0 0
        %5760 = vmatprep.subr.bf16.mxu0 0
        %5761 = vmatpush1.bf16.msra.mxu0 0
        %5762 = vmatprep.subr.bf16.mxu0 0
        %5763 = vmatpush1.bf16.msra.mxu0 0
        %5764 = vmatprep.subr.bf16.mxu0 0
        %5765 = vmatpush1.bf16.msra.mxu0 0
        %5766 = vmatprep.subr.bf16.mxu0 0
        %5767 = vmatpush1.bf16.msra.mxu0 0
        %5768 = vmatprep.subr.bf16.mxu0 0
        %5769 = vmatpush1.bf16.msra.mxu0 0
        %5770 = vmatprep.subr.bf16.mxu0 0
        %5771 = vmatpush1.bf16.msra.mxu0 0
        %5772 = vmatprep.subr.bf16.mxu0 0
        %5773 = vmatpush1.bf16.msra.mxu0 0
        %5774 = vmatprep.subr.bf16.mxu0 0
        %5775 = vmatpush1.bf16.msra.mxu0 0
        %5776 = vmatprep.subr.bf16.mxu0 0
        %5777 = vmatpush1.bf16.msra.mxu0 0
        %5778 = vmatprep.subr.bf16.mxu0 0
        %5779 = vmatpush1.bf16.msra.mxu0 0
        %5780 = vmatprep.subr.bf16.mxu0 0
        %5781 = vmatpush1.bf16.msra.mxu0 0
        %5782 = vmatprep.subr.bf16.mxu0 0
        %5783 = vmatpush1.bf16.msra.mxu0 0
        %5784 = vmatprep.mubr.bf16.mxu0 0
        %5785 = vmatmul.mubr.bf16.gmra.mrb[0].mxu0 %v5493
        %v5786 = vpop.f32.mrb[0].mxu0
        %v5787 = vadd.f32 %v5738, %v5786
        %v5788 = vpop.f32.mrb[0].mxu0
        %v5789 = vpop.f32.mrb[0].mxu0
        %v5790 = vadd.f32 %v5738, %v5789
        %v5791 = vpop.f32.mrb[0].mxu0
        %5792 = vmatprep.mubr.bf16.mxu0 0
        %5793 = vmatmul.mubr.bf16.gmra.mrb[0].mxu0 %v5496
        %v5794 = vpop.f32.mrb[0].mxu0
        %v5795 = vadd.f32 %v5738, %v5794
        %v5796 = vpop.f32.mrb[0].mxu0
        %v5797 = vpop.f32.mrb[0].mxu0
        %v5798 = vadd.f32 %v5738, %v5797
        %v5799 = vpop.f32.mrb[0].mxu0
        %5800 = vmatprep.mubr.bf16.mxu0 0
        %5801 = vmatmul.mubr.bf16.gmra.mrb[0].mxu0 %v5499
        %v5802 = vpop.f32.mrb[0].mxu0
        %v5803 = vadd.f32 %v5738, %v5802
        %v5804 = vpop.f32.mrb[0].mxu0
        %v5805 = vpop.f32.mrb[0].mxu0
        %v5806 = vadd.f32 %v5738, %v5805
        %v5807 = vpop.f32.mrb[0].mxu0
        %5808 = vmatprep.mubr.bf16.mxu0 0
        %5809 = vmatmul.mubr.bf16.gmra.mrb[0].mxu0 %v5502
        %v5810 = vpop.f32.mrb[0].mxu0
        %v5811 = vadd.f32 %v5738, %v5810
        %v5812 = vpop.f32.mrb[0].mxu0
        %v5813 = vpop.f32.mrb[0].mxu0
        %v5814 = vadd.f32 %v5738, %v5813
        %v5815 = vpop.f32.mrb[0].mxu0
        %5816 = vmatprep.mubr.bf16.mxu0 0
        %5817 = vmatmul.mubr.bf16.gmra.mrb[0].mxu0 %v5505
        %v5818 = vpop.f32.mrb[0].mxu0
        %v5819 = vadd.f32 %v5738, %v5818
        %v5820 = vpop.f32.mrb[0].mxu0
        %v5821 = vpop.f32.mrb[0].mxu0
        %v5822 = vadd.f32 %v5738, %v5821
        %v5823 = vpop.f32.mrb[0].mxu0
        %5824 = vmatprep.mubr.bf16.mxu0 0
        %5825 = vmatmul.mubr.bf16.gmra.mrb[0].mxu0 %v5508
        %v5826 = vpop.f32.mrb[0].mxu0
        %v5827 = vadd.f32 %v5738, %v5826
        %v5828 = vpop.f32.mrb[0].mxu0
        %v5829 = vpop.f32.mrb[0].mxu0
        %v5830 = vadd.f32 %v5738, %v5829
        %v5831 = vpop.f32.mrb[0].mxu0
        %5832 = vmatprep.mubr.bf16.mxu0 0
        %5833 = vmatmul.mubr.bf16.gmra.mrb[0].mxu0 %v5511
        %v5834 = vpop.f32.mrb[0].mxu0
        %v5835 = vadd.f32 %v5738, %v5834
        %v5836 = vpop.f32.mrb[0].mxu0
        %v5837 = vpop.f32.mrb[0].mxu0
        %v5838 = vadd.f32 %v5738, %v5837
        %v5839 = vpop.f32.mrb[0].mxu0
        %5840 = vmatprep.mubr.bf16.mxu0 0
        %5841 = vmatmul.mubr.bf16.gmra.mrb[0].mxu0 %v5514
        %v5842 = vpop.f32.mrb[0].mxu0
        %v5843 = vadd.f32 %v5738, %v5842
        %v5844 = vpop.f32.mrb[0].mxu0
        %v5845 = vpop.f32.mrb[0].mxu0
        %v5846 = vadd.f32 %v5738, %v5845
        %v5847 = vpop.f32.mrb[0].mxu0
        %5848 = vdwg.mxu0
        %v5849 = vpack.c.bf16 %v5554, %v5551
        %v5850 = vpack.c.bf16 %v5562, %v5559
        %v5851 = vpack.c.bf16 %v5570, %v5567
        %v5852 = vpack.c.bf16 %v5578, %v5575
        %v5853 = vpack.c.bf16 %v5586, %v5583
        %v5854 = vpack.c.bf16 %v5594, %v5591
        %v5855 = vpack.c.bf16 %v5602, %v5599
        %v5856 = vpack.c.bf16 %v5610, %v5607
        %v5857 = vpack.c.bf16 %v5668, %v5665
        %v5858 = vpack.c.bf16 %v5676, %v5673
        %v5859 = vpack.c.bf16 %v5684, %v5681
        %v5860 = vpack.c.bf16 %v5692, %v5689
        %v5861 = vpack.c.bf16 %v5700, %v5697
        %v5862 = vpack.c.bf16 %v5708, %v5705
        %v5863 = vpack.c.bf16 %v5716, %v5713
        %v5864 = vpack.c.bf16 %v5724, %v5721
        %s5865 = scalar_lea.vmem %s11, 512
        %v5866 = vld [vmem:[%s5865] sm:$0xff]
        %v5867 = vld [vmem:[%s5865 + $0x8] sm:$0xff]
        %v5868 = vld [vmem:[%s5865 + $0x10] sm:$0xff]
        %v5869 = vld [vmem:[%s5865 + $0x18] sm:$0xff]
        %v5870 = vld [vmem:[%s5865 + $0x20] sm:$0xff]
        %v5871 = vld [vmem:[%s5865 + $0x28] sm:$0xff]
        %v5872 = vld [vmem:[%s5865 + $0x30] sm:$0xff]
        %v5873 = vld [vmem:[%s5865 + $0x38] sm:$0xff]
        %v5874 = vld [vmem:[%s5865 + $0x40] sm:$0xff]
        %v5875 = vld [vmem:[%s5865 + $0x48] sm:$0xff]
        %v5876 = vld [vmem:[%s5865 + $0x50] sm:$0xff]
        %v5877 = vld [vmem:[%s5865 + $0x58] sm:$0xff]
        %v5878 = vld [vmem:[%s5865 + $0x60] sm:$0xff]
        %v5879 = vld [vmem:[%s5865 + $0x68] sm:$0xff]
        %v5880 = vld [vmem:[%s5865 + $0x70] sm:$0xff]
        %v5881 = vld [vmem:[%s5865 + $0x78] sm:$0xff]
        %v5883 = vsel %vm1784, %v5849, 0
        %v5886 = vsel %vm1784, %v5850, 0
        %v5889 = vsel %vm1784, %v5851, 0
        %v5892 = vsel %vm1784, %v5852, 0
        %v5895 = vsel %vm1784, %v5853, 0
        %v5898 = vsel %vm1784, %v5854, 0
        %v5901 = vsel %vm1784, %v5855, 0
        %v5904 = vsel %vm1784, %v5856, 0
        %v5907 = vsel %vm1784, %v5857, 0
        %v5910 = vsel %vm1784, %v5858, 0
        %v5913 = vsel %vm1784, %v5859, 0
        %v5916 = vsel %vm1784, %v5860, 0
        %v5919 = vsel %vm1784, %v5861, 0
        %v5922 = vsel %vm1784, %v5862, 0
        %v5925 = vsel %vm1784, %v5863, 0
        %v5928 = vsel %vm1784, %v5864, 0
        %5930 = vmatprep.subr.bf16.mxu0 0
        %5931 = vmatpush1.bf16.xpose.msra.mxu0 %v5907
        %5932 = vmatprep.subr.bf16.mxu0 0
        %5933 = vmatpush1.bf16.xpose.msra.mxu0 %v5910
        %5934 = vmatprep.subr.bf16.mxu0 0
        %5935 = vmatpush1.bf16.xpose.msra.mxu0 %v5913
        %5936 = vmatprep.subr.bf16.mxu0 0
        %5937 = vmatpush1.bf16.xpose.msra.mxu0 %v5916
        %5938 = vmatprep.subr.bf16.mxu0 0
        %5939 = vmatpush1.bf16.xpose.msra.mxu0 %v5919
        %5940 = vmatprep.subr.bf16.mxu0 0
        %5941 = vmatpush1.bf16.xpose.msra.mxu0 %v5922
        %5942 = vmatprep.subr.bf16.mxu0 0
        %5943 = vmatpush1.bf16.xpose.msra.mxu0 %v5925
        %5944 = vmatprep.subr.bf16.mxu0 0
        %5945 = vmatpush1.bf16.xpose.msra.mxu0 %v5928
        %5946 = vmatprep.subr.bf16.mxu0 0
        %5947 = vmatpush1.bf16.xpose.msra.mxu0 0
        %5948 = vmatprep.subr.bf16.mxu0 0
        %5949 = vmatpush1.bf16.xpose.msra.mxu0 0
        %5950 = vmatprep.subr.bf16.mxu0 0
        %5951 = vmatpush1.bf16.xpose.msra.mxu0 0
        %5952 = vmatprep.subr.bf16.mxu0 0
        %5953 = vmatpush1.bf16.xpose.msra.mxu0 0
        %5954 = vmatprep.subr.bf16.mxu0 0
        %5955 = vmatpush1.bf16.xpose.msra.mxu0 0
        %5956 = vmatprep.subr.bf16.mxu0 0
        %5957 = vmatpush1.bf16.xpose.msra.mxu0 0
        %5958 = vmatprep.subr.bf16.mxu0 0
        %5959 = vmatpush1.bf16.xpose.msra.mxu0 0
        %5960 = vmatprep.subr.bf16.mxu0 0
        %5961 = vmatpush1.bf16.xpose.msra.mxu0 0
        %5962 = vmatprep.mubr.bf16.mxu0 0
        %5963 = vmatmul.mubr.bf16.gmra.mrb[0].mxu0 %v5883
        %v5964 = vpop.f32.mrb[0].mxu0
        %v5965 = vadd.f32 %v5866, %v5964
        %v5966 = vpop.f32.mrb[0].mxu0
        %v5967 = vpop.f32.mrb[0].mxu0
        %v5968 = vadd.f32 %v5867, %v5967
        %v5969 = vpop.f32.mrb[0].mxu0
        %5970 = vmatprep.mubr.bf16.mxu0 0
        %5971 = vmatmul.mubr.bf16.gmra.mrb[0].mxu0 %v5886
        %v5972 = vpop.f32.mrb[0].mxu0
        %v5973 = vadd.f32 %v5868, %v5972
        %v5974 = vpop.f32.mrb[0].mxu0
        %v5975 = vpop.f32.mrb[0].mxu0
        %v5976 = vadd.f32 %v5869, %v5975
        %v5977 = vpop.f32.mrb[0].mxu0
        %5978 = vmatprep.mubr.bf16.mxu0 0
        %5979 = vmatmul.mubr.bf16.gmra.mrb[0].mxu0 %v5889
        %v5980 = vpop.f32.mrb[0].mxu0
        %v5981 = vadd.f32 %v5870, %v5980
        %v5982 = vpop.f32.mrb[0].mxu0
        %v5983 = vpop.f32.mrb[0].mxu0
        %v5984 = vadd.f32 %v5871, %v5983
        %v5985 = vpop.f32.mrb[0].mxu0
        %5986 = vmatprep.mubr.bf16.mxu0 0
        %5987 = vmatmul.mubr.bf16.gmra.mrb[0].mxu0 %v5892
        %v5988 = vpop.f32.mrb[0].mxu0
        %v5989 = vadd.f32 %v5872, %v5988
        %v5990 = vpop.f32.mrb[0].mxu0
        %v5991 = vpop.f32.mrb[0].mxu0
        %v5992 = vadd.f32 %v5873, %v5991
        %v5993 = vpop.f32.mrb[0].mxu0
        %5994 = vmatprep.mubr.bf16.mxu0 0
        %5995 = vmatmul.mubr.bf16.gmra.mrb[0].mxu0 %v5895
        %v5996 = vpop.f32.mrb[0].mxu0
        %v5997 = vadd.f32 %v5874, %v5996
        %v5998 = vpop.f32.mrb[0].mxu0
        %v5999 = vpop.f32.mrb[0].mxu0
        %v6000 = vadd.f32 %v5875, %v5999
        %v6001 = vpop.f32.mrb[0].mxu0
        %6002 = vmatprep.mubr.bf16.mxu0 0
        %6003 = vmatmul.mubr.bf16.gmra.mrb[0].mxu0 %v5898
        %v6004 = vpop.f32.mrb[0].mxu0
        %v6005 = vadd.f32 %v5876, %v6004
        %v6006 = vpop.f32.mrb[0].mxu0
        %v6007 = vpop.f32.mrb[0].mxu0
        %v6008 = vadd.f32 %v5877, %v6007
        %v6009 = vpop.f32.mrb[0].mxu0
        %6010 = vmatprep.mubr.bf16.mxu0 0
        %6011 = vmatmul.mubr.bf16.gmra.mrb[0].mxu0 %v5901
        %v6012 = vpop.f32.mrb[0].mxu0
        %v6013 = vadd.f32 %v5878, %v6012
        %v6014 = vpop.f32.mrb[0].mxu0
        %v6015 = vpop.f32.mrb[0].mxu0
        %v6016 = vadd.f32 %v5879, %v6015
        %v6017 = vpop.f32.mrb[0].mxu0
        %6018 = vmatprep.mubr.bf16.mxu0 0
        %6019 = vmatmul.mubr.bf16.gmra.mrb[0].mxu0 %v5904
        %v6020 = vpop.f32.mrb[0].mxu0
        %v6021 = vadd.f32 %v5880, %v6020
        %v6022 = vpop.f32.mrb[0].mxu0
        %v6023 = vpop.f32.mrb[0].mxu0
        %v6024 = vadd.f32 %v5881, %v6023
        %v6025 = vpop.f32.mrb[0].mxu0
        %6026 = vdwg.mxu0
        %v6027 = vmul.f32 %v5965, 1.442695
        %v6028 = vpow.pop %v6027
        %v6029 = vmul.f32 %v5968, 1.442695
        %v6030 = vpow.pop %v6029
        %v6031 = vmul.f32 %v5973, 1.442695
        %v6032 = vpow.pop %v6031
        %v6033 = vmul.f32 %v5976, 1.442695
        %v6034 = vpow.pop %v6033
        %v6035 = vmul.f32 %v5981, 1.442695
        %v6036 = vpow.pop %v6035
        %v6037 = vmul.f32 %v5984, 1.442695
        %v6038 = vpow.pop %v6037
        %v6039 = vmul.f32 %v5989, 1.442695
        %v6040 = vpow.pop %v6039
        %v6041 = vmul.f32 %v5992, 1.442695
        %v6042 = vpow.pop %v6041
        %v6043 = vmul.f32 %v5997, 1.442695
        %v6044 = vpow.pop %v6043
        %v6045 = vmul.f32 %v6000, 1.442695
        %v6046 = vpow.pop %v6045
        %v6047 = vmul.f32 %v6005, 1.442695
        %v6048 = vpow.pop %v6047
        %v6049 = vmul.f32 %v6008, 1.442695
        %v6050 = vpow.pop %v6049
        %v6051 = vmul.f32 %v6013, 1.442695
        %v6052 = vpow.pop %v6051
        %v6053 = vmul.f32 %v6016, 1.442695
        %v6054 = vpow.pop %v6053
        %v6055 = vmul.f32 %v6021, 1.442695
        %v6056 = vpow.pop %v6055
        %v6057 = vmul.f32 %v6024, 1.442695
        %v6058 = vpow.pop %v6057
        %6059 = vadd.xlane.f32.xlu0 %v6028
        %v6060 = vpop.xlane.xlu0 %6059
        %6061 = vadd.xlane.f32.xlu0 %v6030
        %v6062 = vpop.xlane.xlu0 %6061
        %6063 = vadd.xlane.f32.xlu0 %v6032
        %v6064 = vpop.xlane.xlu0 %6063
        %6065 = vadd.xlane.f32.xlu0 %v6034
        %v6066 = vpop.xlane.xlu0 %6065
        %6067 = vadd.xlane.f32.xlu0 %v6036
        %v6068 = vpop.xlane.xlu0 %6067
        %6069 = vadd.xlane.f32.xlu0 %v6038
        %v6070 = vpop.xlane.xlu0 %6069
        %6071 = vadd.xlane.f32.xlu0 %v6040
        %v6072 = vpop.xlane.xlu0 %6071
        %6073 = vadd.xlane.f32.xlu0 %v6042
        %v6074 = vpop.xlane.xlu0 %6073
        %6075 = vadd.xlane.f32.xlu0 %v6044
        %v6076 = vpop.xlane.xlu0 %6075
        %6077 = vadd.xlane.f32.xlu0 %v6046
        %v6078 = vpop.xlane.xlu0 %6077
        %6079 = vadd.xlane.f32.xlu0 %v6048
        %v6080 = vpop.xlane.xlu0 %6079
        %6081 = vadd.xlane.f32.xlu0 %v6050
        %v6082 = vpop.xlane.xlu0 %6081
        %6083 = vadd.xlane.f32.xlu0 %v6052
        %v6084 = vpop.xlane.xlu0 %6083
        %6085 = vadd.xlane.f32.xlu0 %v6054
        %v6086 = vpop.xlane.xlu0 %6085
        %6087 = vadd.xlane.f32.xlu0 %v6056
        %v6088 = vpop.xlane.xlu0 %6087
        %6089 = vadd.xlane.f32.xlu0 %v6058
        %v6090 = vpop.xlane.xlu0 %6089
        %v6091 = vrcp.pop %v6060
        %v6092 = vrcp.pop %v6062
        %v6093 = vrcp.pop %v6064
        %v6094 = vrcp.pop %v6066
        %v6095 = vrcp.pop %v6068
        %v6096 = vrcp.pop %v6070
        %v6097 = vrcp.pop %v6072
        %v6098 = vrcp.pop %v6074
        %v6099 = vrcp.pop %v6076
        %v6100 = vrcp.pop %v6078
        %v6101 = vrcp.pop %v6080
        %v6102 = vrcp.pop %v6082
        %v6103 = vrcp.pop %v6084
        %v6104 = vrcp.pop %v6086
        %v6105 = vrcp.pop %v6088
        %v6106 = vrcp.pop %v6090
        %v6107 = vmul.f32 %v6028, %v6091
        %v6108 = vmul.f32 %v6030, %v6092
        %v6109 = vmul.f32 %v6032, %v6093
        %v6110 = vmul.f32 %v6034, %v6094
        %v6111 = vmul.f32 %v6036, %v6095
        %v6112 = vmul.f32 %v6038, %v6096
        %v6113 = vmul.f32 %v6040, %v6097
        %v6114 = vmul.f32 %v6042, %v6098
        %v6115 = vmul.f32 %v6044, %v6099
        %v6116 = vmul.f32 %v6046, %v6100
        %v6117 = vmul.f32 %v6048, %v6101
        %v6118 = vmul.f32 %v6050, %v6102
        %v6119 = vmul.f32 %v6052, %v6103
        %v6120 = vmul.f32 %v6054, %v6104
        %v6121 = vmul.f32 %v6056, %v6105
        %v6122 = vmul.f32 %v6058, %v6106
        %v6123 = vpack.c.bf16 %v6108, %v6107
        %v6124 = vpack.c.bf16 %v6110, %v6109
        %v6125 = vpack.c.bf16 %v6112, %v6111
        %v6126 = vpack.c.bf16 %v6114, %v6113
        %v6127 = vpack.c.bf16 %v6116, %v6115
        %v6128 = vpack.c.bf16 %v6118, %v6117
        %v6129 = vpack.c.bf16 %v6120, %v6119
        %v6130 = vpack.c.bf16 %v6122, %v6121
        %v6131 = vpack.c.bf16 %v5790, %v5787
        %v6132 = vpack.c.bf16 %v5798, %v5795
        %v6133 = vpack.c.bf16 %v5806, %v5803
        %v6134 = vpack.c.bf16 %v5814, %v5811
        %v6135 = vpack.c.bf16 %v5822, %v5819
        %v6136 = vpack.c.bf16 %v5830, %v5827
        %v6137 = vpack.c.bf16 %v5838, %v5835
        %v6138 = vpack.c.bf16 %v5846, %v5843
        %s6139 = scalar_lea.vmem %s5, 80
        %v6140 = vld [vmem:[%s6139] sm:$0xf]
        %v6141 = vld [vmem:[%s6139 + $0x4] sm:$0xf]
        %v6142 = vld [vmem:[%s6139 + $0x8] sm:$0xf]
        %v6143 = vld [vmem:[%s6139 + $0xc] sm:$0xf]
        %s6144 = scalar_lea.vmem %s6, 5
        %v6145 = vld [vmem:[%s6144] sm:$0x1]
        %v6147 = vlaneseq
        %v6148 = vshrl.u32 %v6147, 7
        %v6149 = vsub.s32 0, %v6148
        %v6150 = vrot.slane %v6145, %v6149
        %v6156 = vunpack.c.l.b16 %v6140
        %v6157 = vunpack.c.l.b16 %v6141
        %v6158 = vunpack.c.l.b16 %v6142
        %v6159 = vunpack.c.l.b16 %v6143
        %v6160 = vpack.c.b16 %v6157, %v6156
        %v6161 = vpack.c.b16 %v6159, %v6158
        %6164 = vmatprep.subr.bf16.mxu0 0
        %6165 = vmatpush1.bf16.msra.mxu0 %v6160
        %6166 = vmatprep.subr.bf16.mxu0 0
        %6167 = vmatpush1.bf16.msra.mxu0 %v6161
        %6168 = vmatprep.subr.bf16.mxu0 0
        %6169 = vmatpush1.bf16.msra.mxu0 0
        %6170 = vmatprep.subr.bf16.mxu0 0
        %6171 = vmatpush1.bf16.msra.mxu0 0
        %6172 = vmatprep.subr.bf16.mxu0 0
        %6173 = vmatpush1.bf16.msra.mxu0 0
        %6174 = vmatprep.subr.bf16.mxu0 0
        %6175 = vmatpush1.bf16.msra.mxu0 0
        %6176 = vmatprep.subr.bf16.mxu0 0
        %6177 = vmatpush1.bf16.msra.mxu0 0
        %6178 = vmatprep.subr.bf16.mxu0 0
        %6179 = vmatpush1.bf16.msra.mxu0 0
        %6180 = vmatprep.subr.bf16.mxu0 0
        %6181 = vmatpush1.bf16.msra.mxu0 0
        %6182 = vmatprep.subr.bf16.mxu0 0
        %6183 = vmatpush1.bf16.msra.mxu0 0
        %6184 = vmatprep.subr.bf16.mxu0 0
        %6185 = vmatpush1.bf16.msra.mxu0 0
        %6186 = vmatprep.subr.bf16.mxu0 0
        %6187 = vmatpush1.bf16.msra.mxu0 0
        %6188 = vmatprep.subr.bf16.mxu0 0
        %6189 = vmatpush1.bf16.msra.mxu0 0
        %6190 = vmatprep.subr.bf16.mxu0 0
        %6191 = vmatpush1.bf16.msra.mxu0 0
        %6192 = vmatprep.subr.bf16.mxu0 0
        %6193 = vmatpush1.bf16.msra.mxu0 0
        %6194 = vmatprep.subr.bf16.mxu0 0
        %6195 = vmatpush1.bf16.msra.mxu0 0
        %6196 = vmatprep.mubr.bf16.mxu0 0
        %6197 = vmatmul.mubr.bf16.gmra.mrb[0].mxu0 %v5493
        %v6198 = vpop.f32.mrb[0].mxu0
        %v6199 = vadd.f32 %v6150, %v6198
        %v6200 = vpop.f32.mrb[0].mxu0
        %v6201 = vpop.f32.mrb[0].mxu0
        %v6202 = vadd.f32 %v6150, %v6201
        %v6203 = vpop.f32.mrb[0].mxu0
        %6204 = vmatprep.mubr.bf16.mxu0 0
        %6205 = vmatmul.mubr.bf16.gmra.mrb[0].mxu0 %v5496
        %v6206 = vpop.f32.mrb[0].mxu0
        %v6207 = vadd.f32 %v6150, %v6206
        %v6208 = vpop.f32.mrb[0].mxu0
        %v6209 = vpop.f32.mrb[0].mxu0
        %v6210 = vadd.f32 %v6150, %v6209
        %v6211 = vpop.f32.mrb[0].mxu0
        %6212 = vmatprep.mubr.bf16.mxu0 0
        %6213 = vmatmul.mubr.bf16.gmra.mrb[0].mxu0 %v5499
        %v6214 = vpop.f32.mrb[0].mxu0
        %v6215 = vadd.f32 %v6150, %v6214
        %v6216 = vpop.f32.mrb[0].mxu0
        %v6217 = vpop.f32.mrb[0].mxu0
        %v6218 = vadd.f32 %v6150, %v6217
        %v6219 = vpop.f32.mrb[0].mxu0
        %6220 = vmatprep.mubr.bf16.mxu0 0
        %6221 = vmatmul.mubr.bf16.gmra.mrb[0].mxu0 %v5502
        %v6222 = vpop.f32.mrb[0].mxu0
        %v6223 = vadd.f32 %v6150, %v6222
        %v6224 = vpop.f32.mrb[0].mxu0
        %v6225 = vpop.f32.mrb[0].mxu0
        %v6226 = vadd.f32 %v6150, %v6225
        %v6227 = vpop.f32.mrb[0].mxu0
        %6228 = vmatprep.mubr.bf16.mxu0 0
        %6229 = vmatmul.mubr.bf16.gmra.mrb[0].mxu0 %v5505
        %v6230 = vpop.f32.mrb[0].mxu0
        %v6231 = vadd.f32 %v6150, %v6230
        %v6232 = vpop.f32.mrb[0].mxu0
        %v6233 = vpop.f32.mrb[0].mxu0
        %v6234 = vadd.f32 %v6150, %v6233
        %v6235 = vpop.f32.mrb[0].mxu0
        %6236 = vmatprep.mubr.bf16.mxu0 0
        %6237 = vmatmul.mubr.bf16.gmra.mrb[0].mxu0 %v5508
        %v6238 = vpop.f32.mrb[0].mxu0
        %v6239 = vadd.f32 %v6150, %v6238
        %v6240 = vpop.f32.mrb[0].mxu0
        %v6241 = vpop.f32.mrb[0].mxu0
        %v6242 = vadd.f32 %v6150, %v6241
        %v6243 = vpop.f32.mrb[0].mxu0
        %6244 = vmatprep.mubr.bf16.mxu0 0
        %6245 = vmatmul.mubr.bf16.gmra.mrb[0].mxu0 %v5511
        %v6246 = vpop.f32.mrb[0].mxu0
        %v6247 = vadd.f32 %v6150, %v6246
        %v6248 = vpop.f32.mrb[0].mxu0
        %v6249 = vpop.f32.mrb[0].mxu0
        %v6250 = vadd.f32 %v6150, %v6249
        %v6251 = vpop.f32.mrb[0].mxu0
        %6252 = vmatprep.mubr.bf16.mxu0 0
        %6253 = vmatmul.mubr.bf16.gmra.mrb[0].mxu0 %v5514
        %v6254 = vpop.f32.mrb[0].mxu0
        %v6255 = vadd.f32 %v6150, %v6254
        %v6256 = vpop.f32.mrb[0].mxu0
        %v6257 = vpop.f32.mrb[0].mxu0
        %v6258 = vadd.f32 %v6150, %v6257
        %v6259 = vpop.f32.mrb[0].mxu0
        %6260 = vdwg.mxu0
        %s6261 = scalar_lea.vmem %s7, 80
        %v6262 = vld [vmem:[%s6261] sm:$0xf]
        %v6263 = vld [vmem:[%s6261 + $0x4] sm:$0xf]
        %v6264 = vld [vmem:[%s6261 + $0x8] sm:$0xf]
        %v6265 = vld [vmem:[%s6261 + $0xc] sm:$0xf]
        %v6270 = vunpack.c.l.b16 %v6262
        %v6271 = vunpack.c.l.b16 %v6263
        %v6272 = vunpack.c.l.b16 %v6264
        %v6273 = vunpack.c.l.b16 %v6265
        %v6274 = vpack.c.b16 %v6271, %v6270
        %v6275 = vpack.c.b16 %v6273, %v6272
        %6278 = vmatprep.subr.bf16.mxu0 0
        %6279 = vmatpush1.bf16.msra.mxu0 %v6274
        %6280 = vmatprep.subr.bf16.mxu0 0
        %6281 = vmatpush1.bf16.msra.mxu0 %v6275
        %6282 = vmatprep.subr.bf16.mxu0 0
        %6283 = vmatpush1.bf16.msra.mxu0 0
        %6284 = vmatprep.subr.bf16.mxu0 0
        %6285 = vmatpush1.bf16.msra.mxu0 0
        %6286 = vmatprep.subr.bf16.mxu0 0
        %6287 = vmatpush1.bf16.msra.mxu0 0
        %6288 = vmatprep.subr.bf16.mxu0 0
        %6289 = vmatpush1.bf16.msra.mxu0 0
        %6290 = vmatprep.subr.bf16.mxu0 0
        %6291 = vmatpush1.bf16.msra.mxu0 0
        %6292 = vmatprep.subr.bf16.mxu0 0
        %6293 = vmatpush1.bf16.msra.mxu0 0
        %6294 = vmatprep.subr.bf16.mxu0 0
        %6295 = vmatpush1.bf16.msra.mxu0 0
        %6296 = vmatprep.subr.bf16.mxu0 0
        %6297 = vmatpush1.bf16.msra.mxu0 0
        %6298 = vmatprep.subr.bf16.mxu0 0
        %6299 = vmatpush1.bf16.msra.mxu0 0
        %6300 = vmatprep.subr.bf16.mxu0 0
        %6301 = vmatpush1.bf16.msra.mxu0 0
        %6302 = vmatprep.subr.bf16.mxu0 0
        %6303 = vmatpush1.bf16.msra.mxu0 0
        %6304 = vmatprep.subr.bf16.mxu0 0
        %6305 = vmatpush1.bf16.msra.mxu0 0
        %6306 = vmatprep.subr.bf16.mxu0 0
        %6307 = vmatpush1.bf16.msra.mxu0 0
        %6308 = vmatprep.subr.bf16.mxu0 0
        %6309 = vmatpush1.bf16.msra.mxu0 0
        %6310 = vmatprep.mubr.bf16.mxu0 0
        %6311 = vmatmul.mubr.bf16.gmra.mrb[0].mxu0 %v5493
        %v6312 = vpop.f32.mrb[0].mxu0
        %v6313 = vadd.f32 0.0, %v6312
        %v6314 = vpop.f32.mrb[0].mxu0
        %v6315 = vpop.f32.mrb[0].mxu0
        %v6316 = vadd.f32 0.0, %v6315
        %v6317 = vpop.f32.mrb[0].mxu0
        %6318 = vmatprep.mubr.bf16.mxu0 0
        %6319 = vmatmul.mubr.bf16.gmra.mrb[0].mxu0 %v5496
        %v6320 = vpop.f32.mrb[0].mxu0
        %v6321 = vadd.f32 0.0, %v6320
        %v6322 = vpop.f32.mrb[0].mxu0
        %v6323 = vpop.f32.mrb[0].mxu0
        %v6324 = vadd.f32 0.0, %v6323
        %v6325 = vpop.f32.mrb[0].mxu0
        %6326 = vmatprep.mubr.bf16.mxu0 0
        %6327 = vmatmul.mubr.bf16.gmra.mrb[0].mxu0 %v5499
        %v6328 = vpop.f32.mrb[0].mxu0
        %v6329 = vadd.f32 0.0, %v6328
        %v6330 = vpop.f32.mrb[0].mxu0
        %v6331 = vpop.f32.mrb[0].mxu0
        %v6332 = vadd.f32 0.0, %v6331
        %v6333 = vpop.f32.mrb[0].mxu0
        %6334 = vmatprep.mubr.bf16.mxu0 0
        %6335 = vmatmul.mubr.bf16.gmra.mrb[0].mxu0 %v5502
        %v6336 = vpop.f32.mrb[0].mxu0
        %v6337 = vadd.f32 0.0, %v6336
        %v6338 = vpop.f32.mrb[0].mxu0
        %v6339 = vpop.f32.mrb[0].mxu0
        %v6340 = vadd.f32 0.0, %v6339
        %v6341 = vpop.f32.mrb[0].mxu0
        %6342 = vmatprep.mubr.bf16.mxu0 0
        %6343 = vmatmul.mubr.bf16.gmra.mrb[0].mxu0 %v5505
        %v6344 = vpop.f32.mrb[0].mxu0
        %v6345 = vadd.f32 0.0, %v6344
        %v6346 = vpop.f32.mrb[0].mxu0
        %v6347 = vpop.f32.mrb[0].mxu0
        %v6348 = vadd.f32 0.0, %v6347
        %v6349 = vpop.f32.mrb[0].mxu0
        %6350 = vmatprep.mubr.bf16.mxu0 0
        %6351 = vmatmul.mubr.bf16.gmra.mrb[0].mxu0 %v5508
        %v6352 = vpop.f32.mrb[0].mxu0
        %v6353 = vadd.f32 0.0, %v6352
        %v6354 = vpop.f32.mrb[0].mxu0
        %v6355 = vpop.f32.mrb[0].mxu0
        %v6356 = vadd.f32 0.0, %v6355
        %v6357 = vpop.f32.mrb[0].mxu0
        %6358 = vmatprep.mubr.bf16.mxu0 0
        %6359 = vmatmul.mubr.bf16.gmra.mrb[0].mxu0 %v5511
        %v6360 = vpop.f32.mrb[0].mxu0
        %v6361 = vadd.f32 0.0, %v6360
        %v6362 = vpop.f32.mrb[0].mxu0
        %v6363 = vpop.f32.mrb[0].mxu0
        %v6364 = vadd.f32 0.0, %v6363
        %v6365 = vpop.f32.mrb[0].mxu0
        %6366 = vmatprep.mubr.bf16.mxu0 0
        %6367 = vmatmul.mubr.bf16.gmra.mrb[0].mxu0 %v5514
        %v6368 = vpop.f32.mrb[0].mxu0
        %v6369 = vadd.f32 0.0, %v6368
        %v6370 = vpop.f32.mrb[0].mxu0
        %v6371 = vpop.f32.mrb[0].mxu0
        %v6372 = vadd.f32 0.0, %v6371
        %v6373 = vpop.f32.mrb[0].mxu0
        %6374 = vdwg.mxu0
        %s6375 = scalar_lea.vmem %s8, 80
        %v6376 = vld [vmem:[%s6375] sm:$0xf]
        %v6377 = vld [vmem:[%s6375 + $0x4] sm:$0xf]
        %v6378 = vld [vmem:[%s6375 + $0x8] sm:$0xf]
        %v6379 = vld [vmem:[%s6375 + $0xc] sm:$0xf]
        %s6380 = scalar_lea.vmem [#allocation2], 5
        %v6381 = vld [vmem:[%s6380] sm:$0x1]
        %v6383 = vlaneseq
        %v6384 = vshrl.u32 %v6383, 7
        %v6385 = vsub.s32 0, %v6384
        %v6386 = vrot.slane %v6381, %v6385
        %v6392 = vunpack.c.l.b16 %v6376
        %v6393 = vunpack.c.l.b16 %v6377
        %v6394 = vunpack.c.l.b16 %v6378
        %v6395 = vunpack.c.l.b16 %v6379
        %v6396 = vpack.c.b16 %v6393, %v6392
        %v6397 = vpack.c.b16 %v6395, %v6394
        %6400 = vmatprep.subr.bf16.mxu0 0
        %6401 = vmatpush1.bf16.msra.mxu0 %v6396
        %6402 = vmatprep.subr.bf16.mxu0 0
        %6403 = vmatpush1.bf16.msra.mxu0 %v6397
        %6404 = vmatprep.subr.bf16.mxu0 0
        %6405 = vmatpush1.bf16.msra.mxu0 0
        %6406 = vmatprep.subr.bf16.mxu0 0
        %6407 = vmatpush1.bf16.msra.mxu0 0
        %6408 = vmatprep.subr.bf16.mxu0 0
        %6409 = vmatpush1.bf16.msra.mxu0 0
        %6410 = vmatprep.subr.bf16.mxu0 0
        %6411 = vmatpush1.bf16.msra.mxu0 0
        %6412 = vmatprep.subr.bf16.mxu0 0
        %6413 = vmatpush1.bf16.msra.mxu0 0
        %6414 = vmatprep.subr.bf16.mxu0 0
        %6415 = vmatpush1.bf16.msra.mxu0 0
        %6416 = vmatprep.subr.bf16.mxu0 0
        %6417 = vmatpush1.bf16.msra.mxu0 0
        %6418 = vmatprep.subr.bf16.mxu0 0
        %6419 = vmatpush1.bf16.msra.mxu0 0
        %6420 = vmatprep.subr.bf16.mxu0 0
        %6421 = vmatpush1.bf16.msra.mxu0 0
        %6422 = vmatprep.subr.bf16.mxu0 0
        %6423 = vmatpush1.bf16.msra.mxu0 0
        %6424 = vmatprep.subr.bf16.mxu0 0
        %6425 = vmatpush1.bf16.msra.mxu0 0
        %6426 = vmatprep.subr.bf16.mxu0 0
        %6427 = vmatpush1.bf16.msra.mxu0 0
        %6428 = vmatprep.subr.bf16.mxu0 0
        %6429 = vmatpush1.bf16.msra.mxu0 0
        %6430 = vmatprep.subr.bf16.mxu0 0
        %6431 = vmatpush1.bf16.msra.mxu0 0
        %6432 = vmatprep.mubr.bf16.mxu0 0
        %6433 = vmatmul.mubr.bf16.gmra.mrb[0].mxu0 %v5493
        %v6434 = vpop.f32.mrb[0].mxu0
        %v6435 = vadd.f32 %v6386, %v6434
        %v6436 = vpop.f32.mrb[0].mxu0
        %v6437 = vpop.f32.mrb[0].mxu0
        %v6438 = vadd.f32 %v6386, %v6437
        %v6439 = vpop.f32.mrb[0].mxu0
        %6440 = vmatprep.mubr.bf16.mxu0 0
        %6441 = vmatmul.mubr.bf16.gmra.mrb[0].mxu0 %v5496
        %v6442 = vpop.f32.mrb[0].mxu0
        %v6443 = vadd.f32 %v6386, %v6442
        %v6444 = vpop.f32.mrb[0].mxu0
        %v6445 = vpop.f32.mrb[0].mxu0
        %v6446 = vadd.f32 %v6386, %v6445
        %v6447 = vpop.f32.mrb[0].mxu0
        %6448 = vmatprep.mubr.bf16.mxu0 0
        %6449 = vmatmul.mubr.bf16.gmra.mrb[0].mxu0 %v5499
        %v6450 = vpop.f32.mrb[0].mxu0
        %v6451 = vadd.f32 %v6386, %v6450
        %v6452 = vpop.f32.mrb[0].mxu0
        %v6453 = vpop.f32.mrb[0].mxu0
        %v6454 = vadd.f32 %v6386, %v6453
        %v6455 = vpop.f32.mrb[0].mxu0
        %6456 = vmatprep.mubr.bf16.mxu0 0
        %6457 = vmatmul.mubr.bf16.gmra.mrb[0].mxu0 %v5502
        %v6458 = vpop.f32.mrb[0].mxu0
        %v6459 = vadd.f32 %v6386, %v6458
        %v6460 = vpop.f32.mrb[0].mxu0
        %v6461 = vpop.f32.mrb[0].mxu0
        %v6462 = vadd.f32 %v6386, %v6461
        %v6463 = vpop.f32.mrb[0].mxu0
        %6464 = vmatprep.mubr.bf16.mxu0 0
        %6465 = vmatmul.mubr.bf16.gmra.mrb[0].mxu0 %v5505
        %v6466 = vpop.f32.mrb[0].mxu0
        %v6467 = vadd.f32 %v6386, %v6466
        %v6468 = vpop.f32.mrb[0].mxu0
        %v6469 = vpop.f32.mrb[0].mxu0
        %v6470 = vadd.f32 %v6386, %v6469
        %v6471 = vpop.f32.mrb[0].mxu0
        %6472 = vmatprep.mubr.bf16.mxu0 0
        %6473 = vmatmul.mubr.bf16.gmra.mrb[0].mxu0 %v5508
        %v6474 = vpop.f32.mrb[0].mxu0
        %v6475 = vadd.f32 %v6386, %v6474
        %v6476 = vpop.f32.mrb[0].mxu0
        %v6477 = vpop.f32.mrb[0].mxu0
        %v6478 = vadd.f32 %v6386, %v6477
        %v6479 = vpop.f32.mrb[0].mxu0
        %6480 = vmatprep.mubr.bf16.mxu0 0
        %6481 = vmatmul.mubr.bf16.gmra.mrb[0].mxu0 %v5511
        %v6482 = vpop.f32.mrb[0].mxu0
        %v6483 = vadd.f32 %v6386, %v6482
        %v6484 = vpop.f32.mrb[0].mxu0
        %v6485 = vpop.f32.mrb[0].mxu0
        %v6486 = vadd.f32 %v6386, %v6485
        %v6487 = vpop.f32.mrb[0].mxu0
        %6488 = vmatprep.mubr.bf16.mxu0 0
        %6489 = vmatmul.mubr.bf16.gmra.mrb[0].mxu0 %v5514
        %v6490 = vpop.f32.mrb[0].mxu0
        %v6491 = vadd.f32 %v6386, %v6490
        %v6492 = vpop.f32.mrb[0].mxu0
        %v6493 = vpop.f32.mrb[0].mxu0
        %v6494 = vadd.f32 %v6386, %v6493
        %v6495 = vpop.f32.mrb[0].mxu0
        %6496 = vdwg.mxu0
        %v6497 = vpack.c.bf16 %v6202, %v6199
        %v6498 = vpack.c.bf16 %v6210, %v6207
        %v6499 = vpack.c.bf16 %v6218, %v6215
        %v6500 = vpack.c.bf16 %v6226, %v6223
        %v6501 = vpack.c.bf16 %v6234, %v6231
        %v6502 = vpack.c.bf16 %v6242, %v6239
        %v6503 = vpack.c.bf16 %v6250, %v6247
        %v6504 = vpack.c.bf16 %v6258, %v6255
        %v6505 = vpack.c.bf16 %v6316, %v6313
        %v6506 = vpack.c.bf16 %v6324, %v6321
        %v6507 = vpack.c.bf16 %v6332, %v6329
        %v6508 = vpack.c.bf16 %v6340, %v6337
        %v6509 = vpack.c.bf16 %v6348, %v6345
        %v6510 = vpack.c.bf16 %v6356, %v6353
        %v6511 = vpack.c.bf16 %v6364, %v6361
        %v6512 = vpack.c.bf16 %v6372, %v6369
        %s6513 = scalar_lea.vmem %s11, 640
        %v6514 = vld [vmem:[%s6513] sm:$0xff]
        %v6515 = vld [vmem:[%s6513 + $0x8] sm:$0xff]
        %v6516 = vld [vmem:[%s6513 + $0x10] sm:$0xff]
        %v6517 = vld [vmem:[%s6513 + $0x18] sm:$0xff]
        %v6518 = vld [vmem:[%s6513 + $0x20] sm:$0xff]
        %v6519 = vld [vmem:[%s6513 + $0x28] sm:$0xff]
        %v6520 = vld [vmem:[%s6513 + $0x30] sm:$0xff]
        %v6521 = vld [vmem:[%s6513 + $0x38] sm:$0xff]
        %v6522 = vld [vmem:[%s6513 + $0x40] sm:$0xff]
        %v6523 = vld [vmem:[%s6513 + $0x48] sm:$0xff]
        %v6524 = vld [vmem:[%s6513 + $0x50] sm:$0xff]
        %v6525 = vld [vmem:[%s6513 + $0x58] sm:$0xff]
        %v6526 = vld [vmem:[%s6513 + $0x60] sm:$0xff]
        %v6527 = vld [vmem:[%s6513 + $0x68] sm:$0xff]
        %v6528 = vld [vmem:[%s6513 + $0x70] sm:$0xff]
        %v6529 = vld [vmem:[%s6513 + $0x78] sm:$0xff]
        %v6531 = vsel %vm1784, %v6497, 0
        %v6534 = vsel %vm1784, %v6498, 0
        %v6537 = vsel %vm1784, %v6499, 0
        %v6540 = vsel %vm1784, %v6500, 0
        %v6543 = vsel %vm1784, %v6501, 0
        %v6546 = vsel %vm1784, %v6502, 0
        %v6549 = vsel %vm1784, %v6503, 0
        %v6552 = vsel %vm1784, %v6504, 0
        %v6555 = vsel %vm1784, %v6505, 0
        %v6558 = vsel %vm1784, %v6506, 0
        %v6561 = vsel %vm1784, %v6507, 0
        %v6564 = vsel %vm1784, %v6508, 0
        %v6567 = vsel %vm1784, %v6509, 0
        %v6570 = vsel %vm1784, %v6510, 0
        %v6573 = vsel %vm1784, %v6511, 0
        %v6576 = vsel %vm1784, %v6512, 0
        %6578 = vmatprep.subr.bf16.mxu0 0
        %6579 = vmatpush1.bf16.xpose.msra.mxu0 %v6555
        %6580 = vmatprep.subr.bf16.mxu0 0
        %6581 = vmatpush1.bf16.xpose.msra.mxu0 %v6558
        %6582 = vmatprep.subr.bf16.mxu0 0
        %6583 = vmatpush1.bf16.xpose.msra.mxu0 %v6561
        %6584 = vmatprep.subr.bf16.mxu0 0
        %6585 = vmatpush1.bf16.xpose.msra.mxu0 %v6564
        %6586 = vmatprep.subr.bf16.mxu0 0
        %6587 = vmatpush1.bf16.xpose.msra.mxu0 %v6567
        %6588 = vmatprep.subr.bf16.mxu0 0
        %6589 = vmatpush1.bf16.xpose.msra.mxu0 %v6570
        %6590 = vmatprep.subr.bf16.mxu0 0
        %6591 = vmatpush1.bf16.xpose.msra.mxu0 %v6573
        %6592 = vmatprep.subr.bf16.mxu0 0
        %6593 = vmatpush1.bf16.xpose.msra.mxu0 %v6576
        %6594 = vmatprep.subr.bf16.mxu0 0
        %6595 = vmatpush1.bf16.xpose.msra.mxu0 0
        %6596 = vmatprep.subr.bf16.mxu0 0
        %6597 = vmatpush1.bf16.xpose.msra.mxu0 0
        %6598 = vmatprep.subr.bf16.mxu0 0
        %6599 = vmatpush1.bf16.xpose.msra.mxu0 0
        %6600 = vmatprep.subr.bf16.mxu0 0
        %6601 = vmatpush1.bf16.xpose.msra.mxu0 0
        %6602 = vmatprep.subr.bf16.mxu0 0
        %6603 = vmatpush1.bf16.xpose.msra.mxu0 0
        %6604 = vmatprep.subr.bf16.mxu0 0
        %6605 = vmatpush1.bf16.xpose.msra.mxu0 0
        %6606 = vmatprep.subr.bf16.mxu0 0
        %6607 = vmatpush1.bf16.xpose.msra.mxu0 0
        %6608 = vmatprep.subr.bf16.mxu0 0
        %6609 = vmatpush1.bf16.xpose.msra.mxu0 0
        %6610 = vmatprep.mubr.bf16.mxu0 0
        %6611 = vmatmul.mubr.bf16.gmra.mrb[0].mxu0 %v6531
        %v6612 = vpop.f32.mrb[0].mxu0
        %v6613 = vadd.f32 %v6514, %v6612
        %v6614 = vpop.f32.mrb[0].mxu0
        %v6615 = vpop.f32.mrb[0].mxu0
        %v6616 = vadd.f32 %v6515, %v6615
        %v6617 = vpop.f32.mrb[0].mxu0
        %6618 = vmatprep.mubr.bf16.mxu0 0
        %6619 = vmatmul.mubr.bf16.gmra.mrb[0].mxu0 %v6534
        %v6620 = vpop.f32.mrb[0].mxu0
        %v6621 = vadd.f32 %v6516, %v6620
        %v6622 = vpop.f32.mrb[0].mxu0
        %v6623 = vpop.f32.mrb[0].mxu0
        %v6624 = vadd.f32 %v6517, %v6623
        %v6625 = vpop.f32.mrb[0].mxu0
        %6626 = vmatprep.mubr.bf16.mxu0 0
        %6627 = vmatmul.mubr.bf16.gmra.mrb[0].mxu0 %v6537
        %v6628 = vpop.f32.mrb[0].mxu0
        %v6629 = vadd.f32 %v6518, %v6628
        %v6630 = vpop.f32.mrb[0].mxu0
        %v6631 = vpop.f32.mrb[0].mxu0
        %v6632 = vadd.f32 %v6519, %v6631
        %v6633 = vpop.f32.mrb[0].mxu0
        %6634 = vmatprep.mubr.bf16.mxu0 0
        %6635 = vmatmul.mubr.bf16.gmra.mrb[0].mxu0 %v6540
        %v6636 = vpop.f32.mrb[0].mxu0
        %v6637 = vadd.f32 %v6520, %v6636
        %v6638 = vpop.f32.mrb[0].mxu0
        %v6639 = vpop.f32.mrb[0].mxu0
        %v6640 = vadd.f32 %v6521, %v6639
        %v6641 = vpop.f32.mrb[0].mxu0
        %6642 = vmatprep.mubr.bf16.mxu0 0
        %6643 = vmatmul.mubr.bf16.gmra.mrb[0].mxu0 %v6543
        %v6644 = vpop.f32.mrb[0].mxu0
        %v6645 = vadd.f32 %v6522, %v6644
        %v6646 = vpop.f32.mrb[0].mxu0
        %v6647 = vpop.f32.mrb[0].mxu0
        %v6648 = vadd.f32 %v6523, %v6647
        %v6649 = vpop.f32.mrb[0].mxu0
        %6650 = vmatprep.mubr.bf16.mxu0 0
        %6651 = vmatmul.mubr.bf16.gmra.mrb[0].mxu0 %v6546
        %v6652 = vpop.f32.mrb[0].mxu0
        %v6653 = vadd.f32 %v6524, %v6652
        %v6654 = vpop.f32.mrb[0].mxu0
        %v6655 = vpop.f32.mrb[0].mxu0
        %v6656 = vadd.f32 %v6525, %v6655
        %v6657 = vpop.f32.mrb[0].mxu0
        %6658 = vmatprep.mubr.bf16.mxu0 0
        %6659 = vmatmul.mubr.bf16.gmra.mrb[0].mxu0 %v6549
        %v6660 = vpop.f32.mrb[0].mxu0
        %v6661 = vadd.f32 %v6526, %v6660
        %v6662 = vpop.f32.mrb[0].mxu0
        %v6663 = vpop.f32.mrb[0].mxu0
        %v6664 = vadd.f32 %v6527, %v6663
        %v6665 = vpop.f32.mrb[0].mxu0
        %6666 = vmatprep.mubr.bf16.mxu0 0
        %6667 = vmatmul.mubr.bf16.gmra.mrb[0].mxu0 %v6552
        %v6668 = vpop.f32.mrb[0].mxu0
        %v6669 = vadd.f32 %v6528, %v6668
        %v6670 = vpop.f32.mrb[0].mxu0
        %v6671 = vpop.f32.mrb[0].mxu0
        %v6672 = vadd.f32 %v6529, %v6671
        %v6673 = vpop.f32.mrb[0].mxu0
        %6674 = vdwg.mxu0
        %v6675 = vmul.f32 %v6613, 1.442695
        %v6676 = vpow.pop %v6675
        %v6677 = vmul.f32 %v6616, 1.442695
        %v6678 = vpow.pop %v6677
        %v6679 = vmul.f32 %v6621, 1.442695
        %v6680 = vpow.pop %v6679
        %v6681 = vmul.f32 %v6624, 1.442695
        %v6682 = vpow.pop %v6681
        %v6683 = vmul.f32 %v6629, 1.442695
        %v6684 = vpow.pop %v6683
        %v6685 = vmul.f32 %v6632, 1.442695
        %v6686 = vpow.pop %v6685
        %v6687 = vmul.f32 %v6637, 1.442695
        %v6688 = vpow.pop %v6687
        %v6689 = vmul.f32 %v6640, 1.442695
        %v6690 = vpow.pop %v6689
        %v6691 = vmul.f32 %v6645, 1.442695
        %v6692 = vpow.pop %v6691
        %v6693 = vmul.f32 %v6648, 1.442695
        %v6694 = vpow.pop %v6693
        %v6695 = vmul.f32 %v6653, 1.442695
        %v6696 = vpow.pop %v6695
        %v6697 = vmul.f32 %v6656, 1.442695
        %v6698 = vpow.pop %v6697
        %v6699 = vmul.f32 %v6661, 1.442695
        %v6700 = vpow.pop %v6699
        %v6701 = vmul.f32 %v6664, 1.442695
        %v6702 = vpow.pop %v6701
        %v6703 = vmul.f32 %v6669, 1.442695
        %v6704 = vpow.pop %v6703
        %v6705 = vmul.f32 %v6672, 1.442695
        %v6706 = vpow.pop %v6705
        %6707 = vadd.xlane.f32.xlu0 %v6676
        %v6708 = vpop.xlane.xlu0 %6707
        %6709 = vadd.xlane.f32.xlu0 %v6678
        %v6710 = vpop.xlane.xlu0 %6709
        %6711 = vadd.xlane.f32.xlu0 %v6680
        %v6712 = vpop.xlane.xlu0 %6711
        %6713 = vadd.xlane.f32.xlu0 %v6682
        %v6714 = vpop.xlane.xlu0 %6713
        %6715 = vadd.xlane.f32.xlu0 %v6684
        %v6716 = vpop.xlane.xlu0 %6715
        %6717 = vadd.xlane.f32.xlu0 %v6686
        %v6718 = vpop.xlane.xlu0 %6717
        %6719 = vadd.xlane.f32.xlu0 %v6688
        %v6720 = vpop.xlane.xlu0 %6719
        %6721 = vadd.xlane.f32.xlu0 %v6690
        %v6722 = vpop.xlane.xlu0 %6721
        %6723 = vadd.xlane.f32.xlu0 %v6692
        %v6724 = vpop.xlane.xlu0 %6723
        %6725 = vadd.xlane.f32.xlu0 %v6694
        %v6726 = vpop.xlane.xlu0 %6725
        %6727 = vadd.xlane.f32.xlu0 %v6696
        %v6728 = vpop.xlane.xlu0 %6727
        %6729 = vadd.xlane.f32.xlu0 %v6698
        %v6730 = vpop.xlane.xlu0 %6729
        %6731 = vadd.xlane.f32.xlu0 %v6700
        %v6732 = vpop.xlane.xlu0 %6731
        %6733 = vadd.xlane.f32.xlu0 %v6702
        %v6734 = vpop.xlane.xlu0 %6733
        %6735 = vadd.xlane.f32.xlu0 %v6704
        %v6736 = vpop.xlane.xlu0 %6735
        %6737 = vadd.xlane.f32.xlu0 %v6706
        %v6738 = vpop.xlane.xlu0 %6737
        %v6739 = vrcp.pop %v6708
        %v6740 = vrcp.pop %v6710
        %v6741 = vrcp.pop %v6712
        %v6742 = vrcp.pop %v6714
        %v6743 = vrcp.pop %v6716
        %v6744 = vrcp.pop %v6718
        %v6745 = vrcp.pop %v6720
        %v6746 = vrcp.pop %v6722
        %v6747 = vrcp.pop %v6724
        %v6748 = vrcp.pop %v6726
        %v6749 = vrcp.pop %v6728
        %v6750 = vrcp.pop %v6730
        %v6751 = vrcp.pop %v6732
        %v6752 = vrcp.pop %v6734
        %v6753 = vrcp.pop %v6736
        %v6754 = vrcp.pop %v6738
        %v6755 = vmul.f32 %v6676, %v6739
        %v6756 = vmul.f32 %v6678, %v6740
        %v6757 = vmul.f32 %v6680, %v6741
        %v6758 = vmul.f32 %v6682, %v6742
        %v6759 = vmul.f32 %v6684, %v6743
        %v6760 = vmul.f32 %v6686, %v6744
        %v6761 = vmul.f32 %v6688, %v6745
        %v6762 = vmul.f32 %v6690, %v6746
        %v6763 = vmul.f32 %v6692, %v6747
        %v6764 = vmul.f32 %v6694, %v6748
        %v6765 = vmul.f32 %v6696, %v6749
        %v6766 = vmul.f32 %v6698, %v6750
        %v6767 = vmul.f32 %v6700, %v6751
        %v6768 = vmul.f32 %v6702, %v6752
        %v6769 = vmul.f32 %v6704, %v6753
        %v6770 = vmul.f32 %v6706, %v6754
        %v6771 = vpack.c.bf16 %v6756, %v6755
        %v6772 = vpack.c.bf16 %v6758, %v6757
        %v6773 = vpack.c.bf16 %v6760, %v6759
        %v6774 = vpack.c.bf16 %v6762, %v6761
        %v6775 = vpack.c.bf16 %v6764, %v6763
        %v6776 = vpack.c.bf16 %v6766, %v6765
        %v6777 = vpack.c.bf16 %v6768, %v6767
        %v6778 = vpack.c.bf16 %v6770, %v6769
        %v6779 = vpack.c.bf16 %v6438, %v6435
        %v6780 = vpack.c.bf16 %v6446, %v6443
        %v6781 = vpack.c.bf16 %v6454, %v6451
        %v6782 = vpack.c.bf16 %v6462, %v6459
        %v6783 = vpack.c.bf16 %v6470, %v6467
        %v6784 = vpack.c.bf16 %v6478, %v6475
        %v6785 = vpack.c.bf16 %v6486, %v6483
        %v6786 = vpack.c.bf16 %v6494, %v6491
        %6787 = vmatprep.subr.bf16.mxu0 0
        %6788 = vmatpush1.bf16.msra.mxu0 %v6779
        %6789 = vmatprep.subr.bf16.mxu0 0
        %6790 = vmatpush1.bf16.msra.mxu0 %v6780
        %6791 = vmatprep.subr.bf16.mxu0 0
        %6792 = vmatpush1.bf16.msra.mxu0 %v6781
        %6793 = vmatprep.subr.bf16.mxu0 0
        %6794 = vmatpush1.bf16.msra.mxu0 %v6782
        %6795 = vmatprep.subr.bf16.mxu0 0
        %6796 = vmatpush1.bf16.msra.mxu0 %v6783
        %6797 = vmatprep.subr.bf16.mxu0 0
        %6798 = vmatpush1.bf16.msra.mxu0 %v6784
        %6799 = vmatprep.subr.bf16.mxu0 0
        %6800 = vmatpush1.bf16.msra.mxu0 %v6785
        %6801 = vmatprep.subr.bf16.mxu0 0
        %6802 = vmatpush1.bf16.msra.mxu0 %v6786
        %6803 = vmatprep.subr.bf16.mxu0 0
        %6804 = vmatpush1.bf16.msra.mxu0 0
        %6805 = vmatprep.subr.bf16.mxu0 0
        %6806 = vmatpush1.bf16.msra.mxu0 0
        %6807 = vmatprep.subr.bf16.mxu0 0
        %6808 = vmatpush1.bf16.msra.mxu0 0
        %6809 = vmatprep.subr.bf16.mxu0 0
        %6810 = vmatpush1.bf16.msra.mxu0 0
        %6811 = vmatprep.subr.bf16.mxu0 0
        %6812 = vmatpush1.bf16.msra.mxu0 0
        %6813 = vmatprep.subr.bf16.mxu0 0
        %6814 = vmatpush1.bf16.msra.mxu0 0
        %6815 = vmatprep.subr.bf16.mxu0 0
        %6816 = vmatpush1.bf16.msra.mxu0 0
        %6817 = vmatprep.subr.bf16.mxu0 0
        %6818 = vmatpush1.bf16.msra.mxu0 0
        %6819 = vmatprep.mubr.bf16.mxu0 0
        %6820 = vmatmul.mubr.bf16.gmra.mrb[0].mxu0 %v6771
        %v6821 = vpop.f32.mrb[0].mxu0
        %v6822 = vadd.f32 0.0, %v6821
        %v6823 = vpop.f32.mrb[0].mxu0
        %v6824 = vpop.f32.mrb[0].mxu0
        %v6825 = vadd.f32 0.0, %v6824
        %v6826 = vpop.f32.mrb[0].mxu0
        %6827 = vmatprep.mubr.bf16.mxu0 0
        %6828 = vmatmul.mubr.bf16.gmra.mrb[0].mxu0 %v6772
        %v6829 = vpop.f32.mrb[0].mxu0
        %v6830 = vadd.f32 0.0, %v6829
        %v6831 = vpop.f32.mrb[0].mxu0
        %v6832 = vpop.f32.mrb[0].mxu0
        %v6833 = vadd.f32 0.0, %v6832
        %v6834 = vpop.f32.mrb[0].mxu0
        %6835 = vmatprep.mubr.bf16.mxu0 0
        %6836 = vmatmul.mubr.bf16.gmra.mrb[0].mxu0 %v6773
        %v6837 = vpop.f32.mrb[0].mxu0
        %v6838 = vadd.f32 0.0, %v6837
        %v6839 = vpop.f32.mrb[0].mxu0
        %v6840 = vpop.f32.mrb[0].mxu0
        %v6841 = vadd.f32 0.0, %v6840
        %v6842 = vpop.f32.mrb[0].mxu0
        %6843 = vmatprep.mubr.bf16.mxu0 0
        %6844 = vmatmul.mubr.bf16.gmra.mrb[0].mxu0 %v6774
        %v6845 = vpop.f32.mrb[0].mxu0
        %v6846 = vadd.f32 0.0, %v6845
        %v6847 = vpop.f32.mrb[0].mxu0
        %v6848 = vpop.f32.mrb[0].mxu0
        %v6849 = vadd.f32 0.0, %v6848
        %v6850 = vpop.f32.mrb[0].mxu0
        %6851 = vmatprep.mubr.bf16.mxu0 0
        %6852 = vmatmul.mubr.bf16.gmra.mrb[0].mxu0 %v6775
        %v6853 = vpop.f32.mrb[0].mxu0
        %v6854 = vadd.f32 0.0, %v6853
        %v6855 = vpop.f32.mrb[0].mxu0
        %v6856 = vpop.f32.mrb[0].mxu0
        %v6857 = vadd.f32 0.0, %v6856
        %v6858 = vpop.f32.mrb[0].mxu0
        %6859 = vmatprep.mubr.bf16.mxu0 0
        %6860 = vmatmul.mubr.bf16.gmra.mrb[0].mxu0 %v6776
        %v6861 = vpop.f32.mrb[0].mxu0
        %v6862 = vadd.f32 0.0, %v6861
        %v6863 = vpop.f32.mrb[0].mxu0
        %v6864 = vpop.f32.mrb[0].mxu0
        %v6865 = vadd.f32 0.0, %v6864
        %v6866 = vpop.f32.mrb[0].mxu0
        %6867 = vmatprep.mubr.bf16.mxu0 0
        %6868 = vmatmul.mubr.bf16.gmra.mrb[0].mxu0 %v6777
        %v6869 = vpop.f32.mrb[0].mxu0
        %v6870 = vadd.f32 0.0, %v6869
        %v6871 = vpop.f32.mrb[0].mxu0
        %v6872 = vpop.f32.mrb[0].mxu0
        %v6873 = vadd.f32 0.0, %v6872
        %v6874 = vpop.f32.mrb[0].mxu0
        %6875 = vmatprep.mubr.bf16.mxu0 0
        %6876 = vmatmul.mubr.bf16.gmra.mrb[0].mxu0 %v6778
        %v6877 = vpop.f32.mrb[0].mxu0
        %v6878 = vadd.f32 0.0, %v6877
        %v6879 = vpop.f32.mrb[0].mxu0
        %v6880 = vpop.f32.mrb[0].mxu0
        %v6881 = vadd.f32 0.0, %v6880
        %v6882 = vpop.f32.mrb[0].mxu0
        %6883 = vdwg.mxu0
        %6884 = vmatprep.subr.bf16.mxu0 0
        %6885 = vmatpush1.bf16.msra.mxu0 %v6131
        %6886 = vmatprep.subr.bf16.mxu0 0
        %6887 = vmatpush1.bf16.msra.mxu0 %v6132
        %6888 = vmatprep.subr.bf16.mxu0 0
        %6889 = vmatpush1.bf16.msra.mxu0 %v6133
        %6890 = vmatprep.subr.bf16.mxu0 0
        %6891 = vmatpush1.bf16.msra.mxu0 %v6134
        %6892 = vmatprep.subr.bf16.mxu0 0
        %6893 = vmatpush1.bf16.msra.mxu0 %v6135
        %6894 = vmatprep.subr.bf16.mxu0 0
        %6895 = vmatpush1.bf16.msra.mxu0 %v6136
        %6896 = vmatprep.subr.bf16.mxu0 0
        %6897 = vmatpush1.bf16.msra.mxu0 %v6137
        %6898 = vmatprep.subr.bf16.mxu0 0
        %6899 = vmatpush1.bf16.msra.mxu0 %v6138
        %6900 = vmatprep.subr.bf16.mxu0 0
        %6901 = vmatpush1.bf16.msra.mxu0 0
        %6902 = vmatprep.subr.bf16.mxu0 0
        %6903 = vmatpush1.bf16.msra.mxu0 0
        %6904 = vmatprep.subr.bf16.mxu0 0
        %6905 = vmatpush1.bf16.msra.mxu0 0
        %6906 = vmatprep.subr.bf16.mxu0 0
        %6907 = vmatpush1.bf16.msra.mxu0 0
        %6908 = vmatprep.subr.bf16.mxu0 0
        %6909 = vmatpush1.bf16.msra.mxu0 0
        %6910 = vmatprep.subr.bf16.mxu0 0
        %6911 = vmatpush1.bf16.msra.mxu0 0
        %6912 = vmatprep.subr.bf16.mxu0 0
        %6913 = vmatpush1.bf16.msra.mxu0 0
        %6914 = vmatprep.subr.bf16.mxu0 0
        %6915 = vmatpush1.bf16.msra.mxu0 0
        %6916 = vmatprep.mubr.bf16.mxu0 0
        %6917 = vmatmul.mubr.bf16.gmra.mrb[0].mxu0 %v6123
        %v6918 = vpop.f32.mrb[0].mxu0
        %v6919 = vadd.f32 %v6822, %v6918
        %v6920 = vpop.f32.mrb[0].mxu0
        %v6921 = vpop.f32.mrb[0].mxu0
        %v6922 = vadd.f32 %v6825, %v6921
        %v6923 = vpop.f32.mrb[0].mxu0
        %6924 = vmatprep.mubr.bf16.mxu0 0
        %6925 = vmatmul.mubr.bf16.gmra.mrb[0].mxu0 %v6124
        %v6926 = vpop.f32.mrb[0].mxu0
        %v6927 = vadd.f32 %v6830, %v6926
        %v6928 = vpop.f32.mrb[0].mxu0
        %v6929 = vpop.f32.mrb[0].mxu0
        %v6930 = vadd.f32 %v6833, %v6929
        %v6931 = vpop.f32.mrb[0].mxu0
        %6932 = vmatprep.mubr.bf16.mxu0 0
        %6933 = vmatmul.mubr.bf16.gmra.mrb[0].mxu0 %v6125
        %v6934 = vpop.f32.mrb[0].mxu0
        %v6935 = vadd.f32 %v6838, %v6934
        %v6936 = vpop.f32.mrb[0].mxu0
        %v6937 = vpop.f32.mrb[0].mxu0
        %v6938 = vadd.f32 %v6841, %v6937
        %v6939 = vpop.f32.mrb[0].mxu0
        %6940 = vmatprep.mubr.bf16.mxu0 0
        %6941 = vmatmul.mubr.bf16.gmra.mrb[0].mxu0 %v6126
        %v6942 = vpop.f32.mrb[0].mxu0
        %v6943 = vadd.f32 %v6846, %v6942
        %v6944 = vpop.f32.mrb[0].mxu0
        %v6945 = vpop.f32.mrb[0].mxu0
        %v6946 = vadd.f32 %v6849, %v6945
        %v6947 = vpop.f32.mrb[0].mxu0
        %6948 = vmatprep.mubr.bf16.mxu0 0
        %6949 = vmatmul.mubr.bf16.gmra.mrb[0].mxu0 %v6127
        %v6950 = vpop.f32.mrb[0].mxu0
        %v6951 = vadd.f32 %v6854, %v6950
        %v6952 = vpop.f32.mrb[0].mxu0
        %v6953 = vpop.f32.mrb[0].mxu0
        %v6954 = vadd.f32 %v6857, %v6953
        %v6955 = vpop.f32.mrb[0].mxu0
        %6956 = vmatprep.mubr.bf16.mxu0 0
        %6957 = vmatmul.mubr.bf16.gmra.mrb[0].mxu0 %v6128
        %v6958 = vpop.f32.mrb[0].mxu0
        %v6959 = vadd.f32 %v6862, %v6958
        %v6960 = vpop.f32.mrb[0].mxu0
        %v6961 = vpop.f32.mrb[0].mxu0
        %v6962 = vadd.f32 %v6865, %v6961
        %v6963 = vpop.f32.mrb[0].mxu0
        %6964 = vmatprep.mubr.bf16.mxu0 0
        %6965 = vmatmul.mubr.bf16.gmra.mrb[0].mxu0 %v6129
        %v6966 = vpop.f32.mrb[0].mxu0
        %v6967 = vadd.f32 %v6870, %v6966
        %v6968 = vpop.f32.mrb[0].mxu0
        %v6969 = vpop.f32.mrb[0].mxu0
        %v6970 = vadd.f32 %v6873, %v6969
        %v6971 = vpop.f32.mrb[0].mxu0
        %6972 = vmatprep.mubr.bf16.mxu0 0
        %6973 = vmatmul.mubr.bf16.gmra.mrb[0].mxu0 %v6130
        %v6974 = vpop.f32.mrb[0].mxu0
        %v6975 = vadd.f32 %v6878, %v6974
        %v6976 = vpop.f32.mrb[0].mxu0
        %v6977 = vpop.f32.mrb[0].mxu0
        %v6978 = vadd.f32 %v6881, %v6977
        %v6979 = vpop.f32.mrb[0].mxu0
        %6980 = vdwg.mxu0
        %s6981 = scalar_lea.vmem %s5, 96
        %v6982 = vld [vmem:[%s6981] sm:$0xf]
        %v6983 = vld [vmem:[%s6981 + $0x4] sm:$0xf]
        %v6984 = vld [vmem:[%s6981 + $0x8] sm:$0xf]
        %v6985 = vld [vmem:[%s6981 + $0xc] sm:$0xf]
        %s6986 = scalar_lea.vmem %s6, 6
        %v6987 = vld [vmem:[%s6986] sm:$0x1]
        %v6989 = vlaneseq
        %v6990 = vshrl.u32 %v6989, 7
        %v6991 = vsub.s32 0, %v6990
        %v6992 = vrot.slane %v6987, %v6991
        %v6998 = vunpack.c.l.b16 %v6982
        %v6999 = vunpack.c.l.b16 %v6983
        %v7000 = vunpack.c.l.b16 %v6984
        %v7001 = vunpack.c.l.b16 %v6985
        %v7002 = vpack.c.b16 %v6999, %v6998
        %v7003 = vpack.c.b16 %v7001, %v7000
        %7006 = vmatprep.subr.bf16.mxu0 0
        %7007 = vmatpush1.bf16.msra.mxu0 %v7002
        %7008 = vmatprep.subr.bf16.mxu0 0
        %7009 = vmatpush1.bf16.msra.mxu0 %v7003
        %7010 = vmatprep.subr.bf16.mxu0 0
        %7011 = vmatpush1.bf16.msra.mxu0 0
        %7012 = vmatprep.subr.bf16.mxu0 0
        %7013 = vmatpush1.bf16.msra.mxu0 0
        %7014 = vmatprep.subr.bf16.mxu0 0
        %7015 = vmatpush1.bf16.msra.mxu0 0
        %7016 = vmatprep.subr.bf16.mxu0 0
        %7017 = vmatpush1.bf16.msra.mxu0 0
        %7018 = vmatprep.subr.bf16.mxu0 0
        %7019 = vmatpush1.bf16.msra.mxu0 0
        %7020 = vmatprep.subr.bf16.mxu0 0
        %7021 = vmatpush1.bf16.msra.mxu0 0
        %7022 = vmatprep.subr.bf16.mxu0 0
        %7023 = vmatpush1.bf16.msra.mxu0 0
        %7024 = vmatprep.subr.bf16.mxu0 0
        %7025 = vmatpush1.bf16.msra.mxu0 0
        %7026 = vmatprep.subr.bf16.mxu0 0
        %7027 = vmatpush1.bf16.msra.mxu0 0
        %7028 = vmatprep.subr.bf16.mxu0 0
        %7029 = vmatpush1.bf16.msra.mxu0 0
        %7030 = vmatprep.subr.bf16.mxu0 0
        %7031 = vmatpush1.bf16.msra.mxu0 0
        %7032 = vmatprep.subr.bf16.mxu0 0
        %7033 = vmatpush1.bf16.msra.mxu0 0
        %7034 = vmatprep.subr.bf16.mxu0 0
        %7035 = vmatpush1.bf16.msra.mxu0 0
        %7036 = vmatprep.subr.bf16.mxu0 0
        %7037 = vmatpush1.bf16.msra.mxu0 0
        %7038 = vmatprep.mubr.bf16.mxu0 0
        %7039 = vmatmul.mubr.bf16.gmra.mrb[0].mxu0 %v5493
        %v7040 = vpop.f32.mrb[0].mxu0
        %v7041 = vadd.f32 %v6992, %v7040
        %v7042 = vpop.f32.mrb[0].mxu0
        %v7043 = vpop.f32.mrb[0].mxu0
        %v7044 = vadd.f32 %v6992, %v7043
        %v7045 = vpop.f32.mrb[0].mxu0
        %7046 = vmatprep.mubr.bf16.mxu0 0
        %7047 = vmatmul.mubr.bf16.gmra.mrb[0].mxu0 %v5496
        %v7048 = vpop.f32.mrb[0].mxu0
        %v7049 = vadd.f32 %v6992, %v7048
        %v7050 = vpop.f32.mrb[0].mxu0
        %v7051 = vpop.f32.mrb[0].mxu0
        %v7052 = vadd.f32 %v6992, %v7051
        %v7053 = vpop.f32.mrb[0].mxu0
        %7054 = vmatprep.mubr.bf16.mxu0 0
        %7055 = vmatmul.mubr.bf16.gmra.mrb[0].mxu0 %v5499
        %v7056 = vpop.f32.mrb[0].mxu0
        %v7057 = vadd.f32 %v6992, %v7056
        %v7058 = vpop.f32.mrb[0].mxu0
        %v7059 = vpop.f32.mrb[0].mxu0
        %v7060 = vadd.f32 %v6992, %v7059
        %v7061 = vpop.f32.mrb[0].mxu0
        %7062 = vmatprep.mubr.bf16.mxu0 0
        %7063 = vmatmul.mubr.bf16.gmra.mrb[0].mxu0 %v5502
        %v7064 = vpop.f32.mrb[0].mxu0
        %v7065 = vadd.f32 %v6992, %v7064
        %v7066 = vpop.f32.mrb[0].mxu0
        %v7067 = vpop.f32.mrb[0].mxu0
        %v7068 = vadd.f32 %v6992, %v7067
        %v7069 = vpop.f32.mrb[0].mxu0
        %7070 = vmatprep.mubr.bf16.mxu0 0
        %7071 = vmatmul.mubr.bf16.gmra.mrb[0].mxu0 %v5505
        %v7072 = vpop.f32.mrb[0].mxu0
        %v7073 = vadd.f32 %v6992, %v7072
        %v7074 = vpop.f32.mrb[0].mxu0
        %v7075 = vpop.f32.mrb[0].mxu0
        %v7076 = vadd.f32 %v6992, %v7075
        %v7077 = vpop.f32.mrb[0].mxu0
        %7078 = vmatprep.mubr.bf16.mxu0 0
        %7079 = vmatmul.mubr.bf16.gmra.mrb[0].mxu0 %v5508
        %v7080 = vpop.f32.mrb[0].mxu0
        %v7081 = vadd.f32 %v6992, %v7080
        %v7082 = vpop.f32.mrb[0].mxu0
        %v7083 = vpop.f32.mrb[0].mxu0
        %v7084 = vadd.f32 %v6992, %v7083
        %v7085 = vpop.f32.mrb[0].mxu0
        %7086 = vmatprep.mubr.bf16.mxu0 0
        %7087 = vmatmul.mubr.bf16.gmra.mrb[0].mxu0 %v5511
        %v7088 = vpop.f32.mrb[0].mxu0
        %v7089 = vadd.f32 %v6992, %v7088
        %v7090 = vpop.f32.mrb[0].mxu0
        %v7091 = vpop.f32.mrb[0].mxu0
        %v7092 = vadd.f32 %v6992, %v7091
        %v7093 = vpop.f32.mrb[0].mxu0
        %7094 = vmatprep.mubr.bf16.mxu0 0
        %7095 = vmatmul.mubr.bf16.gmra.mrb[0].mxu0 %v5514
        %v7096 = vpop.f32.mrb[0].mxu0
        %v7097 = vadd.f32 %v6992, %v7096
        %v7098 = vpop.f32.mrb[0].mxu0
        %v7099 = vpop.f32.mrb[0].mxu0
        %v7100 = vadd.f32 %v6992, %v7099
        %v7101 = vpop.f32.mrb[0].mxu0
        %7102 = vdwg.mxu0
        %s7103 = scalar_lea.vmem %s7, 96
        %v7104 = vld [vmem:[%s7103] sm:$0xf]
        %v7105 = vld [vmem:[%s7103 + $0x4] sm:$0xf]
        %v7106 = vld [vmem:[%s7103 + $0x8] sm:$0xf]
        %v7107 = vld [vmem:[%s7103 + $0xc] sm:$0xf]
        %v7112 = vunpack.c.l.b16 %v7104
        %v7113 = vunpack.c.l.b16 %v7105
        %v7114 = vunpack.c.l.b16 %v7106
        %v7115 = vunpack.c.l.b16 %v7107
        %v7116 = vpack.c.b16 %v7113, %v7112
        %v7117 = vpack.c.b16 %v7115, %v7114
        %7120 = vmatprep.subr.bf16.mxu0 0
        %7121 = vmatpush1.bf16.msra.mxu0 %v7116
        %7122 = vmatprep.subr.bf16.mxu0 0
        %7123 = vmatpush1.bf16.msra.mxu0 %v7117
        %7124 = vmatprep.subr.bf16.mxu0 0
        %7125 = vmatpush1.bf16.msra.mxu0 0
        %7126 = vmatprep.subr.bf16.mxu0 0
        %7127 = vmatpush1.bf16.msra.mxu0 0
        %7128 = vmatprep.subr.bf16.mxu0 0
        %7129 = vmatpush1.bf16.msra.mxu0 0
        %7130 = vmatprep.subr.bf16.mxu0 0
        %7131 = vmatpush1.bf16.msra.mxu0 0
        %7132 = vmatprep.subr.bf16.mxu0 0
        %7133 = vmatpush1.bf16.msra.mxu0 0
        %7134 = vmatprep.subr.bf16.mxu0 0
        %7135 = vmatpush1.bf16.msra.mxu0 0
        %7136 = vmatprep.subr.bf16.mxu0 0
        %7137 = vmatpush1.bf16.msra.mxu0 0
        %7138 = vmatprep.subr.bf16.mxu0 0
        %7139 = vmatpush1.bf16.msra.mxu0 0
        %7140 = vmatprep.subr.bf16.mxu0 0
        %7141 = vmatpush1.bf16.msra.mxu0 0
        %7142 = vmatprep.subr.bf16.mxu0 0
        %7143 = vmatpush1.bf16.msra.mxu0 0
        %7144 = vmatprep.subr.bf16.mxu0 0
        %7145 = vmatpush1.bf16.msra.mxu0 0
        %7146 = vmatprep.subr.bf16.mxu0 0
        %7147 = vmatpush1.bf16.msra.mxu0 0
        %7148 = vmatprep.subr.bf16.mxu0 0
        %7149 = vmatpush1.bf16.msra.mxu0 0
        %7150 = vmatprep.subr.bf16.mxu0 0
        %7151 = vmatpush1.bf16.msra.mxu0 0
        %7152 = vmatprep.mubr.bf16.mxu0 0
        %7153 = vmatmul.mubr.bf16.gmra.mrb[0].mxu0 %v5493
        %v7154 = vpop.f32.mrb[0].mxu0
        %v7155 = vadd.f32 0.0, %v7154
        %v7156 = vpop.f32.mrb[0].mxu0
        %v7157 = vpop.f32.mrb[0].mxu0
        %v7158 = vadd.f32 0.0, %v7157
        %v7159 = vpop.f32.mrb[0].mxu0
        %7160 = vmatprep.mubr.bf16.mxu0 0
        %7161 = vmatmul.mubr.bf16.gmra.mrb[0].mxu0 %v5496
        %v7162 = vpop.f32.mrb[0].mxu0
        %v7163 = vadd.f32 0.0, %v7162
        %v7164 = vpop.f32.mrb[0].mxu0
        %v7165 = vpop.f32.mrb[0].mxu0
        %v7166 = vadd.f32 0.0, %v7165
        %v7167 = vpop.f32.mrb[0].mxu0
        %7168 = vmatprep.mubr.bf16.mxu0 0
        %7169 = vmatmul.mubr.bf16.gmra.mrb[0].mxu0 %v5499
        %v7170 = vpop.f32.mrb[0].mxu0
        %v7171 = vadd.f32 0.0, %v7170
        %v7172 = vpop.f32.mrb[0].mxu0
        %v7173 = vpop.f32.mrb[0].mxu0
        %v7174 = vadd.f32 0.0, %v7173
        %v7175 = vpop.f32.mrb[0].mxu0
        %7176 = vmatprep.mubr.bf16.mxu0 0
        %7177 = vmatmul.mubr.bf16.gmra.mrb[0].mxu0 %v5502
        %v7178 = vpop.f32.mrb[0].mxu0
        %v7179 = vadd.f32 0.0, %v7178
        %v7180 = vpop.f32.mrb[0].mxu0
        %v7181 = vpop.f32.mrb[0].mxu0
        %v7182 = vadd.f32 0.0, %v7181
        %v7183 = vpop.f32.mrb[0].mxu0
        %7184 = vmatprep.mubr.bf16.mxu0 0
        %7185 = vmatmul.mubr.bf16.gmra.mrb[0].mxu0 %v5505
        %v7186 = vpop.f32.mrb[0].mxu0
        %v7187 = vadd.f32 0.0, %v7186
        %v7188 = vpop.f32.mrb[0].mxu0
        %v7189 = vpop.f32.mrb[0].mxu0
        %v7190 = vadd.f32 0.0, %v7189
        %v7191 = vpop.f32.mrb[0].mxu0
        %7192 = vmatprep.mubr.bf16.mxu0 0
        %7193 = vmatmul.mubr.bf16.gmra.mrb[0].mxu0 %v5508
        %v7194 = vpop.f32.mrb[0].mxu0
        %v7195 = vadd.f32 0.0, %v7194
        %v7196 = vpop.f32.mrb[0].mxu0
        %v7197 = vpop.f32.mrb[0].mxu0
        %v7198 = vadd.f32 0.0, %v7197
        %v7199 = vpop.f32.mrb[0].mxu0
        %7200 = vmatprep.mubr.bf16.mxu0 0
        %7201 = vmatmul.mubr.bf16.gmra.mrb[0].mxu0 %v5511
        %v7202 = vpop.f32.mrb[0].mxu0
        %v7203 = vadd.f32 0.0, %v7202
        %v7204 = vpop.f32.mrb[0].mxu0
        %v7205 = vpop.f32.mrb[0].mxu0
        %v7206 = vadd.f32 0.0, %v7205
        %v7207 = vpop.f32.mrb[0].mxu0
        %7208 = vmatprep.mubr.bf16.mxu0 0
        %7209 = vmatmul.mubr.bf16.gmra.mrb[0].mxu0 %v5514
        %v7210 = vpop.f32.mrb[0].mxu0
        %v7211 = vadd.f32 0.0, %v7210
        %v7212 = vpop.f32.mrb[0].mxu0
        %v7213 = vpop.f32.mrb[0].mxu0
        %v7214 = vadd.f32 0.0, %v7213
        %v7215 = vpop.f32.mrb[0].mxu0
        %7216 = vdwg.mxu0
        %s7217 = scalar_lea.vmem %s8, 96
        %v7218 = vld [vmem:[%s7217] sm:$0xf]
        %v7219 = vld [vmem:[%s7217 + $0x4] sm:$0xf]
        %v7220 = vld [vmem:[%s7217 + $0x8] sm:$0xf]
        %v7221 = vld [vmem:[%s7217 + $0xc] sm:$0xf]
        %s7222 = scalar_lea.vmem [#allocation2], 6
        %v7223 = vld [vmem:[%s7222] sm:$0x1]
        %v7225 = vlaneseq
        %v7226 = vshrl.u32 %v7225, 7
        %v7227 = vsub.s32 0, %v7226
        %v7228 = vrot.slane %v7223, %v7227
        %v7234 = vunpack.c.l.b16 %v7218
        %v7235 = vunpack.c.l.b16 %v7219
        %v7236 = vunpack.c.l.b16 %v7220
        %v7237 = vunpack.c.l.b16 %v7221
        %v7238 = vpack.c.b16 %v7235, %v7234
        %v7239 = vpack.c.b16 %v7237, %v7236
        %7242 = vmatprep.subr.bf16.mxu0 0
        %7243 = vmatpush1.bf16.msra.mxu0 %v7238
        %7244 = vmatprep.subr.bf16.mxu0 0
        %7245 = vmatpush1.bf16.msra.mxu0 %v7239
        %7246 = vmatprep.subr.bf16.mxu0 0
        %7247 = vmatpush1.bf16.msra.mxu0 0
        %7248 = vmatprep.subr.bf16.mxu0 0
        %7249 = vmatpush1.bf16.msra.mxu0 0
        %7250 = vmatprep.subr.bf16.mxu0 0
        %7251 = vmatpush1.bf16.msra.mxu0 0
        %7252 = vmatprep.subr.bf16.mxu0 0
        %7253 = vmatpush1.bf16.msra.mxu0 0
        %7254 = vmatprep.subr.bf16.mxu0 0
        %7255 = vmatpush1.bf16.msra.mxu0 0
        %7256 = vmatprep.subr.bf16.mxu0 0
        %7257 = vmatpush1.bf16.msra.mxu0 0
        %7258 = vmatprep.subr.bf16.mxu0 0
        %7259 = vmatpush1.bf16.msra.mxu0 0
        %7260 = vmatprep.subr.bf16.mxu0 0
        %7261 = vmatpush1.bf16.msra.mxu0 0
        %7262 = vmatprep.subr.bf16.mxu0 0
        %7263 = vmatpush1.bf16.msra.mxu0 0
        %7264 = vmatprep.subr.bf16.mxu0 0
        %7265 = vmatpush1.bf16.msra.mxu0 0
        %7266 = vmatprep.subr.bf16.mxu0 0
        %7267 = vmatpush1.bf16.msra.mxu0 0
        %7268 = vmatprep.subr.bf16.mxu0 0
        %7269 = vmatpush1.bf16.msra.mxu0 0
        %7270 = vmatprep.subr.bf16.mxu0 0
        %7271 = vmatpush1.bf16.msra.mxu0 0
        %7272 = vmatprep.subr.bf16.mxu0 0
        %7273 = vmatpush1.bf16.msra.mxu0 0
        %7274 = vmatprep.mubr.bf16.mxu0 0
        %7275 = vmatmul.mubr.bf16.gmra.mrb[0].mxu0 %v5493
        %v7276 = vpop.f32.mrb[0].mxu0
        %v7277 = vadd.f32 %v7228, %v7276
        %v7278 = vpop.f32.mrb[0].mxu0
        %v7279 = vpop.f32.mrb[0].mxu0
        %v7280 = vadd.f32 %v7228, %v7279
        %v7281 = vpop.f32.mrb[0].mxu0
        %7282 = vmatprep.mubr.bf16.mxu0 0
        %7283 = vmatmul.mubr.bf16.gmra.mrb[0].mxu0 %v5496
        %v7284 = vpop.f32.mrb[0].mxu0
        %v7285 = vadd.f32 %v7228, %v7284
        %v7286 = vpop.f32.mrb[0].mxu0
        %v7287 = vpop.f32.mrb[0].mxu0
        %v7288 = vadd.f32 %v7228, %v7287
        %v7289 = vpop.f32.mrb[0].mxu0
        %7290 = vmatprep.mubr.bf16.mxu0 0
        %7291 = vmatmul.mubr.bf16.gmra.mrb[0].mxu0 %v5499
        %v7292 = vpop.f32.mrb[0].mxu0
        %v7293 = vadd.f32 %v7228, %v7292
        %v7294 = vpop.f32.mrb[0].mxu0
        %v7295 = vpop.f32.mrb[0].mxu0
        %v7296 = vadd.f32 %v7228, %v7295
        %v7297 = vpop.f32.mrb[0].mxu0
        %7298 = vmatprep.mubr.bf16.mxu0 0
        %7299 = vmatmul.mubr.bf16.gmra.mrb[0].mxu0 %v5502
        %v7300 = vpop.f32.mrb[0].mxu0
        %v7301 = vadd.f32 %v7228, %v7300
        %v7302 = vpop.f32.mrb[0].mxu0
        %v7303 = vpop.f32.mrb[0].mxu0
        %v7304 = vadd.f32 %v7228, %v7303
        %v7305 = vpop.f32.mrb[0].mxu0
        %7306 = vmatprep.mubr.bf16.mxu0 0
        %7307 = vmatmul.mubr.bf16.gmra.mrb[0].mxu0 %v5505
        %v7308 = vpop.f32.mrb[0].mxu0
        %v7309 = vadd.f32 %v7228, %v7308
        %v7310 = vpop.f32.mrb[0].mxu0
        %v7311 = vpop.f32.mrb[0].mxu0
        %v7312 = vadd.f32 %v7228, %v7311
        %v7313 = vpop.f32.mrb[0].mxu0
        %7314 = vmatprep.mubr.bf16.mxu0 0
        %7315 = vmatmul.mubr.bf16.gmra.mrb[0].mxu0 %v5508
        %v7316 = vpop.f32.mrb[0].mxu0
        %v7317 = vadd.f32 %v7228, %v7316
        %v7318 = vpop.f32.mrb[0].mxu0
        %v7319 = vpop.f32.mrb[0].mxu0
        %v7320 = vadd.f32 %v7228, %v7319
        %v7321 = vpop.f32.mrb[0].mxu0
        %7322 = vmatprep.mubr.bf16.mxu0 0
        %7323 = vmatmul.mubr.bf16.gmra.mrb[0].mxu0 %v5511
        %v7324 = vpop.f32.mrb[0].mxu0
        %v7325 = vadd.f32 %v7228, %v7324
        %v7326 = vpop.f32.mrb[0].mxu0
        %v7327 = vpop.f32.mrb[0].mxu0
        %v7328 = vadd.f32 %v7228, %v7327
        %v7329 = vpop.f32.mrb[0].mxu0
        %7330 = vmatprep.mubr.bf16.mxu0 0
        %7331 = vmatmul.mubr.bf16.gmra.mrb[0].mxu0 %v5514
        %v7332 = vpop.f32.mrb[0].mxu0
        %v7333 = vadd.f32 %v7228, %v7332
        %v7334 = vpop.f32.mrb[0].mxu0
        %v7335 = vpop.f32.mrb[0].mxu0
        %v7336 = vadd.f32 %v7228, %v7335
        %v7337 = vpop.f32.mrb[0].mxu0
        %7338 = vdwg.mxu0
        %v7339 = vpack.c.bf16 %v7044, %v7041
        %v7340 = vpack.c.bf16 %v7052, %v7049
        %v7341 = vpack.c.bf16 %v7060, %v7057
        %v7342 = vpack.c.bf16 %v7068, %v7065
        %v7343 = vpack.c.bf16 %v7076, %v7073
        %v7344 = vpack.c.bf16 %v7084, %v7081
        %v7345 = vpack.c.bf16 %v7092, %v7089
        %v7346 = vpack.c.bf16 %v7100, %v7097
        %v7347 = vpack.c.bf16 %v7158, %v7155
        %v7348 = vpack.c.bf16 %v7166, %v7163
        %v7349 = vpack.c.bf16 %v7174, %v7171
        %v7350 = vpack.c.bf16 %v7182, %v7179
        %v7351 = vpack.c.bf16 %v7190, %v7187
        %v7352 = vpack.c.bf16 %v7198, %v7195
        %v7353 = vpack.c.bf16 %v7206, %v7203
        %v7354 = vpack.c.bf16 %v7214, %v7211
        %s7355 = scalar_lea.vmem %s11, 768
        %v7356 = vld [vmem:[%s7355] sm:$0xff]
        %v7357 = vld [vmem:[%s7355 + $0x8] sm:$0xff]
        %v7358 = vld [vmem:[%s7355 + $0x10] sm:$0xff]
        %v7359 = vld [vmem:[%s7355 + $0x18] sm:$0xff]
        %v7360 = vld [vmem:[%s7355 + $0x20] sm:$0xff]
        %v7361 = vld [vmem:[%s7355 + $0x28] sm:$0xff]
        %v7362 = vld [vmem:[%s7355 + $0x30] sm:$0xff]
        %v7363 = vld [vmem:[%s7355 + $0x38] sm:$0xff]
        %v7364 = vld [vmem:[%s7355 + $0x40] sm:$0xff]
        %v7365 = vld [vmem:[%s7355 + $0x48] sm:$0xff]
        %v7366 = vld [vmem:[%s7355 + $0x50] sm:$0xff]
        %v7367 = vld [vmem:[%s7355 + $0x58] sm:$0xff]
        %v7368 = vld [vmem:[%s7355 + $0x60] sm:$0xff]
        %v7369 = vld [vmem:[%s7355 + $0x68] sm:$0xff]
        %v7370 = vld [vmem:[%s7355 + $0x70] sm:$0xff]
        %v7371 = vld [vmem:[%s7355 + $0x78] sm:$0xff]
        %v7373 = vsel %vm1784, %v7339, 0
        %v7376 = vsel %vm1784, %v7340, 0
        %v7379 = vsel %vm1784, %v7341, 0
        %v7382 = vsel %vm1784, %v7342, 0
        %v7385 = vsel %vm1784, %v7343, 0
        %v7388 = vsel %vm1784, %v7344, 0
        %v7391 = vsel %vm1784, %v7345, 0
        %v7394 = vsel %vm1784, %v7346, 0
        %v7397 = vsel %vm1784, %v7347, 0
        %v7400 = vsel %vm1784, %v7348, 0
        %v7403 = vsel %vm1784, %v7349, 0
        %v7406 = vsel %vm1784, %v7350, 0
        %v7409 = vsel %vm1784, %v7351, 0
        %v7412 = vsel %vm1784, %v7352, 0
        %v7415 = vsel %vm1784, %v7353, 0
        %v7418 = vsel %vm1784, %v7354, 0
        %7420 = vmatprep.subr.bf16.mxu0 0
        %7421 = vmatpush1.bf16.xpose.msra.mxu0 %v7397
        %7422 = vmatprep.subr.bf16.mxu0 0
        %7423 = vmatpush1.bf16.xpose.msra.mxu0 %v7400
        %7424 = vmatprep.subr.bf16.mxu0 0
        %7425 = vmatpush1.bf16.xpose.msra.mxu0 %v7403
        %7426 = vmatprep.subr.bf16.mxu0 0
        %7427 = vmatpush1.bf16.xpose.msra.mxu0 %v7406
        %7428 = vmatprep.subr.bf16.mxu0 0
        %7429 = vmatpush1.bf16.xpose.msra.mxu0 %v7409
        %7430 = vmatprep.subr.bf16.mxu0 0
        %7431 = vmatpush1.bf16.xpose.msra.mxu0 %v7412
        %7432 = vmatprep.subr.bf16.mxu0 0
        %7433 = vmatpush1.bf16.xpose.msra.mxu0 %v7415
        %7434 = vmatprep.subr.bf16.mxu0 0
        %7435 = vmatpush1.bf16.xpose.msra.mxu0 %v7418
        %7436 = vmatprep.subr.bf16.mxu0 0
        %7437 = vmatpush1.bf16.xpose.msra.mxu0 0
        %7438 = vmatprep.subr.bf16.mxu0 0
        %7439 = vmatpush1.bf16.xpose.msra.mxu0 0
        %7440 = vmatprep.subr.bf16.mxu0 0
        %7441 = vmatpush1.bf16.xpose.msra.mxu0 0
        %7442 = vmatprep.subr.bf16.mxu0 0
        %7443 = vmatpush1.bf16.xpose.msra.mxu0 0
        %7444 = vmatprep.subr.bf16.mxu0 0
        %7445 = vmatpush1.bf16.xpose.msra.mxu0 0
        %7446 = vmatprep.subr.bf16.mxu0 0
        %7447 = vmatpush1.bf16.xpose.msra.mxu0 0
        %7448 = vmatprep.subr.bf16.mxu0 0
        %7449 = vmatpush1.bf16.xpose.msra.mxu0 0
        %7450 = vmatprep.subr.bf16.mxu0 0
        %7451 = vmatpush1.bf16.xpose.msra.mxu0 0
        %7452 = vmatprep.mubr.bf16.mxu0 0
        %7453 = vmatmul.mubr.bf16.gmra.mrb[0].mxu0 %v7373
        %v7454 = vpop.f32.mrb[0].mxu0
        %v7455 = vadd.f32 %v7356, %v7454
        %v7456 = vpop.f32.mrb[0].mxu0
        %v7457 = vpop.f32.mrb[0].mxu0
        %v7458 = vadd.f32 %v7357, %v7457
        %v7459 = vpop.f32.mrb[0].mxu0
        %7460 = vmatprep.mubr.bf16.mxu0 0
        %7461 = vmatmul.mubr.bf16.gmra.mrb[0].mxu0 %v7376
        %v7462 = vpop.f32.mrb[0].mxu0
        %v7463 = vadd.f32 %v7358, %v7462
        %v7464 = vpop.f32.mrb[0].mxu0
        %v7465 = vpop.f32.mrb[0].mxu0
        %v7466 = vadd.f32 %v7359, %v7465
        %v7467 = vpop.f32.mrb[0].mxu0
        %7468 = vmatprep.mubr.bf16.mxu0 0
        %7469 = vmatmul.mubr.bf16.gmra.mrb[0].mxu0 %v7379
        %v7470 = vpop.f32.mrb[0].mxu0
        %v7471 = vadd.f32 %v7360, %v7470
        %v7472 = vpop.f32.mrb[0].mxu0
        %v7473 = vpop.f32.mrb[0].mxu0
        %v7474 = vadd.f32 %v7361, %v7473
        %v7475 = vpop.f32.mrb[0].mxu0
        %7476 = vmatprep.mubr.bf16.mxu0 0
        %7477 = vmatmul.mubr.bf16.gmra.mrb[0].mxu0 %v7382
        %v7478 = vpop.f32.mrb[0].mxu0
        %v7479 = vadd.f32 %v7362, %v7478
        %v7480 = vpop.f32.mrb[0].mxu0
        %v7481 = vpop.f32.mrb[0].mxu0
        %v7482 = vadd.f32 %v7363, %v7481
        %v7483 = vpop.f32.mrb[0].mxu0
        %7484 = vmatprep.mubr.bf16.mxu0 0
        %7485 = vmatmul.mubr.bf16.gmra.mrb[0].mxu0 %v7385
        %v7486 = vpop.f32.mrb[0].mxu0
        %v7487 = vadd.f32 %v7364, %v7486
        %v7488 = vpop.f32.mrb[0].mxu0
        %v7489 = vpop.f32.mrb[0].mxu0
        %v7490 = vadd.f32 %v7365, %v7489
        %v7491 = vpop.f32.mrb[0].mxu0
        %7492 = vmatprep.mubr.bf16.mxu0 0
        %7493 = vmatmul.mubr.bf16.gmra.mrb[0].mxu0 %v7388
        %v7494 = vpop.f32.mrb[0].mxu0
        %v7495 = vadd.f32 %v7366, %v7494
        %v7496 = vpop.f32.mrb[0].mxu0
        %v7497 = vpop.f32.mrb[0].mxu0
        %v7498 = vadd.f32 %v7367, %v7497
        %v7499 = vpop.f32.mrb[0].mxu0
        %7500 = vmatprep.mubr.bf16.mxu0 0
        %7501 = vmatmul.mubr.bf16.gmra.mrb[0].mxu0 %v7391
        %v7502 = vpop.f32.mrb[0].mxu0
        %v7503 = vadd.f32 %v7368, %v7502
        %v7504 = vpop.f32.mrb[0].mxu0
        %v7505 = vpop.f32.mrb[0].mxu0
        %v7506 = vadd.f32 %v7369, %v7505
        %v7507 = vpop.f32.mrb[0].mxu0
        %7508 = vmatprep.mubr.bf16.mxu0 0
        %7509 = vmatmul.mubr.bf16.gmra.mrb[0].mxu0 %v7394
        %v7510 = vpop.f32.mrb[0].mxu0
        %v7511 = vadd.f32 %v7370, %v7510
        %v7512 = vpop.f32.mrb[0].mxu0
        %v7513 = vpop.f32.mrb[0].mxu0
        %v7514 = vadd.f32 %v7371, %v7513
        %v7515 = vpop.f32.mrb[0].mxu0
        %7516 = vdwg.mxu0
        %v7517 = vmul.f32 %v7455, 1.442695
        %v7518 = vpow.pop %v7517
        %v7519 = vmul.f32 %v7458, 1.442695
        %v7520 = vpow.pop %v7519
        %v7521 = vmul.f32 %v7463, 1.442695
        %v7522 = vpow.pop %v7521
        %v7523 = vmul.f32 %v7466, 1.442695
        %v7524 = vpow.pop %v7523
        %v7525 = vmul.f32 %v7471, 1.442695
        %v7526 = vpow.pop %v7525
        %v7527 = vmul.f32 %v7474, 1.442695
        %v7528 = vpow.pop %v7527
        %v7529 = vmul.f32 %v7479, 1.442695
        %v7530 = vpow.pop %v7529
        %v7531 = vmul.f32 %v7482, 1.442695
        %v7532 = vpow.pop %v7531
        %v7533 = vmul.f32 %v7487, 1.442695
        %v7534 = vpow.pop %v7533
        %v7535 = vmul.f32 %v7490, 1.442695
        %v7536 = vpow.pop %v7535
        %v7537 = vmul.f32 %v7495, 1.442695
        %v7538 = vpow.pop %v7537
        %v7539 = vmul.f32 %v7498, 1.442695
        %v7540 = vpow.pop %v7539
        %v7541 = vmul.f32 %v7503, 1.442695
        %v7542 = vpow.pop %v7541
        %v7543 = vmul.f32 %v7506, 1.442695
        %v7544 = vpow.pop %v7543
        %v7545 = vmul.f32 %v7511, 1.442695
        %v7546 = vpow.pop %v7545
        %v7547 = vmul.f32 %v7514, 1.442695
        %v7548 = vpow.pop %v7547
        %7549 = vadd.xlane.f32.xlu0 %v7518
        %v7550 = vpop.xlane.xlu0 %7549
        %7551 = vadd.xlane.f32.xlu0 %v7520
        %v7552 = vpop.xlane.xlu0 %7551
        %7553 = vadd.xlane.f32.xlu0 %v7522
        %v7554 = vpop.xlane.xlu0 %7553
        %7555 = vadd.xlane.f32.xlu0 %v7524
        %v7556 = vpop.xlane.xlu0 %7555
        %7557 = vadd.xlane.f32.xlu0 %v7526
        %v7558 = vpop.xlane.xlu0 %7557
        %7559 = vadd.xlane.f32.xlu0 %v7528
        %v7560 = vpop.xlane.xlu0 %7559
        %7561 = vadd.xlane.f32.xlu0 %v7530
        %v7562 = vpop.xlane.xlu0 %7561
        %7563 = vadd.xlane.f32.xlu0 %v7532
        %v7564 = vpop.xlane.xlu0 %7563
        %7565 = vadd.xlane.f32.xlu0 %v7534
        %v7566 = vpop.xlane.xlu0 %7565
        %7567 = vadd.xlane.f32.xlu0 %v7536
        %v7568 = vpop.xlane.xlu0 %7567
        %7569 = vadd.xlane.f32.xlu0 %v7538
        %v7570 = vpop.xlane.xlu0 %7569
        %7571 = vadd.xlane.f32.xlu0 %v7540
        %v7572 = vpop.xlane.xlu0 %7571
        %7573 = vadd.xlane.f32.xlu0 %v7542
        %v7574 = vpop.xlane.xlu0 %7573
        %7575 = vadd.xlane.f32.xlu0 %v7544
        %v7576 = vpop.xlane.xlu0 %7575
        %7577 = vadd.xlane.f32.xlu0 %v7546
        %v7578 = vpop.xlane.xlu0 %7577
        %7579 = vadd.xlane.f32.xlu0 %v7548
        %v7580 = vpop.xlane.xlu0 %7579
        %v7581 = vrcp.pop %v7550
        %v7582 = vrcp.pop %v7552
        %v7583 = vrcp.pop %v7554
        %v7584 = vrcp.pop %v7556
        %v7585 = vrcp.pop %v7558
        %v7586 = vrcp.pop %v7560
        %v7587 = vrcp.pop %v7562
        %v7588 = vrcp.pop %v7564
        %v7589 = vrcp.pop %v7566
        %v7590 = vrcp.pop %v7568
        %v7591 = vrcp.pop %v7570
        %v7592 = vrcp.pop %v7572
        %v7593 = vrcp.pop %v7574
        %v7594 = vrcp.pop %v7576
        %v7595 = vrcp.pop %v7578
        %v7596 = vrcp.pop %v7580
        %v7597 = vmul.f32 %v7518, %v7581
        %v7598 = vmul.f32 %v7520, %v7582
        %v7599 = vmul.f32 %v7522, %v7583
        %v7600 = vmul.f32 %v7524, %v7584
        %v7601 = vmul.f32 %v7526, %v7585
        %v7602 = vmul.f32 %v7528, %v7586
        %v7603 = vmul.f32 %v7530, %v7587
        %v7604 = vmul.f32 %v7532, %v7588
        %v7605 = vmul.f32 %v7534, %v7589
        %v7606 = vmul.f32 %v7536, %v7590
        %v7607 = vmul.f32 %v7538, %v7591
        %v7608 = vmul.f32 %v7540, %v7592
        %v7609 = vmul.f32 %v7542, %v7593
        %v7610 = vmul.f32 %v7544, %v7594
        %v7611 = vmul.f32 %v7546, %v7595
        %v7612 = vmul.f32 %v7548, %v7596
        %v7613 = vpack.c.bf16 %v7598, %v7597
        %v7614 = vpack.c.bf16 %v7600, %v7599
        %v7615 = vpack.c.bf16 %v7602, %v7601
        %v7616 = vpack.c.bf16 %v7604, %v7603
        %v7617 = vpack.c.bf16 %v7606, %v7605
        %v7618 = vpack.c.bf16 %v7608, %v7607
        %v7619 = vpack.c.bf16 %v7610, %v7609
        %v7620 = vpack.c.bf16 %v7612, %v7611
        %v7621 = vpack.c.bf16 %v7280, %v7277
        %v7622 = vpack.c.bf16 %v7288, %v7285
        %v7623 = vpack.c.bf16 %v7296, %v7293
        %v7624 = vpack.c.bf16 %v7304, %v7301
        %v7625 = vpack.c.bf16 %v7312, %v7309
        %v7626 = vpack.c.bf16 %v7320, %v7317
        %v7627 = vpack.c.bf16 %v7328, %v7325
        %v7628 = vpack.c.bf16 %v7336, %v7333
        %7629 = vmatprep.subr.bf16.mxu0 0
        %7630 = vmatpush1.bf16.msra.mxu0 %v7621
        %7631 = vmatprep.subr.bf16.mxu0 0
        %7632 = vmatpush1.bf16.msra.mxu0 %v7622
        %7633 = vmatprep.subr.bf16.mxu0 0
        %7634 = vmatpush1.bf16.msra.mxu0 %v7623
        %7635 = vmatprep.subr.bf16.mxu0 0
        %7636 = vmatpush1.bf16.msra.mxu0 %v7624
        %7637 = vmatprep.subr.bf16.mxu0 0
        %7638 = vmatpush1.bf16.msra.mxu0 %v7625
        %7639 = vmatprep.subr.bf16.mxu0 0
        %7640 = vmatpush1.bf16.msra.mxu0 %v7626
        %7641 = vmatprep.subr.bf16.mxu0 0
        %7642 = vmatpush1.bf16.msra.mxu0 %v7627
        %7643 = vmatprep.subr.bf16.mxu0 0
        %7644 = vmatpush1.bf16.msra.mxu0 %v7628
        %7645 = vmatprep.subr.bf16.mxu0 0
        %7646 = vmatpush1.bf16.msra.mxu0 0
        %7647 = vmatprep.subr.bf16.mxu0 0
        %7648 = vmatpush1.bf16.msra.mxu0 0
        %7649 = vmatprep.subr.bf16.mxu0 0
        %7650 = vmatpush1.bf16.msra.mxu0 0
        %7651 = vmatprep.subr.bf16.mxu0 0
        %7652 = vmatpush1.bf16.msra.mxu0 0
        %7653 = vmatprep.subr.bf16.mxu0 0
        %7654 = vmatpush1.bf16.msra.mxu0 0
        %7655 = vmatprep.subr.bf16.mxu0 0
        %7656 = vmatpush1.bf16.msra.mxu0 0
        %7657 = vmatprep.subr.bf16.mxu0 0
        %7658 = vmatpush1.bf16.msra.mxu0 0
        %7659 = vmatprep.subr.bf16.mxu0 0
        %7660 = vmatpush1.bf16.msra.mxu0 0
        %7661 = vmatprep.mubr.bf16.mxu0 0
        %7662 = vmatmul.mubr.bf16.gmra.mrb[0].mxu0 %v7613
        %v7663 = vpop.f32.mrb[0].mxu0
        %v7664 = vadd.f32 0.0, %v7663
        %v7665 = vpop.f32.mrb[0].mxu0
        %v7666 = vpop.f32.mrb[0].mxu0
        %v7667 = vadd.f32 0.0, %v7666
        %v7668 = vpop.f32.mrb[0].mxu0
        %7669 = vmatprep.mubr.bf16.mxu0 0
        %7670 = vmatmul.mubr.bf16.gmra.mrb[0].mxu0 %v7614
        %v7671 = vpop.f32.mrb[0].mxu0
        %v7672 = vadd.f32 0.0, %v7671
        %v7673 = vpop.f32.mrb[0].mxu0
        %v7674 = vpop.f32.mrb[0].mxu0
        %v7675 = vadd.f32 0.0, %v7674
        %v7676 = vpop.f32.mrb[0].mxu0
        %7677 = vmatprep.mubr.bf16.mxu0 0
        %7678 = vmatmul.mubr.bf16.gmra.mrb[0].mxu0 %v7615
        %v7679 = vpop.f32.mrb[0].mxu0
        %v7680 = vadd.f32 0.0, %v7679
        %v7681 = vpop.f32.mrb[0].mxu0
        %v7682 = vpop.f32.mrb[0].mxu0
        %v7683 = vadd.f32 0.0, %v7682
        %v7684 = vpop.f32.mrb[0].mxu0
        %7685 = vmatprep.mubr.bf16.mxu0 0
        %7686 = vmatmul.mubr.bf16.gmra.mrb[0].mxu0 %v7616
        %v7687 = vpop.f32.mrb[0].mxu0
        %v7688 = vadd.f32 0.0, %v7687
        %v7689 = vpop.f32.mrb[0].mxu0
        %v7690 = vpop.f32.mrb[0].mxu0
        %v7691 = vadd.f32 0.0, %v7690
        %v7692 = vpop.f32.mrb[0].mxu0
        %7693 = vmatprep.mubr.bf16.mxu0 0
        %7694 = vmatmul.mubr.bf16.gmra.mrb[0].mxu0 %v7617
        %v7695 = vpop.f32.mrb[0].mxu0
        %v7696 = vadd.f32 0.0, %v7695
        %v7697 = vpop.f32.mrb[0].mxu0
        %v7698 = vpop.f32.mrb[0].mxu0
        %v7699 = vadd.f32 0.0, %v7698
        %v7700 = vpop.f32.mrb[0].mxu0
        %7701 = vmatprep.mubr.bf16.mxu0 0
        %7702 = vmatmul.mubr.bf16.gmra.mrb[0].mxu0 %v7618
        %v7703 = vpop.f32.mrb[0].mxu0
        %v7704 = vadd.f32 0.0, %v7703
        %v7705 = vpop.f32.mrb[0].mxu0
        %v7706 = vpop.f32.mrb[0].mxu0
        %v7707 = vadd.f32 0.0, %v7706
        %v7708 = vpop.f32.mrb[0].mxu0
        %7709 = vmatprep.mubr.bf16.mxu0 0
        %7710 = vmatmul.mubr.bf16.gmra.mrb[0].mxu0 %v7619
        %v7711 = vpop.f32.mrb[0].mxu0
        %v7712 = vadd.f32 0.0, %v7711
        %v7713 = vpop.f32.mrb[0].mxu0
        %v7714 = vpop.f32.mrb[0].mxu0
        %v7715 = vadd.f32 0.0, %v7714
        %v7716 = vpop.f32.mrb[0].mxu0
        %7717 = vmatprep.mubr.bf16.mxu0 0
        %7718 = vmatmul.mubr.bf16.gmra.mrb[0].mxu0 %v7620
        %v7719 = vpop.f32.mrb[0].mxu0
        %v7720 = vadd.f32 0.0, %v7719
        %v7721 = vpop.f32.mrb[0].mxu0
        %v7722 = vpop.f32.mrb[0].mxu0
        %v7723 = vadd.f32 0.0, %v7722
        %v7724 = vpop.f32.mrb[0].mxu0
        %7725 = vdwg.mxu0
        %v7726 = vadd.f32 %v6919, %v7664
        %v7727 = vadd.f32 %v6922, %v7667
        %v7728 = vadd.f32 %v6927, %v7672
        %v7729 = vadd.f32 %v6930, %v7675
        %v7730 = vadd.f32 %v6935, %v7680
        %v7731 = vadd.f32 %v6938, %v7683
        %v7732 = vadd.f32 %v6943, %v7688
        %v7733 = vadd.f32 %v6946, %v7691
        %v7734 = vadd.f32 %v6951, %v7696
        %v7735 = vadd.f32 %v6954, %v7699
        %v7736 = vadd.f32 %v6959, %v7704
        %v7737 = vadd.f32 %v6962, %v7707
        %v7738 = vadd.f32 %v6967, %v7712
        %v7739 = vadd.f32 %v6970, %v7715
        %v7740 = vadd.f32 %v6975, %v7720
        %v7741 = vadd.f32 %v6978, %v7723
        %s7742 = scalar_lea.vmem %s5, 112
        %v7743 = vld [vmem:[%s7742] sm:$0xf]
        %v7744 = vld [vmem:[%s7742 + $0x4] sm:$0xf]
        %v7745 = vld [vmem:[%s7742 + $0x8] sm:$0xf]
        %v7746 = vld [vmem:[%s7742 + $0xc] sm:$0xf]
        %s7747 = scalar_lea.vmem %s6, 7
        %v7748 = vld [vmem:[%s7747] sm:$0x1]
        %v7750 = vlaneseq
        %v7751 = vshrl.u32 %v7750, 7
        %v7752 = vsub.s32 0, %v7751
        %v7753 = vrot.slane %v7748, %v7752
        %v7759 = vunpack.c.l.b16 %v7743
        %v7760 = vunpack.c.l.b16 %v7744
        %v7761 = vunpack.c.l.b16 %v7745
        %v7762 = vunpack.c.l.b16 %v7746
        %v7763 = vpack.c.b16 %v7760, %v7759
        %v7764 = vpack.c.b16 %v7762, %v7761
        %7767 = vmatprep.subr.bf16.mxu0 0
        %7768 = vmatpush1.bf16.msra.mxu0 %v7763
        %7769 = vmatprep.subr.bf16.mxu0 0
        %7770 = vmatpush1.bf16.msra.mxu0 %v7764
        %7771 = vmatprep.subr.bf16.mxu0 0
        %7772 = vmatpush1.bf16.msra.mxu0 0
        %7773 = vmatprep.subr.bf16.mxu0 0
        %7774 = vmatpush1.bf16.msra.mxu0 0
        %7775 = vmatprep.subr.bf16.mxu0 0
        %7776 = vmatpush1.bf16.msra.mxu0 0
        %7777 = vmatprep.subr.bf16.mxu0 0
        %7778 = vmatpush1.bf16.msra.mxu0 0
        %7779 = vmatprep.subr.bf16.mxu0 0
        %7780 = vmatpush1.bf16.msra.mxu0 0
        %7781 = vmatprep.subr.bf16.mxu0 0
        %7782 = vmatpush1.bf16.msra.mxu0 0
        %7783 = vmatprep.subr.bf16.mxu0 0
        %7784 = vmatpush1.bf16.msra.mxu0 0
        %7785 = vmatprep.subr.bf16.mxu0 0
        %7786 = vmatpush1.bf16.msra.mxu0 0
        %7787 = vmatprep.subr.bf16.mxu0 0
        %7788 = vmatpush1.bf16.msra.mxu0 0
        %7789 = vmatprep.subr.bf16.mxu0 0
        %7790 = vmatpush1.bf16.msra.mxu0 0
        %7791 = vmatprep.subr.bf16.mxu0 0
        %7792 = vmatpush1.bf16.msra.mxu0 0
        %7793 = vmatprep.subr.bf16.mxu0 0
        %7794 = vmatpush1.bf16.msra.mxu0 0
        %7795 = vmatprep.subr.bf16.mxu0 0
        %7796 = vmatpush1.bf16.msra.mxu0 0
        %7797 = vmatprep.subr.bf16.mxu0 0
        %7798 = vmatpush1.bf16.msra.mxu0 0
        %7799 = vmatprep.mubr.bf16.mxu0 0
        %7800 = vmatmul.mubr.bf16.gmra.mrb[0].mxu0 %v5493
        %v7801 = vpop.f32.mrb[0].mxu0
        %v7802 = vadd.f32 %v7753, %v7801
        %v7803 = vpop.f32.mrb[0].mxu0
        %v7804 = vpop.f32.mrb[0].mxu0
        %v7805 = vadd.f32 %v7753, %v7804
        %v7806 = vpop.f32.mrb[0].mxu0
        %7807 = vmatprep.mubr.bf16.mxu0 0
        %7808 = vmatmul.mubr.bf16.gmra.mrb[0].mxu0 %v5496
        %v7809 = vpop.f32.mrb[0].mxu0
        %v7810 = vadd.f32 %v7753, %v7809
        %v7811 = vpop.f32.mrb[0].mxu0
        %v7812 = vpop.f32.mrb[0].mxu0
        %v7813 = vadd.f32 %v7753, %v7812
        %v7814 = vpop.f32.mrb[0].mxu0
        %7815 = vmatprep.mubr.bf16.mxu0 0
        %7816 = vmatmul.mubr.bf16.gmra.mrb[0].mxu0 %v5499
        %v7817 = vpop.f32.mrb[0].mxu0
        %v7818 = vadd.f32 %v7753, %v7817
        %v7819 = vpop.f32.mrb[0].mxu0
        %v7820 = vpop.f32.mrb[0].mxu0
        %v7821 = vadd.f32 %v7753, %v7820
        %v7822 = vpop.f32.mrb[0].mxu0
        %7823 = vmatprep.mubr.bf16.mxu0 0
        %7824 = vmatmul.mubr.bf16.gmra.mrb[0].mxu0 %v5502
        %v7825 = vpop.f32.mrb[0].mxu0
        %v7826 = vadd.f32 %v7753, %v7825
        %v7827 = vpop.f32.mrb[0].mxu0
        %v7828 = vpop.f32.mrb[0].mxu0
        %v7829 = vadd.f32 %v7753, %v7828
        %v7830 = vpop.f32.mrb[0].mxu0
        %7831 = vmatprep.mubr.bf16.mxu0 0
        %7832 = vmatmul.mubr.bf16.gmra.mrb[0].mxu0 %v5505
        %v7833 = vpop.f32.mrb[0].mxu0
        %v7834 = vadd.f32 %v7753, %v7833
        %v7835 = vpop.f32.mrb[0].mxu0
        %v7836 = vpop.f32.mrb[0].mxu0
        %v7837 = vadd.f32 %v7753, %v7836
        %v7838 = vpop.f32.mrb[0].mxu0
        %7839 = vmatprep.mubr.bf16.mxu0 0
        %7840 = vmatmul.mubr.bf16.gmra.mrb[0].mxu0 %v5508
        %v7841 = vpop.f32.mrb[0].mxu0
        %v7842 = vadd.f32 %v7753, %v7841
        %v7843 = vpop.f32.mrb[0].mxu0
        %v7844 = vpop.f32.mrb[0].mxu0
        %v7845 = vadd.f32 %v7753, %v7844
        %v7846 = vpop.f32.mrb[0].mxu0
        %7847 = vmatprep.mubr.bf16.mxu0 0
        %7848 = vmatmul.mubr.bf16.gmra.mrb[0].mxu0 %v5511
        %v7849 = vpop.f32.mrb[0].mxu0
        %v7850 = vadd.f32 %v7753, %v7849
        %v7851 = vpop.f32.mrb[0].mxu0
        %v7852 = vpop.f32.mrb[0].mxu0
        %v7853 = vadd.f32 %v7753, %v7852
        %v7854 = vpop.f32.mrb[0].mxu0
        %7855 = vmatprep.mubr.bf16.mxu0 0
        %7856 = vmatmul.mubr.bf16.gmra.mrb[0].mxu0 %v5514
        %v7857 = vpop.f32.mrb[0].mxu0
        %v7858 = vadd.f32 %v7753, %v7857
        %v7859 = vpop.f32.mrb[0].mxu0
        %v7860 = vpop.f32.mrb[0].mxu0
        %v7861 = vadd.f32 %v7753, %v7860
        %v7862 = vpop.f32.mrb[0].mxu0
        %7863 = vdwg.mxu0
        %s7864 = scalar_lea.vmem %s7, 112
        %v7865 = vld [vmem:[%s7864] sm:$0xf]
        %v7866 = vld [vmem:[%s7864 + $0x4] sm:$0xf]
        %v7867 = vld [vmem:[%s7864 + $0x8] sm:$0xf]
        %v7868 = vld [vmem:[%s7864 + $0xc] sm:$0xf]
        %v7873 = vunpack.c.l.b16 %v7865
        %v7874 = vunpack.c.l.b16 %v7866
        %v7875 = vunpack.c.l.b16 %v7867
        %v7876 = vunpack.c.l.b16 %v7868
        %v7877 = vpack.c.b16 %v7874, %v7873
        %v7878 = vpack.c.b16 %v7876, %v7875
        %7881 = vmatprep.subr.bf16.mxu0 0
        %7882 = vmatpush1.bf16.msra.mxu0 %v7877
        %7883 = vmatprep.subr.bf16.mxu0 0
        %7884 = vmatpush1.bf16.msra.mxu0 %v7878
        %7885 = vmatprep.subr.bf16.mxu0 0
        %7886 = vmatpush1.bf16.msra.mxu0 0
        %7887 = vmatprep.subr.bf16.mxu0 0
        %7888 = vmatpush1.bf16.msra.mxu0 0
        %7889 = vmatprep.subr.bf16.mxu0 0
        %7890 = vmatpush1.bf16.msra.mxu0 0
        %7891 = vmatprep.subr.bf16.mxu0 0
        %7892 = vmatpush1.bf16.msra.mxu0 0
        %7893 = vmatprep.subr.bf16.mxu0 0
        %7894 = vmatpush1.bf16.msra.mxu0 0
        %7895 = vmatprep.subr.bf16.mxu0 0
        %7896 = vmatpush1.bf16.msra.mxu0 0
        %7897 = vmatprep.subr.bf16.mxu0 0
        %7898 = vmatpush1.bf16.msra.mxu0 0
        %7899 = vmatprep.subr.bf16.mxu0 0
        %7900 = vmatpush1.bf16.msra.mxu0 0
        %7901 = vmatprep.subr.bf16.mxu0 0
        %7902 = vmatpush1.bf16.msra.mxu0 0
        %7903 = vmatprep.subr.bf16.mxu0 0
        %7904 = vmatpush1.bf16.msra.mxu0 0
        %7905 = vmatprep.subr.bf16.mxu0 0
        %7906 = vmatpush1.bf16.msra.mxu0 0
        %7907 = vmatprep.subr.bf16.mxu0 0
        %7908 = vmatpush1.bf16.msra.mxu0 0
        %7909 = vmatprep.subr.bf16.mxu0 0
        %7910 = vmatpush1.bf16.msra.mxu0 0
        %7911 = vmatprep.subr.bf16.mxu0 0
        %7912 = vmatpush1.bf16.msra.mxu0 0
        %7913 = vmatprep.mubr.bf16.mxu0 0
        %7914 = vmatmul.mubr.bf16.gmra.mrb[0].mxu0 %v5493
        %v7915 = vpop.f32.mrb[0].mxu0
        %v7916 = vadd.f32 0.0, %v7915
        %v7917 = vpop.f32.mrb[0].mxu0
        %v7918 = vpop.f32.mrb[0].mxu0
        %v7919 = vadd.f32 0.0, %v7918
        %v7920 = vpop.f32.mrb[0].mxu0
        %7921 = vmatprep.mubr.bf16.mxu0 0
        %7922 = vmatmul.mubr.bf16.gmra.mrb[0].mxu0 %v5496
        %v7923 = vpop.f32.mrb[0].mxu0
        %v7924 = vadd.f32 0.0, %v7923
        %v7925 = vpop.f32.mrb[0].mxu0
        %v7926 = vpop.f32.mrb[0].mxu0
        %v7927 = vadd.f32 0.0, %v7926
        %v7928 = vpop.f32.mrb[0].mxu0
        %7929 = vmatprep.mubr.bf16.mxu0 0
        %7930 = vmatmul.mubr.bf16.gmra.mrb[0].mxu0 %v5499
        %v7931 = vpop.f32.mrb[0].mxu0
        %v7932 = vadd.f32 0.0, %v7931
        %v7933 = vpop.f32.mrb[0].mxu0
        %v7934 = vpop.f32.mrb[0].mxu0
        %v7935 = vadd.f32 0.0, %v7934
        %v7936 = vpop.f32.mrb[0].mxu0
        %7937 = vmatprep.mubr.bf16.mxu0 0
        %7938 = vmatmul.mubr.bf16.gmra.mrb[0].mxu0 %v5502
        %v7939 = vpop.f32.mrb[0].mxu0
        %v7940 = vadd.f32 0.0, %v7939
        %v7941 = vpop.f32.mrb[0].mxu0
        %v7942 = vpop.f32.mrb[0].mxu0
        %v7943 = vadd.f32 0.0, %v7942
        %v7944 = vpop.f32.mrb[0].mxu0
        %7945 = vmatprep.mubr.bf16.mxu0 0
        %7946 = vmatmul.mubr.bf16.gmra.mrb[0].mxu0 %v5505
        %v7947 = vpop.f32.mrb[0].mxu0
        %v7948 = vadd.f32 0.0, %v7947
        %v7949 = vpop.f32.mrb[0].mxu0
        %v7950 = vpop.f32.mrb[0].mxu0
        %v7951 = vadd.f32 0.0, %v7950
        %v7952 = vpop.f32.mrb[0].mxu0
        %7953 = vmatprep.mubr.bf16.mxu0 0
        %7954 = vmatmul.mubr.bf16.gmra.mrb[0].mxu0 %v5508
        %v7955 = vpop.f32.mrb[0].mxu0
        %v7956 = vadd.f32 0.0, %v7955
        %v7957 = vpop.f32.mrb[0].mxu0
        %v7958 = vpop.f32.mrb[0].mxu0
        %v7959 = vadd.f32 0.0, %v7958
        %v7960 = vpop.f32.mrb[0].mxu0
        %7961 = vmatprep.mubr.bf16.mxu0 0
        %7962 = vmatmul.mubr.bf16.gmra.mrb[0].mxu0 %v5511
        %v7963 = vpop.f32.mrb[0].mxu0
        %v7964 = vadd.f32 0.0, %v7963
        %v7965 = vpop.f32.mrb[0].mxu0
        %v7966 = vpop.f32.mrb[0].mxu0
        %v7967 = vadd.f32 0.0, %v7966
        %v7968 = vpop.f32.mrb[0].mxu0
        %7969 = vmatprep.mubr.bf16.mxu0 0
        %7970 = vmatmul.mubr.bf16.gmra.mrb[0].mxu0 %v5514
        %v7971 = vpop.f32.mrb[0].mxu0
        %v7972 = vadd.f32 0.0, %v7971
        %v7973 = vpop.f32.mrb[0].mxu0
        %v7974 = vpop.f32.mrb[0].mxu0
        %v7975 = vadd.f32 0.0, %v7974
        %v7976 = vpop.f32.mrb[0].mxu0
        %7977 = vdwg.mxu0
        %s7978 = scalar_lea.vmem %s8, 112
        %v7979 = vld [vmem:[%s7978] sm:$0xf]
        %v7980 = vld [vmem:[%s7978 + $0x4] sm:$0xf]
        %v7981 = vld [vmem:[%s7978 + $0x8] sm:$0xf]
        %v7982 = vld [vmem:[%s7978 + $0xc] sm:$0xf]
        %s7983 = scalar_lea.vmem [#allocation2], 7
        %v7984 = vld [vmem:[%s7983] sm:$0x1]
        %v7986 = vlaneseq
        %v7987 = vshrl.u32 %v7986, 7
        %v7988 = vsub.s32 0, %v7987
        %v7989 = vrot.slane %v7984, %v7988
        %v7995 = vunpack.c.l.b16 %v7979
        %v7996 = vunpack.c.l.b16 %v7980
        %v7997 = vunpack.c.l.b16 %v7981
        %v7998 = vunpack.c.l.b16 %v7982
        %v7999 = vpack.c.b16 %v7996, %v7995
        %v8000 = vpack.c.b16 %v7998, %v7997
        %8003 = vmatprep.subr.bf16.mxu0 0
        %8004 = vmatpush1.bf16.msra.mxu0 %v7999
        %8005 = vmatprep.subr.bf16.mxu0 0
        %8006 = vmatpush1.bf16.msra.mxu0 %v8000
        %8007 = vmatprep.subr.bf16.mxu0 0
        %8008 = vmatpush1.bf16.msra.mxu0 0
        %8009 = vmatprep.subr.bf16.mxu0 0
        %8010 = vmatpush1.bf16.msra.mxu0 0
        %8011 = vmatprep.subr.bf16.mxu0 0
        %8012 = vmatpush1.bf16.msra.mxu0 0
        %8013 = vmatprep.subr.bf16.mxu0 0
        %8014 = vmatpush1.bf16.msra.mxu0 0
        %8015 = vmatprep.subr.bf16.mxu0 0
        %8016 = vmatpush1.bf16.msra.mxu0 0
        %8017 = vmatprep.subr.bf16.mxu0 0
        %8018 = vmatpush1.bf16.msra.mxu0 0
        %8019 = vmatprep.subr.bf16.mxu0 0
        %8020 = vmatpush1.bf16.msra.mxu0 0
        %8021 = vmatprep.subr.bf16.mxu0 0
        %8022 = vmatpush1.bf16.msra.mxu0 0
        %8023 = vmatprep.subr.bf16.mxu0 0
        %8024 = vmatpush1.bf16.msra.mxu0 0
        %8025 = vmatprep.subr.bf16.mxu0 0
        %8026 = vmatpush1.bf16.msra.mxu0 0
        %8027 = vmatprep.subr.bf16.mxu0 0
        %8028 = vmatpush1.bf16.msra.mxu0 0
        %8029 = vmatprep.subr.bf16.mxu0 0
        %8030 = vmatpush1.bf16.msra.mxu0 0
        %8031 = vmatprep.subr.bf16.mxu0 0
        %8032 = vmatpush1.bf16.msra.mxu0 0
        %8033 = vmatprep.subr.bf16.mxu0 0
        %8034 = vmatpush1.bf16.msra.mxu0 0
        %8035 = vmatprep.mubr.bf16.mxu0 0
        %8036 = vmatmul.mubr.bf16.gmra.mrb[0].mxu0 %v5493
        %v8037 = vpop.f32.mrb[0].mxu0
        %v8038 = vadd.f32 %v7989, %v8037
        %v8039 = vpop.f32.mrb[0].mxu0
        %v8040 = vpop.f32.mrb[0].mxu0
        %v8041 = vadd.f32 %v7989, %v8040
        %v8042 = vpop.f32.mrb[0].mxu0
        %8043 = vmatprep.mubr.bf16.mxu0 0
        %8044 = vmatmul.mubr.bf16.gmra.mrb[0].mxu0 %v5496
        %v8045 = vpop.f32.mrb[0].mxu0
        %v8046 = vadd.f32 %v7989, %v8045
        %v8047 = vpop.f32.mrb[0].mxu0
        %v8048 = vpop.f32.mrb[0].mxu0
        %v8049 = vadd.f32 %v7989, %v8048
        %v8050 = vpop.f32.mrb[0].mxu0
        %8051 = vmatprep.mubr.bf16.mxu0 0
        %8052 = vmatmul.mubr.bf16.gmra.mrb[0].mxu0 %v5499
        %v8053 = vpop.f32.mrb[0].mxu0
        %v8054 = vadd.f32 %v7989, %v8053
        %v8055 = vpop.f32.mrb[0].mxu0
        %v8056 = vpop.f32.mrb[0].mxu0
        %v8057 = vadd.f32 %v7989, %v8056
        %v8058 = vpop.f32.mrb[0].mxu0
        %8059 = vmatprep.mubr.bf16.mxu0 0
        %8060 = vmatmul.mubr.bf16.gmra.mrb[0].mxu0 %v5502
        %v8061 = vpop.f32.mrb[0].mxu0
        %v8062 = vadd.f32 %v7989, %v8061
        %v8063 = vpop.f32.mrb[0].mxu0
        %v8064 = vpop.f32.mrb[0].mxu0
        %v8065 = vadd.f32 %v7989, %v8064
        %v8066 = vpop.f32.mrb[0].mxu0
        %8067 = vmatprep.mubr.bf16.mxu0 0
        %8068 = vmatmul.mubr.bf16.gmra.mrb[0].mxu0 %v5505
        %v8069 = vpop.f32.mrb[0].mxu0
        %v8070 = vadd.f32 %v7989, %v8069
        %v8071 = vpop.f32.mrb[0].mxu0
        %v8072 = vpop.f32.mrb[0].mxu0
        %v8073 = vadd.f32 %v7989, %v8072
        %v8074 = vpop.f32.mrb[0].mxu0
        %8075 = vmatprep.mubr.bf16.mxu0 0
        %8076 = vmatmul.mubr.bf16.gmra.mrb[0].mxu0 %v5508
        %v8077 = vpop.f32.mrb[0].mxu0
        %v8078 = vadd.f32 %v7989, %v8077
        %v8079 = vpop.f32.mrb[0].mxu0
        %v8080 = vpop.f32.mrb[0].mxu0
        %v8081 = vadd.f32 %v7989, %v8080
        %v8082 = vpop.f32.mrb[0].mxu0
        %8083 = vmatprep.mubr.bf16.mxu0 0
        %8084 = vmatmul.mubr.bf16.gmra.mrb[0].mxu0 %v5511
        %v8085 = vpop.f32.mrb[0].mxu0
        %v8086 = vadd.f32 %v7989, %v8085
        %v8087 = vpop.f32.mrb[0].mxu0
        %v8088 = vpop.f32.mrb[0].mxu0
        %v8089 = vadd.f32 %v7989, %v8088
        %v8090 = vpop.f32.mrb[0].mxu0
        %8091 = vmatprep.mubr.bf16.mxu0 0
        %8092 = vmatmul.mubr.bf16.gmra.mrb[0].mxu0 %v5514
        %v8093 = vpop.f32.mrb[0].mxu0
        %v8094 = vadd.f32 %v7989, %v8093
        %v8095 = vpop.f32.mrb[0].mxu0
        %v8096 = vpop.f32.mrb[0].mxu0
        %v8097 = vadd.f32 %v7989, %v8096
        %v8098 = vpop.f32.mrb[0].mxu0
        %8099 = vdwg.mxu0
        %v8100 = vpack.c.bf16 %v7805, %v7802
        %v8101 = vpack.c.bf16 %v7813, %v7810
        %v8102 = vpack.c.bf16 %v7821, %v7818
        %v8103 = vpack.c.bf16 %v7829, %v7826
        %v8104 = vpack.c.bf16 %v7837, %v7834
        %v8105 = vpack.c.bf16 %v7845, %v7842
        %v8106 = vpack.c.bf16 %v7853, %v7850
        %v8107 = vpack.c.bf16 %v7861, %v7858
        %v8108 = vpack.c.bf16 %v7919, %v7916
        %v8109 = vpack.c.bf16 %v7927, %v7924
        %v8110 = vpack.c.bf16 %v7935, %v7932
        %v8111 = vpack.c.bf16 %v7943, %v7940
        %v8112 = vpack.c.bf16 %v7951, %v7948
        %v8113 = vpack.c.bf16 %v7959, %v7956
        %v8114 = vpack.c.bf16 %v7967, %v7964
        %v8115 = vpack.c.bf16 %v7975, %v7972
        %s8116 = scalar_lea.vmem %s11, 896
        %v8117 = vld [vmem:[%s8116] sm:$0xff]
        %v8118 = vld [vmem:[%s8116 + $0x8] sm:$0xff]
        %v8119 = vld [vmem:[%s8116 + $0x10] sm:$0xff]
        %v8120 = vld [vmem:[%s8116 + $0x18] sm:$0xff]
        %v8121 = vld [vmem:[%s8116 + $0x20] sm:$0xff]
        %v8122 = vld [vmem:[%s8116 + $0x28] sm:$0xff]
        %v8123 = vld [vmem:[%s8116 + $0x30] sm:$0xff]
        %v8124 = vld [vmem:[%s8116 + $0x38] sm:$0xff]
        %v8125 = vld [vmem:[%s8116 + $0x40] sm:$0xff]
        %v8126 = vld [vmem:[%s8116 + $0x48] sm:$0xff]
        %v8127 = vld [vmem:[%s8116 + $0x50] sm:$0xff]
        %v8128 = vld [vmem:[%s8116 + $0x58] sm:$0xff]
        %v8129 = vld [vmem:[%s8116 + $0x60] sm:$0xff]
        %v8130 = vld [vmem:[%s8116 + $0x68] sm:$0xff]
        %v8131 = vld [vmem:[%s8116 + $0x70] sm:$0xff]
        %v8132 = vld [vmem:[%s8116 + $0x78] sm:$0xff]
        %v8134 = vsel %vm1784, %v8100, 0
        %v8137 = vsel %vm1784, %v8101, 0
        %v8140 = vsel %vm1784, %v8102, 0
        %v8143 = vsel %vm1784, %v8103, 0
        %v8146 = vsel %vm1784, %v8104, 0
        %v8149 = vsel %vm1784, %v8105, 0
        %v8152 = vsel %vm1784, %v8106, 0
        %v8155 = vsel %vm1784, %v8107, 0
        %v8158 = vsel %vm1784, %v8108, 0
        %v8161 = vsel %vm1784, %v8109, 0
        %v8164 = vsel %vm1784, %v8110, 0
        %v8167 = vsel %vm1784, %v8111, 0
        %v8170 = vsel %vm1784, %v8112, 0
        %v8173 = vsel %vm1784, %v8113, 0
        %v8176 = vsel %vm1784, %v8114, 0
        %v8179 = vsel %vm1784, %v8115, 0
        %8181 = vmatprep.subr.bf16.mxu0 0
        %8182 = vmatpush1.bf16.xpose.msra.mxu0 %v8158
        %8183 = vmatprep.subr.bf16.mxu0 0
        %8184 = vmatpush1.bf16.xpose.msra.mxu0 %v8161
        %8185 = vmatprep.subr.bf16.mxu0 0
        %8186 = vmatpush1.bf16.xpose.msra.mxu0 %v8164
        %8187 = vmatprep.subr.bf16.mxu0 0
        %8188 = vmatpush1.bf16.xpose.msra.mxu0 %v8167
        %8189 = vmatprep.subr.bf16.mxu0 0
        %8190 = vmatpush1.bf16.xpose.msra.mxu0 %v8170
        %8191 = vmatprep.subr.bf16.mxu0 0
        %8192 = vmatpush1.bf16.xpose.msra.mxu0 %v8173
        %8193 = vmatprep.subr.bf16.mxu0 0
        %8194 = vmatpush1.bf16.xpose.msra.mxu0 %v8176
        %8195 = vmatprep.subr.bf16.mxu0 0
        %8196 = vmatpush1.bf16.xpose.msra.mxu0 %v8179
        %8197 = vmatprep.subr.bf16.mxu0 0
        %8198 = vmatpush1.bf16.xpose.msra.mxu0 0
        %8199 = vmatprep.subr.bf16.mxu0 0
        %8200 = vmatpush1.bf16.xpose.msra.mxu0 0
        %8201 = vmatprep.subr.bf16.mxu0 0
        %8202 = vmatpush1.bf16.xpose.msra.mxu0 0
        %8203 = vmatprep.subr.bf16.mxu0 0
        %8204 = vmatpush1.bf16.xpose.msra.mxu0 0
        %8205 = vmatprep.subr.bf16.mxu0 0
        %8206 = vmatpush1.bf16.xpose.msra.mxu0 0
        %8207 = vmatprep.subr.bf16.mxu0 0
        %8208 = vmatpush1.bf16.xpose.msra.mxu0 0
        %8209 = vmatprep.subr.bf16.mxu0 0
        %8210 = vmatpush1.bf16.xpose.msra.mxu0 0
        %8211 = vmatprep.subr.bf16.mxu0 0
        %8212 = vmatpush1.bf16.xpose.msra.mxu0 0
        %8213 = vmatprep.mubr.bf16.mxu0 0
        %8214 = vmatmul.mubr.bf16.gmra.mrb[0].mxu0 %v8134
        %v8215 = vpop.f32.mrb[0].mxu0
        %v8216 = vadd.f32 %v8117, %v8215
        %v8217 = vpop.f32.mrb[0].mxu0
        %v8218 = vpop.f32.mrb[0].mxu0
        %v8219 = vadd.f32 %v8118, %v8218
        %v8220 = vpop.f32.mrb[0].mxu0
        %8221 = vmatprep.mubr.bf16.mxu0 0
        %8222 = vmatmul.mubr.bf16.gmra.mrb[0].mxu0 %v8137
        %v8223 = vpop.f32.mrb[0].mxu0
        %v8224 = vadd.f32 %v8119, %v8223
        %v8225 = vpop.f32.mrb[0].mxu0
        %v8226 = vpop.f32.mrb[0].mxu0
        %v8227 = vadd.f32 %v8120, %v8226
        %v8228 = vpop.f32.mrb[0].mxu0
        %8229 = vmatprep.mubr.bf16.mxu0 0
        %8230 = vmatmul.mubr.bf16.gmra.mrb[0].mxu0 %v8140
        %v8231 = vpop.f32.mrb[0].mxu0
        %v8232 = vadd.f32 %v8121, %v8231
        %v8233 = vpop.f32.mrb[0].mxu0
        %v8234 = vpop.f32.mrb[0].mxu0
        %v8235 = vadd.f32 %v8122, %v8234
        %v8236 = vpop.f32.mrb[0].mxu0
        %8237 = vmatprep.mubr.bf16.mxu0 0
        %8238 = vmatmul.mubr.bf16.gmra.mrb[0].mxu0 %v8143
        %v8239 = vpop.f32.mrb[0].mxu0
        %v8240 = vadd.f32 %v8123, %v8239
        %v8241 = vpop.f32.mrb[0].mxu0
        %v8242 = vpop.f32.mrb[0].mxu0
        %v8243 = vadd.f32 %v8124, %v8242
        %v8244 = vpop.f32.mrb[0].mxu0
        %8245 = vmatprep.mubr.bf16.mxu0 0
        %8246 = vmatmul.mubr.bf16.gmra.mrb[0].mxu0 %v8146
        %v8247 = vpop.f32.mrb[0].mxu0
        %v8248 = vadd.f32 %v8125, %v8247
        %v8249 = vpop.f32.mrb[0].mxu0
        %v8250 = vpop.f32.mrb[0].mxu0
        %v8251 = vadd.f32 %v8126, %v8250
        %v8252 = vpop.f32.mrb[0].mxu0
        %8253 = vmatprep.mubr.bf16.mxu0 0
        %8254 = vmatmul.mubr.bf16.gmra.mrb[0].mxu0 %v8149
        %v8255 = vpop.f32.mrb[0].mxu0
        %v8256 = vadd.f32 %v8127, %v8255
        %v8257 = vpop.f32.mrb[0].mxu0
        %v8258 = vpop.f32.mrb[0].mxu0
        %v8259 = vadd.f32 %v8128, %v8258
        %v8260 = vpop.f32.mrb[0].mxu0
        %8261 = vmatprep.mubr.bf16.mxu0 0
        %8262 = vmatmul.mubr.bf16.gmra.mrb[0].mxu0 %v8152
        %v8263 = vpop.f32.mrb[0].mxu0
        %v8264 = vadd.f32 %v8129, %v8263
        %v8265 = vpop.f32.mrb[0].mxu0
        %v8266 = vpop.f32.mrb[0].mxu0
        %v8267 = vadd.f32 %v8130, %v8266
        %v8268 = vpop.f32.mrb[0].mxu0
        %8269 = vmatprep.mubr.bf16.mxu0 0
        %8270 = vmatmul.mubr.bf16.gmra.mrb[0].mxu0 %v8155
        %v8271 = vpop.f32.mrb[0].mxu0
        %v8272 = vadd.f32 %v8131, %v8271
        %v8273 = vpop.f32.mrb[0].mxu0
        %v8274 = vpop.f32.mrb[0].mxu0
        %v8275 = vadd.f32 %v8132, %v8274
        %v8276 = vpop.f32.mrb[0].mxu0
        %8277 = vdwg.mxu0
        %v8278 = vmul.f32 %v8216, 1.442695
        %v8279 = vpow.pop %v8278
        %v8280 = vmul.f32 %v8219, 1.442695
        %v8281 = vpow.pop %v8280
        %v8282 = vmul.f32 %v8224, 1.442695
        %v8283 = vpow.pop %v8282
        %v8284 = vmul.f32 %v8227, 1.442695
        %v8285 = vpow.pop %v8284
        %v8286 = vmul.f32 %v8232, 1.442695
        %v8287 = vpow.pop %v8286
        %v8288 = vmul.f32 %v8235, 1.442695
        %v8289 = vpow.pop %v8288
        %v8290 = vmul.f32 %v8240, 1.442695
        %v8291 = vpow.pop %v8290
        %v8292 = vmul.f32 %v8243, 1.442695
        %v8293 = vpow.pop %v8292
        %v8294 = vmul.f32 %v8248, 1.442695
        %v8295 = vpow.pop %v8294
        %v8296 = vmul.f32 %v8251, 1.442695
        %v8297 = vpow.pop %v8296
        %v8298 = vmul.f32 %v8256, 1.442695
        %v8299 = vpow.pop %v8298
        %v8300 = vmul.f32 %v8259, 1.442695
        %v8301 = vpow.pop %v8300
        %v8302 = vmul.f32 %v8264, 1.442695
        %v8303 = vpow.pop %v8302
        %v8304 = vmul.f32 %v8267, 1.442695
        %v8305 = vpow.pop %v8304
        %v8306 = vmul.f32 %v8272, 1.442695
        %v8307 = vpow.pop %v8306
        %v8308 = vmul.f32 %v8275, 1.442695
        %v8309 = vpow.pop %v8308
        %8310 = vadd.xlane.f32.xlu0 %v8279
        %v8311 = vpop.xlane.xlu0 %8310
        %8312 = vadd.xlane.f32.xlu0 %v8281
        %v8313 = vpop.xlane.xlu0 %8312
        %8314 = vadd.xlane.f32.xlu0 %v8283
        %v8315 = vpop.xlane.xlu0 %8314
        %8316 = vadd.xlane.f32.xlu0 %v8285
        %v8317 = vpop.xlane.xlu0 %8316
        %8318 = vadd.xlane.f32.xlu0 %v8287
        %v8319 = vpop.xlane.xlu0 %8318
        %8320 = vadd.xlane.f32.xlu0 %v8289
        %v8321 = vpop.xlane.xlu0 %8320
        %8322 = vadd.xlane.f32.xlu0 %v8291
        %v8323 = vpop.xlane.xlu0 %8322
        %8324 = vadd.xlane.f32.xlu0 %v8293
        %v8325 = vpop.xlane.xlu0 %8324
        %8326 = vadd.xlane.f32.xlu0 %v8295
        %v8327 = vpop.xlane.xlu0 %8326
        %8328 = vadd.xlane.f32.xlu0 %v8297
        %v8329 = vpop.xlane.xlu0 %8328
        %8330 = vadd.xlane.f32.xlu0 %v8299
        %v8331 = vpop.xlane.xlu0 %8330
        %8332 = vadd.xlane.f32.xlu0 %v8301
        %v8333 = vpop.xlane.xlu0 %8332
        %8334 = vadd.xlane.f32.xlu0 %v8303
        %v8335 = vpop.xlane.xlu0 %8334
        %8336 = vadd.xlane.f32.xlu0 %v8305
        %v8337 = vpop.xlane.xlu0 %8336
        %8338 = vadd.xlane.f32.xlu0 %v8307
        %v8339 = vpop.xlane.xlu0 %8338
        %8340 = vadd.xlane.f32.xlu0 %v8309
        %v8341 = vpop.xlane.xlu0 %8340
        %v8342 = vrcp.pop %v8311
        %v8343 = vrcp.pop %v8313
        %v8344 = vrcp.pop %v8315
        %v8345 = vrcp.pop %v8317
        %v8346 = vrcp.pop %v8319
        %v8347 = vrcp.pop %v8321
        %v8348 = vrcp.pop %v8323
        %v8349 = vrcp.pop %v8325
        %v8350 = vrcp.pop %v8327
        %v8351 = vrcp.pop %v8329
        %v8352 = vrcp.pop %v8331
        %v8353 = vrcp.pop %v8333
        %v8354 = vrcp.pop %v8335
        %v8355 = vrcp.pop %v8337
        %v8356 = vrcp.pop %v8339
        %v8357 = vrcp.pop %v8341
        %v8358 = vmul.f32 %v8279, %v8342
        %v8359 = vmul.f32 %v8281, %v8343
        %v8360 = vmul.f32 %v8283, %v8344
        %v8361 = vmul.f32 %v8285, %v8345
        %v8362 = vmul.f32 %v8287, %v8346
        %v8363 = vmul.f32 %v8289, %v8347
        %v8364 = vmul.f32 %v8291, %v8348
        %v8365 = vmul.f32 %v8293, %v8349
        %v8366 = vmul.f32 %v8295, %v8350
        %v8367 = vmul.f32 %v8297, %v8351
        %v8368 = vmul.f32 %v8299, %v8352
        %v8369 = vmul.f32 %v8301, %v8353
        %v8370 = vmul.f32 %v8303, %v8354
        %v8371 = vmul.f32 %v8305, %v8355
        %v8372 = vmul.f32 %v8307, %v8356
        %v8373 = vmul.f32 %v8309, %v8357
        %v8374 = vpack.c.bf16 %v8359, %v8358
        %v8375 = vpack.c.bf16 %v8361, %v8360
        %v8376 = vpack.c.bf16 %v8363, %v8362
        %v8377 = vpack.c.bf16 %v8365, %v8364
        %v8378 = vpack.c.bf16 %v8367, %v8366
        %v8379 = vpack.c.bf16 %v8369, %v8368
        %v8380 = vpack.c.bf16 %v8371, %v8370
        %v8381 = vpack.c.bf16 %v8373, %v8372
        %v8382 = vpack.c.bf16 %v8041, %v8038
        %v8383 = vpack.c.bf16 %v8049, %v8046
        %v8384 = vpack.c.bf16 %v8057, %v8054
        %v8385 = vpack.c.bf16 %v8065, %v8062
        %v8386 = vpack.c.bf16 %v8073, %v8070
        %v8387 = vpack.c.bf16 %v8081, %v8078
        %v8388 = vpack.c.bf16 %v8089, %v8086
        %v8389 = vpack.c.bf16 %v8097, %v8094
        %8390 = vmatprep.subr.bf16.mxu0 0
        %8391 = vmatpush1.bf16.msra.mxu0 %v8382
        %8392 = vmatprep.subr.bf16.mxu0 0
        %8393 = vmatpush1.bf16.msra.mxu0 %v8383
        %8394 = vmatprep.subr.bf16.mxu0 0
        %8395 = vmatpush1.bf16.msra.mxu0 %v8384
        %8396 = vmatprep.subr.bf16.mxu0 0
        %8397 = vmatpush1.bf16.msra.mxu0 %v8385
        %8398 = vmatprep.subr.bf16.mxu0 0
        %8399 = vmatpush1.bf16.msra.mxu0 %v8386
        %8400 = vmatprep.subr.bf16.mxu0 0
        %8401 = vmatpush1.bf16.msra.mxu0 %v8387
        %8402 = vmatprep.subr.bf16.mxu0 0
        %8403 = vmatpush1.bf16.msra.mxu0 %v8388
        %8404 = vmatprep.subr.bf16.mxu0 0
        %8405 = vmatpush1.bf16.msra.mxu0 %v8389
        %8406 = vmatprep.subr.bf16.mxu0 0
        %8407 = vmatpush1.bf16.msra.mxu0 0
        %8408 = vmatprep.subr.bf16.mxu0 0
        %8409 = vmatpush1.bf16.msra.mxu0 0
        %8410 = vmatprep.subr.bf16.mxu0 0
        %8411 = vmatpush1.bf16.msra.mxu0 0
        %8412 = vmatprep.subr.bf16.mxu0 0
        %8413 = vmatpush1.bf16.msra.mxu0 0
        %8414 = vmatprep.subr.bf16.mxu0 0
        %8415 = vmatpush1.bf16.msra.mxu0 0
        %8416 = vmatprep.subr.bf16.mxu0 0
        %8417 = vmatpush1.bf16.msra.mxu0 0
        %8418 = vmatprep.subr.bf16.mxu0 0
        %8419 = vmatpush1.bf16.msra.mxu0 0
        %8420 = vmatprep.subr.bf16.mxu0 0
        %8421 = vmatpush1.bf16.msra.mxu0 0
        %8422 = vmatprep.mubr.bf16.mxu0 0
        %8423 = vmatmul.mubr.bf16.gmra.mrb[0].mxu0 %v8374
        %v8424 = vpop.f32.mrb[0].mxu0
        %v8425 = vadd.f32 0.0, %v8424
        %v8426 = vpop.f32.mrb[0].mxu0
        %v8427 = vpop.f32.mrb[0].mxu0
        %v8428 = vadd.f32 0.0, %v8427
        %v8429 = vpop.f32.mrb[0].mxu0
        %8430 = vmatprep.mubr.bf16.mxu0 0
        %8431 = vmatmul.mubr.bf16.gmra.mrb[0].mxu0 %v8375
        %v8432 = vpop.f32.mrb[0].mxu0
        %v8433 = vadd.f32 0.0, %v8432
        %v8434 = vpop.f32.mrb[0].mxu0
        %v8435 = vpop.f32.mrb[0].mxu0
        %v8436 = vadd.f32 0.0, %v8435
        %v8437 = vpop.f32.mrb[0].mxu0
        %8438 = vmatprep.mubr.bf16.mxu0 0
        %8439 = vmatmul.mubr.bf16.gmra.mrb[0].mxu0 %v8376
        %v8440 = vpop.f32.mrb[0].mxu0
        %v8441 = vadd.f32 0.0, %v8440
        %v8442 = vpop.f32.mrb[0].mxu0
        %v8443 = vpop.f32.mrb[0].mxu0
        %v8444 = vadd.f32 0.0, %v8443
        %v8445 = vpop.f32.mrb[0].mxu0
        %8446 = vmatprep.mubr.bf16.mxu0 0
        %8447 = vmatmul.mubr.bf16.gmra.mrb[0].mxu0 %v8377
        %v8448 = vpop.f32.mrb[0].mxu0
        %v8449 = vadd.f32 0.0, %v8448
        %v8450 = vpop.f32.mrb[0].mxu0
        %v8451 = vpop.f32.mrb[0].mxu0
        %v8452 = vadd.f32 0.0, %v8451
        %v8453 = vpop.f32.mrb[0].mxu0
        %8454 = vmatprep.mubr.bf16.mxu0 0
        %8455 = vmatmul.mubr.bf16.gmra.mrb[0].mxu0 %v8378
        %v8456 = vpop.f32.mrb[0].mxu0
        %v8457 = vadd.f32 0.0, %v8456
        %v8458 = vpop.f32.mrb[0].mxu0
        %v8459 = vpop.f32.mrb[0].mxu0
        %v8460 = vadd.f32 0.0, %v8459
        %v8461 = vpop.f32.mrb[0].mxu0
        %8462 = vmatprep.mubr.bf16.mxu0 0
        %8463 = vmatmul.mubr.bf16.gmra.mrb[0].mxu0 %v8379
        %v8464 = vpop.f32.mrb[0].mxu0
        %v8465 = vadd.f32 0.0, %v8464
        %v8466 = vpop.f32.mrb[0].mxu0
        %v8467 = vpop.f32.mrb[0].mxu0
        %v8468 = vadd.f32 0.0, %v8467
        %v8469 = vpop.f32.mrb[0].mxu0
        %8470 = vmatprep.mubr.bf16.mxu0 0
        %8471 = vmatmul.mubr.bf16.gmra.mrb[0].mxu0 %v8380
        %v8472 = vpop.f32.mrb[0].mxu0
        %v8473 = vadd.f32 0.0, %v8472
        %v8474 = vpop.f32.mrb[0].mxu0
        %v8475 = vpop.f32.mrb[0].mxu0
        %v8476 = vadd.f32 0.0, %v8475
        %v8477 = vpop.f32.mrb[0].mxu0
        %8478 = vmatprep.mubr.bf16.mxu0 0
        %8479 = vmatmul.mubr.bf16.gmra.mrb[0].mxu0 %v8381
        %v8480 = vpop.f32.mrb[0].mxu0
        %v8481 = vadd.f32 0.0, %v8480
        %v8482 = vpop.f32.mrb[0].mxu0
        %v8483 = vpop.f32.mrb[0].mxu0
        %v8484 = vadd.f32 0.0, %v8483
        %v8485 = vpop.f32.mrb[0].mxu0
        %8486 = vdwg.mxu0
        %v8487 = vadd.f32 %v7726, %v8425
        %v8488 = vadd.f32 %v7727, %v8428
        %v8489 = vadd.f32 %v7728, %v8433
        %v8490 = vadd.f32 %v7729, %v8436
        %v8491 = vadd.f32 %v7730, %v8441
        %v8492 = vadd.f32 %v7731, %v8444
        %v8493 = vadd.f32 %v7732, %v8449
        %v8494 = vadd.f32 %v7733, %v8452
        %v8495 = vadd.f32 %v7734, %v8457
        %v8496 = vadd.f32 %v7735, %v8460
        %v8497 = vadd.f32 %v7736, %v8465
        %v8498 = vadd.f32 %v7737, %v8468
        %v8499 = vadd.f32 %v7738, %v8473
        %v8500 = vadd.f32 %v7739, %v8476
        %v8501 = vadd.f32 %v7740, %v8481
        %v8502 = vadd.f32 %v7741, %v8484
        %v8503 = vadd.f32 %v5187, %v8487
        %v8504 = vadd.f32 %v5188, %v8488
        %v8505 = vadd.f32 %v5189, %v8489
        %v8506 = vadd.f32 %v5190, %v8490
        %v8507 = vadd.f32 %v5191, %v8491
        %v8508 = vadd.f32 %v5192, %v8492
        %v8509 = vadd.f32 %v5193, %v8493
        %v8510 = vadd.f32 %v5194, %v8494
        %v8511 = vadd.f32 %v5195, %v8495
        %v8512 = vadd.f32 %v5196, %v8496
        %v8513 = vadd.f32 %v5197, %v8497
        %v8514 = vadd.f32 %v5198, %v8498
        %v8515 = vadd.f32 %v5199, %v8499
        %v8516 = vadd.f32 %v5200, %v8500
        %v8517 = vadd.f32 %v5201, %v8501
        %v8518 = vadd.f32 %v5202, %v8502
        %s8519 = scalar_lea.vmem [#allocation5], 1
        %v8520 = vld [vmem:[%s8519] sm:$0x1]
        %v8522 = vlaneseq
        %v8523 = vshrl.u32 %v8522, 7
        %v8524 = vsub.s32 0, %v8523
        %v8525 = vrot.slane %v8520, %v8524
        %v8527 = vadd.f32 %v8503, %v8525
        %v8528 = vadd.f32 %v8504, %v8525
        %v8529 = vadd.f32 %v8505, %v8525
        %v8530 = vadd.f32 %v8506, %v8525
        %v8531 = vadd.f32 %v8507, %v8525
        %v8532 = vadd.f32 %v8508, %v8525
        %v8533 = vadd.f32 %v8509, %v8525
        %v8534 = vadd.f32 %v8510, %v8525
        %v8535 = vadd.f32 %v8511, %v8525
        %v8536 = vadd.f32 %v8512, %v8525
        %v8537 = vadd.f32 %v8513, %v8525
        %v8538 = vadd.f32 %v8514, %v8525
        %v8539 = vadd.f32 %v8515, %v8525
        %v8540 = vadd.f32 %v8516, %v8525
        %v8541 = vadd.f32 %v8517, %v8525
        %v8542 = vadd.f32 %v8518, %v8525
        %s8543 = scalar_lea.vmem [#allocation7], 1
        %v8544 = vld [vmem:[%s8543] sm:$0x1]
        %s8545 = scalar_lea.vmem [#allocation8], 1
        %v8546 = vld [vmem:[%s8545] sm:$0x1]
        %v8547 = vsel %vm1113, %v8527, 0.0
        %8548 = vadd.xlane.f32.xlu0 %v8547
        %v8549 = vpop.xlane.xlu0 %8548
        %v8550 = vsel %vm1113, %v8528, 0.0
        %8551 = vadd.xlane.f32.xlu0 %v8550
        %v8552 = vpop.xlane.xlu0 %8551
        %v8553 = vsel %vm1113, %v8529, 0.0
        %8554 = vadd.xlane.f32.xlu0 %v8553
        %v8555 = vpop.xlane.xlu0 %8554
        %v8556 = vsel %vm1113, %v8530, 0.0
        %8557 = vadd.xlane.f32.xlu0 %v8556
        %v8558 = vpop.xlane.xlu0 %8557
        %v8559 = vsel %vm1113, %v8531, 0.0
        %8560 = vadd.xlane.f32.xlu0 %v8559
        %v8561 = vpop.xlane.xlu0 %8560
        %v8562 = vsel %vm1113, %v8532, 0.0
        %8563 = vadd.xlane.f32.xlu0 %v8562
        %v8564 = vpop.xlane.xlu0 %8563
        %v8565 = vsel %vm1113, %v8533, 0.0
        %8566 = vadd.xlane.f32.xlu0 %v8565
        %v8567 = vpop.xlane.xlu0 %8566
        %v8568 = vsel %vm1113, %v8534, 0.0
        %8569 = vadd.xlane.f32.xlu0 %v8568
        %v8570 = vpop.xlane.xlu0 %8569
        %v8571 = vsel %vm1113, %v8535, 0.0
        %8572 = vadd.xlane.f32.xlu0 %v8571
        %v8573 = vpop.xlane.xlu0 %8572
        %v8574 = vsel %vm1113, %v8536, 0.0
        %8575 = vadd.xlane.f32.xlu0 %v8574
        %v8576 = vpop.xlane.xlu0 %8575
        %v8577 = vsel %vm1113, %v8537, 0.0
        %8578 = vadd.xlane.f32.xlu0 %v8577
        %v8579 = vpop.xlane.xlu0 %8578
        %v8580 = vsel %vm1113, %v8538, 0.0
        %8581 = vadd.xlane.f32.xlu0 %v8580
        %v8582 = vpop.xlane.xlu0 %8581
        %v8583 = vsel %vm1113, %v8539, 0.0
        %8584 = vadd.xlane.f32.xlu0 %v8583
        %v8585 = vpop.xlane.xlu0 %8584
        %v8586 = vsel %vm1113, %v8540, 0.0
        %8587 = vadd.xlane.f32.xlu0 %v8586
        %v8588 = vpop.xlane.xlu0 %8587
        %v8589 = vsel %vm1113, %v8541, 0.0
        %8590 = vadd.xlane.f32.xlu0 %v8589
        %v8591 = vpop.xlane.xlu0 %8590
        %v8592 = vsel %vm1113, %v8542, 0.0
        %8593 = vadd.xlane.f32.xlu0 %v8592
        %v8594 = vpop.xlane.xlu0 %8593
        %v8595 = vmul.f32 %v8549, %v1162
        %v8596 = vmul.f32 %v8552, %v1162
        %v8597 = vmul.f32 %v8555, %v1162
        %v8598 = vmul.f32 %v8558, %v1162
        %v8599 = vmul.f32 %v8561, %v1162
        %v8600 = vmul.f32 %v8564, %v1162
        %v8601 = vmul.f32 %v8567, %v1162
        %v8602 = vmul.f32 %v8570, %v1162
        %v8603 = vmul.f32 %v8573, %v1162
        %v8604 = vmul.f32 %v8576, %v1162
        %v8605 = vmul.f32 %v8579, %v1162
        %v8606 = vmul.f32 %v8582, %v1162
        %v8607 = vmul.f32 %v8585, %v1162
        %v8608 = vmul.f32 %v8588, %v1162
        %v8609 = vmul.f32 %v8591, %v1162
        %v8610 = vmul.f32 %v8594, %v1162
        %v8611 = vsub.f32 %v8527, %v8595
        %v8612 = vsub.f32 %v8528, %v8596
        %v8613 = vsub.f32 %v8529, %v8597
        %v8614 = vsub.f32 %v8530, %v8598
        %v8615 = vsub.f32 %v8531, %v8599
        %v8616 = vsub.f32 %v8532, %v8600
        %v8617 = vsub.f32 %v8533, %v8601
        %v8618 = vsub.f32 %v8534, %v8602
        %v8619 = vsub.f32 %v8535, %v8603
        %v8620 = vsub.f32 %v8536, %v8604
        %v8621 = vsub.f32 %v8537, %v8605
        %v8622 = vsub.f32 %v8538, %v8606
        %v8623 = vsub.f32 %v8539, %v8607
        %v8624 = vsub.f32 %v8540, %v8608
        %v8625 = vsub.f32 %v8541, %v8609
        %v8626 = vsub.f32 %v8542, %v8610
        %v8627 = vmul.f32 %v8611, %v8611
        %v8628 = vmul.f32 %v8612, %v8612
        %v8629 = vmul.f32 %v8613, %v8613
        %v8630 = vmul.f32 %v8614, %v8614
        %v8631 = vmul.f32 %v8615, %v8615
        %v8632 = vmul.f32 %v8616, %v8616
        %v8633 = vmul.f32 %v8617, %v8617
        %v8634 = vmul.f32 %v8618, %v8618
        %v8635 = vmul.f32 %v8619, %v8619
        %v8636 = vmul.f32 %v8620, %v8620
        %v8637 = vmul.f32 %v8621, %v8621
        %v8638 = vmul.f32 %v8622, %v8622
        %v8639 = vmul.f32 %v8623, %v8623
        %v8640 = vmul.f32 %v8624, %v8624
        %v8641 = vmul.f32 %v8625, %v8625
        %v8642 = vmul.f32 %v8626, %v8626
        %v8643 = vsel %vm1113, %v8627, 0.0
        %8644 = vadd.xlane.f32.xlu0 %v8643
        %v8645 = vpop.xlane.xlu0 %8644
        %v8646 = vsel %vm1113, %v8628, 0.0
        %8647 = vadd.xlane.f32.xlu0 %v8646
        %v8648 = vpop.xlane.xlu0 %8647
        %v8649 = vsel %vm1113, %v8629, 0.0
        %8650 = vadd.xlane.f32.xlu0 %v8649
        %v8651 = vpop.xlane.xlu0 %8650
        %v8652 = vsel %vm1113, %v8630, 0.0
        %8653 = vadd.xlane.f32.xlu0 %v8652
        %v8654 = vpop.xlane.xlu0 %8653
        %v8655 = vsel %vm1113, %v8631, 0.0
        %8656 = vadd.xlane.f32.xlu0 %v8655
        %v8657 = vpop.xlane.xlu0 %8656
        %v8658 = vsel %vm1113, %v8632, 0.0
        %8659 = vadd.xlane.f32.xlu0 %v8658
        %v8660 = vpop.xlane.xlu0 %8659
        %v8661 = vsel %vm1113, %v8633, 0.0
        %8662 = vadd.xlane.f32.xlu0 %v8661
        %v8663 = vpop.xlane.xlu0 %8662
        %v8664 = vsel %vm1113, %v8634, 0.0
        %8665 = vadd.xlane.f32.xlu0 %v8664
        %v8666 = vpop.xlane.xlu0 %8665
        %v8667 = vsel %vm1113, %v8635, 0.0
        %8668 = vadd.xlane.f32.xlu0 %v8667
        %v8669 = vpop.xlane.xlu0 %8668
        %v8670 = vsel %vm1113, %v8636, 0.0
        %8671 = vadd.xlane.f32.xlu0 %v8670
        %v8672 = vpop.xlane.xlu0 %8671
        %v8673 = vsel %vm1113, %v8637, 0.0
        %8674 = vadd.xlane.f32.xlu0 %v8673
        %v8675 = vpop.xlane.xlu0 %8674
        %v8676 = vsel %vm1113, %v8638, 0.0
        %8677 = vadd.xlane.f32.xlu0 %v8676
        %v8678 = vpop.xlane.xlu0 %8677
        %v8679 = vsel %vm1113, %v8639, 0.0
        %8680 = vadd.xlane.f32.xlu0 %v8679
        %v8681 = vpop.xlane.xlu0 %8680
        %v8682 = vsel %vm1113, %v8640, 0.0
        %8683 = vadd.xlane.f32.xlu0 %v8682
        %v8684 = vpop.xlane.xlu0 %8683
        %v8685 = vsel %vm1113, %v8641, 0.0
        %8686 = vadd.xlane.f32.xlu0 %v8685
        %v8687 = vpop.xlane.xlu0 %8686
        %v8688 = vsel %vm1113, %v8642, 0.0
        %8689 = vadd.xlane.f32.xlu0 %v8688
        %v8690 = vpop.xlane.xlu0 %8689
        %v8691 = vmul.f32 %v8645, %v1162
        %v8692 = vmul.f32 %v8648, %v1162
        %v8693 = vmul.f32 %v8651, %v1162
        %v8694 = vmul.f32 %v8654, %v1162
        %v8695 = vmul.f32 %v8657, %v1162
        %v8696 = vmul.f32 %v8660, %v1162
        %v8697 = vmul.f32 %v8663, %v1162
        %v8698 = vmul.f32 %v8666, %v1162
        %v8699 = vmul.f32 %v8669, %v1162
        %v8700 = vmul.f32 %v8672, %v1162
        %v8701 = vmul.f32 %v8675, %v1162
        %v8702 = vmul.f32 %v8678, %v1162
        %v8703 = vmul.f32 %v8681, %v1162
        %v8704 = vmul.f32 %v8684, %v1162
        %v8705 = vmul.f32 %v8687, %v1162
        %v8706 = vmul.f32 %v8690, %v1162
        %v8707 = vadd.f32 %v8691, 1e-06
        %v8708 = vadd.f32 %v8692, 1e-06
        %v8709 = vadd.f32 %v8693, 1e-06
        %v8710 = vadd.f32 %v8694, 1e-06
        %v8711 = vadd.f32 %v8695, 1e-06
        %v8712 = vadd.f32 %v8696, 1e-06
        %v8713 = vadd.f32 %v8697, 1e-06
        %v8714 = vadd.f32 %v8698, 1e-06
        %v8715 = vadd.f32 %v8699, 1e-06
        %v8716 = vadd.f32 %v8700, 1e-06
        %v8717 = vadd.f32 %v8701, 1e-06
        %v8718 = vadd.f32 %v8702, 1e-06
        %v8719 = vadd.f32 %v8703, 1e-06
        %v8720 = vadd.f32 %v8704, 1e-06
        %v8721 = vadd.f32 %v8705, 1e-06
        %v8722 = vadd.f32 %v8706, 1e-06
        %v8723 = vrsqrt.pop %v8707
        %v8724 = vrsqrt.pop %v8708
        %v8725 = vrsqrt.pop %v8709
        %v8726 = vrsqrt.pop %v8710
        %v8727 = vrsqrt.pop %v8711
        %v8728 = vrsqrt.pop %v8712
        %v8729 = vrsqrt.pop %v8713
        %v8730 = vrsqrt.pop %v8714
        %v8731 = vrsqrt.pop %v8715
        %v8732 = vrsqrt.pop %v8716
        %v8733 = vrsqrt.pop %v8717
        %v8734 = vrsqrt.pop %v8718
        %v8735 = vrsqrt.pop %v8719
        %v8736 = vrsqrt.pop %v8720
        %v8737 = vrsqrt.pop %v8721
        %v8738 = vrsqrt.pop %v8722
        %v8739 = vmul.f32 %v8611, %v8723
        %v8740 = vmul.f32 %v8612, %v8724
        %v8741 = vmul.f32 %v8613, %v8725
        %v8742 = vmul.f32 %v8614, %v8726
        %v8743 = vmul.f32 %v8615, %v8727
        %v8744 = vmul.f32 %v8616, %v8728
        %v8745 = vmul.f32 %v8617, %v8729
        %v8746 = vmul.f32 %v8618, %v8730
        %v8747 = vmul.f32 %v8619, %v8731
        %v8748 = vmul.f32 %v8620, %v8732
        %v8749 = vmul.f32 %v8621, %v8733
        %v8750 = vmul.f32 %v8622, %v8734
        %v8751 = vmul.f32 %v8623, %v8735
        %v8752 = vmul.f32 %v8624, %v8736
        %v8753 = vmul.f32 %v8625, %v8737
        %v8754 = vmul.f32 %v8626, %v8738
        %v8756 = vlaneseq
        %v8757 = vshrl.u32 %v8756, 7
        %v8758 = vsub.s32 0, %v8757
        %v8759 = vrot.slane %v8544, %v8758
        %v8761 = vmul.f32 %v8739, %v8759
        %v8762 = vmul.f32 %v8740, %v8759
        %v8763 = vmul.f32 %v8741, %v8759
        %v8764 = vmul.f32 %v8742, %v8759
        %v8765 = vmul.f32 %v8743, %v8759
        %v8766 = vmul.f32 %v8744, %v8759
        %v8767 = vmul.f32 %v8745, %v8759
        %v8768 = vmul.f32 %v8746, %v8759
        %v8769 = vmul.f32 %v8747, %v8759
        %v8770 = vmul.f32 %v8748, %v8759
        %v8771 = vmul.f32 %v8749, %v8759
        %v8772 = vmul.f32 %v8750, %v8759
        %v8773 = vmul.f32 %v8751, %v8759
        %v8774 = vmul.f32 %v8752, %v8759
        %v8775 = vmul.f32 %v8753, %v8759
        %v8776 = vmul.f32 %v8754, %v8759
        %v8778 = vlaneseq
        %v8779 = vshrl.u32 %v8778, 7
        %v8780 = vsub.s32 0, %v8779
        %v8781 = vrot.slane %v8546, %v8780
        %v8783 = vadd.f32 %v8761, %v8781
        %v8784 = vadd.f32 %v8762, %v8781
        %v8785 = vadd.f32 %v8763, %v8781
        %v8786 = vadd.f32 %v8764, %v8781
        %v8787 = vadd.f32 %v8765, %v8781
        %v8788 = vadd.f32 %v8766, %v8781
        %v8789 = vadd.f32 %v8767, %v8781
        %v8790 = vadd.f32 %v8768, %v8781
        %v8791 = vadd.f32 %v8769, %v8781
        %v8792 = vadd.f32 %v8770, %v8781
        %v8793 = vadd.f32 %v8771, %v8781
        %v8794 = vadd.f32 %v8772, %v8781
        %v8795 = vadd.f32 %v8773, %v8781
        %v8796 = vadd.f32 %v8774, %v8781
        %v8797 = vadd.f32 %v8775, %v8781
        %v8798 = vadd.f32 %v8776, %v8781
        %v8799 = vpack.c.bf16 %v8784, %v8783
        %v8800 = vpack.c.bf16 %v8786, %v8785
        %v8801 = vpack.c.bf16 %v8788, %v8787
        %v8802 = vpack.c.bf16 %v8790, %v8789
        %v8803 = vpack.c.bf16 %v8792, %v8791
        %v8804 = vpack.c.bf16 %v8794, %v8793
        %v8805 = vpack.c.bf16 %v8796, %v8795
        %v8806 = vpack.c.bf16 %v8798, %v8797
        %s8807 = scalar_lea.vmem %s14, 16
        %v8808 = vld [vmem:[%s8807] sm:$0xf]
        %v8809 = vld [vmem:[%s8807 + $0x4] sm:$0xf]
        %v8810 = vld [vmem:[%s8807 + $0x8] sm:$0xf]
        %v8811 = vld [vmem:[%s8807 + $0xc] sm:$0xf]
        %s8812 = scalar_lea.vmem [#allocation10], 1
        %v8813 = vld [vmem:[%s8812] sm:$0x1]
        %v8815 = vlaneseq
        %v8816 = vshrl.u32 %v8815, 7
        %v8817 = vsub.s32 0, %v8816
        %v8818 = vrot.slane %v8813, %v8817
        %v8824 = vunpack.c.l.b16 %v8808
        %v8825 = vunpack.c.l.b16 %v8809
        %v8826 = vunpack.c.l.b16 %v8810
        %v8827 = vunpack.c.l.b16 %v8811
        %v8828 = vpack.c.b16 %v8825, %v8824
        %v8829 = vpack.c.b16 %v8827, %v8826
        %v8833 = vsel %vm1113, %v8799, 0
        %v8836 = vsel %vm1113, %v8800, 0
        %v8839 = vsel %vm1113, %v8801, 0
        %v8842 = vsel %vm1113, %v8802, 0
        %v8845 = vsel %vm1113, %v8803, 0
        %v8848 = vsel %vm1113, %v8804, 0
        %v8851 = vsel %vm1113, %v8805, 0
        %v8854 = vsel %vm1113, %v8806, 0
        %8856 = vmatprep.subr.bf16.mxu0 0
        %8857 = vmatpush1.bf16.msra.mxu0 %v8828
        %8858 = vmatprep.subr.bf16.mxu0 0
        %8859 = vmatpush1.bf16.msra.mxu0 %v8829
        %8860 = vmatprep.subr.bf16.mxu0 0
        %8861 = vmatpush1.bf16.msra.mxu0 0
        %8862 = vmatprep.subr.bf16.mxu0 0
        %8863 = vmatpush1.bf16.msra.mxu0 0
        %8864 = vmatprep.subr.bf16.mxu0 0
        %8865 = vmatpush1.bf16.msra.mxu0 0
        %8866 = vmatprep.subr.bf16.mxu0 0
        %8867 = vmatpush1.bf16.msra.mxu0 0
        %8868 = vmatprep.subr.bf16.mxu0 0
        %8869 = vmatpush1.bf16.msra.mxu0 0
        %8870 = vmatprep.subr.bf16.mxu0 0
        %8871 = vmatpush1.bf16.msra.mxu0 0
        %8872 = vmatprep.subr.bf16.mxu0 0
        %8873 = vmatpush1.bf16.msra.mxu0 0
        %8874 = vmatprep.subr.bf16.mxu0 0
        %8875 = vmatpush1.bf16.msra.mxu0 0
        %8876 = vmatprep.subr.bf16.mxu0 0
        %8877 = vmatpush1.bf16.msra.mxu0 0
        %8878 = vmatprep.subr.bf16.mxu0 0
        %8879 = vmatpush1.bf16.msra.mxu0 0
        %8880 = vmatprep.subr.bf16.mxu0 0
        %8881 = vmatpush1.bf16.msra.mxu0 0
        %8882 = vmatprep.subr.bf16.mxu0 0
        %8883 = vmatpush1.bf16.msra.mxu0 0
        %8884 = vmatprep.subr.bf16.mxu0 0
        %8885 = vmatpush1.bf16.msra.mxu0 0
        %8886 = vmatprep.subr.bf16.mxu0 0
        %8887 = vmatpush1.bf16.msra.mxu0 0
        %8888 = vmatprep.mubr.bf16.mxu0 0
        %8889 = vmatmul.mubr.bf16.gmra.mrb[0].mxu0 %v8833
        %v8890 = vpop.f32.mrb[0].mxu0
        %v8891 = vadd.f32 %v8818, %v8890
        %v8892 = vpop.f32.mrb[0].mxu0
        %v8893 = vpop.f32.mrb[0].mxu0
        %v8894 = vadd.f32 %v8818, %v8893
        %v8895 = vpop.f32.mrb[0].mxu0
        %8896 = vmatprep.mubr.bf16.mxu0 0
        %8897 = vmatmul.mubr.bf16.gmra.mrb[0].mxu0 %v8836
        %v8898 = vpop.f32.mrb[0].mxu0
        %v8899 = vadd.f32 %v8818, %v8898
        %v8900 = vpop.f32.mrb[0].mxu0
        %v8901 = vpop.f32.mrb[0].mxu0
        %v8902 = vadd.f32 %v8818, %v8901
        %v8903 = vpop.f32.mrb[0].mxu0
        %8904 = vmatprep.mubr.bf16.mxu0 0
        %8905 = vmatmul.mubr.bf16.gmra.mrb[0].mxu0 %v8839
        %v8906 = vpop.f32.mrb[0].mxu0
        %v8907 = vadd.f32 %v8818, %v8906
        %v8908 = vpop.f32.mrb[0].mxu0
        %v8909 = vpop.f32.mrb[0].mxu0
        %v8910 = vadd.f32 %v8818, %v8909
        %v8911 = vpop.f32.mrb[0].mxu0
        %8912 = vmatprep.mubr.bf16.mxu0 0
        %8913 = vmatmul.mubr.bf16.gmra.mrb[0].mxu0 %v8842
        %v8914 = vpop.f32.mrb[0].mxu0
        %v8915 = vadd.f32 %v8818, %v8914
        %v8916 = vpop.f32.mrb[0].mxu0
        %v8917 = vpop.f32.mrb[0].mxu0
        %v8918 = vadd.f32 %v8818, %v8917
        %v8919 = vpop.f32.mrb[0].mxu0
        %8920 = vmatprep.mubr.bf16.mxu0 0
        %8921 = vmatmul.mubr.bf16.gmra.mrb[0].mxu0 %v8845
        %v8922 = vpop.f32.mrb[0].mxu0
        %v8923 = vadd.f32 %v8818, %v8922
        %v8924 = vpop.f32.mrb[0].mxu0
        %v8925 = vpop.f32.mrb[0].mxu0
        %v8926 = vadd.f32 %v8818, %v8925
        %v8927 = vpop.f32.mrb[0].mxu0
        %8928 = vmatprep.mubr.bf16.mxu0 0
        %8929 = vmatmul.mubr.bf16.gmra.mrb[0].mxu0 %v8848
        %v8930 = vpop.f32.mrb[0].mxu0
        %v8931 = vadd.f32 %v8818, %v8930
        %v8932 = vpop.f32.mrb[0].mxu0
        %v8933 = vpop.f32.mrb[0].mxu0
        %v8934 = vadd.f32 %v8818, %v8933
        %v8935 = vpop.f32.mrb[0].mxu0
        %8936 = vmatprep.mubr.bf16.mxu0 0
        %8937 = vmatmul.mubr.bf16.gmra.mrb[0].mxu0 %v8851
        %v8938 = vpop.f32.mrb[0].mxu0
        %v8939 = vadd.f32 %v8818, %v8938
        %v8940 = vpop.f32.mrb[0].mxu0
        %v8941 = vpop.f32.mrb[0].mxu0
        %v8942 = vadd.f32 %v8818, %v8941
        %v8943 = vpop.f32.mrb[0].mxu0
        %8944 = vmatprep.mubr.bf16.mxu0 0
        %8945 = vmatmul.mubr.bf16.gmra.mrb[0].mxu0 %v8854
        %v8946 = vpop.f32.mrb[0].mxu0
        %v8947 = vadd.f32 %v8818, %v8946
        %v8948 = vpop.f32.mrb[0].mxu0
        %v8949 = vpop.f32.mrb[0].mxu0
        %v8950 = vadd.f32 %v8818, %v8949
        %v8951 = vpop.f32.mrb[0].mxu0
        %8952 = vdwg.mxu0
        %v8953 = vmul.f32 %v8891, 0.5
        %v8954 = vmul.f32 %v8894, 0.5
        %v8955 = vmul.f32 %v8899, 0.5
        %v8956 = vmul.f32 %v8902, 0.5
        %v8957 = vmul.f32 %v8907, 0.5
        %v8958 = vmul.f32 %v8910, 0.5
        %v8959 = vmul.f32 %v8915, 0.5
        %v8960 = vmul.f32 %v8918, 0.5
        %v8961 = vmul.f32 %v8923, 0.5
        %v8962 = vmul.f32 %v8926, 0.5
        %v8963 = vmul.f32 %v8931, 0.5
        %v8964 = vmul.f32 %v8934, 0.5
        %v8965 = vmul.f32 %v8939, 0.5
        %v8966 = vmul.f32 %v8942, 0.5
        %v8967 = vmul.f32 %v8947, 0.5
        %v8968 = vmul.f32 %v8950, 0.5
        %v8969 = vmul.f32 %v8891, 0.044715
        %v8970 = vmul.f32 %v8894, 0.044715
        %v8971 = vmul.f32 %v8899, 0.044715
        %v8972 = vmul.f32 %v8902, 0.044715
        %v8973 = vmul.f32 %v8907, 0.044715
        %v8974 = vmul.f32 %v8910, 0.044715
        %v8975 = vmul.f32 %v8915, 0.044715
        %v8976 = vmul.f32 %v8918, 0.044715
        %v8977 = vmul.f32 %v8923, 0.044715
        %v8978 = vmul.f32 %v8926, 0.044715
        %v8979 = vmul.f32 %v8931, 0.044715
        %v8980 = vmul.f32 %v8934, 0.044715
        %v8981 = vmul.f32 %v8939, 0.044715
        %v8982 = vmul.f32 %v8942, 0.044715
        %v8983 = vmul.f32 %v8947, 0.044715
        %v8984 = vmul.f32 %v8950, 0.044715
        %v8985 = vmul.f32 %v8969, %v8891
        %v8986 = vmul.f32 %v8970, %v8894
        %v8987 = vmul.f32 %v8971, %v8899
        %v8988 = vmul.f32 %v8972, %v8902
        %v8989 = vmul.f32 %v8973, %v8907
        %v8990 = vmul.f32 %v8974, %v8910
        %v8991 = vmul.f32 %v8975, %v8915
        %v8992 = vmul.f32 %v8976, %v8918
        %v8993 = vmul.f32 %v8977, %v8923
        %v8994 = vmul.f32 %v8978, %v8926
        %v8995 = vmul.f32 %v8979, %v8931
        %v8996 = vmul.f32 %v8980, %v8934
        %v8997 = vmul.f32 %v8981, %v8939
        %v8998 = vmul.f32 %v8982, %v8942
        %v8999 = vmul.f32 %v8983, %v8947
        %v9000 = vmul.f32 %v8984, %v8950
        %v9001 = vmul.f32 %v8985, %v8891
        %v9002 = vmul.f32 %v8986, %v8894
        %v9003 = vmul.f32 %v8987, %v8899
        %v9004 = vmul.f32 %v8988, %v8902
        %v9005 = vmul.f32 %v8989, %v8907
        %v9006 = vmul.f32 %v8990, %v8910
        %v9007 = vmul.f32 %v8991, %v8915
        %v9008 = vmul.f32 %v8992, %v8918
        %v9009 = vmul.f32 %v8993, %v8923
        %v9010 = vmul.f32 %v8994, %v8926
        %v9011 = vmul.f32 %v8995, %v8931
        %v9012 = vmul.f32 %v8996, %v8934
        %v9013 = vmul.f32 %v8997, %v8939
        %v9014 = vmul.f32 %v8998, %v8942
        %v9015 = vmul.f32 %v8999, %v8947
        %v9016 = vmul.f32 %v9000, %v8950
        %v9017 = vadd.f32 %v8891, %v9001
        %v9018 = vadd.f32 %v8894, %v9002
        %v9019 = vadd.f32 %v8899, %v9003
        %v9020 = vadd.f32 %v8902, %v9004
        %v9021 = vadd.f32 %v8907, %v9005
        %v9022 = vadd.f32 %v8910, %v9006
        %v9023 = vadd.f32 %v8915, %v9007
        %v9024 = vadd.f32 %v8918, %v9008
        %v9025 = vadd.f32 %v8923, %v9009
        %v9026 = vadd.f32 %v8926, %v9010
        %v9027 = vadd.f32 %v8931, %v9011
        %v9028 = vadd.f32 %v8934, %v9012
        %v9029 = vadd.f32 %v8939, %v9013
        %v9030 = vadd.f32 %v8942, %v9014
        %v9031 = vadd.f32 %v8947, %v9015
        %v9032 = vadd.f32 %v8950, %v9016
        %v9033 = vmul.f32 %v9017, 0.7978846
        %v9034 = vmul.f32 %v9018, 0.7978846
        %v9035 = vmul.f32 %v9019, 0.7978846
        %v9036 = vmul.f32 %v9020, 0.7978846
        %v9037 = vmul.f32 %v9021, 0.7978846
        %v9038 = vmul.f32 %v9022, 0.7978846
        %v9039 = vmul.f32 %v9023, 0.7978846
        %v9040 = vmul.f32 %v9024, 0.7978846
        %v9041 = vmul.f32 %v9025, 0.7978846
        %v9042 = vmul.f32 %v9026, 0.7978846
        %v9043 = vmul.f32 %v9027, 0.7978846
        %v9044 = vmul.f32 %v9028, 0.7978846
        %v9045 = vmul.f32 %v9029, 0.7978846
        %v9046 = vmul.f32 %v9030, 0.7978846
        %v9047 = vmul.f32 %v9031, 0.7978846
        %v9048 = vmul.f32 %v9032, 0.7978846
        %v9049 = vtanh.pop %v9033
        %v9050 = vtanh.pop %v9034
        %v9051 = vtanh.pop %v9035
        %v9052 = vtanh.pop %v9036
        %v9053 = vtanh.pop %v9037
        %v9054 = vtanh.pop %v9038
        %v9055 = vtanh.pop %v9039
        %v9056 = vtanh.pop %v9040
        %v9057 = vtanh.pop %v9041
        %v9058 = vtanh.pop %v9042
        %v9059 = vtanh.pop %v9043
        %v9060 = vtanh.pop %v9044
        %v9061 = vtanh.pop %v9045
        %v9062 = vtanh.pop %v9046
        %v9063 = vtanh.pop %v9047
        %v9064 = vtanh.pop %v9048
        %v9065 = vadd.f32 %v9049, 1.0
        %v9066 = vadd.f32 %v9050, 1.0
        %v9067 = vadd.f32 %v9051, 1.0
        %v9068 = vadd.f32 %v9052, 1.0
        %v9069 = vadd.f32 %v9053, 1.0
        %v9070 = vadd.f32 %v9054, 1.0
        %v9071 = vadd.f32 %v9055, 1.0
        %v9072 = vadd.f32 %v9056, 1.0
        %v9073 = vadd.f32 %v9057, 1.0
        %v9074 = vadd.f32 %v9058, 1.0
        %v9075 = vadd.f32 %v9059, 1.0
        %v9076 = vadd.f32 %v9060, 1.0
        %v9077 = vadd.f32 %v9061, 1.0
        %v9078 = vadd.f32 %v9062, 1.0
        %v9079 = vadd.f32 %v9063, 1.0
        %v9080 = vadd.f32 %v9064, 1.0
        %v9081 = vmul.f32 %v8953, %v9065
        %v9082 = vmul.f32 %v8954, %v9066
        %v9083 = vmul.f32 %v8955, %v9067
        %v9084 = vmul.f32 %v8956, %v9068
        %v9085 = vmul.f32 %v8957, %v9069
        %v9086 = vmul.f32 %v8958, %v9070
        %v9087 = vmul.f32 %v8959, %v9071
        %v9088 = vmul.f32 %v8960, %v9072
        %v9089 = vmul.f32 %v8961, %v9073
        %v9090 = vmul.f32 %v8962, %v9074
        %v9091 = vmul.f32 %v8963, %v9075
        %v9092 = vmul.f32 %v8964, %v9076
        %v9093 = vmul.f32 %v8965, %v9077
        %v9094 = vmul.f32 %v8966, %v9078
        %v9095 = vmul.f32 %v8967, %v9079
        %v9096 = vmul.f32 %v8968, %v9080
        %v9097 = vpack.c.bf16 %v9082, %v9081
        %v9098 = vpack.c.bf16 %v9084, %v9083
        %v9099 = vpack.c.bf16 %v9086, %v9085
        %v9100 = vpack.c.bf16 %v9088, %v9087
        %v9101 = vpack.c.bf16 %v9090, %v9089
        %v9102 = vpack.c.bf16 %v9092, %v9091
        %v9103 = vpack.c.bf16 %v9094, %v9093
        %v9104 = vpack.c.bf16 %v9096, %v9095
        %s9105 = scalar_lea.vmem %s16, 64
        %v9106 = vld [vmem:[%s9105] sm:$0xf]
        %v9107 = vld [vmem:[%s9105 + $0x4] sm:$0xf]
        %v9108 = vld [vmem:[%s9105 + $0x8] sm:$0xf]
        %v9109 = vld [vmem:[%s9105 + $0xc] sm:$0xf]
        %v9110 = vld [vmem:[%s9105 + $0x10] sm:$0xf]
        %v9111 = vld [vmem:[%s9105 + $0x14] sm:$0xf]
        %v9112 = vld [vmem:[%s9105 + $0x18] sm:$0xf]
        %v9113 = vld [vmem:[%s9105 + $0x1c] sm:$0xf]
        %v9114 = vld [vmem:[%s9105 + $0x20] sm:$0xf]
        %v9115 = vld [vmem:[%s9105 + $0x24] sm:$0xf]
        %v9116 = vld [vmem:[%s9105 + $0x28] sm:$0xf]
        %v9117 = vld [vmem:[%s9105 + $0x2c] sm:$0xf]
        %v9118 = vld [vmem:[%s9105 + $0x30] sm:$0xf]
        %v9119 = vld [vmem:[%s9105 + $0x34] sm:$0xf]
        %v9120 = vld [vmem:[%s9105 + $0x38] sm:$0xf]
        %v9121 = vld [vmem:[%s9105 + $0x3c] sm:$0xf]
        %v9138 = vunpack.c.l.b16 %v9106
        %v9139 = vunpack.c.l.b16 %v9107
        %v9140 = vunpack.c.l.b16 %v9108
        %v9141 = vunpack.c.l.b16 %v9109
        %v9142 = vunpack.c.l.b16 %v9110
        %v9143 = vunpack.c.l.b16 %v9111
        %v9144 = vunpack.c.l.b16 %v9112
        %v9145 = vunpack.c.l.b16 %v9113
        %v9146 = vunpack.c.l.b16 %v9114
        %v9147 = vunpack.c.l.b16 %v9115
        %v9148 = vunpack.c.l.b16 %v9116
        %v9149 = vunpack.c.l.b16 %v9117
        %v9150 = vunpack.c.l.b16 %v9118
        %v9151 = vunpack.c.l.b16 %v9119
        %v9152 = vunpack.c.l.b16 %v9120
        %v9153 = vunpack.c.l.b16 %v9121
        %v9154 = vpack.c.b16 %v9139, %v9138
        %v9155 = vpack.c.b16 %v9141, %v9140
        %v9156 = vpack.c.b16 %v9143, %v9142
        %v9157 = vpack.c.b16 %v9145, %v9144
        %v9158 = vpack.c.b16 %v9147, %v9146
        %v9159 = vpack.c.b16 %v9149, %v9148
        %v9160 = vpack.c.b16 %v9151, %v9150
        %v9161 = vpack.c.b16 %v9153, %v9152
        %9170 = vmatprep.subr.bf16.mxu0 0
        %9171 = vmatpush1.bf16.msra.mxu0 %v9154
        %9172 = vmatprep.subr.bf16.mxu0 0
        %9173 = vmatpush1.bf16.msra.mxu0 %v9155
        %9174 = vmatprep.subr.bf16.mxu0 0
        %9175 = vmatpush1.bf16.msra.mxu0 %v9156
        %9176 = vmatprep.subr.bf16.mxu0 0
        %9177 = vmatpush1.bf16.msra.mxu0 %v9157
        %9178 = vmatprep.subr.bf16.mxu0 0
        %9179 = vmatpush1.bf16.msra.mxu0 %v9158
        %9180 = vmatprep.subr.bf16.mxu0 0
        %9181 = vmatpush1.bf16.msra.mxu0 %v9159
        %9182 = vmatprep.subr.bf16.mxu0 0
        %9183 = vmatpush1.bf16.msra.mxu0 %v9160
        %9184 = vmatprep.subr.bf16.mxu0 0
        %9185 = vmatpush1.bf16.msra.mxu0 %v9161
        %9186 = vmatprep.subr.bf16.mxu0 0
        %9187 = vmatpush1.bf16.msra.mxu0 0
        %9188 = vmatprep.subr.bf16.mxu0 0
        %9189 = vmatpush1.bf16.msra.mxu0 0
        %9190 = vmatprep.subr.bf16.mxu0 0
        %9191 = vmatpush1.bf16.msra.mxu0 0
        %9192 = vmatprep.subr.bf16.mxu0 0
        %9193 = vmatpush1.bf16.msra.mxu0 0
        %9194 = vmatprep.subr.bf16.mxu0 0
        %9195 = vmatpush1.bf16.msra.mxu0 0
        %9196 = vmatprep.subr.bf16.mxu0 0
        %9197 = vmatpush1.bf16.msra.mxu0 0
        %9198 = vmatprep.subr.bf16.mxu0 0
        %9199 = vmatpush1.bf16.msra.mxu0 0
        %9200 = vmatprep.subr.bf16.mxu0 0
        %9201 = vmatpush1.bf16.msra.mxu0 0
        %9202 = vmatprep.mubr.bf16.mxu0 0
        %9203 = vmatmul.mubr.bf16.gmra.mrb[0].mxu0 %v9097
        %v9204 = vpop.f32.mrb[0].mxu0
        %v9205 = vadd.f32 0.0, %v9204
        %v9206 = vpop.f32.mrb[0].mxu0
        %v9207 = vpop.f32.mrb[0].mxu0
        %v9208 = vadd.f32 0.0, %v9207
        %v9209 = vpop.f32.mrb[0].mxu0
        %9210 = vmatprep.mubr.bf16.mxu0 0
        %9211 = vmatmul.mubr.bf16.gmra.mrb[0].mxu0 %v9098
        %v9212 = vpop.f32.mrb[0].mxu0
        %v9213 = vadd.f32 0.0, %v9212
        %v9214 = vpop.f32.mrb[0].mxu0
        %v9215 = vpop.f32.mrb[0].mxu0
        %v9216 = vadd.f32 0.0, %v9215
        %v9217 = vpop.f32.mrb[0].mxu0
        %9218 = vmatprep.mubr.bf16.mxu0 0
        %9219 = vmatmul.mubr.bf16.gmra.mrb[0].mxu0 %v9099
        %v9220 = vpop.f32.mrb[0].mxu0
        %v9221 = vadd.f32 0.0, %v9220
        %v9222 = vpop.f32.mrb[0].mxu0
        %v9223 = vpop.f32.mrb[0].mxu0
        %v9224 = vadd.f32 0.0, %v9223
        %v9225 = vpop.f32.mrb[0].mxu0
        %9226 = vmatprep.mubr.bf16.mxu0 0
        %9227 = vmatmul.mubr.bf16.gmra.mrb[0].mxu0 %v9100
        %v9228 = vpop.f32.mrb[0].mxu0
        %v9229 = vadd.f32 0.0, %v9228
        %v9230 = vpop.f32.mrb[0].mxu0
        %v9231 = vpop.f32.mrb[0].mxu0
        %v9232 = vadd.f32 0.0, %v9231
        %v9233 = vpop.f32.mrb[0].mxu0
        %9234 = vmatprep.mubr.bf16.mxu0 0
        %9235 = vmatmul.mubr.bf16.gmra.mrb[0].mxu0 %v9101
        %v9236 = vpop.f32.mrb[0].mxu0
        %v9237 = vadd.f32 0.0, %v9236
        %v9238 = vpop.f32.mrb[0].mxu0
        %v9239 = vpop.f32.mrb[0].mxu0
        %v9240 = vadd.f32 0.0, %v9239
        %v9241 = vpop.f32.mrb[0].mxu0
        %9242 = vmatprep.mubr.bf16.mxu0 0
        %9243 = vmatmul.mubr.bf16.gmra.mrb[0].mxu0 %v9102
        %v9244 = vpop.f32.mrb[0].mxu0
        %v9245 = vadd.f32 0.0, %v9244
        %v9246 = vpop.f32.mrb[0].mxu0
        %v9247 = vpop.f32.mrb[0].mxu0
        %v9248 = vadd.f32 0.0, %v9247
        %v9249 = vpop.f32.mrb[0].mxu0
        %9250 = vmatprep.mubr.bf16.mxu0 0
        %9251 = vmatmul.mubr.bf16.gmra.mrb[0].mxu0 %v9103
        %v9252 = vpop.f32.mrb[0].mxu0
        %v9253 = vadd.f32 0.0, %v9252
        %v9254 = vpop.f32.mrb[0].mxu0
        %v9255 = vpop.f32.mrb[0].mxu0
        %v9256 = vadd.f32 0.0, %v9255
        %v9257 = vpop.f32.mrb[0].mxu0
        %9258 = vmatprep.mubr.bf16.mxu0 0
        %9259 = vmatmul.mubr.bf16.gmra.mrb[0].mxu0 %v9104
        %v9260 = vpop.f32.mrb[0].mxu0
        %v9261 = vadd.f32 0.0, %v9260
        %v9262 = vpop.f32.mrb[0].mxu0
        %v9263 = vpop.f32.mrb[0].mxu0
        %v9264 = vadd.f32 0.0, %v9263
        %v9265 = vpop.f32.mrb[0].mxu0
        %9266 = vdwg.mxu0
        %v9267 = vadd.f32 %v8527, %v9205
        %v9268 = vadd.f32 %v8528, %v9208
        %v9269 = vadd.f32 %v8529, %v9213
        %v9270 = vadd.f32 %v8530, %v9216
        %v9271 = vadd.f32 %v8531, %v9221
        %v9272 = vadd.f32 %v8532, %v9224
        %v9273 = vadd.f32 %v8533, %v9229
        %v9274 = vadd.f32 %v8534, %v9232
        %v9275 = vadd.f32 %v8535, %v9237
        %v9276 = vadd.f32 %v8536, %v9240
        %v9277 = vadd.f32 %v8537, %v9245
        %v9278 = vadd.f32 %v8538, %v9248
        %v9279 = vadd.f32 %v8539, %v9253
        %v9280 = vadd.f32 %v8540, %v9256
        %v9281 = vadd.f32 %v8541, %v9261
        %v9282 = vadd.f32 %v8542, %v9264
        %s9283 = scalar_lea.vmem %s17, 1
        %v9284 = vld [vmem:[%s9283] sm:$0x1]
        %v9286 = vlaneseq
        %v9287 = vshrl.u32 %v9286, 7
        %v9288 = vsub.s32 0, %v9287
        %v9289 = vrot.slane %v9284, %v9288
        %v9291 = vadd.f32 %v9267, %v9289
        %v9292 = vadd.f32 %v9268, %v9289
        %v9293 = vadd.f32 %v9269, %v9289
        %v9294 = vadd.f32 %v9270, %v9289
        %v9295 = vadd.f32 %v9271, %v9289
        %v9296 = vadd.f32 %v9272, %v9289
        %v9297 = vadd.f32 %v9273, %v9289
        %v9298 = vadd.f32 %v9274, %v9289
        %v9299 = vadd.f32 %v9275, %v9289
        %v9300 = vadd.f32 %v9276, %v9289
        %v9301 = vadd.f32 %v9277, %v9289
        %v9302 = vadd.f32 %v9278, %v9289
        %v9303 = vadd.f32 %v9279, %v9289
        %v9304 = vadd.f32 %v9280, %v9289
        %v9305 = vadd.f32 %v9281, %v9289
        %v9306 = vadd.f32 %v9282, %v9289
        %v9307 = vld [vmem:[%s20] sm:$0xff]
        %v9308 = vld [vmem:[%s20 + $0x8] sm:$0xff]
        %9309 = vmatprep.subr.mxu0 0.0
        %9310 = vmatpush1.msra.mxu0 %v9291
        %9311 = vmatprep.subr.mxu0 0.0
        %9312 = vmatpush1.msra.mxu0 %v9292
        %9313 = vmatprep.subr.mxu0 0.0
        %9314 = vmatpush1.msra.mxu0 %v9293
        %9315 = vmatprep.subr.mxu0 0.0
        %9316 = vmatpush1.msra.mxu0 %v9294
        %9317 = vmatprep.subr.mxu0 0.0
        %9318 = vmatpush1.msra.mxu0 %v9295
        %9319 = vmatprep.subr.mxu0 0.0
        %9320 = vmatpush1.msra.mxu0 %v9296
        %9321 = vmatprep.subr.mxu0 0.0
        %9322 = vmatpush1.msra.mxu0 %v9297
        %9323 = vmatprep.subr.mxu0 0.0
        %9324 = vmatpush1.msra.mxu0 %v9298
        %9325 = vmatprep.subr.mxu0 0.0
        %9326 = vmatpush1.msra.mxu0 %v9299
        %9327 = vmatprep.subr.mxu0 0.0
        %9328 = vmatpush1.msra.mxu0 %v9300
        %9329 = vmatprep.subr.mxu0 0.0
        %9330 = vmatpush1.msra.mxu0 %v9301
        %9331 = vmatprep.subr.mxu0 0.0
        %9332 = vmatpush1.msra.mxu0 %v9302
        %9333 = vmatprep.subr.mxu0 0.0
        %9334 = vmatpush1.msra.mxu0 %v9303
        %9335 = vmatprep.subr.mxu0 0.0
        %9336 = vmatpush1.msra.mxu0 %v9304
        %9337 = vmatprep.subr.mxu0 0.0
        %9338 = vmatpush1.msra.mxu0 %v9305
        %9339 = vmatprep.subr.mxu0 0.0
        %9340 = vmatpush1.msra.mxu0 %v9306
        %9341 = vmatprep.subr.mxu0 0.0
        %9342 = vmatpush1.msra.mxu0 0.0
        %9343 = vmatprep.subr.mxu0 0.0
        %9344 = vmatpush1.msra.mxu0 0.0
        %9345 = vmatprep.subr.mxu0 0.0
        %9346 = vmatpush1.msra.mxu0 0.0
        %9347 = vmatprep.subr.mxu0 0.0
        %9348 = vmatpush1.msra.mxu0 0.0
        %9349 = vmatprep.subr.mxu0 0.0
        %9350 = vmatpush1.msra.mxu0 0.0
        %9351 = vmatprep.subr.mxu0 0.0
        %9352 = vmatpush1.msra.mxu0 0.0
        %9353 = vmatprep.subr.mxu0 0.0
        %9354 = vmatpush1.msra.mxu0 0.0
        %9355 = vmatprep.subr.mxu0 0.0
        %9356 = vmatpush1.msra.mxu0 0.0
        %9357 = vmatprep.subr.mxu0 0.0
        %9358 = vmatpush1.msra.mxu0 0.0
        %9359 = vmatprep.subr.mxu0 0.0
        %9360 = vmatpush1.msra.mxu0 0.0
        %9361 = vmatprep.subr.mxu0 0.0
        %9362 = vmatpush1.msra.mxu0 0.0
        %9363 = vmatprep.subr.mxu0 0.0
        %9364 = vmatpush1.msra.mxu0 0.0
        %9365 = vmatprep.subr.mxu0 0.0
        %9366 = vmatpush1.msra.mxu0 0.0
        %9367 = vmatprep.subr.mxu0 0.0
        %9368 = vmatpush1.msra.mxu0 0.0
        %9369 = vmatprep.subr.mxu0 0.0
        %9370 = vmatpush1.msra.mxu0 0.0
        %9371 = vmatprep.subr.mxu0 0.0
        %9372 = vmatpush1.msra.mxu0 0.0
        %9373 = vmatprep.mubr.f32.mxu0 0.0
        %9374 = vmatmul.mubr.f32.gmra.mrb[0].mxu0 %v9307
        %v9375 = vpop.f32.mrb[0].mxu0
        %v9376 = vadd.f32 0.0, %v9375
        %v9377 = vpop.f32.mrb[0].mxu0
        %9378 = vmatprep.mubr.f32.mxu0 0.0
        %9379 = vmatmul.mubr.f32.gmra.mrb[0].mxu0 %v9308
        %v9380 = vpop.f32.mrb[0].mxu0
        %v9381 = vadd.f32 0.0, %v9380
        %v9382 = vpop.f32.mrb[0].mxu0
        %9383 = vdwg.mxu0
        %v9384 = vld [vmem:[%s18] sm:$0x1]
        %v9385 = vld [vmem:[%s19] sm:$0x1]
        %v9386 = vsel %vm1113, %v9376, 0.0
        %9387 = vadd.xlane.f32.xlu0 %v9386
        %v9388 = vpop.xlane.xlu0 %9387
        %v9389 = vsel %vm1113, %v9381, 0.0
        %9390 = vadd.xlane.f32.xlu0 %v9389
        %v9391 = vpop.xlane.xlu0 %9390
        %v9392 = vmul.f32 %v9388, %v1162
        %v9393 = vmul.f32 %v9391, %v1162
        %v9394 = vsub.f32 %v9376, %v9392
        %v9395 = vsub.f32 %v9381, %v9393
        %v9396 = vmul.f32 %v9394, %v9394
        %v9397 = vmul.f32 %v9395, %v9395
        %v9398 = vsel %vm1113, %v9396, 0.0
        %9399 = vadd.xlane.f32.xlu0 %v9398
        %v9400 = vpop.xlane.xlu0 %9399
        %v9401 = vsel %vm1113, %v9397, 0.0
        %9402 = vadd.xlane.f32.xlu0 %v9401
        %v9403 = vpop.xlane.xlu0 %9402
        %v9404 = vmul.f32 %v9400, %v1162
        %v9405 = vmul.f32 %v9403, %v1162
        %v9406 = vadd.f32 %v9404, 1e-06
        %v9407 = vadd.f32 %v9405, 1e-06
        %v9408 = vrsqrt.pop %v9406
        %v9409 = vrsqrt.pop %v9407
        %v9410 = vmul.f32 %v9394, %v9408
        %v9411 = vmul.f32 %v9395, %v9409
        %v9413 = vlaneseq
        %v9414 = vshrl.u32 %v9413, 7
        %v9415 = vsub.s32 0, %v9414
        %v9416 = vrot.slane %v9384, %v9415
        %v9418 = vmul.f32 %v9410, %v9416
        %v9419 = vmul.f32 %v9411, %v9416
        %v9421 = vlaneseq
        %v9422 = vshrl.u32 %v9421, 7
        %v9423 = vsub.s32 0, %v9422
        %v9424 = vrot.slane %v9385, %v9423
        %v9426 = vadd.f32 %v9418, %v9424
        %v9427 = vadd.f32 %v9419, %v9424
        %v9428 = vpack.c.bf16 %v9427, %v9426
        %v9429 = vld [vmem:[%s21] sm:$0xf]
        %v9430 = vld [vmem:[%s21 + $0x4] sm:$0xf]
        %v9431 = vld [vmem:[%s21 + $0x8] sm:$0xf]
        %v9432 = vld [vmem:[%s21 + $0xc] sm:$0xf]
        %v9433 = vld [vmem:[%s22] sm:$0x1]
        %v9435 = vlaneseq
        %v9436 = vshrl.u32 %v9435, 7
        %v9437 = vsub.s32 0, %v9436
        %v9438 = vrot.slane %v9433, %v9437
        %v9444 = vunpack.c.l.b16 %v9429
        %v9445 = vunpack.c.l.b16 %v9430
        %v9446 = vunpack.c.l.b16 %v9431
        %v9447 = vunpack.c.l.b16 %v9432
        %v9448 = vpack.c.b16 %v9445, %v9444
        %v9449 = vpack.c.b16 %v9447, %v9446
        %v9453 = vsel %vm1113, %v9428, 0
        %9455 = vmatprep.subr.bf16.mxu0 0
        %9456 = vmatpush1.bf16.msra.mxu0 %v9448
        %9457 = vmatprep.subr.bf16.mxu0 0
        %9458 = vmatpush1.bf16.msra.mxu0 %v9449
        %9459 = vmatprep.subr.bf16.mxu0 0
        %9460 = vmatpush1.bf16.msra.mxu0 0
        %9461 = vmatprep.subr.bf16.mxu0 0
        %9462 = vmatpush1.bf16.msra.mxu0 0
        %9463 = vmatprep.subr.bf16.mxu0 0
        %9464 = vmatpush1.bf16.msra.mxu0 0
        %9465 = vmatprep.subr.bf16.mxu0 0
        %9466 = vmatpush1.bf16.msra.mxu0 0
        %9467 = vmatprep.subr.bf16.mxu0 0
        %9468 = vmatpush1.bf16.msra.mxu0 0
        %9469 = vmatprep.subr.bf16.mxu0 0
        %9470 = vmatpush1.bf16.msra.mxu0 0
        %9471 = vmatprep.subr.bf16.mxu0 0
        %9472 = vmatpush1.bf16.msra.mxu0 0
        %9473 = vmatprep.subr.bf16.mxu0 0
        %9474 = vmatpush1.bf16.msra.mxu0 0
        %9475 = vmatprep.subr.bf16.mxu0 0
        %9476 = vmatpush1.bf16.msra.mxu0 0
        %9477 = vmatprep.subr.bf16.mxu0 0
        %9478 = vmatpush1.bf16.msra.mxu0 0
        %9479 = vmatprep.subr.bf16.mxu0 0
        %9480 = vmatpush1.bf16.msra.mxu0 0
        %9481 = vmatprep.subr.bf16.mxu0 0
        %9482 = vmatpush1.bf16.msra.mxu0 0
        %9483 = vmatprep.subr.bf16.mxu0 0
        %9484 = vmatpush1.bf16.msra.mxu0 0
        %9485 = vmatprep.subr.bf16.mxu0 0
        %9486 = vmatpush1.bf16.msra.mxu0 0
        %9487 = vmatprep.mubr.bf16.mxu0 0
        %9488 = vmatmul.mubr.bf16.gmra.mrb[0].mxu0 %v9453
        %v9489 = vpop.f32.mrb[0].mxu0
        %v9490 = vadd.f32 %v9438, %v9489
        %v9491 = vpop.f32.mrb[0].mxu0
        %v9492 = vpop.f32.mrb[0].mxu0
        %v9493 = vadd.f32 %v9438, %v9492
        %v9494 = vpop.f32.mrb[0].mxu0
        %9495 = vdwg.mxu0
        %9496 = vst [vmem:[%s779] sm:$0xff] %v9490
        %9497 = vst [vmem:[%s779 + $0x8] sm:$0xff] %v9493
        %s9498 = sand.u32 %s536, 1
        %s9499 = scalar_lea.sflag [#allocation4], %s9498
        %s9500 = sand.u32 %s536, 1
        %s9501 = smul.addr %s9500, 16
        %s9502 = scalar_lea.vmem [#allocation11], %s9501
        // Predicated region
        $region133: #{tpu_custom_call.1} parent=111 // pred_check
          %p9503 = pneg %p546
        $region134: #{tpu_custom_call.1} parent=111 // pred_check_branch
          %9505 = sbr.rel (%p9503) target = $region136
        $region135: #{tpu_custom_call.1} parent=111 // pred_region
          %s9506 = smul.u32 2, %s40
          %s9508 = ssub.s32 256, 256
          %9509 = vsyncadd %s9499, %s9508
          %s9510 = smul.addr %s9506, 128
          %s9511 = scalar_lea.hbm %s23, %s9510
          %s9512 = sshll.u32 %s9502, 4
          %s9513 = int_to_ptr.vmem [resolvable:$true] %s9512
          %9518 = dma.vmem_to_hbm [thread:$0]  %s9513, 256, %s9511, %s9499, 128, 128, 8
        $region136: #{tpu_custom_call.1} parent=111 // pred_fallthru
          _
      $region112: #{tpu_custom_call.1} parent=5 // pred_fallthru
        _
      %p9519 = scmp.le.s32.totalorder 2, %s35
      // Predicated region
      $region137: #{tpu_custom_call.1} parent=5 // pred_check
        %p9520 = pneg %p9519
      $region138: #{tpu_custom_call.1} parent=5 // pred_check_branch
        %9522 = sbr.rel (%p9520) target = $region140
      $region139: #{tpu_custom_call.1} parent=5 // pred_region
        %s9523 = ssub.s32 %s35, 2
        // Predicated region
        $region141: #{tpu_custom_call.1} parent=139 // pred_check
          %p9524 = pneg %p552
        $region142: #{tpu_custom_call.1} parent=139 // pred_check_branch
          %9526 = sbr.rel (%p9524) target = $region144
        $region143: #{tpu_custom_call.1} parent=139 // pred_region
          %s9527 = sand.u32 %s537, 1
          %s9528 = scalar_lea.sflag [#allocation4], %s9527
          %s9529 = sand.u32 %s537, 1
          %s9530 = smul.addr %s9529, 16
          %s9531 = scalar_lea.vmem [#allocation11], %s9530
          %9532 = dma.done %s9528, 256
        $region144: #{tpu_custom_call.1} parent=139 // pred_fallthru
          _
      $region140: #{tpu_custom_call.1} parent=5 // pred_fallthru
        _
    $region6: #{tpu_custom_call.1} parent=1 // loop_footer
      %s39 = sadd.s32 1, %s35
    $region7: #{tpu_custom_call.1} parent=1 // loop_footer_branch
      %34 = sbr.rel target = $region3
    $region8: #{tpu_custom_call.1} parent=1 // loop_exit
      _
    %9533 = vsyncpa [#allocation3], 1
    %s9534 = scalar_lea.sflag [#allocation3], 1
    %9535 = vsyncpa %s9534, 1
    %9536 = vsyncpa [#allocation6], 1
    %9537 = vsyncpa [#allocation9], 1
    %9538 = vsyncpa [#allocation4], 1
    %s9539 = scalar_lea.sflag [#allocation4], 1
    %9540 = vsyncpa %s9539, 1

</llo_original>
